<compile_context>
chip_gen: v7x
topology: tpu7x:2x2x1
jax: 0.10.0
libtpu: 0.0.40
codegen_flags: <defaults>
</compile_context>

<pallas_src>
import functools

import jax
import jax.numpy as jnp
from jax.experimental import pallas as pl
from jax.experimental.pallas import tpu as pltpu

KSIZE = 21
CONV_CH = 128
HIDDEN = 512
HEAD_OUT = 128  # lane-dense merged head output width (needs actions_n + 1 <= 128)


# ---------------------------------------------------------------------------
# Fused forward kernel: conv1 -> relu -> conv2 -> relu -> flatten -> heads,
# with manual, overlapped HBM->VMEM DMA of the big weights.
# ---------------------------------------------------------------------------
def a2c_fused_kernel(batch, l1, l2, ksize,
                     x_ref, w1_ref, b1_ref, w2_hbm, b2_ref,
                     wh1_hbm, bh1_ref, wh2_hbm, bh2_ref,
                     out_ref,
                     w2_vmem, wh1_vmem, wh2_vmem, sem):
    c_in = w1_ref.shape[1]
    c = w1_ref.shape[2]

    # Kick off every big-weight DMA up front, in the order they are consumed.
    # They stream HBM->VMEM while the conv stage does its vector work — the
    # main win on this DMA-bound kernel.
    cp_w2 = pltpu.make_async_copy(w2_hbm, w2_vmem, sem.at[0])
    cp_wh1 = pltpu.make_async_copy(wh1_hbm, wh1_vmem, sem.at[1])
    cp_wh2 = pltpu.make_async_copy(wh2_hbm, wh2_vmem, sem.at[2])
    cp_w2.start()
    cp_wh1.start()
    cp_wh2.start()

    # conv1: K-term accumulation of depth-C_in matmuls (im2col never
    # materialized; only the current shifted slice is live).  f32 operands —
    # the MXU is idle here and this skips a bf16 cast of x.
    x = x_ref[...]                                           # (B, L, C_in) f32
    h1 = jnp.zeros((batch * l1, c), jnp.float32)
    for k in range(ksize):
        xk = x[:, k:k + l1, :].reshape(batch * l1, c_in)
        h1 = h1 + jnp.dot(xk, w1_ref[k], preferred_element_type=jnp.float32)
    h1 = jnp.maximum(h1 + b1_ref[...], 0.0)
    h1 = h1.astype(jnp.bfloat16).reshape(batch, l1, c)       # (B, L1, C) bf16

    # conv2: same accumulate form (replaces the 21-slice / 2688-lane im2col
    # concat: fewer vector moves, no spill risk; 21 depth-128 MXU pushes are
    # free since the MXU is otherwise idle).
    cp_w2.wait()
    h2 = jnp.zeros((batch * l2, c), jnp.float32)
    for k in range(ksize):
        hk = h1[:, k:k + l2, :].reshape(batch * l2, c)
        h2 = h2 + jnp.dot(hk, w2_vmem[k], preferred_element_type=jnp.float32)
    h2 = jnp.maximum(h2 + b2_ref[...], 0.0)

    # Channel-minor flatten (head rows were pre-permuted to match this order);
    # cast to bf16 BEFORE the tile-crossing reshape to halve the moved bytes.
    feat = h2.astype(jnp.bfloat16).reshape(batch, l2 * c)    # (B, L2*C) bf16

    # Merged policy|value heads -> a single lane-dense (B, 128) store.
    cp_wh1.wait()
    hid = jnp.dot(feat, wh1_vmem[...], preferred_element_type=jnp.float32)
    hid = jnp.maximum(hid + bh1_ref[...], 0.0).astype(jnp.bfloat16)
    cp_wh2.wait()
    out = jnp.dot(hid, wh2_vmem[...], preferred_element_type=jnp.float32)
    out_ref[...] = out + bh2_ref[...]


def a2c_conv1d_forward(x_ncw, kp, actions_n):
    """x_ncw: (B, C_in, L) float32 (PyTorch NCW).  Returns (policy, value)."""
    b, c_in, length = x_ncw.shape
    k = KSIZE
    l1 = length - k + 1
    l2 = l1 - k + 1

    # Only layout prep left outside the kernel: the tiny NCW -> NLC transpose
    # (B*L*C_in floats).  The conv1 im2col now lives inside the kernel.
    x_blc = jnp.transpose(x_ncw, (0, 2, 1))                  # (B, L, C_in) f32

    vmem = pl.BlockSpec(memory_space=pltpu.MemorySpace.VMEM)
    hbm = pl.BlockSpec(memory_space=pl.ANY)   # big weights: manual overlapped DMA
    kernel = functools.partial(a2c_fused_kernel, b, l1, l2, k)
    out = pl.pallas_call(
        kernel,
        out_shape=jax.ShapeDtypeStruct((b, HEAD_OUT), jnp.float32),
        in_specs=[vmem, vmem, vmem, hbm, vmem, hbm, vmem, hbm, vmem],
        out_specs=vmem,
        scratch_shapes=[
            pltpu.VMEM(kp["w2"].shape, kp["w2"].dtype),
            pltpu.VMEM(kp["wh1"].shape, kp["wh1"].dtype),
            pltpu.VMEM(kp["wh2"].shape, kp["wh2"].dtype),
            pltpu.SemaphoreType.DMA((3,)),
        ],
    )(x_blc, kp["w1"], kp["b1"], kp["w2"], kp["b2"],
      kp["wh1"], kp["bh1"], kp["wh2"], kp["bh2"])

    policy = out[:, :actions_n]
    value = out[:, actions_n:actions_n + 1]
    return policy, value


# ---------------------------------------------------------------------------
# Parameters: torch-layout init, then one-time conversion to kernel layout.
# ---------------------------------------------------------------------------
def init_torch_params(key, obs_shape, actions_n):
    """Random params in the exact layouts torch's A2CConv1d would store."""
    c_in, length = obs_shape
    l1 = length - KSIZE + 1
    l2 = l1 - KSIZE + 1
    out_size = CONV_CH * l2
    ks = jax.random.split(key, 12)

    def u(kk, shape, fan_in):
        bound = 1.0 / float(fan_in) ** 0.5
        return jax.random.uniform(kk, shape, jnp.float32, -bound, bound)

    return {
        "conv1_w": u(ks[0], (CONV_CH, c_in, KSIZE), c_in * KSIZE),
        "conv1_b": u(ks[1], (CONV_CH,), c_in * KSIZE),
        "conv2_w": u(ks[2], (CONV_CH, CONV_CH, KSIZE), CONV_CH * KSIZE),
        "conv2_b": u(ks[3], (CONV_CH,), CONV_CH * KSIZE),
        "pol1_w": u(ks[4], (HIDDEN, out_size), out_size),
        "pol1_b": u(ks[5], (HIDDEN,), out_size),
        "pol2_w": u(ks[6], (actions_n, HIDDEN), HIDDEN),
        "pol2_b": u(ks[7], (actions_n,), HIDDEN),
        "val1_w": u(ks[8], (HIDDEN, out_size), out_size),
        "val1_b": u(ks[9], (HIDDEN,), out_size),
        "val2_w": u(ks[10], (1, HIDDEN), HIDDEN),
        "val2_b": u(ks[11], (1,), HIDDEN),
    }


def prepare_params(tp, obs_shape, actions_n):
    """Convert torch-layout params to the fused kernel's layout (one-time cost)."""
    c_in, length = obs_shape
    l1 = length - KSIZE + 1
    l2 = l1 - KSIZE + 1
    out_size = CONV_CH * l2
    c = CONV_CH
    assert actions_n + 1 <= HEAD_OUT

    # conv weights -> (K, C_in, C_out) for the K-term accumulation form.
    w1 = jnp.transpose(tp["conv1_w"], (2, 1, 0))             # (K, C_in, 128) f32
    w2 = jnp.transpose(tp["conv2_w"], (2, 1, 0))             # (K, 128, 128)

    # Head layer 1: reorder rows from torch's channel-major flatten
    # (f = ch*L2 + l) to the kernel's channel-minor flatten (f' = l*C + ch),
    # then concatenate policy|value along the output dim.
    def permute_rows(w_torch):                    # (HIDDEN, out_size)
        wt = w_torch.T.reshape(c, l2, HIDDEN)     # [ch, l, h]
        return jnp.transpose(wt, (1, 0, 2)).reshape(out_size, HIDDEN)

    wh1 = jnp.concatenate(
        [permute_rows(tp["pol1_w"]), permute_rows(tp["val1_w"])], axis=1)
    bh1 = jnp.concatenate([tp["pol1_b"], tp["val1_b"]]).reshape(1, 2 * HIDDEN)

    # Head layer 2: block matrix producing one lane-dense (B, 128) output:
    # cols [0, actions_n) = policy logits, col actions_n = value.
    wh2 = jnp.zeros((2 * HIDDEN, HEAD_OUT), jnp.float32)
    wh2 = wh2.at[:HIDDEN, :actions_n].set(tp["pol2_w"].T)
    wh2 = wh2.at[HIDDEN:, actions_n].set(tp["val2_w"][0])
    bh2 = jnp.zeros((1, HEAD_OUT), jnp.float32)
    bh2 = bh2.at[0, :actions_n].set(tp["pol2_b"])
    bh2 = bh2.at[0, actions_n].set(tp["val2_b"][0])

    # Note: int8 (v5e/v6e) or fp8 (v7x) quantization of wh1/w2 would halve the
    # dominant HBM read; kept bf16 here for cross-generation robustness.
    return {
        "w1": w1, "b1": tp["conv1_b"].reshape(1, c),
        "w2": w2.astype(jnp.bfloat16), "b2": tp["conv2_b"].reshape(1, c),
        "wh1": wh1.astype(jnp.bfloat16), "bh1": bh1,
        "wh2": wh2.astype(jnp.bfloat16), "bh2": bh2,
    }


# ---------------------------------------------------------------------------
# Pure-JAX emulation of the torch module (for a tolerance check).
# ---------------------------------------------------------------------------
def _ref_conv1d(x, w, bias):        # x (B, Cin, L), w (Cout, Cin, K), bias (Cout,)
    kk = w.shape[2]
    lout = x.shape[2] - kk + 1
    cols = jnp.stack([x[:, :, i:i + lout] for i in range(kk)], axis=3)
    return jnp.einsum("bclk,dck->bdl", cols, w) + bias[None, :, None]


def torch_reference(x, tp):
    h = jax.nn.relu(_ref_conv1d(x, tp["conv1_w"], tp["conv1_b"]))
    h = jax.nn.relu(_ref_conv1d(h, tp["conv2_w"], tp["conv2_b"]))
    flat = h.reshape(x.shape[0], -1)                          # channel-major flatten
    p = jax.nn.relu(flat @ tp["pol1_w"].T + tp["pol1_b"]) @ tp["pol2_w"].T + tp["pol2_b"]
    v = jax.nn.relu(flat @ tp["val1_w"].T + tp["val1_b"]) @ tp["val2_w"].T + tp["val2_b"]
    return p, v


if __name__ == "__main__":
    key = jax.random.PRNGKey(0)
    k_param, k_x = jax.random.split(key)

    batch = 2
    obs_shape = (4, 48)      # (channels, length); two valid k=21 convs -> L2 = 8
    actions_n = 6

    torch_params = init_torch_params(k_param, obs_shape, actions_n)
    kparams = prepare_params(torch_params, obs_shape, actions_n)
    x = jax.random.normal(k_x, (batch,) + obs_shape, jnp.float32)

    fwd = jax.jit(a2c_conv1d_forward, static_argnames=("actions_n",))
    policy, value = fwd(x, kparams, actions_n=actions_n)
    jax.block_until_ready((policy, value))

    assert policy.shape == (batch, actions_n), policy.shape
    assert value.shape == (batch, 1), value.shape

    # Loose tolerance: kernel uses bf16 matmul operands (f32 accumulation).
    p_ref, v_ref = jax.jit(torch_reference)(x, torch_params)
    assert jnp.allclose(policy, p_ref, atol=5e-2, rtol=5e-2)
    assert jnp.allclose(value, v_ref, atol=5e-2, rtol=5e-2)
    print("KERNEL_OK")
</pallas_src>

<mosaic_0001>
module attributes {stable_mosaic.version = 11 : i64} {
  func.func @a2c_fused_kernel(%arg0: memref<2x48x4xf32, #tpu.memory_space<vmem>>, %arg1: memref<21x4x128xf32, #tpu.memory_space<vmem>>, %arg2: memref<1x128xf32, #tpu.memory_space<vmem>>, %arg3: memref<21x128x128xbf16, #tpu.memory_space<any>>, %arg4: memref<1x128xf32, #tpu.memory_space<vmem>>, %arg5: memref<1024x1024xbf16, #tpu.memory_space<any>>, %arg6: memref<1x1024xf32, #tpu.memory_space<vmem>>, %arg7: memref<1024x128xbf16, #tpu.memory_space<any>>, %arg8: memref<1x128xf32, #tpu.memory_space<vmem>>, %arg9: memref<2x128xf32, #tpu.memory_space<vmem>>, %arg10: memref<21x128x128xbf16, #tpu.memory_space<vmem>>, %arg11: memref<1024x1024xbf16, #tpu.memory_space<vmem>>, %arg12: memref<1024x128xbf16, #tpu.memory_space<vmem>>, %arg13: memref<3x!tpu.dma_semaphore, #tpu.memory_space<semaphore_mem>>) attributes {dimension_semantics = [], scalar_prefetch = 0 : i64, scratch_operands = 4 : i64, tpu.core_type = #tpu.core_type<tc>} {
    %c0_i32 = arith.constant 0 : i32
    %0 = tpu.memref_slice %arg13[%c0_i32] : memref<3x!tpu.dma_semaphore, #tpu.memory_space<semaphore_mem>> -> memref<1x!tpu.dma_semaphore, #tpu.memory_space<semaphore_mem>>
    %1 = tpu.memref_squeeze %0 : memref<1x!tpu.dma_semaphore, #tpu.memory_space<semaphore_mem>> -> memref<!tpu.dma_semaphore, #tpu.memory_space<semaphore_mem>>
    tpu.enqueue_dma source(%arg3 : memref<21x128x128xbf16, #tpu.memory_space<any>>) target(%arg10 : memref<21x128x128xbf16, #tpu.memory_space<vmem>>) target_semaphore(%1 : memref<!tpu.dma_semaphore, #tpu.memory_space<semaphore_mem>>)
    %c1_i32 = arith.constant 1 : i32
    %2 = tpu.memref_slice %arg13[%c1_i32] : memref<3x!tpu.dma_semaphore, #tpu.memory_space<semaphore_mem>> -> memref<1x!tpu.dma_semaphore, #tpu.memory_space<semaphore_mem>>
    %3 = tpu.memref_squeeze %2 : memref<1x!tpu.dma_semaphore, #tpu.memory_space<semaphore_mem>> -> memref<!tpu.dma_semaphore, #tpu.memory_space<semaphore_mem>>
    tpu.enqueue_dma source(%arg5 : memref<1024x1024xbf16, #tpu.memory_space<any>>) target(%arg11 : memref<1024x1024xbf16, #tpu.memory_space<vmem>>) target_semaphore(%3 : memref<!tpu.dma_semaphore, #tpu.memory_space<semaphore_mem>>)
    %c2_i32 = arith.constant 2 : i32
    %4 = tpu.memref_slice %arg13[%c2_i32] : memref<3x!tpu.dma_semaphore, #tpu.memory_space<semaphore_mem>> -> memref<1x!tpu.dma_semaphore, #tpu.memory_space<semaphore_mem>>
    %5 = tpu.memref_squeeze %4 : memref<1x!tpu.dma_semaphore, #tpu.memory_space<semaphore_mem>> -> memref<!tpu.dma_semaphore, #tpu.memory_space<semaphore_mem>>
    tpu.enqueue_dma source(%arg7 : memref<1024x128xbf16, #tpu.memory_space<any>>) target(%arg12 : memref<1024x128xbf16, #tpu.memory_space<vmem>>) target_semaphore(%5 : memref<!tpu.dma_semaphore, #tpu.memory_space<semaphore_mem>>)
    %c0 = arith.constant 0 : index
    %c0_0 = arith.constant 0 : index
    %c0_1 = arith.constant 0 : index
    %6 = vector.load %arg0[%c0, %c0_0, %c0_1] : memref<2x48x4xf32, #tpu.memory_space<vmem>>, vector<2x48x4xf32>
    %cst = arith.constant 0.000000e+00 : f32
    %7 = vector.broadcast %cst : f32 to vector<56x128xf32>
    %8 = vector.extract_strided_slice %6 {offsets = [0, 0, 0], sizes = [2, 28, 4], strides = [1, 1, 1]} : vector<2x48x4xf32> to vector<2x28x4xf32>
    %9 = vector.shape_cast %8 : vector<2x28x4xf32> to vector<56x4xf32>
    %c0_2 = arith.constant 0 : index
    %c0_3 = arith.constant 0 : index
    %c0_4 = arith.constant 0 : index
    %10 = vector.load %arg1[%c0_2, %c0_3, %c0_4] : memref<21x4x128xf32, #tpu.memory_space<vmem>>, vector<1x4x128xf32>
    %11 = vector.shape_cast %10 : vector<1x4x128xf32> to vector<4x128xf32>
    %cst_5 = arith.constant dense<0.000000e+00> : vector<56x128xf32>
    %12 = tpu.matmul %9, %11, %cst_5 {dimension_numbers = #tpu.dot_dimension_numbers<[1], [0], [0], [1], [0, 0, 1, 1], [], []>} : vector<56x4xf32>, vector<4x128xf32>, vector<56x128xf32> -> vector<56x128xf32>
    %13 = arith.addf %7, %12 : vector<56x128xf32>
    %14 = vector.extract_strided_slice %6 {offsets = [0, 1, 0], sizes = [2, 28, 4], strides = [1, 1, 1]} : vector<2x48x4xf32> to vector<2x28x4xf32>
    %15 = vector.shape_cast %14 : vector<2x28x4xf32> to vector<56x4xf32>
    %c1 = arith.constant 1 : index
    %c0_6 = arith.constant 0 : index
    %c0_7 = arith.constant 0 : index
    %16 = vector.load %arg1[%c1, %c0_6, %c0_7] : memref<21x4x128xf32, #tpu.memory_space<vmem>>, vector<1x4x128xf32>
    %17 = vector.shape_cast %16 : vector<1x4x128xf32> to vector<4x128xf32>
    %cst_8 = arith.constant dense<0.000000e+00> : vector<56x128xf32>
    %18 = tpu.matmul %15, %17, %cst_8 {dimension_numbers = #tpu.dot_dimension_numbers<[1], [0], [0], [1], [0, 0, 1, 1], [], []>} : vector<56x4xf32>, vector<4x128xf32>, vector<56x128xf32> -> vector<56x128xf32>
    %19 = arith.addf %13, %18 : vector<56x128xf32>
    %20 = vector.extract_strided_slice %6 {offsets = [0, 2, 0], sizes = [2, 28, 4], strides = [1, 1, 1]} : vector<2x48x4xf32> to vector<2x28x4xf32>
    %21 = vector.shape_cast %20 : vector<2x28x4xf32> to vector<56x4xf32>
    %c2 = arith.constant 2 : index
    %c0_9 = arith.constant 0 : index
    %c0_10 = arith.constant 0 : index
    %22 = vector.load %arg1[%c2, %c0_9, %c0_10] : memref<21x4x128xf32, #tpu.memory_space<vmem>>, vector<1x4x128xf32>
    %23 = vector.shape_cast %22 : vector<1x4x128xf32> to vector<4x128xf32>
    %cst_11 = arith.constant dense<0.000000e+00> : vector<56x128xf32>
    %24 = tpu.matmul %21, %23, %cst_11 {dimension_numbers = #tpu.dot_dimension_numbers<[1], [0], [0], [1], [0, 0, 1, 1], [], []>} : vector<56x4xf32>, vector<4x128xf32>, vector<56x128xf32> -> vector<56x128xf32>
    %25 = arith.addf %19, %24 : vector<56x128xf32>
    %26 = vector.extract_strided_slice %6 {offsets = [0, 3, 0], sizes = [2, 28, 4], strides = [1, 1, 1]} : vector<2x48x4xf32> to vector<2x28x4xf32>
    %27 = vector.shape_cast %26 : vector<2x28x4xf32> to vector<56x4xf32>
    %c3 = arith.constant 3 : index
    %c0_12 = arith.constant 0 : index
    %c0_13 = arith.constant 0 : index
    %28 = vector.load %arg1[%c3, %c0_12, %c0_13] : memref<21x4x128xf32, #tpu.memory_space<vmem>>, vector<1x4x128xf32>
    %29 = vector.shape_cast %28 : vector<1x4x128xf32> to vector<4x128xf32>
    %cst_14 = arith.constant dense<0.000000e+00> : vector<56x128xf32>
    %30 = tpu.matmul %27, %29, %cst_14 {dimension_numbers = #tpu.dot_dimension_numbers<[1], [0], [0], [1], [0, 0, 1, 1], [], []>} : vector<56x4xf32>, vector<4x128xf32>, vector<56x128xf32> -> vector<56x128xf32>
    %31 = arith.addf %25, %30 : vector<56x128xf32>
    %32 = vector.extract_strided_slice %6 {offsets = [0, 4, 0], sizes = [2, 28, 4], strides = [1, 1, 1]} : vector<2x48x4xf32> to vector<2x28x4xf32>
    %33 = vector.shape_cast %32 : vector<2x28x4xf32> to vector<56x4xf32>
    %c4 = arith.constant 4 : index
    %c0_15 = arith.constant 0 : index
    %c0_16 = arith.constant 0 : index
    %34 = vector.load %arg1[%c4, %c0_15, %c0_16] : memref<21x4x128xf32, #tpu.memory_space<vmem>>, vector<1x4x128xf32>
    %35 = vector.shape_cast %34 : vector<1x4x128xf32> to vector<4x128xf32>
    %cst_17 = arith.constant dense<0.000000e+00> : vector<56x128xf32>
    %36 = tpu.matmul %33, %35, %cst_17 {dimension_numbers = #tpu.dot_dimension_numbers<[1], [0], [0], [1], [0, 0, 1, 1], [], []>} : vector<56x4xf32>, vector<4x128xf32>, vector<56x128xf32> -> vector<56x128xf32>
    %37 = arith.addf %31, %36 : vector<56x128xf32>
    %38 = vector.extract_strided_slice %6 {offsets = [0, 5, 0], sizes = [2, 28, 4], strides = [1, 1, 1]} : vector<2x48x4xf32> to vector<2x28x4xf32>
    %39 = vector.shape_cast %38 : vector<2x28x4xf32> to vector<56x4xf32>
    %c5 = arith.constant 5 : index
    %c0_18 = arith.constant 0 : index
    %c0_19 = arith.constant 0 : index
    %40 = vector.load %arg1[%c5, %c0_18, %c0_19] : memref<21x4x128xf32, #tpu.memory_space<vmem>>, vector<1x4x128xf32>
    %41 = vector.shape_cast %40 : vector<1x4x128xf32> to vector<4x128xf32>
    %cst_20 = arith.constant dense<0.000000e+00> : vector<56x128xf32>
    %42 = tpu.matmul %39, %41, %cst_20 {dimension_numbers = #tpu.dot_dimension_numbers<[1], [0], [0], [1], [0, 0, 1, 1], [], []>} : vector<56x4xf32>, vector<4x128xf32>, vector<56x128xf32> -> vector<56x128xf32>
    %43 = arith.addf %37, %42 : vector<56x128xf32>
    %44 = vector.extract_strided_slice %6 {offsets = [0, 6, 0], sizes = [2, 28, 4], strides = [1, 1, 1]} : vector<2x48x4xf32> to vector<2x28x4xf32>
    %45 = vector.shape_cast %44 : vector<2x28x4xf32> to vector<56x4xf32>
    %c6 = arith.constant 6 : index
    %c0_21 = arith.constant 0 : index
    %c0_22 = arith.constant 0 : index
    %46 = vector.load %arg1[%c6, %c0_21, %c0_22] : memref<21x4x128xf32, #tpu.memory_space<vmem>>, vector<1x4x128xf32>
    %47 = vector.shape_cast %46 : vector<1x4x128xf32> to vector<4x128xf32>
    %cst_23 = arith.constant dense<0.000000e+00> : vector<56x128xf32>
    %48 = tpu.matmul %45, %47, %cst_23 {dimension_numbers = #tpu.dot_dimension_numbers<[1], [0], [0], [1], [0, 0, 1, 1], [], []>} : vector<56x4xf32>, vector<4x128xf32>, vector<56x128xf32> -> vector<56x128xf32>
    %49 = arith.addf %43, %48 : vector<56x128xf32>
    %50 = vector.extract_strided_slice %6 {offsets = [0, 7, 0], sizes = [2, 28, 4], strides = [1, 1, 1]} : vector<2x48x4xf32> to vector<2x28x4xf32>
    %51 = vector.shape_cast %50 : vector<2x28x4xf32> to vector<56x4xf32>
    %c7 = arith.constant 7 : index
    %c0_24 = arith.constant 0 : index
    %c0_25 = arith.constant 0 : index
    %52 = vector.load %arg1[%c7, %c0_24, %c0_25] : memref<21x4x128xf32, #tpu.memory_space<vmem>>, vector<1x4x128xf32>
    %53 = vector.shape_cast %52 : vector<1x4x128xf32> to vector<4x128xf32>
    %cst_26 = arith.constant dense<0.000000e+00> : vector<56x128xf32>
    %54 = tpu.matmul %51, %53, %cst_26 {dimension_numbers = #tpu.dot_dimension_numbers<[1], [0], [0], [1], [0, 0, 1, 1], [], []>} : vector<56x4xf32>, vector<4x128xf32>, vector<56x128xf32> -> vector<56x128xf32>
    %55 = arith.addf %49, %54 : vector<56x128xf32>
    %56 = vector.extract_strided_slice %6 {offsets = [0, 8, 0], sizes = [2, 28, 4], strides = [1, 1, 1]} : vector<2x48x4xf32> to vector<2x28x4xf32>
    %57 = vector.shape_cast %56 : vector<2x28x4xf32> to vector<56x4xf32>
    %c8 = arith.constant 8 : index
    %c0_27 = arith.constant 0 : index
    %c0_28 = arith.constant 0 : index
    %58 = vector.load %arg1[%c8, %c0_27, %c0_28] : memref<21x4x128xf32, #tpu.memory_space<vmem>>, vector<1x4x128xf32>
    %59 = vector.shape_cast %58 : vector<1x4x128xf32> to vector<4x128xf32>
    %cst_29 = arith.constant dense<0.000000e+00> : vector<56x128xf32>
    %60 = tpu.matmul %57, %59, %cst_29 {dimension_numbers = #tpu.dot_dimension_numbers<[1], [0], [0], [1], [0, 0, 1, 1], [], []>} : vector<56x4xf32>, vector<4x128xf32>, vector<56x128xf32> -> vector<56x128xf32>
    %61 = arith.addf %55, %60 : vector<56x128xf32>
    %62 = vector.extract_strided_slice %6 {offsets = [0, 9, 0], sizes = [2, 28, 4], strides = [1, 1, 1]} : vector<2x48x4xf32> to vector<2x28x4xf32>
    %63 = vector.shape_cast %62 : vector<2x28x4xf32> to vector<56x4xf32>
    %c9 = arith.constant 9 : index
    %c0_30 = arith.constant 0 : index
    %c0_31 = arith.constant 0 : index
    %64 = vector.load %arg1[%c9, %c0_30, %c0_31] : memref<21x4x128xf32, #tpu.memory_space<vmem>>, vector<1x4x128xf32>
    %65 = vector.shape_cast %64 : vector<1x4x128xf32> to vector<4x128xf32>
    %cst_32 = arith.constant dense<0.000000e+00> : vector<56x128xf32>
    %66 = tpu.matmul %63, %65, %cst_32 {dimension_numbers = #tpu.dot_dimension_numbers<[1], [0], [0], [1], [0, 0, 1, 1], [], []>} : vector<56x4xf32>, vector<4x128xf32>, vector<56x128xf32> -> vector<56x128xf32>
    %67 = arith.addf %61, %66 : vector<56x128xf32>
    %68 = vector.extract_strided_slice %6 {offsets = [0, 10, 0], sizes = [2, 28, 4], strides = [1, 1, 1]} : vector<2x48x4xf32> to vector<2x28x4xf32>
    %69 = vector.shape_cast %68 : vector<2x28x4xf32> to vector<56x4xf32>
    %c10 = arith.constant 10 : index
    %c0_33 = arith.constant 0 : index
    %c0_34 = arith.constant 0 : index
    %70 = vector.load %arg1[%c10, %c0_33, %c0_34] : memref<21x4x128xf32, #tpu.memory_space<vmem>>, vector<1x4x128xf32>
    %71 = vector.shape_cast %70 : vector<1x4x128xf32> to vector<4x128xf32>
    %cst_35 = arith.constant dense<0.000000e+00> : vector<56x128xf32>
    %72 = tpu.matmul %69, %71, %cst_35 {dimension_numbers = #tpu.dot_dimension_numbers<[1], [0], [0], [1], [0, 0, 1, 1], [], []>} : vector<56x4xf32>, vector<4x128xf32>, vector<56x128xf32> -> vector<56x128xf32>
    %73 = arith.addf %67, %72 : vector<56x128xf32>
    %74 = vector.extract_strided_slice %6 {offsets = [0, 11, 0], sizes = [2, 28, 4], strides = [1, 1, 1]} : vector<2x48x4xf32> to vector<2x28x4xf32>
    %75 = vector.shape_cast %74 : vector<2x28x4xf32> to vector<56x4xf32>
    %c11 = arith.constant 11 : index
    %c0_36 = arith.constant 0 : index
    %c0_37 = arith.constant 0 : index
    %76 = vector.load %arg1[%c11, %c0_36, %c0_37] : memref<21x4x128xf32, #tpu.memory_space<vmem>>, vector<1x4x128xf32>
    %77 = vector.shape_cast %76 : vector<1x4x128xf32> to vector<4x128xf32>
    %cst_38 = arith.constant dense<0.000000e+00> : vector<56x128xf32>
    %78 = tpu.matmul %75, %77, %cst_38 {dimension_numbers = #tpu.dot_dimension_numbers<[1], [0], [0], [1], [0, 0, 1, 1], [], []>} : vector<56x4xf32>, vector<4x128xf32>, vector<56x128xf32> -> vector<56x128xf32>
    %79 = arith.addf %73, %78 : vector<56x128xf32>
    %80 = vector.extract_strided_slice %6 {offsets = [0, 12, 0], sizes = [2, 28, 4], strides = [1, 1, 1]} : vector<2x48x4xf32> to vector<2x28x4xf32>
    %81 = vector.shape_cast %80 : vector<2x28x4xf32> to vector<56x4xf32>
    %c12 = arith.constant 12 : index
    %c0_39 = arith.constant 0 : index
    %c0_40 = arith.constant 0 : index
    %82 = vector.load %arg1[%c12, %c0_39, %c0_40] : memref<21x4x128xf32, #tpu.memory_space<vmem>>, vector<1x4x128xf32>
    %83 = vector.shape_cast %82 : vector<1x4x128xf32> to vector<4x128xf32>
    %cst_41 = arith.constant dense<0.000000e+00> : vector<56x128xf32>
    %84 = tpu.matmul %81, %83, %cst_41 {dimension_numbers = #tpu.dot_dimension_numbers<[1], [0], [0], [1], [0, 0, 1, 1], [], []>} : vector<56x4xf32>, vector<4x128xf32>, vector<56x128xf32> -> vector<56x128xf32>
    %85 = arith.addf %79, %84 : vector<56x128xf32>
    %86 = vector.extract_strided_slice %6 {offsets = [0, 13, 0], sizes = [2, 28, 4], strides = [1, 1, 1]} : vector<2x48x4xf32> to vector<2x28x4xf32>
    %87 = vector.shape_cast %86 : vector<2x28x4xf32> to vector<56x4xf32>
    %c13 = arith.constant 13 : index
    %c0_42 = arith.constant 0 : index
    %c0_43 = arith.constant 0 : index
    %88 = vector.load %arg1[%c13, %c0_42, %c0_43] : memref<21x4x128xf32, #tpu.memory_space<vmem>>, vector<1x4x128xf32>
    %89 = vector.shape_cast %88 : vector<1x4x128xf32> to vector<4x128xf32>
    %cst_44 = arith.constant dense<0.000000e+00> : vector<56x128xf32>
    %90 = tpu.matmul %87, %89, %cst_44 {dimension_numbers = #tpu.dot_dimension_numbers<[1], [0], [0], [1], [0, 0, 1, 1], [], []>} : vector<56x4xf32>, vector<4x128xf32>, vector<56x128xf32> -> vector<56x128xf32>
    %91 = arith.addf %85, %90 : vector<56x128xf32>
    %92 = vector.extract_strided_slice %6 {offsets = [0, 14, 0], sizes = [2, 28, 4], strides = [1, 1, 1]} : vector<2x48x4xf32> to vector<2x28x4xf32>
    %93 = vector.shape_cast %92 : vector<2x28x4xf32> to vector<56x4xf32>
    %c14 = arith.constant 14 : index
    %c0_45 = arith.constant 0 : index
    %c0_46 = arith.constant 0 : index
    %94 = vector.load %arg1[%c14, %c0_45, %c0_46] : memref<21x4x128xf32, #tpu.memory_space<vmem>>, vector<1x4x128xf32>
    %95 = vector.shape_cast %94 : vector<1x4x128xf32> to vector<4x128xf32>
    %cst_47 = arith.constant dense<0.000000e+00> : vector<56x128xf32>
    %96 = tpu.matmul %93, %95, %cst_47 {dimension_numbers = #tpu.dot_dimension_numbers<[1], [0], [0], [1], [0, 0, 1, 1], [], []>} : vector<56x4xf32>, vector<4x128xf32>, vector<56x128xf32> -> vector<56x128xf32>
    %97 = arith.addf %91, %96 : vector<56x128xf32>
    %98 = vector.extract_strided_slice %6 {offsets = [0, 15, 0], sizes = [2, 28, 4], strides = [1, 1, 1]} : vector<2x48x4xf32> to vector<2x28x4xf32>
    %99 = vector.shape_cast %98 : vector<2x28x4xf32> to vector<56x4xf32>
    %c15 = arith.constant 15 : index
    %c0_48 = arith.constant 0 : index
    %c0_49 = arith.constant 0 : index
    %100 = vector.load %arg1[%c15, %c0_48, %c0_49] : memref<21x4x128xf32, #tpu.memory_space<vmem>>, vector<1x4x128xf32>
    %101 = vector.shape_cast %100 : vector<1x4x128xf32> to vector<4x128xf32>
    %cst_50 = arith.constant dense<0.000000e+00> : vector<56x128xf32>
    %102 = tpu.matmul %99, %101, %cst_50 {dimension_numbers = #tpu.dot_dimension_numbers<[1], [0], [0], [1], [0, 0, 1, 1], [], []>} : vector<56x4xf32>, vector<4x128xf32>, vector<56x128xf32> -> vector<56x128xf32>
    %103 = arith.addf %97, %102 : vector<56x128xf32>
    %104 = vector.extract_strided_slice %6 {offsets = [0, 16, 0], sizes = [2, 28, 4], strides = [1, 1, 1]} : vector<2x48x4xf32> to vector<2x28x4xf32>
    %105 = vector.shape_cast %104 : vector<2x28x4xf32> to vector<56x4xf32>
    %c16 = arith.constant 16 : index
    %c0_51 = arith.constant 0 : index
    %c0_52 = arith.constant 0 : index
    %106 = vector.load %arg1[%c16, %c0_51, %c0_52] : memref<21x4x128xf32, #tpu.memory_space<vmem>>, vector<1x4x128xf32>
    %107 = vector.shape_cast %106 : vector<1x4x128xf32> to vector<4x128xf32>
    %cst_53 = arith.constant dense<0.000000e+00> : vector<56x128xf32>
    %108 = tpu.matmul %105, %107, %cst_53 {dimension_numbers = #tpu.dot_dimension_numbers<[1], [0], [0], [1], [0, 0, 1, 1], [], []>} : vector<56x4xf32>, vector<4x128xf32>, vector<56x128xf32> -> vector<56x128xf32>
    %109 = arith.addf %103, %108 : vector<56x128xf32>
    %110 = vector.extract_strided_slice %6 {offsets = [0, 17, 0], sizes = [2, 28, 4], strides = [1, 1, 1]} : vector<2x48x4xf32> to vector<2x28x4xf32>
    %111 = vector.shape_cast %110 : vector<2x28x4xf32> to vector<56x4xf32>
    %c17 = arith.constant 17 : index
    %c0_54 = arith.constant 0 : index
    %c0_55 = arith.constant 0 : index
    %112 = vector.load %arg1[%c17, %c0_54, %c0_55] : memref<21x4x128xf32, #tpu.memory_space<vmem>>, vector<1x4x128xf32>
    %113 = vector.shape_cast %112 : vector<1x4x128xf32> to vector<4x128xf32>
    %cst_56 = arith.constant dense<0.000000e+00> : vector<56x128xf32>
    %114 = tpu.matmul %111, %113, %cst_56 {dimension_numbers = #tpu.dot_dimension_numbers<[1], [0], [0], [1], [0, 0, 1, 1], [], []>} : vector<56x4xf32>, vector<4x128xf32>, vector<56x128xf32> -> vector<56x128xf32>
    %115 = arith.addf %109, %114 : vector<56x128xf32>
    %116 = vector.extract_strided_slice %6 {offsets = [0, 18, 0], sizes = [2, 28, 4], strides = [1, 1, 1]} : vector<2x48x4xf32> to vector<2x28x4xf32>
    %117 = vector.shape_cast %116 : vector<2x28x4xf32> to vector<56x4xf32>
    %c18 = arith.constant 18 : index
    %c0_57 = arith.constant 0 : index
    %c0_58 = arith.constant 0 : index
    %118 = vector.load %arg1[%c18, %c0_57, %c0_58] : memref<21x4x128xf32, #tpu.memory_space<vmem>>, vector<1x4x128xf32>
    %119 = vector.shape_cast %118 : vector<1x4x128xf32> to vector<4x128xf32>
    %cst_59 = arith.constant dense<0.000000e+00> : vector<56x128xf32>
    %120 = tpu.matmul %117, %119, %cst_59 {dimension_numbers = #tpu.dot_dimension_numbers<[1], [0], [0], [1], [0, 0, 1, 1], [], []>} : vector<56x4xf32>, vector<4x128xf32>, vector<56x128xf32> -> vector<56x128xf32>
    %121 = arith.addf %115, %120 : vector<56x128xf32>
    %122 = vector.extract_strided_slice %6 {offsets = [0, 19, 0], sizes = [2, 28, 4], strides = [1, 1, 1]} : vector<2x48x4xf32> to vector<2x28x4xf32>
    %123 = vector.shape_cast %122 : vector<2x28x4xf32> to vector<56x4xf32>
    %c19 = arith.constant 19 : index
    %c0_60 = arith.constant 0 : index
    %c0_61 = arith.constant 0 : index
    %124 = vector.load %arg1[%c19, %c0_60, %c0_61] : memref<21x4x128xf32, #tpu.memory_space<vmem>>, vector<1x4x128xf32>
    %125 = vector.shape_cast %124 : vector<1x4x128xf32> to vector<4x128xf32>
    %cst_62 = arith.constant dense<0.000000e+00> : vector<56x128xf32>
    %126 = tpu.matmul %123, %125, %cst_62 {dimension_numbers = #tpu.dot_dimension_numbers<[1], [0], [0], [1], [0, 0, 1, 1], [], []>} : vector<56x4xf32>, vector<4x128xf32>, vector<56x128xf32> -> vector<56x128xf32>
    %127 = arith.addf %121, %126 : vector<56x128xf32>
    %128 = vector.extract_strided_slice %6 {offsets = [0, 20, 0], sizes = [2, 28, 4], strides = [1, 1, 1]} : vector<2x48x4xf32> to vector<2x28x4xf32>
    %129 = vector.shape_cast %128 : vector<2x28x4xf32> to vector<56x4xf32>
    %c20 = arith.constant 20 : index
    %c0_63 = arith.constant 0 : index
    %c0_64 = arith.constant 0 : index
    %130 = vector.load %arg1[%c20, %c0_63, %c0_64] : memref<21x4x128xf32, #tpu.memory_space<vmem>>, vector<1x4x128xf32>
    %131 = vector.shape_cast %130 : vector<1x4x128xf32> to vector<4x128xf32>
    %cst_65 = arith.constant dense<0.000000e+00> : vector<56x128xf32>
    %132 = tpu.matmul %129, %131, %cst_65 {dimension_numbers = #tpu.dot_dimension_numbers<[1], [0], [0], [1], [0, 0, 1, 1], [], []>} : vector<56x4xf32>, vector<4x128xf32>, vector<56x128xf32> -> vector<56x128xf32>
    %133 = arith.addf %127, %132 : vector<56x128xf32>
    %c0_66 = arith.constant 0 : index
    %c0_67 = arith.constant 0 : index
    %134 = vector.load %arg2[%c0_66, %c0_67] : memref<1x128xf32, #tpu.memory_space<vmem>>, vector<1x128xf32>
    %135 = vector.broadcast %134 : vector<1x128xf32> to vector<56x128xf32>
    %136 = arith.addf %133, %135 : vector<56x128xf32>
    %cst_68 = arith.constant 0.000000e+00 : f32
    %137 = vector.broadcast %cst_68 : f32 to vector<56x128xf32>
    %138 = arith.maximumf %136, %137 : vector<56x128xf32>
    %139 = arith.truncf %138 : vector<56x128xf32> to vector<56x128xbf16>
    %140 = vector.shape_cast %139 : vector<56x128xbf16> to vector<2x28x128xbf16>
    %c0_i32_69 = arith.constant 0 : i32
    %141 = tpu.memref_slice %arg13[%c0_i32_69] : memref<3x!tpu.dma_semaphore, #tpu.memory_space<semaphore_mem>> -> memref<1x!tpu.dma_semaphore, #tpu.memory_space<semaphore_mem>>
    %142 = tpu.memref_squeeze %141 : memref<1x!tpu.dma_semaphore, #tpu.memory_space<semaphore_mem>> -> memref<!tpu.dma_semaphore, #tpu.memory_space<semaphore_mem>>
    tpu.wait_dma2 semaphore(%142 : memref<!tpu.dma_semaphore, #tpu.memory_space<semaphore_mem>>) src(%arg3 : memref<21x128x128xbf16, #tpu.memory_space<any>>) dst(%arg10 : memref<21x128x128xbf16, #tpu.memory_space<vmem>>)
    %cst_70 = arith.constant 0.000000e+00 : f32
    %143 = vector.broadcast %cst_70 : f32 to vector<16x128xf32>
    %144 = vector.extract_strided_slice %140 {offsets = [0, 0, 0], sizes = [2, 8, 128], strides = [1, 1, 1]} : vector<2x28x128xbf16> to vector<2x8x128xbf16>
    %145 = vector.shape_cast %144 : vector<2x8x128xbf16> to vector<16x128xbf16>
    %c0_71 = arith.constant 0 : index
    %c0_72 = arith.constant 0 : index
    %c0_73 = arith.constant 0 : index
    %146 = vector.load %arg10[%c0_71, %c0_72, %c0_73] : memref<21x128x128xbf16, #tpu.memory_space<vmem>>, vector<1x128x128xbf16>
    %147 = vector.shape_cast %146 : vector<1x128x128xbf16> to vector<128x128xbf16>
    %cst_74 = arith.constant dense<0.000000e+00> : vector<16x128xf32>
    %148 = tpu.matmul %145, %147, %cst_74 {dimension_numbers = #tpu.dot_dimension_numbers<[1], [0], [0], [1], [0, 0, 1, 1], [], []>} : vector<16x128xbf16>, vector<128x128xbf16>, vector<16x128xf32> -> vector<16x128xf32>
    %149 = arith.addf %143, %148 : vector<16x128xf32>
    %150 = vector.extract_strided_slice %140 {offsets = [0, 1, 0], sizes = [2, 8, 128], strides = [1, 1, 1]} : vector<2x28x128xbf16> to vector<2x8x128xbf16>
    %151 = vector.shape_cast %150 : vector<2x8x128xbf16> to vector<16x128xbf16>
    %c1_75 = arith.constant 1 : index
    %c0_76 = arith.constant 0 : index
    %c0_77 = arith.constant 0 : index
    %152 = vector.load %arg10[%c1_75, %c0_76, %c0_77] : memref<21x128x128xbf16, #tpu.memory_space<vmem>>, vector<1x128x128xbf16>
    %153 = vector.shape_cast %152 : vector<1x128x128xbf16> to vector<128x128xbf16>
    %cst_78 = arith.constant dense<0.000000e+00> : vector<16x128xf32>
    %154 = tpu.matmul %151, %153, %cst_78 {dimension_numbers = #tpu.dot_dimension_numbers<[1], [0], [0], [1], [0, 0, 1, 1], [], []>} : vector<16x128xbf16>, vector<128x128xbf16>, vector<16x128xf32> -> vector<16x128xf32>
    %155 = arith.addf %149, %154 : vector<16x128xf32>
    %156 = vector.extract_strided_slice %140 {offsets = [0, 2, 0], sizes = [2, 8, 128], strides = [1, 1, 1]} : vector<2x28x128xbf16> to vector<2x8x128xbf16>
    %157 = vector.shape_cast %156 : vector<2x8x128xbf16> to vector<16x128xbf16>
    %c2_79 = arith.constant 2 : index
    %c0_80 = arith.constant 0 : index
    %c0_81 = arith.constant 0 : index
    %158 = vector.load %arg10[%c2_79, %c0_80, %c0_81] : memref<21x128x128xbf16, #tpu.memory_space<vmem>>, vector<1x128x128xbf16>
    %159 = vector.shape_cast %158 : vector<1x128x128xbf16> to vector<128x128xbf16>
    %cst_82 = arith.constant dense<0.000000e+00> : vector<16x128xf32>
    %160 = tpu.matmul %157, %159, %cst_82 {dimension_numbers = #tpu.dot_dimension_numbers<[1], [0], [0], [1], [0, 0, 1, 1], [], []>} : vector<16x128xbf16>, vector<128x128xbf16>, vector<16x128xf32> -> vector<16x128xf32>
    %161 = arith.addf %155, %160 : vector<16x128xf32>
    %162 = vector.extract_strided_slice %140 {offsets = [0, 3, 0], sizes = [2, 8, 128], strides = [1, 1, 1]} : vector<2x28x128xbf16> to vector<2x8x128xbf16>
    %163 = vector.shape_cast %162 : vector<2x8x128xbf16> to vector<16x128xbf16>
    %c3_83 = arith.constant 3 : index
    %c0_84 = arith.constant 0 : index
    %c0_85 = arith.constant 0 : index
    %164 = vector.load %arg10[%c3_83, %c0_84, %c0_85] : memref<21x128x128xbf16, #tpu.memory_space<vmem>>, vector<1x128x128xbf16>
    %165 = vector.shape_cast %164 : vector<1x128x128xbf16> to vector<128x128xbf16>
    %cst_86 = arith.constant dense<0.000000e+00> : vector<16x128xf32>
    %166 = tpu.matmul %163, %165, %cst_86 {dimension_numbers = #tpu.dot_dimension_numbers<[1], [0], [0], [1], [0, 0, 1, 1], [], []>} : vector<16x128xbf16>, vector<128x128xbf16>, vector<16x128xf32> -> vector<16x128xf32>
    %167 = arith.addf %161, %166 : vector<16x128xf32>
    %168 = vector.extract_strided_slice %140 {offsets = [0, 4, 0], sizes = [2, 8, 128], strides = [1, 1, 1]} : vector<2x28x128xbf16> to vector<2x8x128xbf16>
    %169 = vector.shape_cast %168 : vector<2x8x128xbf16> to vector<16x128xbf16>
    %c4_87 = arith.constant 4 : index
    %c0_88 = arith.constant 0 : index
    %c0_89 = arith.constant 0 : index
    %170 = vector.load %arg10[%c4_87, %c0_88, %c0_89] : memref<21x128x128xbf16, #tpu.memory_space<vmem>>, vector<1x128x128xbf16>
    %171 = vector.shape_cast %170 : vector<1x128x128xbf16> to vector<128x128xbf16>
    %cst_90 = arith.constant dense<0.000000e+00> : vector<16x128xf32>
    %172 = tpu.matmul %169, %171, %cst_90 {dimension_numbers = #tpu.dot_dimension_numbers<[1], [0], [0], [1], [0, 0, 1, 1], [], []>} : vector<16x128xbf16>, vector<128x128xbf16>, vector<16x128xf32> -> vector<16x128xf32>
    %173 = arith.addf %167, %172 : vector<16x128xf32>
    %174 = vector.extract_strided_slice %140 {offsets = [0, 5, 0], sizes = [2, 8, 128], strides = [1, 1, 1]} : vector<2x28x128xbf16> to vector<2x8x128xbf16>
    %175 = vector.shape_cast %174 : vector<2x8x128xbf16> to vector<16x128xbf16>
    %c5_91 = arith.constant 5 : index
    %c0_92 = arith.constant 0 : index
    %c0_93 = arith.constant 0 : index
    %176 = vector.load %arg10[%c5_91, %c0_92, %c0_93] : memref<21x128x128xbf16, #tpu.memory_space<vmem>>, vector<1x128x128xbf16>
    %177 = vector.shape_cast %176 : vector<1x128x128xbf16> to vector<128x128xbf16>
    %cst_94 = arith.constant dense<0.000000e+00> : vector<16x128xf32>
    %178 = tpu.matmul %175, %177, %cst_94 {dimension_numbers = #tpu.dot_dimension_numbers<[1], [0], [0], [1], [0, 0, 1, 1], [], []>} : vector<16x128xbf16>, vector<128x128xbf16>, vector<16x128xf32> -> vector<16x128xf32>
    %179 = arith.addf %173, %178 : vector<16x128xf32>
    %180 = vector.extract_strided_slice %140 {offsets = [0, 6, 0], sizes = [2, 8, 128], strides = [1, 1, 1]} : vector<2x28x128xbf16> to vector<2x8x128xbf16>
    %181 = vector.shape_cast %180 : vector<2x8x128xbf16> to vector<16x128xbf16>
    %c6_95 = arith.constant 6 : index
    %c0_96 = arith.constant 0 : index
    %c0_97 = arith.constant 0 : index
    %182 = vector.load %arg10[%c6_95, %c0_96, %c0_97] : memref<21x128x128xbf16, #tpu.memory_space<vmem>>, vector<1x128x128xbf16>
    %183 = vector.shape_cast %182 : vector<1x128x128xbf16> to vector<128x128xbf16>
    %cst_98 = arith.constant dense<0.000000e+00> : vector<16x128xf32>
    %184 = tpu.matmul %181, %183, %cst_98 {dimension_numbers = #tpu.dot_dimension_numbers<[1], [0], [0], [1], [0, 0, 1, 1], [], []>} : vector<16x128xbf16>, vector<128x128xbf16>, vector<16x128xf32> -> vector<16x128xf32>
    %185 = arith.addf %179, %184 : vector<16x128xf32>
    %186 = vector.extract_strided_slice %140 {offsets = [0, 7, 0], sizes = [2, 8, 128], strides = [1, 1, 1]} : vector<2x28x128xbf16> to vector<2x8x128xbf16>
    %187 = vector.shape_cast %186 : vector<2x8x128xbf16> to vector<16x128xbf16>
    %c7_99 = arith.constant 7 : index
    %c0_100 = arith.constant 0 : index
    %c0_101 = arith.constant 0 : index
    %188 = vector.load %arg10[%c7_99, %c0_100, %c0_101] : memref<21x128x128xbf16, #tpu.memory_space<vmem>>, vector<1x128x128xbf16>
    %189 = vector.shape_cast %188 : vector<1x128x128xbf16> to vector<128x128xbf16>
    %cst_102 = arith.constant dense<0.000000e+00> : vector<16x128xf32>
    %190 = tpu.matmul %187, %189, %cst_102 {dimension_numbers = #tpu.dot_dimension_numbers<[1], [0], [0], [1], [0, 0, 1, 1], [], []>} : vector<16x128xbf16>, vector<128x128xbf16>, vector<16x128xf32> -> vector<16x128xf32>
    %191 = arith.addf %185, %190 : vector<16x128xf32>
    %192 = vector.extract_strided_slice %140 {offsets = [0, 8, 0], sizes = [2, 8, 128], strides = [1, 1, 1]} : vector<2x28x128xbf16> to vector<2x8x128xbf16>
    %193 = vector.shape_cast %192 : vector<2x8x128xbf16> to vector<16x128xbf16>
    %c8_103 = arith.constant 8 : index
    %c0_104 = arith.constant 0 : index
    %c0_105 = arith.constant 0 : index
    %194 = vector.load %arg10[%c8_103, %c0_104, %c0_105] : memref<21x128x128xbf16, #tpu.memory_space<vmem>>, vector<1x128x128xbf16>
    %195 = vector.shape_cast %194 : vector<1x128x128xbf16> to vector<128x128xbf16>
    %cst_106 = arith.constant dense<0.000000e+00> : vector<16x128xf32>
    %196 = tpu.matmul %193, %195, %cst_106 {dimension_numbers = #tpu.dot_dimension_numbers<[1], [0], [0], [1], [0, 0, 1, 1], [], []>} : vector<16x128xbf16>, vector<128x128xbf16>, vector<16x128xf32> -> vector<16x128xf32>
    %197 = arith.addf %191, %196 : vector<16x128xf32>
    %198 = vector.extract_strided_slice %140 {offsets = [0, 9, 0], sizes = [2, 8, 128], strides = [1, 1, 1]} : vector<2x28x128xbf16> to vector<2x8x128xbf16>
    %199 = vector.shape_cast %198 : vector<2x8x128xbf16> to vector<16x128xbf16>
    %c9_107 = arith.constant 9 : index
    %c0_108 = arith.constant 0 : index
    %c0_109 = arith.constant 0 : index
    %200 = vector.load %arg10[%c9_107, %c0_108, %c0_109] : memref<21x128x128xbf16, #tpu.memory_space<vmem>>, vector<1x128x128xbf16>
    %201 = vector.shape_cast %200 : vector<1x128x128xbf16> to vector<128x128xbf16>
    %cst_110 = arith.constant dense<0.000000e+00> : vector<16x128xf32>
    %202 = tpu.matmul %199, %201, %cst_110 {dimension_numbers = #tpu.dot_dimension_numbers<[1], [0], [0], [1], [0, 0, 1, 1], [], []>} : vector<16x128xbf16>, vector<128x128xbf16>, vector<16x128xf32> -> vector<16x128xf32>
    %203 = arith.addf %197, %202 : vector<16x128xf32>
    %204 = vector.extract_strided_slice %140 {offsets = [0, 10, 0], sizes = [2, 8, 128], strides = [1, 1, 1]} : vector<2x28x128xbf16> to vector<2x8x128xbf16>
    %205 = vector.shape_cast %204 : vector<2x8x128xbf16> to vector<16x128xbf16>
    %c10_111 = arith.constant 10 : index
    %c0_112 = arith.constant 0 : index
    %c0_113 = arith.constant 0 : index
    %206 = vector.load %arg10[%c10_111, %c0_112, %c0_113] : memref<21x128x128xbf16, #tpu.memory_space<vmem>>, vector<1x128x128xbf16>
    %207 = vector.shape_cast %206 : vector<1x128x128xbf16> to vector<128x128xbf16>
    %cst_114 = arith.constant dense<0.000000e+00> : vector<16x128xf32>
    %208 = tpu.matmul %205, %207, %cst_114 {dimension_numbers = #tpu.dot_dimension_numbers<[1], [0], [0], [1], [0, 0, 1, 1], [], []>} : vector<16x128xbf16>, vector<128x128xbf16>, vector<16x128xf32> -> vector<16x128xf32>
    %209 = arith.addf %203, %208 : vector<16x128xf32>
    %210 = vector.extract_strided_slice %140 {offsets = [0, 11, 0], sizes = [2, 8, 128], strides = [1, 1, 1]} : vector<2x28x128xbf16> to vector<2x8x128xbf16>
    %211 = vector.shape_cast %210 : vector<2x8x128xbf16> to vector<16x128xbf16>
    %c11_115 = arith.constant 11 : index
    %c0_116 = arith.constant 0 : index
    %c0_117 = arith.constant 0 : index
    %212 = vector.load %arg10[%c11_115, %c0_116, %c0_117] : memref<21x128x128xbf16, #tpu.memory_space<vmem>>, vector<1x128x128xbf16>
    %213 = vector.shape_cast %212 : vector<1x128x128xbf16> to vector<128x128xbf16>
    %cst_118 = arith.constant dense<0.000000e+00> : vector<16x128xf32>
    %214 = tpu.matmul %211, %213, %cst_118 {dimension_numbers = #tpu.dot_dimension_numbers<[1], [0], [0], [1], [0, 0, 1, 1], [], []>} : vector<16x128xbf16>, vector<128x128xbf16>, vector<16x128xf32> -> vector<16x128xf32>
    %215 = arith.addf %209, %214 : vector<16x128xf32>
    %216 = vector.extract_strided_slice %140 {offsets = [0, 12, 0], sizes = [2, 8, 128], strides = [1, 1, 1]} : vector<2x28x128xbf16> to vector<2x8x128xbf16>
    %217 = vector.shape_cast %216 : vector<2x8x128xbf16> to vector<16x128xbf16>
    %c12_119 = arith.constant 12 : index
    %c0_120 = arith.constant 0 : index
    %c0_121 = arith.constant 0 : index
    %218 = vector.load %arg10[%c12_119, %c0_120, %c0_121] : memref<21x128x128xbf16, #tpu.memory_space<vmem>>, vector<1x128x128xbf16>
    %219 = vector.shape_cast %218 : vector<1x128x128xbf16> to vector<128x128xbf16>
    %cst_122 = arith.constant dense<0.000000e+00> : vector<16x128xf32>
    %220 = tpu.matmul %217, %219, %cst_122 {dimension_numbers = #tpu.dot_dimension_numbers<[1], [0], [0], [1], [0, 0, 1, 1], [], []>} : vector<16x128xbf16>, vector<128x128xbf16>, vector<16x128xf32> -> vector<16x128xf32>
    %221 = arith.addf %215, %220 : vector<16x128xf32>
    %222 = vector.extract_strided_slice %140 {offsets = [0, 13, 0], sizes = [2, 8, 128], strides = [1, 1, 1]} : vector<2x28x128xbf16> to vector<2x8x128xbf16>
    %223 = vector.shape_cast %222 : vector<2x8x128xbf16> to vector<16x128xbf16>
    %c13_123 = arith.constant 13 : index
    %c0_124 = arith.constant 0 : index
    %c0_125 = arith.constant 0 : index
    %224 = vector.load %arg10[%c13_123, %c0_124, %c0_125] : memref<21x128x128xbf16, #tpu.memory_space<vmem>>, vector<1x128x128xbf16>
    %225 = vector.shape_cast %224 : vector<1x128x128xbf16> to vector<128x128xbf16>
    %cst_126 = arith.constant dense<0.000000e+00> : vector<16x128xf32>
    %226 = tpu.matmul %223, %225, %cst_126 {dimension_numbers = #tpu.dot_dimension_numbers<[1], [0], [0], [1], [0, 0, 1, 1], [], []>} : vector<16x128xbf16>, vector<128x128xbf16>, vector<16x128xf32> -> vector<16x128xf32>
    %227 = arith.addf %221, %226 : vector<16x128xf32>
    %228 = vector.extract_strided_slice %140 {offsets = [0, 14, 0], sizes = [2, 8, 128], strides = [1, 1, 1]} : vector<2x28x128xbf16> to vector<2x8x128xbf16>
    %229 = vector.shape_cast %228 : vector<2x8x128xbf16> to vector<16x128xbf16>
    %c14_127 = arith.constant 14 : index
    %c0_128 = arith.constant 0 : index
    %c0_129 = arith.constant 0 : index
    %230 = vector.load %arg10[%c14_127, %c0_128, %c0_129] : memref<21x128x128xbf16, #tpu.memory_space<vmem>>, vector<1x128x128xbf16>
    %231 = vector.shape_cast %230 : vector<1x128x128xbf16> to vector<128x128xbf16>
    %cst_130 = arith.constant dense<0.000000e+00> : vector<16x128xf32>
    %232 = tpu.matmul %229, %231, %cst_130 {dimension_numbers = #tpu.dot_dimension_numbers<[1], [0], [0], [1], [0, 0, 1, 1], [], []>} : vector<16x128xbf16>, vector<128x128xbf16>, vector<16x128xf32> -> vector<16x128xf32>
    %233 = arith.addf %227, %232 : vector<16x128xf32>
    %234 = vector.extract_strided_slice %140 {offsets = [0, 15, 0], sizes = [2, 8, 128], strides = [1, 1, 1]} : vector<2x28x128xbf16> to vector<2x8x128xbf16>
    %235 = vector.shape_cast %234 : vector<2x8x128xbf16> to vector<16x128xbf16>
    %c15_131 = arith.constant 15 : index
    %c0_132 = arith.constant 0 : index
    %c0_133 = arith.constant 0 : index
    %236 = vector.load %arg10[%c15_131, %c0_132, %c0_133] : memref<21x128x128xbf16, #tpu.memory_space<vmem>>, vector<1x128x128xbf16>
    %237 = vector.shape_cast %236 : vector<1x128x128xbf16> to vector<128x128xbf16>
    %cst_134 = arith.constant dense<0.000000e+00> : vector<16x128xf32>
    %238 = tpu.matmul %235, %237, %cst_134 {dimension_numbers = #tpu.dot_dimension_numbers<[1], [0], [0], [1], [0, 0, 1, 1], [], []>} : vector<16x128xbf16>, vector<128x128xbf16>, vector<16x128xf32> -> vector<16x128xf32>
    %239 = arith.addf %233, %238 : vector<16x128xf32>
    %240 = vector.extract_strided_slice %140 {offsets = [0, 16, 0], sizes = [2, 8, 128], strides = [1, 1, 1]} : vector<2x28x128xbf16> to vector<2x8x128xbf16>
    %241 = vector.shape_cast %240 : vector<2x8x128xbf16> to vector<16x128xbf16>
    %c16_135 = arith.constant 16 : index
    %c0_136 = arith.constant 0 : index
    %c0_137 = arith.constant 0 : index
    %242 = vector.load %arg10[%c16_135, %c0_136, %c0_137] : memref<21x128x128xbf16, #tpu.memory_space<vmem>>, vector<1x128x128xbf16>
    %243 = vector.shape_cast %242 : vector<1x128x128xbf16> to vector<128x128xbf16>
    %cst_138 = arith.constant dense<0.000000e+00> : vector<16x128xf32>
    %244 = tpu.matmul %241, %243, %cst_138 {dimension_numbers = #tpu.dot_dimension_numbers<[1], [0], [0], [1], [0, 0, 1, 1], [], []>} : vector<16x128xbf16>, vector<128x128xbf16>, vector<16x128xf32> -> vector<16x128xf32>
    %245 = arith.addf %239, %244 : vector<16x128xf32>
    %246 = vector.extract_strided_slice %140 {offsets = [0, 17, 0], sizes = [2, 8, 128], strides = [1, 1, 1]} : vector<2x28x128xbf16> to vector<2x8x128xbf16>
    %247 = vector.shape_cast %246 : vector<2x8x128xbf16> to vector<16x128xbf16>
    %c17_139 = arith.constant 17 : index
    %c0_140 = arith.constant 0 : index
    %c0_141 = arith.constant 0 : index
    %248 = vector.load %arg10[%c17_139, %c0_140, %c0_141] : memref<21x128x128xbf16, #tpu.memory_space<vmem>>, vector<1x128x128xbf16>
    %249 = vector.shape_cast %248 : vector<1x128x128xbf16> to vector<128x128xbf16>
    %cst_142 = arith.constant dense<0.000000e+00> : vector<16x128xf32>
    %250 = tpu.matmul %247, %249, %cst_142 {dimension_numbers = #tpu.dot_dimension_numbers<[1], [0], [0], [1], [0, 0, 1, 1], [], []>} : vector<16x128xbf16>, vector<128x128xbf16>, vector<16x128xf32> -> vector<16x128xf32>
    %251 = arith.addf %245, %250 : vector<16x128xf32>
    %252 = vector.extract_strided_slice %140 {offsets = [0, 18, 0], sizes = [2, 8, 128], strides = [1, 1, 1]} : vector<2x28x128xbf16> to vector<2x8x128xbf16>
    %253 = vector.shape_cast %252 : vector<2x8x128xbf16> to vector<16x128xbf16>
    %c18_143 = arith.constant 18 : index
    %c0_144 = arith.constant 0 : index
    %c0_145 = arith.constant 0 : index
    %254 = vector.load %arg10[%c18_143, %c0_144, %c0_145] : memref<21x128x128xbf16, #tpu.memory_space<vmem>>, vector<1x128x128xbf16>
    %255 = vector.shape_cast %254 : vector<1x128x128xbf16> to vector<128x128xbf16>
    %cst_146 = arith.constant dense<0.000000e+00> : vector<16x128xf32>
    %256 = tpu.matmul %253, %255, %cst_146 {dimension_numbers = #tpu.dot_dimension_numbers<[1], [0], [0], [1], [0, 0, 1, 1], [], []>} : vector<16x128xbf16>, vector<128x128xbf16>, vector<16x128xf32> -> vector<16x128xf32>
    %257 = arith.addf %251, %256 : vector<16x128xf32>
    %258 = vector.extract_strided_slice %140 {offsets = [0, 19, 0], sizes = [2, 8, 128], strides = [1, 1, 1]} : vector<2x28x128xbf16> to vector<2x8x128xbf16>
    %259 = vector.shape_cast %258 : vector<2x8x128xbf16> to vector<16x128xbf16>
    %c19_147 = arith.constant 19 : index
    %c0_148 = arith.constant 0 : index
    %c0_149 = arith.constant 0 : index
    %260 = vector.load %arg10[%c19_147, %c0_148, %c0_149] : memref<21x128x128xbf16, #tpu.memory_space<vmem>>, vector<1x128x128xbf16>
    %261 = vector.shape_cast %260 : vector<1x128x128xbf16> to vector<128x128xbf16>
    %cst_150 = arith.constant dense<0.000000e+00> : vector<16x128xf32>
    %262 = tpu.matmul %259, %261, %cst_150 {dimension_numbers = #tpu.dot_dimension_numbers<[1], [0], [0], [1], [0, 0, 1, 1], [], []>} : vector<16x128xbf16>, vector<128x128xbf16>, vector<16x128xf32> -> vector<16x128xf32>
    %263 = arith.addf %257, %262 : vector<16x128xf32>
    %264 = vector.extract_strided_slice %140 {offsets = [0, 20, 0], sizes = [2, 8, 128], strides = [1, 1, 1]} : vector<2x28x128xbf16> to vector<2x8x128xbf16>
    %265 = vector.shape_cast %264 : vector<2x8x128xbf16> to vector<16x128xbf16>
    %c20_151 = arith.constant 20 : index
    %c0_152 = arith.constant 0 : index
    %c0_153 = arith.constant 0 : index
    %266 = vector.load %arg10[%c20_151, %c0_152, %c0_153] : memref<21x128x128xbf16, #tpu.memory_space<vmem>>, vector<1x128x128xbf16>
    %267 = vector.shape_cast %266 : vector<1x128x128xbf16> to vector<128x128xbf16>
    %cst_154 = arith.constant dense<0.000000e+00> : vector<16x128xf32>
    %268 = tpu.matmul %265, %267, %cst_154 {dimension_numbers = #tpu.dot_dimension_numbers<[1], [0], [0], [1], [0, 0, 1, 1], [], []>} : vector<16x128xbf16>, vector<128x128xbf16>, vector<16x128xf32> -> vector<16x128xf32>
    %269 = arith.addf %263, %268 : vector<16x128xf32>
    %c0_155 = arith.constant 0 : index
    %c0_156 = arith.constant 0 : index
    %270 = vector.load %arg4[%c0_155, %c0_156] : memref<1x128xf32, #tpu.memory_space<vmem>>, vector<1x128xf32>
    %271 = vector.broadcast %270 : vector<1x128xf32> to vector<16x128xf32>
    %272 = arith.addf %269, %271 : vector<16x128xf32>
    %cst_157 = arith.constant 0.000000e+00 : f32
    %273 = vector.broadcast %cst_157 : f32 to vector<16x128xf32>
    %274 = arith.maximumf %272, %273 : vector<16x128xf32>
    %275 = arith.truncf %274 : vector<16x128xf32> to vector<16x128xbf16>
    %276 = vector.shape_cast %275 : vector<16x128xbf16> to vector<2x1024xbf16>
    %c1_i32_158 = arith.constant 1 : i32
    %277 = tpu.memref_slice %arg13[%c1_i32_158] : memref<3x!tpu.dma_semaphore, #tpu.memory_space<semaphore_mem>> -> memref<1x!tpu.dma_semaphore, #tpu.memory_space<semaphore_mem>>
    %278 = tpu.memref_squeeze %277 : memref<1x!tpu.dma_semaphore, #tpu.memory_space<semaphore_mem>> -> memref<!tpu.dma_semaphore, #tpu.memory_space<semaphore_mem>>
    tpu.wait_dma2 semaphore(%278 : memref<!tpu.dma_semaphore, #tpu.memory_space<semaphore_mem>>) src(%arg5 : memref<1024x1024xbf16, #tpu.memory_space<any>>) dst(%arg11 : memref<1024x1024xbf16, #tpu.memory_space<vmem>>)
    %c0_159 = arith.constant 0 : index
    %c0_160 = arith.constant 0 : index
    %279 = vector.load %arg11[%c0_159, %c0_160] : memref<1024x1024xbf16, #tpu.memory_space<vmem>>, vector<1024x1024xbf16>
    %cst_161 = arith.constant dense<0.000000e+00> : vector<2x1024xf32>
    %280 = tpu.matmul %276, %279, %cst_161 {dimension_numbers = #tpu.dot_dimension_numbers<[1], [0], [0], [1], [0, 0, 1, 1], [], []>} : vector<2x1024xbf16>, vector<1024x1024xbf16>, vector<2x1024xf32> -> vector<2x1024xf32>
    %c0_162 = arith.constant 0 : index
    %c0_163 = arith.constant 0 : index
    %281 = vector.load %arg6[%c0_162, %c0_163] : memref<1x1024xf32, #tpu.memory_space<vmem>>, vector<1x1024xf32>
    %282 = vector.broadcast %281 : vector<1x1024xf32> to vector<2x1024xf32>
    %283 = arith.addf %280, %282 : vector<2x1024xf32>
    %cst_164 = arith.constant 0.000000e+00 : f32
    %284 = vector.broadcast %cst_164 : f32 to vector<2x1024xf32>
    %285 = arith.maximumf %283, %284 : vector<2x1024xf32>
    %286 = arith.truncf %285 : vector<2x1024xf32> to vector<2x1024xbf16>
    %c2_i32_165 = arith.constant 2 : i32
    %287 = tpu.memref_slice %arg13[%c2_i32_165] : memref<3x!tpu.dma_semaphore, #tpu.memory_space<semaphore_mem>> -> memref<1x!tpu.dma_semaphore, #tpu.memory_space<semaphore_mem>>
    %288 = tpu.memref_squeeze %287 : memref<1x!tpu.dma_semaphore, #tpu.memory_space<semaphore_mem>> -> memref<!tpu.dma_semaphore, #tpu.memory_space<semaphore_mem>>
    tpu.wait_dma2 semaphore(%288 : memref<!tpu.dma_semaphore, #tpu.memory_space<semaphore_mem>>) src(%arg7 : memref<1024x128xbf16, #tpu.memory_space<any>>) dst(%arg12 : memref<1024x128xbf16, #tpu.memory_space<vmem>>)
    %c0_166 = arith.constant 0 : index
    %c0_167 = arith.constant 0 : index
    %289 = vector.load %arg12[%c0_166, %c0_167] : memref<1024x128xbf16, #tpu.memory_space<vmem>>, vector<1024x128xbf16>
    %cst_168 = arith.constant dense<0.000000e+00> : vector<2x128xf32>
    %290 = tpu.matmul %286, %289, %cst_168 {dimension_numbers = #tpu.dot_dimension_numbers<[1], [0], [0], [1], [0, 0, 1, 1], [], []>} : vector<2x1024xbf16>, vector<1024x128xbf16>, vector<2x128xf32> -> vector<2x128xf32>
    %c0_169 = arith.constant 0 : index
    %c0_170 = arith.constant 0 : index
    %291 = vector.load %arg8[%c0_169, %c0_170] : memref<1x128xf32, #tpu.memory_space<vmem>>, vector<1x128xf32>
    %292 = vector.broadcast %291 : vector<1x128xf32> to vector<2x128xf32>
    %293 = arith.addf %290, %292 : vector<2x128xf32>
    %c0_171 = arith.constant 0 : index
    %c0_172 = arith.constant 0 : index
    %294 = vector.load %arg9[%c0_171, %c0_172] : memref<2x128xf32, #tpu.memory_space<vmem>>, vector<2x128xf32>
    tpu.vector_store %arg9[%c0_171, %c0_172], %293 {strides = array<i32>} : memref<2x128xf32, #tpu.memory_space<vmem>>, vector<2x128xf32>,
    return
  }
}

</mosaic_0001>

<llo_original>
// kernel: a2c_conv1d_forward.1
$region0: #{a2c_conv1d_forward.1}
  #allocation0 [shape = 'u32[]', space=smem, size = 0x4, offset = 0x4, fixed_abs, tag = 'smem constant byte address 0x4 - core index']
  #allocation1 [shape = 'u32[144,128]{1,0:T(1,128)}', space=vmem, size = 0x12000, scoped, tag = 'internal scratch']
  #allocation2 [shape = 'bf16[21,128,128]{2,1,0:T(16,128)(2,1)}', space=vmem, size = 0xa8000, scoped, tag = 'scratch operand']
  #allocation3 [shape = 'bf16[1024,1024]{1,0:T(16,128)(2,1)}', space=vmem, size = 0x200000, scoped, tag = 'scratch operand']
  #allocation4 [shape = 'bf16[1024,128]{1,0:T(16,128)(2,1)}', space=vmem, size = 0x40000, scoped, tag = 'scratch operand']
  #allocation5 [shape = 's32[3]{0}', space=sflag, size = 0xc, scoped, tag = 'scratch operand']
  #allocation14 [shape = 's32[]', space=sflag, size = 0x4, offset = 0, fixed_abs, tag = 'sflag constant byte address 0x0 - dummy sync flag']
  #allocation15 [shape = 's32[]', space=sflag, size = 0x4, offset = 0, fixed_abs, tag = 'sflag constant byte address 0x0 - dummy sync flag']
  #allocation16 [shape = 'u32[]', space=smem, size = 0x4, offset = 0x44, fixed_abs, tag = 'smem constant byte address 0x44 - assertion arg 0']
  #allocation17 [shape = 'u32[]', space=smem, size = 0x4, offset = 0x48, fixed_abs, tag = 'smem constant byte address 0x48 - assertion arg 1']
  #allocation18 [shape = 's32[]', space=sflag, size = 0x4, offset = 0, fixed_abs, tag = 'sflag constant byte address 0x0 - dummy sync flag']
  #allocation20 [shape = 's32[]', space=sflag, size = 0x4, offset = 0, fixed_abs, tag = 'sflag constant byte address 0x0 - dummy sync flag']
  #allocation21 [shape = 's32[]', space=sflag, size = 0x4, offset = 0, fixed_abs, tag = 'sflag constant byte address 0x0 - dummy sync flag']
  %s0 = inlined_call_operand.vmem [shape: f32[2,48,4], index: 0, kind: input, shape index: {}]
  %s1 = inlined_call_operand.hbm [shape: f32[21,4,128], index: 1, kind: input, shape index: {}]
  %s2 = inlined_call_operand.hbm [shape: f32[1,128], index: 2, kind: input, shape index: {}]
  %s3 = inlined_call_operand.hbm [shape: bf16[21,128,128], index: 3, kind: input, shape index: {}]
  %s4 = inlined_call_operand.hbm [shape: f32[1,128], index: 4, kind: input, shape index: {}]
  %s5 = inlined_call_operand.hbm [shape: bf16[1024,1024], index: 5, kind: input, shape index: {}]
  %s6 = inlined_call_operand.hbm [shape: f32[1,1024], index: 6, kind: input, shape index: {}]
  %s7 = inlined_call_operand.hbm [shape: bf16[1024,128], index: 7, kind: input, shape index: {}]
  %s8 = inlined_call_operand.hbm [shape: f32[1,128], index: 8, kind: input, shape index: {}]
  %s9 = inlined_call_operand.vmem [shape: f32[2,128], index: 9, kind: output, shape index: {}]
  %s10 = sld [smem:[#allocation0]]
  $region62: #{a2c_conv1d_forward.1} parent=0
    _
  %s12 = ssub.s32 1, %s10
  %s13 = scalar_select 0, %s12, %s10
  $region1: #{a2c_conv1d_forward.1} parent=0
    #allocation6 [shape = 'u8[43008]{0}', space=vmem, size = 0xa800, scoped, tag = 'input window, operand 1, single buffered']
    #allocation7 [shape = 's32[1]{0}', space=sflag, size = 0x4, scoped, tag = 'scoped memory for a2c_conv1d_forward.1']
    #allocation8 [shape = 'u8[512]{0}', space=vmem, size = 0x400, scoped, tag = 'input window, operand 2, single buffered']
    #allocation9 [shape = 's32[1]{0}', space=sflag, size = 0x4, scoped, tag = 'scoped memory for a2c_conv1d_forward.1']
    #allocation10 [shape = 'u8[512]{0}', space=vmem, size = 0x400, scoped, tag = 'input window, operand 4, single buffered']
    #allocation11 [shape = 'u8[4096]{0}', space=vmem, size = 0x1000, scoped, tag = 'input window, operand 6, single buffered']
    #allocation12 [shape = 's32[1]{0}', space=sflag, size = 0x4, scoped, tag = 'scoped memory for a2c_conv1d_forward.1']
    #allocation13 [shape = 'u8[512]{0}', space=vmem, size = 0x400, scoped, tag = 'input window, operand 8, single buffered']
    #allocation19 [shape = 'u32[9]{0}', space=smem, size = 0x24, scoped, tag = 'DMA stride descriptor']
    %14 = vsyncpa [#allocation7], 0
    %15 = vsyncpa [#allocation9], 0
    %16 = vsyncpa [#allocation12], 0
    // Predicated region
    $region2: #{a2c_conv1d_forward.1} parent=1 // pred_check
      _
    $region3: #{a2c_conv1d_forward.1} parent=1 // pred_check_branch
      %18 = sbr.rel (0) target = $region5
    $region4: #{a2c_conv1d_forward.1} parent=1 // pred_region
      _
    $region5: #{a2c_conv1d_forward.1} parent=1 // pred_fallthru
      _
    // Predicated region
    $region6: #{a2c_conv1d_forward.1} parent=1 // pred_check
      _
    $region7: #{a2c_conv1d_forward.1} parent=1 // pred_check_branch
      %20 = sbr.rel (0) target = $region9
    $region8: #{a2c_conv1d_forward.1} parent=1 // pred_region
      %s22 = ssub.s32 1344, 1344
      %23 = vsyncadd [#allocation7], %s22
      %s24 = sshll.u32 [#allocation6], 4
      %s25 = int_to_ptr.vmem [resolvable:$true] %s24
      %30 = dma.hbm_to_vmem [thread:$0]  %s1, 1344, %s25, [#allocation7], 64, 64, 4
    $region9: #{a2c_conv1d_forward.1} parent=1 // pred_fallthru
      _
    // Predicated region
    $region10: #{a2c_conv1d_forward.1} parent=1 // pred_check
      _
    $region11: #{a2c_conv1d_forward.1} parent=1 // pred_check_branch
      %32 = sbr.rel (0) target = $region13
    $region12: #{a2c_conv1d_forward.1} parent=1 // pred_region
      %s34 = ssub.s32 16, 16
      %35 = vsyncadd [#allocation9], %s34
      %s37 = sshll.u32 [#allocation8], 4
      %s38 = int_to_ptr.vmem [resolvable:$true] %s37
      %40 = dma.hbm_to_vmem [thread:$0]  %s2, 16, %s38, [#allocation9]
    $region13: #{a2c_conv1d_forward.1} parent=1 // pred_fallthru
      _
    // Predicated region
    $region14: #{a2c_conv1d_forward.1} parent=1 // pred_check
      _
    $region15: #{a2c_conv1d_forward.1} parent=1 // pred_check_branch
      %42 = sbr.rel (0) target = $region17
    $region16: #{a2c_conv1d_forward.1} parent=1 // pred_region
      %s44 = ssub.s32 16, 16
      %45 = vsyncadd [#allocation9], %s44
      %s47 = sshll.u32 [#allocation10], 4
      %s48 = int_to_ptr.vmem [resolvable:$true] %s47
      %50 = dma.hbm_to_vmem [thread:$0]  %s4, 16, %s48, [#allocation9]
    $region17: #{a2c_conv1d_forward.1} parent=1 // pred_fallthru
      _
    // Predicated region
    $region18: #{a2c_conv1d_forward.1} parent=1 // pred_check
      _
    $region19: #{a2c_conv1d_forward.1} parent=1 // pred_check_branch
      %52 = sbr.rel (0) target = $region21
    $region20: #{a2c_conv1d_forward.1} parent=1 // pred_region
      %s54 = ssub.s32 128, 128
      %55 = vsyncadd [#allocation12], %s54
      %s57 = sshll.u32 [#allocation11], 4
      %s58 = int_to_ptr.vmem [resolvable:$true] %s57
      %60 = dma.hbm_to_vmem [thread:$0]  %s6, 128, %s58, [#allocation12]
    $region21: #{a2c_conv1d_forward.1} parent=1 // pred_fallthru
      _
    // Predicated region
    $region22: #{a2c_conv1d_forward.1} parent=1 // pred_check
      _
    $region23: #{a2c_conv1d_forward.1} parent=1 // pred_check_branch
      %62 = sbr.rel (0) target = $region25
    $region24: #{a2c_conv1d_forward.1} parent=1 // pred_region
      %s64 = ssub.s32 16, 16
      %65 = vsyncadd [#allocation12], %s64
      %s67 = sshll.u32 [#allocation13], 4
      %s68 = int_to_ptr.vmem [resolvable:$true] %s67
      %70 = dma.hbm_to_vmem [thread:$0]  %s8, 16, %s68, [#allocation12]
    $region25: #{a2c_conv1d_forward.1} parent=1 // pred_fallthru
      _
    // Predicated region
    $region26: #{a2c_conv1d_forward.1} parent=1 // pred_check
      _
    $region27: #{a2c_conv1d_forward.1} parent=1 // pred_check_branch
      %72 = sbr.rel (0) target = $region29
    $region28: #{a2c_conv1d_forward.1} parent=1 // pred_region
      %73 = dma.done [#allocation7], 1344
    $region29: #{a2c_conv1d_forward.1} parent=1 // pred_fallthru
      _
    // Predicated region
    $region30: #{a2c_conv1d_forward.1} parent=1 // pred_check
      _
    $region31: #{a2c_conv1d_forward.1} parent=1 // pred_check_branch
      %75 = sbr.rel (0) target = $region33
    $region32: #{a2c_conv1d_forward.1} parent=1 // pred_region
      %76 = dma.done [#allocation9], 16
    $region33: #{a2c_conv1d_forward.1} parent=1 // pred_fallthru
      _
    // Predicated region
    $region34: #{a2c_conv1d_forward.1} parent=1 // pred_check
      _
    $region35: #{a2c_conv1d_forward.1} parent=1 // pred_check_branch
      %78 = sbr.rel (0) target = $region37
    $region36: #{a2c_conv1d_forward.1} parent=1 // pred_region
      %79 = dma.done [#allocation9], 16
    $region37: #{a2c_conv1d_forward.1} parent=1 // pred_fallthru
      _
    // Predicated region
    $region38: #{a2c_conv1d_forward.1} parent=1 // pred_check
      _
    $region39: #{a2c_conv1d_forward.1} parent=1 // pred_check_branch
      %81 = sbr.rel (0) target = $region41
    $region40: #{a2c_conv1d_forward.1} parent=1 // pred_region
      %82 = dma.done [#allocation12], 128
    $region41: #{a2c_conv1d_forward.1} parent=1 // pred_fallthru
      _
    // Predicated region
    $region42: #{a2c_conv1d_forward.1} parent=1 // pred_check
      _
    $region43: #{a2c_conv1d_forward.1} parent=1 // pred_check_branch
      %84 = sbr.rel (0) target = $region45
    $region44: #{a2c_conv1d_forward.1} parent=1 // pred_region
      %85 = dma.done [#allocation12], 16
    $region45: #{a2c_conv1d_forward.1} parent=1 // pred_fallthru
      _
    // Predicated region
    $region46: #{a2c_conv1d_forward.1} parent=1 // pred_check
      _
    $region47: #{a2c_conv1d_forward.1} parent=1 // pred_check_branch
      %88 = sbr.rel target = $region49
    $region48: #{a2c_conv1d_forward.1} parent=1 // pred_region
      %89 = sst [smem:[#allocation16]] [#allocation15]
      %90 = sst [smem:[#allocation17]] [#allocation14]
    $region49: #{a2c_conv1d_forward.1} parent=1 // pred_fallthru
      _
    %92 = shalt.err (0)
    %s94 = sshll.u32 [#allocation2], 4
    %s95 = int_to_ptr.vmem [resolvable:$true] %s94
    %97 = dma.hbm_to_vmem [thread:$0]  %s3, 21504, %s95, [#allocation5]
    %s98 = scalar_lea.sflag [#allocation5], 1
    %s100 = sshll.u32 1, 14
    %s101 = sxor.u32 4294967295, %s100
    %s103 = sld [smem:[#allocation0]]
    %s104 = sadd.s32 2, %s103
    %s106 = sshll.u32 7, 26
    %s107 = sxor.u32 4294967295, %s106
    %s108 = sand.u32 0, %s107
    %s109 = sshll.u32 %s104, 26
    %s110 = sor.u32 %s108, %s109
    %s111 = sshll.u32 [#allocation3], 4
    %s112 = int_to_ptr.vmem [resolvable:$true] %s111
    %115 = sst [smem:[#allocation19]] 1024
    %s116 = scalar_lea.smem [#allocation19], 1
    %117 = sst [smem:[%s116]] 1024
    %s118 = scalar_lea.smem [#allocation19], 2
    %119 = sst [smem:[%s118]] 8
    %s120 = scalar_lea.smem [#allocation19], 3
    %121 = sst [smem:[%s120]] 64
    %s122 = scalar_lea.smem [#allocation19], 4
    %123 = sst [smem:[%s122]] 128
    %s124 = scalar_lea.smem [#allocation19], 5
    %125 = sst [smem:[%s124]] 2
    %s126 = scalar_lea.smem [#allocation19], 6
    %127 = sst [smem:[%s126]] 512
    %s128 = scalar_lea.smem [#allocation19], 7
    %129 = sst [smem:[%s128]] 64
    %s130 = scalar_lea.smem [#allocation19], 8
    %131 = sst [smem:[%s130]] 4
    %133 = dma.general %s5, 65536, %s112, %s98, [#allocation18], [#allocation19], %s110, 0
    %s134 = scalar_lea.sflag [#allocation5], 2
    // Predicated region
    $region50: #{a2c_conv1d_forward.1} parent=1 // pred_check
      _
    $region51: #{a2c_conv1d_forward.1} parent=1 // pred_check_branch
      %136 = sbr.rel target = $region53
    $region52: #{a2c_conv1d_forward.1} parent=1 // pred_region
      %137 = sst [smem:[#allocation16]] [#allocation21]
      %138 = sst [smem:[#allocation17]] [#allocation20]
    $region53: #{a2c_conv1d_forward.1} parent=1 // pred_fallthru
      _
    %140 = shalt.err (0)
    %s142 = sshll.u32 [#allocation4], 4
    %s143 = int_to_ptr.vmem [resolvable:$true] %s142
    %145 = dma.hbm_to_vmem [thread:$0]  %s7, 8192, %s143, %s134
    %v146 = vld [vmem:[%s0] sm:$0xff]
    %v147 = vld [vmem:[%s0 + $0x8] sm:$0xff]
    %v148 = vld [vmem:[%s0 + $0x10] sm:$0xff]
    %v149 = vld [vmem:[%s0 + $0x18] sm:$0xff]
    %v150 = vld [vmem:[%s0 + $0x20] sm:$0xff]
    %v151 = vld [vmem:[%s0 + $0x28] sm:$0xff]
    %v152 = vld [vmem:[%s0 + $0x30] sm:$0xff]
    %v153 = vld [vmem:[%s0 + $0x38] sm:$0xff]
    %v154 = vld [vmem:[%s0 + $0x40] sm:$0xff]
    %v155 = vld [vmem:[%s0 + $0x48] sm:$0xff]
    %v156 = vld [vmem:[%s0 + $0x50] sm:$0xff]
    %v157 = vld [vmem:[%s0 + $0x58] sm:$0xff]
    %v166 = vcombine.high %v146, %v146
    %v167 = vcombine.high %v147, %v147
    %v168 = vcombine.high %v148, %v148
    %v169 = vcombine.high %v152, %v152
    %v170 = vcombine.high %v153, %v153
    %v171 = vcombine.high %v154, %v154
    %v172 = vld [vmem:[#allocation6] sm:$0xf]
    %v173 = vcombine.high %v149, %v149
    %v174 = vcombine.high %v155, %v155
    %vm175 = vcmask 1042432
    %vm176 = vcmask 1046532
    %vm177 = vmor %vm175, %vm176
    %v178 = vrot.slane %v146, 5
    %v179 = vrot.slane %v178, 4
    %v180 = vrot.slane %v166, 5
    %v181 = vsel %vm177, %v179, %v180
    %v182 = vrot.slane %v180, 4
    %v183 = vrot.slane %v147, 5
    %v184 = vsel %vm177, %v182, %v183
    %v185 = vrot.slane %v183, 4
    %v186 = vrot.slane %v167, 5
    %v187 = vsel %vm177, %v185, %v186
    %v188 = vrot.slane %v186, 4
    %v189 = vrot.slane %v148, 5
    %v190 = vsel %vm177, %v188, %v189
    %v191 = vrot.slane %v189, 4
    %v192 = vrot.slane %v168, 5
    %v193 = vsel %vm177, %v191, %v192
    %v194 = vrot.slane %v192, 4
    %v195 = vrot.slane %v149, 5
    %v196 = vsel %vm177, %v194, %v195
    %v197 = vrot.slane %v195, 4
    %v198 = vrot.slane %v173, 5
    %v199 = vsel %vm177, %v197, %v198
    %v200 = vrot.slane %v152, 5
    %v201 = vrot.slane %v200, 4
    %v202 = vrot.slane %v169, 5
    %v203 = vsel %vm177, %v201, %v202
    %v204 = vrot.slane %v202, 4
    %v205 = vrot.slane %v153, 5
    %v206 = vsel %vm177, %v204, %v205
    %v207 = vrot.slane %v205, 4
    %v208 = vrot.slane %v170, 5
    %v209 = vsel %vm177, %v207, %v208
    %v210 = vrot.slane %v208, 4
    %v211 = vrot.slane %v154, 5
    %v212 = vsel %vm177, %v210, %v211
    %v213 = vrot.slane %v211, 4
    %v214 = vrot.slane %v171, 5
    %v215 = vsel %vm177, %v213, %v214
    %v216 = vrot.slane %v214, 4
    %v217 = vrot.slane %v155, 5
    %v218 = vsel %vm177, %v216, %v217
    %v219 = vrot.slane %v217, 4
    %v220 = vrot.slane %v174, 5
    %v221 = vsel %vm177, %v219, %v220
    %s222 = scalar_lea.vmem [#allocation6], 4
    %v223 = vld [vmem:[%s222] sm:$0xf]
    %v224 = vcombine.low %v181, %v184
    %v225 = vcombine.low %v187, %v190
    %v226 = vcombine.low %v193, %v196
    %v227 = vcombine.low %v199, %v203
    %v228 = vcombine.low %v206, %v209
    %v229 = vcombine.low %v212, %v215
    %v230 = vcombine.low %v218, %v221
    %vm231 = vcmask 31744
    %v232 = vsel %vm231, %v224, 0
    %v234 = vsel %vm231, %v225, 0
    %v236 = vsel %vm231, %v226, 0
    %v238 = vsel %vm231, %v227, 0
    %v240 = vsel %vm231, %v228, 0
    %v242 = vsel %vm231, %v229, 0
    %v244 = vsel %vm231, %v230, 0
    %vm246 = vcmask 1043456
    %v248 = vsel %vm246, %v223, 0
    %250 = vmatprep.subr.mxu0 0.0
    %251 = vmatpush1.msra.mxu0 %v248
    %252 = vmatprep.subr.mxu0 0.0
    %253 = vmatpush1.msra.mxu0 0.0
    %254 = vmatprep.subr.mxu0 0.0
    %255 = vmatpush1.msra.mxu0 0.0
    %256 = vmatprep.subr.mxu0 0.0
    %257 = vmatpush1.msra.mxu0 0.0
    %258 = vmatprep.subr.mxu0 0.0
    %259 = vmatpush1.msra.mxu0 0.0
    %260 = vmatprep.subr.mxu0 0.0
    %261 = vmatpush1.msra.mxu0 0.0
    %262 = vmatprep.subr.mxu0 0.0
    %263 = vmatpush1.msra.mxu0 0.0
    %264 = vmatprep.subr.mxu0 0.0
    %265 = vmatpush1.msra.mxu0 0.0
    %266 = vmatprep.subr.mxu0 0.0
    %267 = vmatpush1.msra.mxu0 0.0
    %268 = vmatprep.subr.mxu0 0.0
    %269 = vmatpush1.msra.mxu0 0.0
    %270 = vmatprep.subr.mxu0 0.0
    %271 = vmatpush1.msra.mxu0 0.0
    %272 = vmatprep.subr.mxu0 0.0
    %273 = vmatpush1.msra.mxu0 0.0
    %274 = vmatprep.subr.mxu0 0.0
    %275 = vmatpush1.msra.mxu0 0.0
    %276 = vmatprep.subr.mxu0 0.0
    %277 = vmatpush1.msra.mxu0 0.0
    %278 = vmatprep.subr.mxu0 0.0
    %279 = vmatpush1.msra.mxu0 0.0
    %280 = vmatprep.subr.mxu0 0.0
    %281 = vmatpush1.msra.mxu0 0.0
    %282 = vmatprep.subr.mxu0 0.0
    %283 = vmatpush1.msra.mxu0 0.0
    %284 = vmatprep.subr.mxu0 0.0
    %285 = vmatpush1.msra.mxu0 0.0
    %286 = vmatprep.subr.mxu0 0.0
    %287 = vmatpush1.msra.mxu0 0.0
    %288 = vmatprep.subr.mxu0 0.0
    %289 = vmatpush1.msra.mxu0 0.0
    %290 = vmatprep.subr.mxu0 0.0
    %291 = vmatpush1.msra.mxu0 0.0
    %292 = vmatprep.subr.mxu0 0.0
    %293 = vmatpush1.msra.mxu0 0.0
    %294 = vmatprep.subr.mxu0 0.0
    %295 = vmatpush1.msra.mxu0 0.0
    %296 = vmatprep.subr.mxu0 0.0
    %297 = vmatpush1.msra.mxu0 0.0
    %298 = vmatprep.subr.mxu0 0.0
    %299 = vmatpush1.msra.mxu0 0.0
    %300 = vmatprep.subr.mxu0 0.0
    %301 = vmatpush1.msra.mxu0 0.0
    %302 = vmatprep.subr.mxu0 0.0
    %303 = vmatpush1.msra.mxu0 0.0
    %304 = vmatprep.subr.mxu0 0.0
    %305 = vmatpush1.msra.mxu0 0.0
    %306 = vmatprep.subr.mxu0 0.0
    %307 = vmatpush1.msra.mxu0 0.0
    %308 = vmatprep.subr.mxu0 0.0
    %309 = vmatpush1.msra.mxu0 0.0
    %310 = vmatprep.subr.mxu0 0.0
    %311 = vmatpush1.msra.mxu0 0.0
    %312 = vmatprep.subr.mxu0 0.0
    %313 = vmatpush1.msra.mxu0 0.0
    %314 = vmatprep.mubr.f32.mxu0 0.0
    %315 = vmatmul.mubr.f32.gmra.mrb[0].mxu0 %v232
    %v316 = vpop.f32.mrb[0].mxu0
    %v317 = vadd.f32 0.0, %v316
    %v318 = vpop.f32.mrb[0].mxu0
    %319 = vmatprep.mubr.f32.mxu0 0.0
    %320 = vmatmul.mubr.f32.gmra.mrb[0].mxu0 %v234
    %v321 = vpop.f32.mrb[0].mxu0
    %v322 = vadd.f32 0.0, %v321
    %v323 = vpop.f32.mrb[0].mxu0
    %324 = vmatprep.mubr.f32.mxu0 0.0
    %325 = vmatmul.mubr.f32.gmra.mrb[0].mxu0 %v236
    %v326 = vpop.f32.mrb[0].mxu0
    %v327 = vadd.f32 0.0, %v326
    %v328 = vpop.f32.mrb[0].mxu0
    %329 = vmatprep.mubr.f32.mxu0 0.0
    %330 = vmatmul.mubr.f32.gmra.mrb[0].mxu0 %v238
    %v331 = vpop.f32.mrb[0].mxu0
    %v332 = vadd.f32 0.0, %v331
    %v333 = vpop.f32.mrb[0].mxu0
    %334 = vmatprep.mubr.f32.mxu0 0.0
    %335 = vmatmul.mubr.f32.gmra.mrb[0].mxu0 %v240
    %v336 = vpop.f32.mrb[0].mxu0
    %v337 = vadd.f32 0.0, %v336
    %v338 = vpop.f32.mrb[0].mxu0
    %339 = vmatprep.mubr.f32.mxu0 0.0
    %340 = vmatmul.mubr.f32.gmra.mrb[0].mxu0 %v242
    %v341 = vpop.f32.mrb[0].mxu0
    %v342 = vadd.f32 0.0, %v341
    %v343 = vpop.f32.mrb[0].mxu0
    %344 = vmatprep.mubr.f32.mxu0 0.0
    %345 = vmatmul.mubr.f32.gmra.mrb[0].mxu0 %v244
    %v346 = vpop.f32.mrb[0].mxu0
    %v347 = vadd.f32 0.0, %v346
    %v348 = vpop.f32.mrb[0].mxu0
    %349 = vdwg.mxu0
    %v350 = vcombine.low %v146, %v166
    %v351 = vcombine.low %v147, %v167
    %v352 = vcombine.low %v148, %v168
    %v353 = vcombine.low %v149, %v152
    %v354 = vcombine.low %v169, %v153
    %v355 = vcombine.low %v170, %v154
    %v356 = vcombine.low %v171, %v155
    %v357 = vsel %vm231, %v350, 0
    %v359 = vsel %vm231, %v351, 0
    %v361 = vsel %vm231, %v352, 0
    %v363 = vsel %vm231, %v353, 0
    %v365 = vsel %vm231, %v354, 0
    %v367 = vsel %vm231, %v355, 0
    %v369 = vsel %vm231, %v356, 0
    %v372 = vsel %vm246, %v172, 0
    %374 = vmatprep.subr.mxu0 0.0
    %375 = vmatpush1.msra.mxu0 %v372
    %376 = vmatprep.subr.mxu0 0.0
    %377 = vmatpush1.msra.mxu0 0.0
    %378 = vmatprep.subr.mxu0 0.0
    %379 = vmatpush1.msra.mxu0 0.0
    %380 = vmatprep.subr.mxu0 0.0
    %381 = vmatpush1.msra.mxu0 0.0
    %382 = vmatprep.subr.mxu0 0.0
    %383 = vmatpush1.msra.mxu0 0.0
    %384 = vmatprep.subr.mxu0 0.0
    %385 = vmatpush1.msra.mxu0 0.0
    %386 = vmatprep.subr.mxu0 0.0
    %387 = vmatpush1.msra.mxu0 0.0
    %388 = vmatprep.subr.mxu0 0.0
    %389 = vmatpush1.msra.mxu0 0.0
    %390 = vmatprep.subr.mxu0 0.0
    %391 = vmatpush1.msra.mxu0 0.0
    %392 = vmatprep.subr.mxu0 0.0
    %393 = vmatpush1.msra.mxu0 0.0
    %394 = vmatprep.subr.mxu0 0.0
    %395 = vmatpush1.msra.mxu0 0.0
    %396 = vmatprep.subr.mxu0 0.0
    %397 = vmatpush1.msra.mxu0 0.0
    %398 = vmatprep.subr.mxu0 0.0
    %399 = vmatpush1.msra.mxu0 0.0
    %400 = vmatprep.subr.mxu0 0.0
    %401 = vmatpush1.msra.mxu0 0.0
    %402 = vmatprep.subr.mxu0 0.0
    %403 = vmatpush1.msra.mxu0 0.0
    %404 = vmatprep.subr.mxu0 0.0
    %405 = vmatpush1.msra.mxu0 0.0
    %406 = vmatprep.subr.mxu0 0.0
    %407 = vmatpush1.msra.mxu0 0.0
    %408 = vmatprep.subr.mxu0 0.0
    %409 = vmatpush1.msra.mxu0 0.0
    %410 = vmatprep.subr.mxu0 0.0
    %411 = vmatpush1.msra.mxu0 0.0
    %412 = vmatprep.subr.mxu0 0.0
    %413 = vmatpush1.msra.mxu0 0.0
    %414 = vmatprep.subr.mxu0 0.0
    %415 = vmatpush1.msra.mxu0 0.0
    %416 = vmatprep.subr.mxu0 0.0
    %417 = vmatpush1.msra.mxu0 0.0
    %418 = vmatprep.subr.mxu0 0.0
    %419 = vmatpush1.msra.mxu0 0.0
    %420 = vmatprep.subr.mxu0 0.0
    %421 = vmatpush1.msra.mxu0 0.0
    %422 = vmatprep.subr.mxu0 0.0
    %423 = vmatpush1.msra.mxu0 0.0
    %424 = vmatprep.subr.mxu0 0.0
    %425 = vmatpush1.msra.mxu0 0.0
    %426 = vmatprep.subr.mxu0 0.0
    %427 = vmatpush1.msra.mxu0 0.0
    %428 = vmatprep.subr.mxu0 0.0
    %429 = vmatpush1.msra.mxu0 0.0
    %430 = vmatprep.subr.mxu0 0.0
    %431 = vmatpush1.msra.mxu0 0.0
    %432 = vmatprep.subr.mxu0 0.0
    %433 = vmatpush1.msra.mxu0 0.0
    %434 = vmatprep.subr.mxu0 0.0
    %435 = vmatpush1.msra.mxu0 0.0
    %436 = vmatprep.subr.mxu0 0.0
    %437 = vmatpush1.msra.mxu0 0.0
    %438 = vmatprep.mubr.f32.mxu0 0.0
    %439 = vmatmul.mubr.f32.gmra.mrb[0].mxu0 %v357
    %v440 = vpop.f32.mrb[0].mxu0
    %v441 = vadd.f32 %v317, %v440
    %v442 = vpop.f32.mrb[0].mxu0
    %443 = vmatprep.mubr.f32.mxu0 0.0
    %444 = vmatmul.mubr.f32.gmra.mrb[0].mxu0 %v359
    %v445 = vpop.f32.mrb[0].mxu0
    %v446 = vadd.f32 %v322, %v445
    %v447 = vpop.f32.mrb[0].mxu0
    %448 = vmatprep.mubr.f32.mxu0 0.0
    %449 = vmatmul.mubr.f32.gmra.mrb[0].mxu0 %v361
    %v450 = vpop.f32.mrb[0].mxu0
    %v451 = vadd.f32 %v327, %v450
    %v452 = vpop.f32.mrb[0].mxu0
    %453 = vmatprep.mubr.f32.mxu0 0.0
    %454 = vmatmul.mubr.f32.gmra.mrb[0].mxu0 %v363
    %v455 = vpop.f32.mrb[0].mxu0
    %v456 = vadd.f32 %v332, %v455
    %v457 = vpop.f32.mrb[0].mxu0
    %458 = vmatprep.mubr.f32.mxu0 0.0
    %459 = vmatmul.mubr.f32.gmra.mrb[0].mxu0 %v365
    %v460 = vpop.f32.mrb[0].mxu0
    %v461 = vadd.f32 %v337, %v460
    %v462 = vpop.f32.mrb[0].mxu0
    %463 = vmatprep.mubr.f32.mxu0 0.0
    %464 = vmatmul.mubr.f32.gmra.mrb[0].mxu0 %v367
    %v465 = vpop.f32.mrb[0].mxu0
    %v466 = vadd.f32 %v342, %v465
    %v467 = vpop.f32.mrb[0].mxu0
    %468 = vmatprep.mubr.f32.mxu0 0.0
    %469 = vmatmul.mubr.f32.gmra.mrb[0].mxu0 %v369
    %v470 = vpop.f32.mrb[0].mxu0
    %v471 = vadd.f32 %v347, %v470
    %v472 = vpop.f32.mrb[0].mxu0
    %473 = vdwg.mxu0
    %vm474 = vcmask 1041408
    %vm475 = vcmask 1045508
    %vm476 = vmor %vm474, %vm475
    %v477 = vrot.slane %v146, 6
    %v478 = vrot.slane %v477, 4
    %v479 = vrot.slane %v166, 6
    %v480 = vsel %vm476, %v478, %v479
    %v481 = vrot.slane %v479, 4
    %v482 = vrot.slane %v147, 6
    %v483 = vsel %vm476, %v481, %v482
    %v484 = vrot.slane %v482, 4
    %v485 = vrot.slane %v167, 6
    %v486 = vsel %vm476, %v484, %v485
    %v487 = vrot.slane %v485, 4
    %v488 = vrot.slane %v148, 6
    %v489 = vsel %vm476, %v487, %v488
    %v490 = vrot.slane %v488, 4
    %v491 = vrot.slane %v168, 6
    %v492 = vsel %vm476, %v490, %v491
    %v493 = vrot.slane %v491, 4
    %v494 = vrot.slane %v149, 6
    %v495 = vsel %vm476, %v493, %v494
    %v496 = vrot.slane %v494, 4
    %v497 = vrot.slane %v173, 6
    %v498 = vsel %vm476, %v496, %v497
    %v499 = vrot.slane %v152, 6
    %v500 = vrot.slane %v499, 4
    %v501 = vrot.slane %v169, 6
    %v502 = vsel %vm476, %v500, %v501
    %v503 = vrot.slane %v501, 4
    %v504 = vrot.slane %v153, 6
    %v505 = vsel %vm476, %v503, %v504
    %v506 = vrot.slane %v504, 4
    %v507 = vrot.slane %v170, 6
    %v508 = vsel %vm476, %v506, %v507
    %v509 = vrot.slane %v507, 4
    %v510 = vrot.slane %v154, 6
    %v511 = vsel %vm476, %v509, %v510
    %v512 = vrot.slane %v510, 4
    %v513 = vrot.slane %v171, 6
    %v514 = vsel %vm476, %v512, %v513
    %v515 = vrot.slane %v513, 4
    %v516 = vrot.slane %v155, 6
    %v517 = vsel %vm476, %v515, %v516
    %v518 = vrot.slane %v516, 4
    %v519 = vrot.slane %v174, 6
    %v520 = vsel %vm476, %v518, %v519
    %s521 = scalar_lea.vmem [#allocation6], 8
    %v522 = vld [vmem:[%s521] sm:$0xf]
    %v523 = vcombine.low %v480, %v483
    %v524 = vcombine.low %v486, %v489
    %v525 = vcombine.low %v492, %v495
    %v526 = vcombine.low %v498, %v502
    %v527 = vcombine.low %v505, %v508
    %v528 = vcombine.low %v511, %v514
    %v529 = vcombine.low %v517, %v520
    %v530 = vsel %vm231, %v523, 0
    %v532 = vsel %vm231, %v524, 0
    %v534 = vsel %vm231, %v525, 0
    %v536 = vsel %vm231, %v526, 0
    %v538 = vsel %vm231, %v527, 0
    %v540 = vsel %vm231, %v528, 0
    %v542 = vsel %vm231, %v529, 0
    %v545 = vsel %vm246, %v522, 0
    %547 = vmatprep.subr.mxu0 0.0
    %548 = vmatpush1.msra.mxu0 %v545
    %549 = vmatprep.subr.mxu0 0.0
    %550 = vmatpush1.msra.mxu0 0.0
    %551 = vmatprep.subr.mxu0 0.0
    %552 = vmatpush1.msra.mxu0 0.0
    %553 = vmatprep.subr.mxu0 0.0
    %554 = vmatpush1.msra.mxu0 0.0
    %555 = vmatprep.subr.mxu0 0.0
    %556 = vmatpush1.msra.mxu0 0.0
    %557 = vmatprep.subr.mxu0 0.0
    %558 = vmatpush1.msra.mxu0 0.0
    %559 = vmatprep.subr.mxu0 0.0
    %560 = vmatpush1.msra.mxu0 0.0
    %561 = vmatprep.subr.mxu0 0.0
    %562 = vmatpush1.msra.mxu0 0.0
    %563 = vmatprep.subr.mxu0 0.0
    %564 = vmatpush1.msra.mxu0 0.0
    %565 = vmatprep.subr.mxu0 0.0
    %566 = vmatpush1.msra.mxu0 0.0
    %567 = vmatprep.subr.mxu0 0.0
    %568 = vmatpush1.msra.mxu0 0.0
    %569 = vmatprep.subr.mxu0 0.0
    %570 = vmatpush1.msra.mxu0 0.0
    %571 = vmatprep.subr.mxu0 0.0
    %572 = vmatpush1.msra.mxu0 0.0
    %573 = vmatprep.subr.mxu0 0.0
    %574 = vmatpush1.msra.mxu0 0.0
    %575 = vmatprep.subr.mxu0 0.0
    %576 = vmatpush1.msra.mxu0 0.0
    %577 = vmatprep.subr.mxu0 0.0
    %578 = vmatpush1.msra.mxu0 0.0
    %579 = vmatprep.subr.mxu0 0.0
    %580 = vmatpush1.msra.mxu0 0.0
    %581 = vmatprep.subr.mxu0 0.0
    %582 = vmatpush1.msra.mxu0 0.0
    %583 = vmatprep.subr.mxu0 0.0
    %584 = vmatpush1.msra.mxu0 0.0
    %585 = vmatprep.subr.mxu0 0.0
    %586 = vmatpush1.msra.mxu0 0.0
    %587 = vmatprep.subr.mxu0 0.0
    %588 = vmatpush1.msra.mxu0 0.0
    %589 = vmatprep.subr.mxu0 0.0
    %590 = vmatpush1.msra.mxu0 0.0
    %591 = vmatprep.subr.mxu0 0.0
    %592 = vmatpush1.msra.mxu0 0.0
    %593 = vmatprep.subr.mxu0 0.0
    %594 = vmatpush1.msra.mxu0 0.0
    %595 = vmatprep.subr.mxu0 0.0
    %596 = vmatpush1.msra.mxu0 0.0
    %597 = vmatprep.subr.mxu0 0.0
    %598 = vmatpush1.msra.mxu0 0.0
    %599 = vmatprep.subr.mxu0 0.0
    %600 = vmatpush1.msra.mxu0 0.0
    %601 = vmatprep.subr.mxu0 0.0
    %602 = vmatpush1.msra.mxu0 0.0
    %603 = vmatprep.subr.mxu0 0.0
    %604 = vmatpush1.msra.mxu0 0.0
    %605 = vmatprep.subr.mxu0 0.0
    %606 = vmatpush1.msra.mxu0 0.0
    %607 = vmatprep.subr.mxu0 0.0
    %608 = vmatpush1.msra.mxu0 0.0
    %609 = vmatprep.subr.mxu0 0.0
    %610 = vmatpush1.msra.mxu0 0.0
    %611 = vmatprep.mubr.f32.mxu0 0.0
    %612 = vmatmul.mubr.f32.gmra.mrb[0].mxu0 %v530
    %v613 = vpop.f32.mrb[0].mxu0
    %v614 = vadd.f32 0.0, %v613
    %v615 = vpop.f32.mrb[0].mxu0
    %616 = vmatprep.mubr.f32.mxu0 0.0
    %617 = vmatmul.mubr.f32.gmra.mrb[0].mxu0 %v532
    %v618 = vpop.f32.mrb[0].mxu0
    %v619 = vadd.f32 0.0, %v618
    %v620 = vpop.f32.mrb[0].mxu0
    %621 = vmatprep.mubr.f32.mxu0 0.0
    %622 = vmatmul.mubr.f32.gmra.mrb[0].mxu0 %v534
    %v623 = vpop.f32.mrb[0].mxu0
    %v624 = vadd.f32 0.0, %v623
    %v625 = vpop.f32.mrb[0].mxu0
    %626 = vmatprep.mubr.f32.mxu0 0.0
    %627 = vmatmul.mubr.f32.gmra.mrb[0].mxu0 %v536
    %v628 = vpop.f32.mrb[0].mxu0
    %v629 = vadd.f32 0.0, %v628
    %v630 = vpop.f32.mrb[0].mxu0
    %631 = vmatprep.mubr.f32.mxu0 0.0
    %632 = vmatmul.mubr.f32.gmra.mrb[0].mxu0 %v538
    %v633 = vpop.f32.mrb[0].mxu0
    %v634 = vadd.f32 0.0, %v633
    %v635 = vpop.f32.mrb[0].mxu0
    %636 = vmatprep.mubr.f32.mxu0 0.0
    %637 = vmatmul.mubr.f32.gmra.mrb[0].mxu0 %v540
    %v638 = vpop.f32.mrb[0].mxu0
    %v639 = vadd.f32 0.0, %v638
    %v640 = vpop.f32.mrb[0].mxu0
    %641 = vmatprep.mubr.f32.mxu0 0.0
    %642 = vmatmul.mubr.f32.gmra.mrb[0].mxu0 %v542
    %v643 = vpop.f32.mrb[0].mxu0
    %v644 = vadd.f32 0.0, %v643
    %v645 = vpop.f32.mrb[0].mxu0
    %646 = vdwg.mxu0
    %v647 = vadd.f32 %v441, %v614
    %v648 = vadd.f32 %v446, %v619
    %v649 = vadd.f32 %v451, %v624
    %v650 = vadd.f32 %v456, %v629
    %v651 = vadd.f32 %v461, %v634
    %v652 = vadd.f32 %v466, %v639
    %v653 = vadd.f32 %v471, %v644
    %vm654 = vcmask 1040384
    %vm655 = vcmask 1044484
    %vm656 = vmor %vm654, %vm655
    %v657 = vrot.slane %v146, 7
    %v658 = vrot.slane %v657, 4
    %v659 = vrot.slane %v166, 7
    %v660 = vsel %vm656, %v658, %v659
    %v661 = vrot.slane %v659, 4
    %v662 = vrot.slane %v147, 7
    %v663 = vsel %vm656, %v661, %v662
    %v664 = vrot.slane %v662, 4
    %v665 = vrot.slane %v167, 7
    %v666 = vsel %vm656, %v664, %v665
    %v667 = vrot.slane %v665, 4
    %v668 = vrot.slane %v148, 7
    %v669 = vsel %vm656, %v667, %v668
    %v670 = vrot.slane %v668, 4
    %v671 = vrot.slane %v168, 7
    %v672 = vsel %vm656, %v670, %v671
    %v673 = vrot.slane %v671, 4
    %v674 = vrot.slane %v149, 7
    %v675 = vsel %vm656, %v673, %v674
    %v676 = vrot.slane %v674, 4
    %v677 = vrot.slane %v173, 7
    %v678 = vsel %vm656, %v676, %v677
    %v679 = vrot.slane %v152, 7
    %v680 = vrot.slane %v679, 4
    %v681 = vrot.slane %v169, 7
    %v682 = vsel %vm656, %v680, %v681
    %v683 = vrot.slane %v681, 4
    %v684 = vrot.slane %v153, 7
    %v685 = vsel %vm656, %v683, %v684
    %v686 = vrot.slane %v684, 4
    %v687 = vrot.slane %v170, 7
    %v688 = vsel %vm656, %v686, %v687
    %v689 = vrot.slane %v687, 4
    %v690 = vrot.slane %v154, 7
    %v691 = vsel %vm656, %v689, %v690
    %v692 = vrot.slane %v690, 4
    %v693 = vrot.slane %v171, 7
    %v694 = vsel %vm656, %v692, %v693
    %v695 = vrot.slane %v693, 4
    %v696 = vrot.slane %v155, 7
    %v697 = vsel %vm656, %v695, %v696
    %v698 = vrot.slane %v696, 4
    %v699 = vrot.slane %v174, 7
    %v700 = vsel %vm656, %v698, %v699
    %s701 = scalar_lea.vmem [#allocation6], 12
    %v702 = vld [vmem:[%s701] sm:$0xf]
    %v703 = vcombine.low %v660, %v663
    %v704 = vcombine.low %v666, %v669
    %v705 = vcombine.low %v672, %v675
    %v706 = vcombine.low %v678, %v682
    %v707 = vcombine.low %v685, %v688
    %v708 = vcombine.low %v691, %v694
    %v709 = vcombine.low %v697, %v700
    %v710 = vsel %vm231, %v703, 0
    %v712 = vsel %vm231, %v704, 0
    %v714 = vsel %vm231, %v705, 0
    %v716 = vsel %vm231, %v706, 0
    %v718 = vsel %vm231, %v707, 0
    %v720 = vsel %vm231, %v708, 0
    %v722 = vsel %vm231, %v709, 0
    %v725 = vsel %vm246, %v702, 0
    %727 = vmatprep.subr.mxu0 0.0
    %728 = vmatpush1.msra.mxu0 %v725
    %729 = vmatprep.subr.mxu0 0.0
    %730 = vmatpush1.msra.mxu0 0.0
    %731 = vmatprep.subr.mxu0 0.0
    %732 = vmatpush1.msra.mxu0 0.0
    %733 = vmatprep.subr.mxu0 0.0
    %734 = vmatpush1.msra.mxu0 0.0
    %735 = vmatprep.subr.mxu0 0.0
    %736 = vmatpush1.msra.mxu0 0.0
    %737 = vmatprep.subr.mxu0 0.0
    %738 = vmatpush1.msra.mxu0 0.0
    %739 = vmatprep.subr.mxu0 0.0
    %740 = vmatpush1.msra.mxu0 0.0
    %741 = vmatprep.subr.mxu0 0.0
    %742 = vmatpush1.msra.mxu0 0.0
    %743 = vmatprep.subr.mxu0 0.0
    %744 = vmatpush1.msra.mxu0 0.0
    %745 = vmatprep.subr.mxu0 0.0
    %746 = vmatpush1.msra.mxu0 0.0
    %747 = vmatprep.subr.mxu0 0.0
    %748 = vmatpush1.msra.mxu0 0.0
    %749 = vmatprep.subr.mxu0 0.0
    %750 = vmatpush1.msra.mxu0 0.0
    %751 = vmatprep.subr.mxu0 0.0
    %752 = vmatpush1.msra.mxu0 0.0
    %753 = vmatprep.subr.mxu0 0.0
    %754 = vmatpush1.msra.mxu0 0.0
    %755 = vmatprep.subr.mxu0 0.0
    %756 = vmatpush1.msra.mxu0 0.0
    %757 = vmatprep.subr.mxu0 0.0
    %758 = vmatpush1.msra.mxu0 0.0
    %759 = vmatprep.subr.mxu0 0.0
    %760 = vmatpush1.msra.mxu0 0.0
    %761 = vmatprep.subr.mxu0 0.0
    %762 = vmatpush1.msra.mxu0 0.0
    %763 = vmatprep.subr.mxu0 0.0
    %764 = vmatpush1.msra.mxu0 0.0
    %765 = vmatprep.subr.mxu0 0.0
    %766 = vmatpush1.msra.mxu0 0.0
    %767 = vmatprep.subr.mxu0 0.0
    %768 = vmatpush1.msra.mxu0 0.0
    %769 = vmatprep.subr.mxu0 0.0
    %770 = vmatpush1.msra.mxu0 0.0
    %771 = vmatprep.subr.mxu0 0.0
    %772 = vmatpush1.msra.mxu0 0.0
    %773 = vmatprep.subr.mxu0 0.0
    %774 = vmatpush1.msra.mxu0 0.0
    %775 = vmatprep.subr.mxu0 0.0
    %776 = vmatpush1.msra.mxu0 0.0
    %777 = vmatprep.subr.mxu0 0.0
    %778 = vmatpush1.msra.mxu0 0.0
    %779 = vmatprep.subr.mxu0 0.0
    %780 = vmatpush1.msra.mxu0 0.0
    %781 = vmatprep.subr.mxu0 0.0
    %782 = vmatpush1.msra.mxu0 0.0
    %783 = vmatprep.subr.mxu0 0.0
    %784 = vmatpush1.msra.mxu0 0.0
    %785 = vmatprep.subr.mxu0 0.0
    %786 = vmatpush1.msra.mxu0 0.0
    %787 = vmatprep.subr.mxu0 0.0
    %788 = vmatpush1.msra.mxu0 0.0
    %789 = vmatprep.subr.mxu0 0.0
    %790 = vmatpush1.msra.mxu0 0.0
    %791 = vmatprep.mubr.f32.mxu0 0.0
    %792 = vmatmul.mubr.f32.gmra.mrb[0].mxu0 %v710
    %v793 = vpop.f32.mrb[0].mxu0
    %v794 = vadd.f32 0.0, %v793
    %v795 = vpop.f32.mrb[0].mxu0
    %796 = vmatprep.mubr.f32.mxu0 0.0
    %797 = vmatmul.mubr.f32.gmra.mrb[0].mxu0 %v712
    %v798 = vpop.f32.mrb[0].mxu0
    %v799 = vadd.f32 0.0, %v798
    %v800 = vpop.f32.mrb[0].mxu0
    %801 = vmatprep.mubr.f32.mxu0 0.0
    %802 = vmatmul.mubr.f32.gmra.mrb[0].mxu0 %v714
    %v803 = vpop.f32.mrb[0].mxu0
    %v804 = vadd.f32 0.0, %v803
    %v805 = vpop.f32.mrb[0].mxu0
    %806 = vmatprep.mubr.f32.mxu0 0.0
    %807 = vmatmul.mubr.f32.gmra.mrb[0].mxu0 %v716
    %v808 = vpop.f32.mrb[0].mxu0
    %v809 = vadd.f32 0.0, %v808
    %v810 = vpop.f32.mrb[0].mxu0
    %811 = vmatprep.mubr.f32.mxu0 0.0
    %812 = vmatmul.mubr.f32.gmra.mrb[0].mxu0 %v718
    %v813 = vpop.f32.mrb[0].mxu0
    %v814 = vadd.f32 0.0, %v813
    %v815 = vpop.f32.mrb[0].mxu0
    %816 = vmatprep.mubr.f32.mxu0 0.0
    %817 = vmatmul.mubr.f32.gmra.mrb[0].mxu0 %v720
    %v818 = vpop.f32.mrb[0].mxu0
    %v819 = vadd.f32 0.0, %v818
    %v820 = vpop.f32.mrb[0].mxu0
    %821 = vmatprep.mubr.f32.mxu0 0.0
    %822 = vmatmul.mubr.f32.gmra.mrb[0].mxu0 %v722
    %v823 = vpop.f32.mrb[0].mxu0
    %v824 = vadd.f32 0.0, %v823
    %v825 = vpop.f32.mrb[0].mxu0
    %826 = vdwg.mxu0
    %v827 = vadd.f32 %v647, %v794
    %v828 = vadd.f32 %v648, %v799
    %v829 = vadd.f32 %v649, %v804
    %v830 = vadd.f32 %v650, %v809
    %v831 = vadd.f32 %v651, %v814
    %v832 = vadd.f32 %v652, %v819
    %v833 = vadd.f32 %v653, %v824
    %s834 = scalar_lea.vmem [#allocation6], 16
    %v835 = vld [vmem:[%s834] sm:$0xf]
    %v836 = vcombine.low %v166, %v147
    %v837 = vcombine.low %v167, %v148
    %v838 = vcombine.low %v168, %v149
    %v839 = vcombine.low %v173, %v169
    %v840 = vcombine.low %v153, %v170
    %v841 = vcombine.low %v154, %v171
    %v842 = vcombine.low %v155, %v174
    %v843 = vsel %vm231, %v836, 0
    %v845 = vsel %vm231, %v837, 0
    %v847 = vsel %vm231, %v838, 0
    %v849 = vsel %vm231, %v839, 0
    %v851 = vsel %vm231, %v840, 0
    %v853 = vsel %vm231, %v841, 0
    %v855 = vsel %vm231, %v842, 0
    %v858 = vsel %vm246, %v835, 0
    %860 = vmatprep.subr.mxu0 0.0
    %861 = vmatpush1.msra.mxu0 %v858
    %862 = vmatprep.subr.mxu0 0.0
    %863 = vmatpush1.msra.mxu0 0.0
    %864 = vmatprep.subr.mxu0 0.0
    %865 = vmatpush1.msra.mxu0 0.0
    %866 = vmatprep.subr.mxu0 0.0
    %867 = vmatpush1.msra.mxu0 0.0
    %868 = vmatprep.subr.mxu0 0.0
    %869 = vmatpush1.msra.mxu0 0.0
    %870 = vmatprep.subr.mxu0 0.0
    %871 = vmatpush1.msra.mxu0 0.0
    %872 = vmatprep.subr.mxu0 0.0
    %873 = vmatpush1.msra.mxu0 0.0
    %874 = vmatprep.subr.mxu0 0.0
    %875 = vmatpush1.msra.mxu0 0.0
    %876 = vmatprep.subr.mxu0 0.0
    %877 = vmatpush1.msra.mxu0 0.0
    %878 = vmatprep.subr.mxu0 0.0
    %879 = vmatpush1.msra.mxu0 0.0
    %880 = vmatprep.subr.mxu0 0.0
    %881 = vmatpush1.msra.mxu0 0.0
    %882 = vmatprep.subr.mxu0 0.0
    %883 = vmatpush1.msra.mxu0 0.0
    %884 = vmatprep.subr.mxu0 0.0
    %885 = vmatpush1.msra.mxu0 0.0
    %886 = vmatprep.subr.mxu0 0.0
    %887 = vmatpush1.msra.mxu0 0.0
    %888 = vmatprep.subr.mxu0 0.0
    %889 = vmatpush1.msra.mxu0 0.0
    %890 = vmatprep.subr.mxu0 0.0
    %891 = vmatpush1.msra.mxu0 0.0
    %892 = vmatprep.subr.mxu0 0.0
    %893 = vmatpush1.msra.mxu0 0.0
    %894 = vmatprep.subr.mxu0 0.0
    %895 = vmatpush1.msra.mxu0 0.0
    %896 = vmatprep.subr.mxu0 0.0
    %897 = vmatpush1.msra.mxu0 0.0
    %898 = vmatprep.subr.mxu0 0.0
    %899 = vmatpush1.msra.mxu0 0.0
    %900 = vmatprep.subr.mxu0 0.0
    %901 = vmatpush1.msra.mxu0 0.0
    %902 = vmatprep.subr.mxu0 0.0
    %903 = vmatpush1.msra.mxu0 0.0
    %904 = vmatprep.subr.mxu0 0.0
    %905 = vmatpush1.msra.mxu0 0.0
    %906 = vmatprep.subr.mxu0 0.0
    %907 = vmatpush1.msra.mxu0 0.0
    %908 = vmatprep.subr.mxu0 0.0
    %909 = vmatpush1.msra.mxu0 0.0
    %910 = vmatprep.subr.mxu0 0.0
    %911 = vmatpush1.msra.mxu0 0.0
    %912 = vmatprep.subr.mxu0 0.0
    %913 = vmatpush1.msra.mxu0 0.0
    %914 = vmatprep.subr.mxu0 0.0
    %915 = vmatpush1.msra.mxu0 0.0
    %916 = vmatprep.subr.mxu0 0.0
    %917 = vmatpush1.msra.mxu0 0.0
    %918 = vmatprep.subr.mxu0 0.0
    %919 = vmatpush1.msra.mxu0 0.0
    %920 = vmatprep.subr.mxu0 0.0
    %921 = vmatpush1.msra.mxu0 0.0
    %922 = vmatprep.subr.mxu0 0.0
    %923 = vmatpush1.msra.mxu0 0.0
    %924 = vmatprep.mubr.f32.mxu0 0.0
    %925 = vmatmul.mubr.f32.gmra.mrb[0].mxu0 %v843
    %v926 = vpop.f32.mrb[0].mxu0
    %v927 = vadd.f32 0.0, %v926
    %v928 = vpop.f32.mrb[0].mxu0
    %929 = vmatprep.mubr.f32.mxu0 0.0
    %930 = vmatmul.mubr.f32.gmra.mrb[0].mxu0 %v845
    %v931 = vpop.f32.mrb[0].mxu0
    %v932 = vadd.f32 0.0, %v931
    %v933 = vpop.f32.mrb[0].mxu0
    %934 = vmatprep.mubr.f32.mxu0 0.0
    %935 = vmatmul.mubr.f32.gmra.mrb[0].mxu0 %v847
    %v936 = vpop.f32.mrb[0].mxu0
    %v937 = vadd.f32 0.0, %v936
    %v938 = vpop.f32.mrb[0].mxu0
    %939 = vmatprep.mubr.f32.mxu0 0.0
    %940 = vmatmul.mubr.f32.gmra.mrb[0].mxu0 %v849
    %v941 = vpop.f32.mrb[0].mxu0
    %v942 = vadd.f32 0.0, %v941
    %v943 = vpop.f32.mrb[0].mxu0
    %944 = vmatprep.mubr.f32.mxu0 0.0
    %945 = vmatmul.mubr.f32.gmra.mrb[0].mxu0 %v851
    %v946 = vpop.f32.mrb[0].mxu0
    %v947 = vadd.f32 0.0, %v946
    %v948 = vpop.f32.mrb[0].mxu0
    %949 = vmatprep.mubr.f32.mxu0 0.0
    %950 = vmatmul.mubr.f32.gmra.mrb[0].mxu0 %v853
    %v951 = vpop.f32.mrb[0].mxu0
    %v952 = vadd.f32 0.0, %v951
    %v953 = vpop.f32.mrb[0].mxu0
    %954 = vmatprep.mubr.f32.mxu0 0.0
    %955 = vmatmul.mubr.f32.gmra.mrb[0].mxu0 %v855
    %v956 = vpop.f32.mrb[0].mxu0
    %v957 = vadd.f32 0.0, %v956
    %v958 = vpop.f32.mrb[0].mxu0
    %959 = vdwg.mxu0
    %v960 = vadd.f32 %v827, %v927
    %v961 = vadd.f32 %v828, %v932
    %v962 = vadd.f32 %v829, %v937
    %v963 = vadd.f32 %v830, %v942
    %v964 = vadd.f32 %v831, %v947
    %v965 = vadd.f32 %v832, %v952
    %v966 = vadd.f32 %v833, %v957
    %v969 = vrot.slane %v198, 4
    %v970 = vrot.slane %v150, 5
    %v971 = vsel %vm177, %v969, %v970
    %v972 = vrot.slane %v220, 4
    %v973 = vrot.slane %v156, 5
    %v974 = vsel %vm177, %v972, %v973
    %s975 = scalar_lea.vmem [#allocation6], 20
    %v976 = vld [vmem:[%s975] sm:$0xf]
    %v977 = vcombine.low %v184, %v187
    %v978 = vcombine.low %v190, %v193
    %v979 = vcombine.low %v196, %v199
    %v980 = vcombine.low %v971, %v206
    %v981 = vcombine.low %v209, %v212
    %v982 = vcombine.low %v215, %v218
    %v983 = vcombine.low %v221, %v974
    %v984 = vsel %vm231, %v977, 0
    %v986 = vsel %vm231, %v978, 0
    %v988 = vsel %vm231, %v979, 0
    %v990 = vsel %vm231, %v980, 0
    %v992 = vsel %vm231, %v981, 0
    %v994 = vsel %vm231, %v982, 0
    %v996 = vsel %vm231, %v983, 0
    %v999 = vsel %vm246, %v976, 0
    %1001 = vmatprep.subr.mxu0 0.0
    %1002 = vmatpush1.msra.mxu0 %v999
    %1003 = vmatprep.subr.mxu0 0.0
    %1004 = vmatpush1.msra.mxu0 0.0
    %1005 = vmatprep.subr.mxu0 0.0
    %1006 = vmatpush1.msra.mxu0 0.0
    %1007 = vmatprep.subr.mxu0 0.0
    %1008 = vmatpush1.msra.mxu0 0.0
    %1009 = vmatprep.subr.mxu0 0.0
    %1010 = vmatpush1.msra.mxu0 0.0
    %1011 = vmatprep.subr.mxu0 0.0
    %1012 = vmatpush1.msra.mxu0 0.0
    %1013 = vmatprep.subr.mxu0 0.0
    %1014 = vmatpush1.msra.mxu0 0.0
    %1015 = vmatprep.subr.mxu0 0.0
    %1016 = vmatpush1.msra.mxu0 0.0
    %1017 = vmatprep.subr.mxu0 0.0
    %1018 = vmatpush1.msra.mxu0 0.0
    %1019 = vmatprep.subr.mxu0 0.0
    %1020 = vmatpush1.msra.mxu0 0.0
    %1021 = vmatprep.subr.mxu0 0.0
    %1022 = vmatpush1.msra.mxu0 0.0
    %1023 = vmatprep.subr.mxu0 0.0
    %1024 = vmatpush1.msra.mxu0 0.0
    %1025 = vmatprep.subr.mxu0 0.0
    %1026 = vmatpush1.msra.mxu0 0.0
    %1027 = vmatprep.subr.mxu0 0.0
    %1028 = vmatpush1.msra.mxu0 0.0
    %1029 = vmatprep.subr.mxu0 0.0
    %1030 = vmatpush1.msra.mxu0 0.0
    %1031 = vmatprep.subr.mxu0 0.0
    %1032 = vmatpush1.msra.mxu0 0.0
    %1033 = vmatprep.subr.mxu0 0.0
    %1034 = vmatpush1.msra.mxu0 0.0
    %1035 = vmatprep.subr.mxu0 0.0
    %1036 = vmatpush1.msra.mxu0 0.0
    %1037 = vmatprep.subr.mxu0 0.0
    %1038 = vmatpush1.msra.mxu0 0.0
    %1039 = vmatprep.subr.mxu0 0.0
    %1040 = vmatpush1.msra.mxu0 0.0
    %1041 = vmatprep.subr.mxu0 0.0
    %1042 = vmatpush1.msra.mxu0 0.0
    %1043 = vmatprep.subr.mxu0 0.0
    %1044 = vmatpush1.msra.mxu0 0.0
    %1045 = vmatprep.subr.mxu0 0.0
    %1046 = vmatpush1.msra.mxu0 0.0
    %1047 = vmatprep.subr.mxu0 0.0
    %1048 = vmatpush1.msra.mxu0 0.0
    %1049 = vmatprep.subr.mxu0 0.0
    %1050 = vmatpush1.msra.mxu0 0.0
    %1051 = vmatprep.subr.mxu0 0.0
    %1052 = vmatpush1.msra.mxu0 0.0
    %1053 = vmatprep.subr.mxu0 0.0
    %1054 = vmatpush1.msra.mxu0 0.0
    %1055 = vmatprep.subr.mxu0 0.0
    %1056 = vmatpush1.msra.mxu0 0.0
    %1057 = vmatprep.subr.mxu0 0.0
    %1058 = vmatpush1.msra.mxu0 0.0
    %1059 = vmatprep.subr.mxu0 0.0
    %1060 = vmatpush1.msra.mxu0 0.0
    %1061 = vmatprep.subr.mxu0 0.0
    %1062 = vmatpush1.msra.mxu0 0.0
    %1063 = vmatprep.subr.mxu0 0.0
    %1064 = vmatpush1.msra.mxu0 0.0
    %1065 = vmatprep.mubr.f32.mxu0 0.0
    %1066 = vmatmul.mubr.f32.gmra.mrb[0].mxu0 %v984
    %v1067 = vpop.f32.mrb[0].mxu0
    %v1068 = vadd.f32 0.0, %v1067
    %v1069 = vpop.f32.mrb[0].mxu0
    %1070 = vmatprep.mubr.f32.mxu0 0.0
    %1071 = vmatmul.mubr.f32.gmra.mrb[0].mxu0 %v986
    %v1072 = vpop.f32.mrb[0].mxu0
    %v1073 = vadd.f32 0.0, %v1072
    %v1074 = vpop.f32.mrb[0].mxu0
    %1075 = vmatprep.mubr.f32.mxu0 0.0
    %1076 = vmatmul.mubr.f32.gmra.mrb[0].mxu0 %v988
    %v1077 = vpop.f32.mrb[0].mxu0
    %v1078 = vadd.f32 0.0, %v1077
    %v1079 = vpop.f32.mrb[0].mxu0
    %1080 = vmatprep.mubr.f32.mxu0 0.0
    %1081 = vmatmul.mubr.f32.gmra.mrb[0].mxu0 %v990
    %v1082 = vpop.f32.mrb[0].mxu0
    %v1083 = vadd.f32 0.0, %v1082
    %v1084 = vpop.f32.mrb[0].mxu0
    %1085 = vmatprep.mubr.f32.mxu0 0.0
    %1086 = vmatmul.mubr.f32.gmra.mrb[0].mxu0 %v992
    %v1087 = vpop.f32.mrb[0].mxu0
    %v1088 = vadd.f32 0.0, %v1087
    %v1089 = vpop.f32.mrb[0].mxu0
    %1090 = vmatprep.mubr.f32.mxu0 0.0
    %1091 = vmatmul.mubr.f32.gmra.mrb[0].mxu0 %v994
    %v1092 = vpop.f32.mrb[0].mxu0
    %v1093 = vadd.f32 0.0, %v1092
    %v1094 = vpop.f32.mrb[0].mxu0
    %1095 = vmatprep.mubr.f32.mxu0 0.0
    %1096 = vmatmul.mubr.f32.gmra.mrb[0].mxu0 %v996
    %v1097 = vpop.f32.mrb[0].mxu0
    %v1098 = vadd.f32 0.0, %v1097
    %v1099 = vpop.f32.mrb[0].mxu0
    %1100 = vdwg.mxu0
    %v1101 = vadd.f32 %v960, %v1068
    %v1102 = vadd.f32 %v961, %v1073
    %v1103 = vadd.f32 %v962, %v1078
    %v1104 = vadd.f32 %v963, %v1083
    %v1105 = vadd.f32 %v964, %v1088
    %v1106 = vadd.f32 %v965, %v1093
    %v1107 = vadd.f32 %v966, %v1098
    %v1108 = vrot.slane %v497, 4
    %v1109 = vrot.slane %v150, 6
    %v1110 = vsel %vm476, %v1108, %v1109
    %v1111 = vrot.slane %v519, 4
    %v1112 = vrot.slane %v156, 6
    %v1113 = vsel %vm476, %v1111, %v1112
    %s1114 = scalar_lea.vmem [#allocation6], 24
    %v1115 = vld [vmem:[%s1114] sm:$0xf]
    %v1116 = vcombine.low %v483, %v486
    %v1117 = vcombine.low %v489, %v492
    %v1118 = vcombine.low %v495, %v498
    %v1119 = vcombine.low %v1110, %v505
    %v1120 = vcombine.low %v508, %v511
    %v1121 = vcombine.low %v514, %v517
    %v1122 = vcombine.low %v520, %v1113
    %v1123 = vsel %vm231, %v1116, 0
    %v1125 = vsel %vm231, %v1117, 0
    %v1127 = vsel %vm231, %v1118, 0
    %v1129 = vsel %vm231, %v1119, 0
    %v1131 = vsel %vm231, %v1120, 0
    %v1133 = vsel %vm231, %v1121, 0
    %v1135 = vsel %vm231, %v1122, 0
    %v1138 = vsel %vm246, %v1115, 0
    %1140 = vmatprep.subr.mxu0 0.0
    %1141 = vmatpush1.msra.mxu0 %v1138
    %1142 = vmatprep.subr.mxu0 0.0
    %1143 = vmatpush1.msra.mxu0 0.0
    %1144 = vmatprep.subr.mxu0 0.0
    %1145 = vmatpush1.msra.mxu0 0.0
    %1146 = vmatprep.subr.mxu0 0.0
    %1147 = vmatpush1.msra.mxu0 0.0
    %1148 = vmatprep.subr.mxu0 0.0
    %1149 = vmatpush1.msra.mxu0 0.0
    %1150 = vmatprep.subr.mxu0 0.0
    %1151 = vmatpush1.msra.mxu0 0.0
    %1152 = vmatprep.subr.mxu0 0.0
    %1153 = vmatpush1.msra.mxu0 0.0
    %1154 = vmatprep.subr.mxu0 0.0
    %1155 = vmatpush1.msra.mxu0 0.0
    %1156 = vmatprep.subr.mxu0 0.0
    %1157 = vmatpush1.msra.mxu0 0.0
    %1158 = vmatprep.subr.mxu0 0.0
    %1159 = vmatpush1.msra.mxu0 0.0
    %1160 = vmatprep.subr.mxu0 0.0
    %1161 = vmatpush1.msra.mxu0 0.0
    %1162 = vmatprep.subr.mxu0 0.0
    %1163 = vmatpush1.msra.mxu0 0.0
    %1164 = vmatprep.subr.mxu0 0.0
    %1165 = vmatpush1.msra.mxu0 0.0
    %1166 = vmatprep.subr.mxu0 0.0
    %1167 = vmatpush1.msra.mxu0 0.0
    %1168 = vmatprep.subr.mxu0 0.0
    %1169 = vmatpush1.msra.mxu0 0.0
    %1170 = vmatprep.subr.mxu0 0.0
    %1171 = vmatpush1.msra.mxu0 0.0
    %1172 = vmatprep.subr.mxu0 0.0
    %1173 = vmatpush1.msra.mxu0 0.0
    %1174 = vmatprep.subr.mxu0 0.0
    %1175 = vmatpush1.msra.mxu0 0.0
    %1176 = vmatprep.subr.mxu0 0.0
    %1177 = vmatpush1.msra.mxu0 0.0
    %1178 = vmatprep.subr.mxu0 0.0
    %1179 = vmatpush1.msra.mxu0 0.0
    %1180 = vmatprep.subr.mxu0 0.0
    %1181 = vmatpush1.msra.mxu0 0.0
    %1182 = vmatprep.subr.mxu0 0.0
    %1183 = vmatpush1.msra.mxu0 0.0
    %1184 = vmatprep.subr.mxu0 0.0
    %1185 = vmatpush1.msra.mxu0 0.0
    %1186 = vmatprep.subr.mxu0 0.0
    %1187 = vmatpush1.msra.mxu0 0.0
    %1188 = vmatprep.subr.mxu0 0.0
    %1189 = vmatpush1.msra.mxu0 0.0
    %1190 = vmatprep.subr.mxu0 0.0
    %1191 = vmatpush1.msra.mxu0 0.0
    %1192 = vmatprep.subr.mxu0 0.0
    %1193 = vmatpush1.msra.mxu0 0.0
    %1194 = vmatprep.subr.mxu0 0.0
    %1195 = vmatpush1.msra.mxu0 0.0
    %1196 = vmatprep.subr.mxu0 0.0
    %1197 = vmatpush1.msra.mxu0 0.0
    %1198 = vmatprep.subr.mxu0 0.0
    %1199 = vmatpush1.msra.mxu0 0.0
    %1200 = vmatprep.subr.mxu0 0.0
    %1201 = vmatpush1.msra.mxu0 0.0
    %1202 = vmatprep.subr.mxu0 0.0
    %1203 = vmatpush1.msra.mxu0 0.0
    %1204 = vmatprep.mubr.f32.mxu0 0.0
    %1205 = vmatmul.mubr.f32.gmra.mrb[0].mxu0 %v1123
    %v1206 = vpop.f32.mrb[0].mxu0
    %v1207 = vadd.f32 0.0, %v1206
    %v1208 = vpop.f32.mrb[0].mxu0
    %1209 = vmatprep.mubr.f32.mxu0 0.0
    %1210 = vmatmul.mubr.f32.gmra.mrb[0].mxu0 %v1125
    %v1211 = vpop.f32.mrb[0].mxu0
    %v1212 = vadd.f32 0.0, %v1211
    %v1213 = vpop.f32.mrb[0].mxu0
    %1214 = vmatprep.mubr.f32.mxu0 0.0
    %1215 = vmatmul.mubr.f32.gmra.mrb[0].mxu0 %v1127
    %v1216 = vpop.f32.mrb[0].mxu0
    %v1217 = vadd.f32 0.0, %v1216
    %v1218 = vpop.f32.mrb[0].mxu0
    %1219 = vmatprep.mubr.f32.mxu0 0.0
    %1220 = vmatmul.mubr.f32.gmra.mrb[0].mxu0 %v1129
    %v1221 = vpop.f32.mrb[0].mxu0
    %v1222 = vadd.f32 0.0, %v1221
    %v1223 = vpop.f32.mrb[0].mxu0
    %1224 = vmatprep.mubr.f32.mxu0 0.0
    %1225 = vmatmul.mubr.f32.gmra.mrb[0].mxu0 %v1131
    %v1226 = vpop.f32.mrb[0].mxu0
    %v1227 = vadd.f32 0.0, %v1226
    %v1228 = vpop.f32.mrb[0].mxu0
    %1229 = vmatprep.mubr.f32.mxu0 0.0
    %1230 = vmatmul.mubr.f32.gmra.mrb[0].mxu0 %v1133
    %v1231 = vpop.f32.mrb[0].mxu0
    %v1232 = vadd.f32 0.0, %v1231
    %v1233 = vpop.f32.mrb[0].mxu0
    %1234 = vmatprep.mubr.f32.mxu0 0.0
    %1235 = vmatmul.mubr.f32.gmra.mrb[0].mxu0 %v1135
    %v1236 = vpop.f32.mrb[0].mxu0
    %v1237 = vadd.f32 0.0, %v1236
    %v1238 = vpop.f32.mrb[0].mxu0
    %1239 = vdwg.mxu0
    %v1240 = vadd.f32 %v1101, %v1207
    %v1241 = vadd.f32 %v1102, %v1212
    %v1242 = vadd.f32 %v1103, %v1217
    %v1243 = vadd.f32 %v1104, %v1222
    %v1244 = vadd.f32 %v1105, %v1227
    %v1245 = vadd.f32 %v1106, %v1232
    %v1246 = vadd.f32 %v1107, %v1237
    %v1247 = vrot.slane %v677, 4
    %v1248 = vrot.slane %v150, 7
    %v1249 = vsel %vm656, %v1247, %v1248
    %v1250 = vrot.slane %v699, 4
    %v1251 = vrot.slane %v156, 7
    %v1252 = vsel %vm656, %v1250, %v1251
    %s1253 = scalar_lea.vmem [#allocation6], 28
    %v1254 = vld [vmem:[%s1253] sm:$0xf]
    %v1255 = vcombine.low %v663, %v666
    %v1256 = vcombine.low %v669, %v672
    %v1257 = vcombine.low %v675, %v678
    %v1258 = vcombine.low %v1249, %v685
    %v1259 = vcombine.low %v688, %v691
    %v1260 = vcombine.low %v694, %v697
    %v1261 = vcombine.low %v700, %v1252
    %v1262 = vsel %vm231, %v1255, 0
    %v1264 = vsel %vm231, %v1256, 0
    %v1266 = vsel %vm231, %v1257, 0
    %v1268 = vsel %vm231, %v1258, 0
    %v1270 = vsel %vm231, %v1259, 0
    %v1272 = vsel %vm231, %v1260, 0
    %v1274 = vsel %vm231, %v1261, 0
    %v1277 = vsel %vm246, %v1254, 0
    %1279 = vmatprep.subr.mxu0 0.0
    %1280 = vmatpush1.msra.mxu0 %v1277
    %1281 = vmatprep.subr.mxu0 0.0
    %1282 = vmatpush1.msra.mxu0 0.0
    %1283 = vmatprep.subr.mxu0 0.0
    %1284 = vmatpush1.msra.mxu0 0.0
    %1285 = vmatprep.subr.mxu0 0.0
    %1286 = vmatpush1.msra.mxu0 0.0
    %1287 = vmatprep.subr.mxu0 0.0
    %1288 = vmatpush1.msra.mxu0 0.0
    %1289 = vmatprep.subr.mxu0 0.0
    %1290 = vmatpush1.msra.mxu0 0.0
    %1291 = vmatprep.subr.mxu0 0.0
    %1292 = vmatpush1.msra.mxu0 0.0
    %1293 = vmatprep.subr.mxu0 0.0
    %1294 = vmatpush1.msra.mxu0 0.0
    %1295 = vmatprep.subr.mxu0 0.0
    %1296 = vmatpush1.msra.mxu0 0.0
    %1297 = vmatprep.subr.mxu0 0.0
    %1298 = vmatpush1.msra.mxu0 0.0
    %1299 = vmatprep.subr.mxu0 0.0
    %1300 = vmatpush1.msra.mxu0 0.0
    %1301 = vmatprep.subr.mxu0 0.0
    %1302 = vmatpush1.msra.mxu0 0.0
    %1303 = vmatprep.subr.mxu0 0.0
    %1304 = vmatpush1.msra.mxu0 0.0
    %1305 = vmatprep.subr.mxu0 0.0
    %1306 = vmatpush1.msra.mxu0 0.0
    %1307 = vmatprep.subr.mxu0 0.0
    %1308 = vmatpush1.msra.mxu0 0.0
    %1309 = vmatprep.subr.mxu0 0.0
    %1310 = vmatpush1.msra.mxu0 0.0
    %1311 = vmatprep.subr.mxu0 0.0
    %1312 = vmatpush1.msra.mxu0 0.0
    %1313 = vmatprep.subr.mxu0 0.0
    %1314 = vmatpush1.msra.mxu0 0.0
    %1315 = vmatprep.subr.mxu0 0.0
    %1316 = vmatpush1.msra.mxu0 0.0
    %1317 = vmatprep.subr.mxu0 0.0
    %1318 = vmatpush1.msra.mxu0 0.0
    %1319 = vmatprep.subr.mxu0 0.0
    %1320 = vmatpush1.msra.mxu0 0.0
    %1321 = vmatprep.subr.mxu0 0.0
    %1322 = vmatpush1.msra.mxu0 0.0
    %1323 = vmatprep.subr.mxu0 0.0
    %1324 = vmatpush1.msra.mxu0 0.0
    %1325 = vmatprep.subr.mxu0 0.0
    %1326 = vmatpush1.msra.mxu0 0.0
    %1327 = vmatprep.subr.mxu0 0.0
    %1328 = vmatpush1.msra.mxu0 0.0
    %1329 = vmatprep.subr.mxu0 0.0
    %1330 = vmatpush1.msra.mxu0 0.0
    %1331 = vmatprep.subr.mxu0 0.0
    %1332 = vmatpush1.msra.mxu0 0.0
    %1333 = vmatprep.subr.mxu0 0.0
    %1334 = vmatpush1.msra.mxu0 0.0
    %1335 = vmatprep.subr.mxu0 0.0
    %1336 = vmatpush1.msra.mxu0 0.0
    %1337 = vmatprep.subr.mxu0 0.0
    %1338 = vmatpush1.msra.mxu0 0.0
    %1339 = vmatprep.subr.mxu0 0.0
    %1340 = vmatpush1.msra.mxu0 0.0
    %1341 = vmatprep.subr.mxu0 0.0
    %1342 = vmatpush1.msra.mxu0 0.0
    %1343 = vmatprep.mubr.f32.mxu0 0.0
    %1344 = vmatmul.mubr.f32.gmra.mrb[0].mxu0 %v1262
    %v1345 = vpop.f32.mrb[0].mxu0
    %v1346 = vadd.f32 0.0, %v1345
    %v1347 = vpop.f32.mrb[0].mxu0
    %1348 = vmatprep.mubr.f32.mxu0 0.0
    %1349 = vmatmul.mubr.f32.gmra.mrb[0].mxu0 %v1264
    %v1350 = vpop.f32.mrb[0].mxu0
    %v1351 = vadd.f32 0.0, %v1350
    %v1352 = vpop.f32.mrb[0].mxu0
    %1353 = vmatprep.mubr.f32.mxu0 0.0
    %1354 = vmatmul.mubr.f32.gmra.mrb[0].mxu0 %v1266
    %v1355 = vpop.f32.mrb[0].mxu0
    %v1356 = vadd.f32 0.0, %v1355
    %v1357 = vpop.f32.mrb[0].mxu0
    %1358 = vmatprep.mubr.f32.mxu0 0.0
    %1359 = vmatmul.mubr.f32.gmra.mrb[0].mxu0 %v1268
    %v1360 = vpop.f32.mrb[0].mxu0
    %v1361 = vadd.f32 0.0, %v1360
    %v1362 = vpop.f32.mrb[0].mxu0
    %1363 = vmatprep.mubr.f32.mxu0 0.0
    %1364 = vmatmul.mubr.f32.gmra.mrb[0].mxu0 %v1270
    %v1365 = vpop.f32.mrb[0].mxu0
    %v1366 = vadd.f32 0.0, %v1365
    %v1367 = vpop.f32.mrb[0].mxu0
    %1368 = vmatprep.mubr.f32.mxu0 0.0
    %1369 = vmatmul.mubr.f32.gmra.mrb[0].mxu0 %v1272
    %v1370 = vpop.f32.mrb[0].mxu0
    %v1371 = vadd.f32 0.0, %v1370
    %v1372 = vpop.f32.mrb[0].mxu0
    %1373 = vmatprep.mubr.f32.mxu0 0.0
    %1374 = vmatmul.mubr.f32.gmra.mrb[0].mxu0 %v1274
    %v1375 = vpop.f32.mrb[0].mxu0
    %v1376 = vadd.f32 0.0, %v1375
    %v1377 = vpop.f32.mrb[0].mxu0
    %1378 = vdwg.mxu0
    %v1379 = vadd.f32 %v1240, %v1346
    %v1380 = vadd.f32 %v1241, %v1351
    %v1381 = vadd.f32 %v1242, %v1356
    %v1382 = vadd.f32 %v1243, %v1361
    %v1383 = vadd.f32 %v1244, %v1366
    %v1384 = vadd.f32 %v1245, %v1371
    %v1385 = vadd.f32 %v1246, %v1376
    %s1386 = scalar_lea.vmem [#allocation6], 32
    %v1387 = vld [vmem:[%s1386] sm:$0xf]
    %v1388 = vcombine.low %v149, %v173
    %v1389 = vcombine.low %v150, %v153
    %v1390 = vcombine.low %v174, %v156
    %v1391 = vsel %vm231, %v1388, 0
    %v1393 = vsel %vm231, %v1389, 0
    %v1395 = vsel %vm231, %v1390, 0
    %v1398 = vsel %vm246, %v1387, 0
    %1400 = vmatprep.subr.mxu0 0.0
    %1401 = vmatpush1.msra.mxu0 %v1398
    %1402 = vmatprep.subr.mxu0 0.0
    %1403 = vmatpush1.msra.mxu0 0.0
    %1404 = vmatprep.subr.mxu0 0.0
    %1405 = vmatpush1.msra.mxu0 0.0
    %1406 = vmatprep.subr.mxu0 0.0
    %1407 = vmatpush1.msra.mxu0 0.0
    %1408 = vmatprep.subr.mxu0 0.0
    %1409 = vmatpush1.msra.mxu0 0.0
    %1410 = vmatprep.subr.mxu0 0.0
    %1411 = vmatpush1.msra.mxu0 0.0
    %1412 = vmatprep.subr.mxu0 0.0
    %1413 = vmatpush1.msra.mxu0 0.0
    %1414 = vmatprep.subr.mxu0 0.0
    %1415 = vmatpush1.msra.mxu0 0.0
    %1416 = vmatprep.subr.mxu0 0.0
    %1417 = vmatpush1.msra.mxu0 0.0
    %1418 = vmatprep.subr.mxu0 0.0
    %1419 = vmatpush1.msra.mxu0 0.0
    %1420 = vmatprep.subr.mxu0 0.0
    %1421 = vmatpush1.msra.mxu0 0.0
    %1422 = vmatprep.subr.mxu0 0.0
    %1423 = vmatpush1.msra.mxu0 0.0
    %1424 = vmatprep.subr.mxu0 0.0
    %1425 = vmatpush1.msra.mxu0 0.0
    %1426 = vmatprep.subr.mxu0 0.0
    %1427 = vmatpush1.msra.mxu0 0.0
    %1428 = vmatprep.subr.mxu0 0.0
    %1429 = vmatpush1.msra.mxu0 0.0
    %1430 = vmatprep.subr.mxu0 0.0
    %1431 = vmatpush1.msra.mxu0 0.0
    %1432 = vmatprep.subr.mxu0 0.0
    %1433 = vmatpush1.msra.mxu0 0.0
    %1434 = vmatprep.subr.mxu0 0.0
    %1435 = vmatpush1.msra.mxu0 0.0
    %1436 = vmatprep.subr.mxu0 0.0
    %1437 = vmatpush1.msra.mxu0 0.0
    %1438 = vmatprep.subr.mxu0 0.0
    %1439 = vmatpush1.msra.mxu0 0.0
    %1440 = vmatprep.subr.mxu0 0.0
    %1441 = vmatpush1.msra.mxu0 0.0
    %1442 = vmatprep.subr.mxu0 0.0
    %1443 = vmatpush1.msra.mxu0 0.0
    %1444 = vmatprep.subr.mxu0 0.0
    %1445 = vmatpush1.msra.mxu0 0.0
    %1446 = vmatprep.subr.mxu0 0.0
    %1447 = vmatpush1.msra.mxu0 0.0
    %1448 = vmatprep.subr.mxu0 0.0
    %1449 = vmatpush1.msra.mxu0 0.0
    %1450 = vmatprep.subr.mxu0 0.0
    %1451 = vmatpush1.msra.mxu0 0.0
    %1452 = vmatprep.subr.mxu0 0.0
    %1453 = vmatpush1.msra.mxu0 0.0
    %1454 = vmatprep.subr.mxu0 0.0
    %1455 = vmatpush1.msra.mxu0 0.0
    %1456 = vmatprep.subr.mxu0 0.0
    %1457 = vmatpush1.msra.mxu0 0.0
    %1458 = vmatprep.subr.mxu0 0.0
    %1459 = vmatpush1.msra.mxu0 0.0
    %1460 = vmatprep.subr.mxu0 0.0
    %1461 = vmatpush1.msra.mxu0 0.0
    %1462 = vmatprep.subr.mxu0 0.0
    %1463 = vmatpush1.msra.mxu0 0.0
    %1464 = vmatprep.mubr.f32.mxu0 0.0
    %1465 = vmatmul.mubr.f32.gmra.mrb[0].mxu0 %v359
    %v1466 = vpop.f32.mrb[0].mxu0
    %v1467 = vadd.f32 0.0, %v1466
    %v1468 = vpop.f32.mrb[0].mxu0
    %1469 = vmatprep.mubr.f32.mxu0 0.0
    %1470 = vmatmul.mubr.f32.gmra.mrb[0].mxu0 %v361
    %v1471 = vpop.f32.mrb[0].mxu0
    %v1472 = vadd.f32 0.0, %v1471
    %v1473 = vpop.f32.mrb[0].mxu0
    %1474 = vmatprep.mubr.f32.mxu0 0.0
    %1475 = vmatmul.mubr.f32.gmra.mrb[0].mxu0 %v1391
    %v1476 = vpop.f32.mrb[0].mxu0
    %v1477 = vadd.f32 0.0, %v1476
    %v1478 = vpop.f32.mrb[0].mxu0
    %1479 = vmatprep.mubr.f32.mxu0 0.0
    %1480 = vmatmul.mubr.f32.gmra.mrb[0].mxu0 %v1393
    %v1481 = vpop.f32.mrb[0].mxu0
    %v1482 = vadd.f32 0.0, %v1481
    %v1483 = vpop.f32.mrb[0].mxu0
    %1484 = vmatprep.mubr.f32.mxu0 0.0
    %1485 = vmatmul.mubr.f32.gmra.mrb[0].mxu0 %v367
    %v1486 = vpop.f32.mrb[0].mxu0
    %v1487 = vadd.f32 0.0, %v1486
    %v1488 = vpop.f32.mrb[0].mxu0
    %1489 = vmatprep.mubr.f32.mxu0 0.0
    %1490 = vmatmul.mubr.f32.gmra.mrb[0].mxu0 %v369
    %v1491 = vpop.f32.mrb[0].mxu0
    %v1492 = vadd.f32 0.0, %v1491
    %v1493 = vpop.f32.mrb[0].mxu0
    %1494 = vmatprep.mubr.f32.mxu0 0.0
    %1495 = vmatmul.mubr.f32.gmra.mrb[0].mxu0 %v1395
    %v1496 = vpop.f32.mrb[0].mxu0
    %v1497 = vadd.f32 0.0, %v1496
    %v1498 = vpop.f32.mrb[0].mxu0
    %1499 = vdwg.mxu0
    %v1500 = vadd.f32 %v1379, %v1467
    %v1501 = vadd.f32 %v1380, %v1472
    %v1502 = vadd.f32 %v1381, %v1477
    %v1503 = vadd.f32 %v1382, %v1482
    %v1504 = vadd.f32 %v1383, %v1487
    %v1505 = vadd.f32 %v1384, %v1492
    %v1506 = vadd.f32 %v1385, %v1497
    %v1507 = vcombine.high %v150, %v150
    %v1508 = vcombine.high %v156, %v156
    %v1509 = vrot.slane %v970, 4
    %v1510 = vrot.slane %v1507, 5
    %v1511 = vsel %vm177, %v1509, %v1510
    %v1512 = vrot.slane %v973, 4
    %v1513 = vrot.slane %v1508, 5
    %v1514 = vsel %vm177, %v1512, %v1513
    %s1515 = scalar_lea.vmem [#allocation6], 36
    %v1516 = vld [vmem:[%s1515] sm:$0xf]
    %v1517 = vcombine.low %v199, %v971
    %v1518 = vcombine.low %v1511, %v209
    %v1519 = vcombine.low %v974, %v1514
    %v1520 = vsel %vm231, %v1517, 0
    %v1522 = vsel %vm231, %v1518, 0
    %v1524 = vsel %vm231, %v1519, 0
    %v1527 = vsel %vm246, %v1516, 0
    %1529 = vmatprep.subr.mxu0 0.0
    %1530 = vmatpush1.msra.mxu0 %v1527
    %1531 = vmatprep.subr.mxu0 0.0
    %1532 = vmatpush1.msra.mxu0 0.0
    %1533 = vmatprep.subr.mxu0 0.0
    %1534 = vmatpush1.msra.mxu0 0.0
    %1535 = vmatprep.subr.mxu0 0.0
    %1536 = vmatpush1.msra.mxu0 0.0
    %1537 = vmatprep.subr.mxu0 0.0
    %1538 = vmatpush1.msra.mxu0 0.0
    %1539 = vmatprep.subr.mxu0 0.0
    %1540 = vmatpush1.msra.mxu0 0.0
    %1541 = vmatprep.subr.mxu0 0.0
    %1542 = vmatpush1.msra.mxu0 0.0
    %1543 = vmatprep.subr.mxu0 0.0
    %1544 = vmatpush1.msra.mxu0 0.0
    %1545 = vmatprep.subr.mxu0 0.0
    %1546 = vmatpush1.msra.mxu0 0.0
    %1547 = vmatprep.subr.mxu0 0.0
    %1548 = vmatpush1.msra.mxu0 0.0
    %1549 = vmatprep.subr.mxu0 0.0
    %1550 = vmatpush1.msra.mxu0 0.0
    %1551 = vmatprep.subr.mxu0 0.0
    %1552 = vmatpush1.msra.mxu0 0.0
    %1553 = vmatprep.subr.mxu0 0.0
    %1554 = vmatpush1.msra.mxu0 0.0
    %1555 = vmatprep.subr.mxu0 0.0
    %1556 = vmatpush1.msra.mxu0 0.0
    %1557 = vmatprep.subr.mxu0 0.0
    %1558 = vmatpush1.msra.mxu0 0.0
    %1559 = vmatprep.subr.mxu0 0.0
    %1560 = vmatpush1.msra.mxu0 0.0
    %1561 = vmatprep.subr.mxu0 0.0
    %1562 = vmatpush1.msra.mxu0 0.0
    %1563 = vmatprep.subr.mxu0 0.0
    %1564 = vmatpush1.msra.mxu0 0.0
    %1565 = vmatprep.subr.mxu0 0.0
    %1566 = vmatpush1.msra.mxu0 0.0
    %1567 = vmatprep.subr.mxu0 0.0
    %1568 = vmatpush1.msra.mxu0 0.0
    %1569 = vmatprep.subr.mxu0 0.0
    %1570 = vmatpush1.msra.mxu0 0.0
    %1571 = vmatprep.subr.mxu0 0.0
    %1572 = vmatpush1.msra.mxu0 0.0
    %1573 = vmatprep.subr.mxu0 0.0
    %1574 = vmatpush1.msra.mxu0 0.0
    %1575 = vmatprep.subr.mxu0 0.0
    %1576 = vmatpush1.msra.mxu0 0.0
    %1577 = vmatprep.subr.mxu0 0.0
    %1578 = vmatpush1.msra.mxu0 0.0
    %1579 = vmatprep.subr.mxu0 0.0
    %1580 = vmatpush1.msra.mxu0 0.0
    %1581 = vmatprep.subr.mxu0 0.0
    %1582 = vmatpush1.msra.mxu0 0.0
    %1583 = vmatprep.subr.mxu0 0.0
    %1584 = vmatpush1.msra.mxu0 0.0
    %1585 = vmatprep.subr.mxu0 0.0
    %1586 = vmatpush1.msra.mxu0 0.0
    %1587 = vmatprep.subr.mxu0 0.0
    %1588 = vmatpush1.msra.mxu0 0.0
    %1589 = vmatprep.subr.mxu0 0.0
    %1590 = vmatpush1.msra.mxu0 0.0
    %1591 = vmatprep.subr.mxu0 0.0
    %1592 = vmatpush1.msra.mxu0 0.0
    %1593 = vmatprep.mubr.f32.mxu0 0.0
    %1594 = vmatmul.mubr.f32.gmra.mrb[0].mxu0 %v234
    %v1595 = vpop.f32.mrb[0].mxu0
    %v1596 = vadd.f32 0.0, %v1595
    %v1597 = vpop.f32.mrb[0].mxu0
    %1598 = vmatprep.mubr.f32.mxu0 0.0
    %1599 = vmatmul.mubr.f32.gmra.mrb[0].mxu0 %v236
    %v1600 = vpop.f32.mrb[0].mxu0
    %v1601 = vadd.f32 0.0, %v1600
    %v1602 = vpop.f32.mrb[0].mxu0
    %1603 = vmatprep.mubr.f32.mxu0 0.0
    %1604 = vmatmul.mubr.f32.gmra.mrb[0].mxu0 %v1520
    %v1605 = vpop.f32.mrb[0].mxu0
    %v1606 = vadd.f32 0.0, %v1605
    %v1607 = vpop.f32.mrb[0].mxu0
    %1608 = vmatprep.mubr.f32.mxu0 0.0
    %1609 = vmatmul.mubr.f32.gmra.mrb[0].mxu0 %v1522
    %v1610 = vpop.f32.mrb[0].mxu0
    %v1611 = vadd.f32 0.0, %v1610
    %v1612 = vpop.f32.mrb[0].mxu0
    %1613 = vmatprep.mubr.f32.mxu0 0.0
    %1614 = vmatmul.mubr.f32.gmra.mrb[0].mxu0 %v242
    %v1615 = vpop.f32.mrb[0].mxu0
    %v1616 = vadd.f32 0.0, %v1615
    %v1617 = vpop.f32.mrb[0].mxu0
    %1618 = vmatprep.mubr.f32.mxu0 0.0
    %1619 = vmatmul.mubr.f32.gmra.mrb[0].mxu0 %v244
    %v1620 = vpop.f32.mrb[0].mxu0
    %v1621 = vadd.f32 0.0, %v1620
    %v1622 = vpop.f32.mrb[0].mxu0
    %1623 = vmatprep.mubr.f32.mxu0 0.0
    %1624 = vmatmul.mubr.f32.gmra.mrb[0].mxu0 %v1524
    %v1625 = vpop.f32.mrb[0].mxu0
    %v1626 = vadd.f32 0.0, %v1625
    %v1627 = vpop.f32.mrb[0].mxu0
    %1628 = vdwg.mxu0
    %v1629 = vadd.f32 %v1500, %v1596
    %v1630 = vadd.f32 %v1501, %v1601
    %v1631 = vadd.f32 %v1502, %v1606
    %v1632 = vadd.f32 %v1503, %v1611
    %v1633 = vadd.f32 %v1504, %v1616
    %v1634 = vadd.f32 %v1505, %v1621
    %v1635 = vadd.f32 %v1506, %v1626
    %v1636 = vrot.slane %v1109, 4
    %v1637 = vrot.slane %v1507, 6
    %v1638 = vsel %vm476, %v1636, %v1637
    %v1639 = vrot.slane %v1112, 4
    %v1640 = vrot.slane %v1508, 6
    %v1641 = vsel %vm476, %v1639, %v1640
    %s1642 = scalar_lea.vmem [#allocation6], 40
    %v1643 = vld [vmem:[%s1642] sm:$0xf]
    %v1644 = vcombine.low %v498, %v1110
    %v1645 = vcombine.low %v1638, %v508
    %v1646 = vcombine.low %v1113, %v1641
    %v1647 = vsel %vm231, %v1644, 0
    %v1649 = vsel %vm231, %v1645, 0
    %v1651 = vsel %vm231, %v1646, 0
    %v1654 = vsel %vm246, %v1643, 0
    %1656 = vmatprep.subr.mxu0 0.0
    %1657 = vmatpush1.msra.mxu0 %v1654
    %1658 = vmatprep.subr.mxu0 0.0
    %1659 = vmatpush1.msra.mxu0 0.0
    %1660 = vmatprep.subr.mxu0 0.0
    %1661 = vmatpush1.msra.mxu0 0.0
    %1662 = vmatprep.subr.mxu0 0.0
    %1663 = vmatpush1.msra.mxu0 0.0
    %1664 = vmatprep.subr.mxu0 0.0
    %1665 = vmatpush1.msra.mxu0 0.0
    %1666 = vmatprep.subr.mxu0 0.0
    %1667 = vmatpush1.msra.mxu0 0.0
    %1668 = vmatprep.subr.mxu0 0.0
    %1669 = vmatpush1.msra.mxu0 0.0
    %1670 = vmatprep.subr.mxu0 0.0
    %1671 = vmatpush1.msra.mxu0 0.0
    %1672 = vmatprep.subr.mxu0 0.0
    %1673 = vmatpush1.msra.mxu0 0.0
    %1674 = vmatprep.subr.mxu0 0.0
    %1675 = vmatpush1.msra.mxu0 0.0
    %1676 = vmatprep.subr.mxu0 0.0
    %1677 = vmatpush1.msra.mxu0 0.0
    %1678 = vmatprep.subr.mxu0 0.0
    %1679 = vmatpush1.msra.mxu0 0.0
    %1680 = vmatprep.subr.mxu0 0.0
    %1681 = vmatpush1.msra.mxu0 0.0
    %1682 = vmatprep.subr.mxu0 0.0
    %1683 = vmatpush1.msra.mxu0 0.0
    %1684 = vmatprep.subr.mxu0 0.0
    %1685 = vmatpush1.msra.mxu0 0.0
    %1686 = vmatprep.subr.mxu0 0.0
    %1687 = vmatpush1.msra.mxu0 0.0
    %1688 = vmatprep.subr.mxu0 0.0
    %1689 = vmatpush1.msra.mxu0 0.0
    %1690 = vmatprep.subr.mxu0 0.0
    %1691 = vmatpush1.msra.mxu0 0.0
    %1692 = vmatprep.subr.mxu0 0.0
    %1693 = vmatpush1.msra.mxu0 0.0
    %1694 = vmatprep.subr.mxu0 0.0
    %1695 = vmatpush1.msra.mxu0 0.0
    %1696 = vmatprep.subr.mxu0 0.0
    %1697 = vmatpush1.msra.mxu0 0.0
    %1698 = vmatprep.subr.mxu0 0.0
    %1699 = vmatpush1.msra.mxu0 0.0
    %1700 = vmatprep.subr.mxu0 0.0
    %1701 = vmatpush1.msra.mxu0 0.0
    %1702 = vmatprep.subr.mxu0 0.0
    %1703 = vmatpush1.msra.mxu0 0.0
    %1704 = vmatprep.subr.mxu0 0.0
    %1705 = vmatpush1.msra.mxu0 0.0
    %1706 = vmatprep.subr.mxu0 0.0
    %1707 = vmatpush1.msra.mxu0 0.0
    %1708 = vmatprep.subr.mxu0 0.0
    %1709 = vmatpush1.msra.mxu0 0.0
    %1710 = vmatprep.subr.mxu0 0.0
    %1711 = vmatpush1.msra.mxu0 0.0
    %1712 = vmatprep.subr.mxu0 0.0
    %1713 = vmatpush1.msra.mxu0 0.0
    %1714 = vmatprep.subr.mxu0 0.0
    %1715 = vmatpush1.msra.mxu0 0.0
    %1716 = vmatprep.subr.mxu0 0.0
    %1717 = vmatpush1.msra.mxu0 0.0
    %1718 = vmatprep.subr.mxu0 0.0
    %1719 = vmatpush1.msra.mxu0 0.0
    %1720 = vmatprep.mubr.f32.mxu0 0.0
    %1721 = vmatmul.mubr.f32.gmra.mrb[0].mxu0 %v532
    %v1722 = vpop.f32.mrb[0].mxu0
    %v1723 = vadd.f32 0.0, %v1722
    %v1724 = vpop.f32.mrb[0].mxu0
    %1725 = vmatprep.mubr.f32.mxu0 0.0
    %1726 = vmatmul.mubr.f32.gmra.mrb[0].mxu0 %v534
    %v1727 = vpop.f32.mrb[0].mxu0
    %v1728 = vadd.f32 0.0, %v1727
    %v1729 = vpop.f32.mrb[0].mxu0
    %1730 = vmatprep.mubr.f32.mxu0 0.0
    %1731 = vmatmul.mubr.f32.gmra.mrb[0].mxu0 %v1647
    %v1732 = vpop.f32.mrb[0].mxu0
    %v1733 = vadd.f32 0.0, %v1732
    %v1734 = vpop.f32.mrb[0].mxu0
    %1735 = vmatprep.mubr.f32.mxu0 0.0
    %1736 = vmatmul.mubr.f32.gmra.mrb[0].mxu0 %v1649
    %v1737 = vpop.f32.mrb[0].mxu0
    %v1738 = vadd.f32 0.0, %v1737
    %v1739 = vpop.f32.mrb[0].mxu0
    %1740 = vmatprep.mubr.f32.mxu0 0.0
    %1741 = vmatmul.mubr.f32.gmra.mrb[0].mxu0 %v540
    %v1742 = vpop.f32.mrb[0].mxu0
    %v1743 = vadd.f32 0.0, %v1742
    %v1744 = vpop.f32.mrb[0].mxu0
    %1745 = vmatprep.mubr.f32.mxu0 0.0
    %1746 = vmatmul.mubr.f32.gmra.mrb[0].mxu0 %v542
    %v1747 = vpop.f32.mrb[0].mxu0
    %v1748 = vadd.f32 0.0, %v1747
    %v1749 = vpop.f32.mrb[0].mxu0
    %1750 = vmatprep.mubr.f32.mxu0 0.0
    %1751 = vmatmul.mubr.f32.gmra.mrb[0].mxu0 %v1651
    %v1752 = vpop.f32.mrb[0].mxu0
    %v1753 = vadd.f32 0.0, %v1752
    %v1754 = vpop.f32.mrb[0].mxu0
    %1755 = vdwg.mxu0
    %v1756 = vadd.f32 %v1629, %v1723
    %v1757 = vadd.f32 %v1630, %v1728
    %v1758 = vadd.f32 %v1631, %v1733
    %v1759 = vadd.f32 %v1632, %v1738
    %v1760 = vadd.f32 %v1633, %v1743
    %v1761 = vadd.f32 %v1634, %v1748
    %v1762 = vadd.f32 %v1635, %v1753
    %v1763 = vrot.slane %v1248, 4
    %v1764 = vrot.slane %v1507, 7
    %v1765 = vsel %vm656, %v1763, %v1764
    %v1766 = vrot.slane %v1251, 4
    %v1767 = vrot.slane %v1508, 7
    %v1768 = vsel %vm656, %v1766, %v1767
    %s1769 = scalar_lea.vmem [#allocation6], 44
    %v1770 = vld [vmem:[%s1769] sm:$0xf]
    %v1771 = vcombine.low %v678, %v1249
    %v1772 = vcombine.low %v1765, %v688
    %v1773 = vcombine.low %v1252, %v1768
    %v1774 = vsel %vm231, %v1771, 0
    %v1776 = vsel %vm231, %v1772, 0
    %v1778 = vsel %vm231, %v1773, 0
    %v1781 = vsel %vm246, %v1770, 0
    %1783 = vmatprep.subr.mxu0 0.0
    %1784 = vmatpush1.msra.mxu0 %v1781
    %1785 = vmatprep.subr.mxu0 0.0
    %1786 = vmatpush1.msra.mxu0 0.0
    %1787 = vmatprep.subr.mxu0 0.0
    %1788 = vmatpush1.msra.mxu0 0.0
    %1789 = vmatprep.subr.mxu0 0.0
    %1790 = vmatpush1.msra.mxu0 0.0
    %1791 = vmatprep.subr.mxu0 0.0
    %1792 = vmatpush1.msra.mxu0 0.0
    %1793 = vmatprep.subr.mxu0 0.0
    %1794 = vmatpush1.msra.mxu0 0.0
    %1795 = vmatprep.subr.mxu0 0.0
    %1796 = vmatpush1.msra.mxu0 0.0
    %1797 = vmatprep.subr.mxu0 0.0
    %1798 = vmatpush1.msra.mxu0 0.0
    %1799 = vmatprep.subr.mxu0 0.0
    %1800 = vmatpush1.msra.mxu0 0.0
    %1801 = vmatprep.subr.mxu0 0.0
    %1802 = vmatpush1.msra.mxu0 0.0
    %1803 = vmatprep.subr.mxu0 0.0
    %1804 = vmatpush1.msra.mxu0 0.0
    %1805 = vmatprep.subr.mxu0 0.0
    %1806 = vmatpush1.msra.mxu0 0.0
    %1807 = vmatprep.subr.mxu0 0.0
    %1808 = vmatpush1.msra.mxu0 0.0
    %1809 = vmatprep.subr.mxu0 0.0
    %1810 = vmatpush1.msra.mxu0 0.0
    %1811 = vmatprep.subr.mxu0 0.0
    %1812 = vmatpush1.msra.mxu0 0.0
    %1813 = vmatprep.subr.mxu0 0.0
    %1814 = vmatpush1.msra.mxu0 0.0
    %1815 = vmatprep.subr.mxu0 0.0
    %1816 = vmatpush1.msra.mxu0 0.0
    %1817 = vmatprep.subr.mxu0 0.0
    %1818 = vmatpush1.msra.mxu0 0.0
    %1819 = vmatprep.subr.mxu0 0.0
    %1820 = vmatpush1.msra.mxu0 0.0
    %1821 = vmatprep.subr.mxu0 0.0
    %1822 = vmatpush1.msra.mxu0 0.0
    %1823 = vmatprep.subr.mxu0 0.0
    %1824 = vmatpush1.msra.mxu0 0.0
    %1825 = vmatprep.subr.mxu0 0.0
    %1826 = vmatpush1.msra.mxu0 0.0
    %1827 = vmatprep.subr.mxu0 0.0
    %1828 = vmatpush1.msra.mxu0 0.0
    %1829 = vmatprep.subr.mxu0 0.0
    %1830 = vmatpush1.msra.mxu0 0.0
    %1831 = vmatprep.subr.mxu0 0.0
    %1832 = vmatpush1.msra.mxu0 0.0
    %1833 = vmatprep.subr.mxu0 0.0
    %1834 = vmatpush1.msra.mxu0 0.0
    %1835 = vmatprep.subr.mxu0 0.0
    %1836 = vmatpush1.msra.mxu0 0.0
    %1837 = vmatprep.subr.mxu0 0.0
    %1838 = vmatpush1.msra.mxu0 0.0
    %1839 = vmatprep.subr.mxu0 0.0
    %1840 = vmatpush1.msra.mxu0 0.0
    %1841 = vmatprep.subr.mxu0 0.0
    %1842 = vmatpush1.msra.mxu0 0.0
    %1843 = vmatprep.subr.mxu0 0.0
    %1844 = vmatpush1.msra.mxu0 0.0
    %1845 = vmatprep.subr.mxu0 0.0
    %1846 = vmatpush1.msra.mxu0 0.0
    %1847 = vmatprep.mubr.f32.mxu0 0.0
    %1848 = vmatmul.mubr.f32.gmra.mrb[0].mxu0 %v712
    %v1849 = vpop.f32.mrb[0].mxu0
    %v1850 = vadd.f32 0.0, %v1849
    %v1851 = vpop.f32.mrb[0].mxu0
    %1852 = vmatprep.mubr.f32.mxu0 0.0
    %1853 = vmatmul.mubr.f32.gmra.mrb[0].mxu0 %v714
    %v1854 = vpop.f32.mrb[0].mxu0
    %v1855 = vadd.f32 0.0, %v1854
    %v1856 = vpop.f32.mrb[0].mxu0
    %1857 = vmatprep.mubr.f32.mxu0 0.0
    %1858 = vmatmul.mubr.f32.gmra.mrb[0].mxu0 %v1774
    %v1859 = vpop.f32.mrb[0].mxu0
    %v1860 = vadd.f32 0.0, %v1859
    %v1861 = vpop.f32.mrb[0].mxu0
    %1862 = vmatprep.mubr.f32.mxu0 0.0
    %1863 = vmatmul.mubr.f32.gmra.mrb[0].mxu0 %v1776
    %v1864 = vpop.f32.mrb[0].mxu0
    %v1865 = vadd.f32 0.0, %v1864
    %v1866 = vpop.f32.mrb[0].mxu0
    %1867 = vmatprep.mubr.f32.mxu0 0.0
    %1868 = vmatmul.mubr.f32.gmra.mrb[0].mxu0 %v720
    %v1869 = vpop.f32.mrb[0].mxu0
    %v1870 = vadd.f32 0.0, %v1869
    %v1871 = vpop.f32.mrb[0].mxu0
    %1872 = vmatprep.mubr.f32.mxu0 0.0
    %1873 = vmatmul.mubr.f32.gmra.mrb[0].mxu0 %v722
    %v1874 = vpop.f32.mrb[0].mxu0
    %v1875 = vadd.f32 0.0, %v1874
    %v1876 = vpop.f32.mrb[0].mxu0
    %1877 = vmatprep.mubr.f32.mxu0 0.0
    %1878 = vmatmul.mubr.f32.gmra.mrb[0].mxu0 %v1778
    %v1879 = vpop.f32.mrb[0].mxu0
    %v1880 = vadd.f32 0.0, %v1879
    %v1881 = vpop.f32.mrb[0].mxu0
    %1882 = vdwg.mxu0
    %v1883 = vadd.f32 %v1756, %v1850
    %v1884 = vadd.f32 %v1757, %v1855
    %v1885 = vadd.f32 %v1758, %v1860
    %v1886 = vadd.f32 %v1759, %v1865
    %v1887 = vadd.f32 %v1760, %v1870
    %v1888 = vadd.f32 %v1761, %v1875
    %v1889 = vadd.f32 %v1762, %v1880
    %s1890 = scalar_lea.vmem [#allocation6], 48
    %v1891 = vld [vmem:[%s1890] sm:$0xf]
    %v1892 = vcombine.low %v173, %v150
    %v1893 = vcombine.low %v1507, %v170
    %v1894 = vcombine.low %v156, %v1508
    %v1895 = vsel %vm231, %v1892, 0
    %v1897 = vsel %vm231, %v1893, 0
    %v1899 = vsel %vm231, %v1894, 0
    %v1902 = vsel %vm246, %v1891, 0
    %1904 = vmatprep.subr.mxu0 0.0
    %1905 = vmatpush1.msra.mxu0 %v1902
    %1906 = vmatprep.subr.mxu0 0.0
    %1907 = vmatpush1.msra.mxu0 0.0
    %1908 = vmatprep.subr.mxu0 0.0
    %1909 = vmatpush1.msra.mxu0 0.0
    %1910 = vmatprep.subr.mxu0 0.0
    %1911 = vmatpush1.msra.mxu0 0.0
    %1912 = vmatprep.subr.mxu0 0.0
    %1913 = vmatpush1.msra.mxu0 0.0
    %1914 = vmatprep.subr.mxu0 0.0
    %1915 = vmatpush1.msra.mxu0 0.0
    %1916 = vmatprep.subr.mxu0 0.0
    %1917 = vmatpush1.msra.mxu0 0.0
    %1918 = vmatprep.subr.mxu0 0.0
    %1919 = vmatpush1.msra.mxu0 0.0
    %1920 = vmatprep.subr.mxu0 0.0
    %1921 = vmatpush1.msra.mxu0 0.0
    %1922 = vmatprep.subr.mxu0 0.0
    %1923 = vmatpush1.msra.mxu0 0.0
    %1924 = vmatprep.subr.mxu0 0.0
    %1925 = vmatpush1.msra.mxu0 0.0
    %1926 = vmatprep.subr.mxu0 0.0
    %1927 = vmatpush1.msra.mxu0 0.0
    %1928 = vmatprep.subr.mxu0 0.0
    %1929 = vmatpush1.msra.mxu0 0.0
    %1930 = vmatprep.subr.mxu0 0.0
    %1931 = vmatpush1.msra.mxu0 0.0
    %1932 = vmatprep.subr.mxu0 0.0
    %1933 = vmatpush1.msra.mxu0 0.0
    %1934 = vmatprep.subr.mxu0 0.0
    %1935 = vmatpush1.msra.mxu0 0.0
    %1936 = vmatprep.subr.mxu0 0.0
    %1937 = vmatpush1.msra.mxu0 0.0
    %1938 = vmatprep.subr.mxu0 0.0
    %1939 = vmatpush1.msra.mxu0 0.0
    %1940 = vmatprep.subr.mxu0 0.0
    %1941 = vmatpush1.msra.mxu0 0.0
    %1942 = vmatprep.subr.mxu0 0.0
    %1943 = vmatpush1.msra.mxu0 0.0
    %1944 = vmatprep.subr.mxu0 0.0
    %1945 = vmatpush1.msra.mxu0 0.0
    %1946 = vmatprep.subr.mxu0 0.0
    %1947 = vmatpush1.msra.mxu0 0.0
    %1948 = vmatprep.subr.mxu0 0.0
    %1949 = vmatpush1.msra.mxu0 0.0
    %1950 = vmatprep.subr.mxu0 0.0
    %1951 = vmatpush1.msra.mxu0 0.0
    %1952 = vmatprep.subr.mxu0 0.0
    %1953 = vmatpush1.msra.mxu0 0.0
    %1954 = vmatprep.subr.mxu0 0.0
    %1955 = vmatpush1.msra.mxu0 0.0
    %1956 = vmatprep.subr.mxu0 0.0
    %1957 = vmatpush1.msra.mxu0 0.0
    %1958 = vmatprep.subr.mxu0 0.0
    %1959 = vmatpush1.msra.mxu0 0.0
    %1960 = vmatprep.subr.mxu0 0.0
    %1961 = vmatpush1.msra.mxu0 0.0
    %1962 = vmatprep.subr.mxu0 0.0
    %1963 = vmatpush1.msra.mxu0 0.0
    %1964 = vmatprep.subr.mxu0 0.0
    %1965 = vmatpush1.msra.mxu0 0.0
    %1966 = vmatprep.subr.mxu0 0.0
    %1967 = vmatpush1.msra.mxu0 0.0
    %1968 = vmatprep.mubr.f32.mxu0 0.0
    %1969 = vmatmul.mubr.f32.gmra.mrb[0].mxu0 %v845
    %v1970 = vpop.f32.mrb[0].mxu0
    %v1971 = vadd.f32 0.0, %v1970
    %v1972 = vpop.f32.mrb[0].mxu0
    %1973 = vmatprep.mubr.f32.mxu0 0.0
    %1974 = vmatmul.mubr.f32.gmra.mrb[0].mxu0 %v847
    %v1975 = vpop.f32.mrb[0].mxu0
    %v1976 = vadd.f32 0.0, %v1975
    %v1977 = vpop.f32.mrb[0].mxu0
    %1978 = vmatprep.mubr.f32.mxu0 0.0
    %1979 = vmatmul.mubr.f32.gmra.mrb[0].mxu0 %v1895
    %v1980 = vpop.f32.mrb[0].mxu0
    %v1981 = vadd.f32 0.0, %v1980
    %v1982 = vpop.f32.mrb[0].mxu0
    %1983 = vmatprep.mubr.f32.mxu0 0.0
    %1984 = vmatmul.mubr.f32.gmra.mrb[0].mxu0 %v1897
    %v1985 = vpop.f32.mrb[0].mxu0
    %v1986 = vadd.f32 0.0, %v1985
    %v1987 = vpop.f32.mrb[0].mxu0
    %1988 = vmatprep.mubr.f32.mxu0 0.0
    %1989 = vmatmul.mubr.f32.gmra.mrb[0].mxu0 %v853
    %v1990 = vpop.f32.mrb[0].mxu0
    %v1991 = vadd.f32 0.0, %v1990
    %v1992 = vpop.f32.mrb[0].mxu0
    %1993 = vmatprep.mubr.f32.mxu0 0.0
    %1994 = vmatmul.mubr.f32.gmra.mrb[0].mxu0 %v855
    %v1995 = vpop.f32.mrb[0].mxu0
    %v1996 = vadd.f32 0.0, %v1995
    %v1997 = vpop.f32.mrb[0].mxu0
    %1998 = vmatprep.mubr.f32.mxu0 0.0
    %1999 = vmatmul.mubr.f32.gmra.mrb[0].mxu0 %v1899
    %v2000 = vpop.f32.mrb[0].mxu0
    %v2001 = vadd.f32 0.0, %v2000
    %v2002 = vpop.f32.mrb[0].mxu0
    %2003 = vdwg.mxu0
    %v2004 = vadd.f32 %v1883, %v1971
    %v2005 = vadd.f32 %v1884, %v1976
    %v2006 = vadd.f32 %v1885, %v1981
    %v2007 = vadd.f32 %v1886, %v1986
    %v2008 = vadd.f32 %v1887, %v1991
    %v2009 = vadd.f32 %v1888, %v1996
    %v2010 = vadd.f32 %v1889, %v2001
    %v2013 = vrot.slane %v1510, 4
    %v2014 = vrot.slane %v151, 5
    %v2015 = vsel %vm177, %v2013, %v2014
    %v2016 = vrot.slane %v1513, 4
    %v2017 = vrot.slane %v157, 5
    %v2018 = vsel %vm177, %v2016, %v2017
    %s2019 = scalar_lea.vmem [#allocation6], 52
    %v2020 = vld [vmem:[%s2019] sm:$0xf]
    %v2021 = vcombine.low %v971, %v1511
    %v2022 = vcombine.low %v2015, %v212
    %v2023 = vcombine.low %v1514, %v2018
    %v2024 = vsel %vm231, %v2021, 0
    %v2026 = vsel %vm231, %v2022, 0
    %v2028 = vsel %vm231, %v2023, 0
    %v2031 = vsel %vm246, %v2020, 0
    %2033 = vmatprep.subr.mxu0 0.0
    %2034 = vmatpush1.msra.mxu0 %v2031
    %2035 = vmatprep.subr.mxu0 0.0
    %2036 = vmatpush1.msra.mxu0 0.0
    %2037 = vmatprep.subr.mxu0 0.0
    %2038 = vmatpush1.msra.mxu0 0.0
    %2039 = vmatprep.subr.mxu0 0.0
    %2040 = vmatpush1.msra.mxu0 0.0
    %2041 = vmatprep.subr.mxu0 0.0
    %2042 = vmatpush1.msra.mxu0 0.0
    %2043 = vmatprep.subr.mxu0 0.0
    %2044 = vmatpush1.msra.mxu0 0.0
    %2045 = vmatprep.subr.mxu0 0.0
    %2046 = vmatpush1.msra.mxu0 0.0
    %2047 = vmatprep.subr.mxu0 0.0
    %2048 = vmatpush1.msra.mxu0 0.0
    %2049 = vmatprep.subr.mxu0 0.0
    %2050 = vmatpush1.msra.mxu0 0.0
    %2051 = vmatprep.subr.mxu0 0.0
    %2052 = vmatpush1.msra.mxu0 0.0
    %2053 = vmatprep.subr.mxu0 0.0
    %2054 = vmatpush1.msra.mxu0 0.0
    %2055 = vmatprep.subr.mxu0 0.0
    %2056 = vmatpush1.msra.mxu0 0.0
    %2057 = vmatprep.subr.mxu0 0.0
    %2058 = vmatpush1.msra.mxu0 0.0
    %2059 = vmatprep.subr.mxu0 0.0
    %2060 = vmatpush1.msra.mxu0 0.0
    %2061 = vmatprep.subr.mxu0 0.0
    %2062 = vmatpush1.msra.mxu0 0.0
    %2063 = vmatprep.subr.mxu0 0.0
    %2064 = vmatpush1.msra.mxu0 0.0
    %2065 = vmatprep.subr.mxu0 0.0
    %2066 = vmatpush1.msra.mxu0 0.0
    %2067 = vmatprep.subr.mxu0 0.0
    %2068 = vmatpush1.msra.mxu0 0.0
    %2069 = vmatprep.subr.mxu0 0.0
    %2070 = vmatpush1.msra.mxu0 0.0
    %2071 = vmatprep.subr.mxu0 0.0
    %2072 = vmatpush1.msra.mxu0 0.0
    %2073 = vmatprep.subr.mxu0 0.0
    %2074 = vmatpush1.msra.mxu0 0.0
    %2075 = vmatprep.subr.mxu0 0.0
    %2076 = vmatpush1.msra.mxu0 0.0
    %2077 = vmatprep.subr.mxu0 0.0
    %2078 = vmatpush1.msra.mxu0 0.0
    %2079 = vmatprep.subr.mxu0 0.0
    %2080 = vmatpush1.msra.mxu0 0.0
    %2081 = vmatprep.subr.mxu0 0.0
    %2082 = vmatpush1.msra.mxu0 0.0
    %2083 = vmatprep.subr.mxu0 0.0
    %2084 = vmatpush1.msra.mxu0 0.0
    %2085 = vmatprep.subr.mxu0 0.0
    %2086 = vmatpush1.msra.mxu0 0.0
    %2087 = vmatprep.subr.mxu0 0.0
    %2088 = vmatpush1.msra.mxu0 0.0
    %2089 = vmatprep.subr.mxu0 0.0
    %2090 = vmatpush1.msra.mxu0 0.0
    %2091 = vmatprep.subr.mxu0 0.0
    %2092 = vmatpush1.msra.mxu0 0.0
    %2093 = vmatprep.subr.mxu0 0.0
    %2094 = vmatpush1.msra.mxu0 0.0
    %2095 = vmatprep.subr.mxu0 0.0
    %2096 = vmatpush1.msra.mxu0 0.0
    %2097 = vmatprep.mubr.f32.mxu0 0.0
    %2098 = vmatmul.mubr.f32.gmra.mrb[0].mxu0 %v986
    %v2099 = vpop.f32.mrb[0].mxu0
    %v2100 = vadd.f32 0.0, %v2099
    %v2101 = vpop.f32.mrb[0].mxu0
    %2102 = vmatprep.mubr.f32.mxu0 0.0
    %2103 = vmatmul.mubr.f32.gmra.mrb[0].mxu0 %v988
    %v2104 = vpop.f32.mrb[0].mxu0
    %v2105 = vadd.f32 0.0, %v2104
    %v2106 = vpop.f32.mrb[0].mxu0
    %2107 = vmatprep.mubr.f32.mxu0 0.0
    %2108 = vmatmul.mubr.f32.gmra.mrb[0].mxu0 %v2024
    %v2109 = vpop.f32.mrb[0].mxu0
    %v2110 = vadd.f32 0.0, %v2109
    %v2111 = vpop.f32.mrb[0].mxu0
    %2112 = vmatprep.mubr.f32.mxu0 0.0
    %2113 = vmatmul.mubr.f32.gmra.mrb[0].mxu0 %v2026
    %v2114 = vpop.f32.mrb[0].mxu0
    %v2115 = vadd.f32 0.0, %v2114
    %v2116 = vpop.f32.mrb[0].mxu0
    %2117 = vmatprep.mubr.f32.mxu0 0.0
    %2118 = vmatmul.mubr.f32.gmra.mrb[0].mxu0 %v994
    %v2119 = vpop.f32.mrb[0].mxu0
    %v2120 = vadd.f32 0.0, %v2119
    %v2121 = vpop.f32.mrb[0].mxu0
    %2122 = vmatprep.mubr.f32.mxu0 0.0
    %2123 = vmatmul.mubr.f32.gmra.mrb[0].mxu0 %v996
    %v2124 = vpop.f32.mrb[0].mxu0
    %v2125 = vadd.f32 0.0, %v2124
    %v2126 = vpop.f32.mrb[0].mxu0
    %2127 = vmatprep.mubr.f32.mxu0 0.0
    %2128 = vmatmul.mubr.f32.gmra.mrb[0].mxu0 %v2028
    %v2129 = vpop.f32.mrb[0].mxu0
    %v2130 = vadd.f32 0.0, %v2129
    %v2131 = vpop.f32.mrb[0].mxu0
    %2132 = vdwg.mxu0
    %v2133 = vadd.f32 %v2004, %v2100
    %v2134 = vadd.f32 %v2005, %v2105
    %v2135 = vadd.f32 %v2006, %v2110
    %v2136 = vadd.f32 %v2007, %v2115
    %v2137 = vadd.f32 %v2008, %v2120
    %v2138 = vadd.f32 %v2009, %v2125
    %v2139 = vadd.f32 %v2010, %v2130
    %v2140 = vrot.slane %v1637, 4
    %v2141 = vrot.slane %v151, 6
    %v2142 = vsel %vm476, %v2140, %v2141
    %v2143 = vrot.slane %v1640, 4
    %v2144 = vrot.slane %v157, 6
    %v2145 = vsel %vm476, %v2143, %v2144
    %s2146 = scalar_lea.vmem [#allocation6], 56
    %v2147 = vld [vmem:[%s2146] sm:$0xf]
    %v2148 = vcombine.low %v1110, %v1638
    %v2149 = vcombine.low %v2142, %v511
    %v2150 = vcombine.low %v1641, %v2145
    %v2151 = vsel %vm231, %v2148, 0
    %v2153 = vsel %vm231, %v2149, 0
    %v2155 = vsel %vm231, %v2150, 0
    %v2158 = vsel %vm246, %v2147, 0
    %2160 = vmatprep.subr.mxu0 0.0
    %2161 = vmatpush1.msra.mxu0 %v2158
    %2162 = vmatprep.subr.mxu0 0.0
    %2163 = vmatpush1.msra.mxu0 0.0
    %2164 = vmatprep.subr.mxu0 0.0
    %2165 = vmatpush1.msra.mxu0 0.0
    %2166 = vmatprep.subr.mxu0 0.0
    %2167 = vmatpush1.msra.mxu0 0.0
    %2168 = vmatprep.subr.mxu0 0.0
    %2169 = vmatpush1.msra.mxu0 0.0
    %2170 = vmatprep.subr.mxu0 0.0
    %2171 = vmatpush1.msra.mxu0 0.0
    %2172 = vmatprep.subr.mxu0 0.0
    %2173 = vmatpush1.msra.mxu0 0.0
    %2174 = vmatprep.subr.mxu0 0.0
    %2175 = vmatpush1.msra.mxu0 0.0
    %2176 = vmatprep.subr.mxu0 0.0
    %2177 = vmatpush1.msra.mxu0 0.0
    %2178 = vmatprep.subr.mxu0 0.0
    %2179 = vmatpush1.msra.mxu0 0.0
    %2180 = vmatprep.subr.mxu0 0.0
    %2181 = vmatpush1.msra.mxu0 0.0
    %2182 = vmatprep.subr.mxu0 0.0
    %2183 = vmatpush1.msra.mxu0 0.0
    %2184 = vmatprep.subr.mxu0 0.0
    %2185 = vmatpush1.msra.mxu0 0.0
    %2186 = vmatprep.subr.mxu0 0.0
    %2187 = vmatpush1.msra.mxu0 0.0
    %2188 = vmatprep.subr.mxu0 0.0
    %2189 = vmatpush1.msra.mxu0 0.0
    %2190 = vmatprep.subr.mxu0 0.0
    %2191 = vmatpush1.msra.mxu0 0.0
    %2192 = vmatprep.subr.mxu0 0.0
    %2193 = vmatpush1.msra.mxu0 0.0
    %2194 = vmatprep.subr.mxu0 0.0
    %2195 = vmatpush1.msra.mxu0 0.0
    %2196 = vmatprep.subr.mxu0 0.0
    %2197 = vmatpush1.msra.mxu0 0.0
    %2198 = vmatprep.subr.mxu0 0.0
    %2199 = vmatpush1.msra.mxu0 0.0
    %2200 = vmatprep.subr.mxu0 0.0
    %2201 = vmatpush1.msra.mxu0 0.0
    %2202 = vmatprep.subr.mxu0 0.0
    %2203 = vmatpush1.msra.mxu0 0.0
    %2204 = vmatprep.subr.mxu0 0.0
    %2205 = vmatpush1.msra.mxu0 0.0
    %2206 = vmatprep.subr.mxu0 0.0
    %2207 = vmatpush1.msra.mxu0 0.0
    %2208 = vmatprep.subr.mxu0 0.0
    %2209 = vmatpush1.msra.mxu0 0.0
    %2210 = vmatprep.subr.mxu0 0.0
    %2211 = vmatpush1.msra.mxu0 0.0
    %2212 = vmatprep.subr.mxu0 0.0
    %2213 = vmatpush1.msra.mxu0 0.0
    %2214 = vmatprep.subr.mxu0 0.0
    %2215 = vmatpush1.msra.mxu0 0.0
    %2216 = vmatprep.subr.mxu0 0.0
    %2217 = vmatpush1.msra.mxu0 0.0
    %2218 = vmatprep.subr.mxu0 0.0
    %2219 = vmatpush1.msra.mxu0 0.0
    %2220 = vmatprep.subr.mxu0 0.0
    %2221 = vmatpush1.msra.mxu0 0.0
    %2222 = vmatprep.subr.mxu0 0.0
    %2223 = vmatpush1.msra.mxu0 0.0
    %2224 = vmatprep.mubr.f32.mxu0 0.0
    %2225 = vmatmul.mubr.f32.gmra.mrb[0].mxu0 %v1125
    %v2226 = vpop.f32.mrb[0].mxu0
    %v2227 = vadd.f32 0.0, %v2226
    %v2228 = vpop.f32.mrb[0].mxu0
    %2229 = vmatprep.mubr.f32.mxu0 0.0
    %2230 = vmatmul.mubr.f32.gmra.mrb[0].mxu0 %v1127
    %v2231 = vpop.f32.mrb[0].mxu0
    %v2232 = vadd.f32 0.0, %v2231
    %v2233 = vpop.f32.mrb[0].mxu0
    %2234 = vmatprep.mubr.f32.mxu0 0.0
    %2235 = vmatmul.mubr.f32.gmra.mrb[0].mxu0 %v2151
    %v2236 = vpop.f32.mrb[0].mxu0
    %v2237 = vadd.f32 0.0, %v2236
    %v2238 = vpop.f32.mrb[0].mxu0
    %2239 = vmatprep.mubr.f32.mxu0 0.0
    %2240 = vmatmul.mubr.f32.gmra.mrb[0].mxu0 %v2153
    %v2241 = vpop.f32.mrb[0].mxu0
    %v2242 = vadd.f32 0.0, %v2241
    %v2243 = vpop.f32.mrb[0].mxu0
    %2244 = vmatprep.mubr.f32.mxu0 0.0
    %2245 = vmatmul.mubr.f32.gmra.mrb[0].mxu0 %v1133
    %v2246 = vpop.f32.mrb[0].mxu0
    %v2247 = vadd.f32 0.0, %v2246
    %v2248 = vpop.f32.mrb[0].mxu0
    %2249 = vmatprep.mubr.f32.mxu0 0.0
    %2250 = vmatmul.mubr.f32.gmra.mrb[0].mxu0 %v1135
    %v2251 = vpop.f32.mrb[0].mxu0
    %v2252 = vadd.f32 0.0, %v2251
    %v2253 = vpop.f32.mrb[0].mxu0
    %2254 = vmatprep.mubr.f32.mxu0 0.0
    %2255 = vmatmul.mubr.f32.gmra.mrb[0].mxu0 %v2155
    %v2256 = vpop.f32.mrb[0].mxu0
    %v2257 = vadd.f32 0.0, %v2256
    %v2258 = vpop.f32.mrb[0].mxu0
    %2259 = vdwg.mxu0
    %v2260 = vadd.f32 %v2133, %v2227
    %v2261 = vadd.f32 %v2134, %v2232
    %v2262 = vadd.f32 %v2135, %v2237
    %v2263 = vadd.f32 %v2136, %v2242
    %v2264 = vadd.f32 %v2137, %v2247
    %v2265 = vadd.f32 %v2138, %v2252
    %v2266 = vadd.f32 %v2139, %v2257
    %v2267 = vrot.slane %v1764, 4
    %v2268 = vrot.slane %v151, 7
    %v2269 = vsel %vm656, %v2267, %v2268
    %v2270 = vrot.slane %v1767, 4
    %v2271 = vrot.slane %v157, 7
    %v2272 = vsel %vm656, %v2270, %v2271
    %s2273 = scalar_lea.vmem [#allocation6], 60
    %v2274 = vld [vmem:[%s2273] sm:$0xf]
    %v2275 = vcombine.low %v1249, %v1765
    %v2276 = vcombine.low %v2269, %v691
    %v2277 = vcombine.low %v1768, %v2272
    %v2278 = vsel %vm231, %v2275, 0
    %v2280 = vsel %vm231, %v2276, 0
    %v2282 = vsel %vm231, %v2277, 0
    %v2285 = vsel %vm246, %v2274, 0
    %2287 = vmatprep.subr.mxu0 0.0
    %2288 = vmatpush1.msra.mxu0 %v2285
    %2289 = vmatprep.subr.mxu0 0.0
    %2290 = vmatpush1.msra.mxu0 0.0
    %2291 = vmatprep.subr.mxu0 0.0
    %2292 = vmatpush1.msra.mxu0 0.0
    %2293 = vmatprep.subr.mxu0 0.0
    %2294 = vmatpush1.msra.mxu0 0.0
    %2295 = vmatprep.subr.mxu0 0.0
    %2296 = vmatpush1.msra.mxu0 0.0
    %2297 = vmatprep.subr.mxu0 0.0
    %2298 = vmatpush1.msra.mxu0 0.0
    %2299 = vmatprep.subr.mxu0 0.0
    %2300 = vmatpush1.msra.mxu0 0.0
    %2301 = vmatprep.subr.mxu0 0.0
    %2302 = vmatpush1.msra.mxu0 0.0
    %2303 = vmatprep.subr.mxu0 0.0
    %2304 = vmatpush1.msra.mxu0 0.0
    %2305 = vmatprep.subr.mxu0 0.0
    %2306 = vmatpush1.msra.mxu0 0.0
    %2307 = vmatprep.subr.mxu0 0.0
    %2308 = vmatpush1.msra.mxu0 0.0
    %2309 = vmatprep.subr.mxu0 0.0
    %2310 = vmatpush1.msra.mxu0 0.0
    %2311 = vmatprep.subr.mxu0 0.0
    %2312 = vmatpush1.msra.mxu0 0.0
    %2313 = vmatprep.subr.mxu0 0.0
    %2314 = vmatpush1.msra.mxu0 0.0
    %2315 = vmatprep.subr.mxu0 0.0
    %2316 = vmatpush1.msra.mxu0 0.0
    %2317 = vmatprep.subr.mxu0 0.0
    %2318 = vmatpush1.msra.mxu0 0.0
    %2319 = vmatprep.subr.mxu0 0.0
    %2320 = vmatpush1.msra.mxu0 0.0
    %2321 = vmatprep.subr.mxu0 0.0
    %2322 = vmatpush1.msra.mxu0 0.0
    %2323 = vmatprep.subr.mxu0 0.0
    %2324 = vmatpush1.msra.mxu0 0.0
    %2325 = vmatprep.subr.mxu0 0.0
    %2326 = vmatpush1.msra.mxu0 0.0
    %2327 = vmatprep.subr.mxu0 0.0
    %2328 = vmatpush1.msra.mxu0 0.0
    %2329 = vmatprep.subr.mxu0 0.0
    %2330 = vmatpush1.msra.mxu0 0.0
    %2331 = vmatprep.subr.mxu0 0.0
    %2332 = vmatpush1.msra.mxu0 0.0
    %2333 = vmatprep.subr.mxu0 0.0
    %2334 = vmatpush1.msra.mxu0 0.0
    %2335 = vmatprep.subr.mxu0 0.0
    %2336 = vmatpush1.msra.mxu0 0.0
    %2337 = vmatprep.subr.mxu0 0.0
    %2338 = vmatpush1.msra.mxu0 0.0
    %2339 = vmatprep.subr.mxu0 0.0
    %2340 = vmatpush1.msra.mxu0 0.0
    %2341 = vmatprep.subr.mxu0 0.0
    %2342 = vmatpush1.msra.mxu0 0.0
    %2343 = vmatprep.subr.mxu0 0.0
    %2344 = vmatpush1.msra.mxu0 0.0
    %2345 = vmatprep.subr.mxu0 0.0
    %2346 = vmatpush1.msra.mxu0 0.0
    %2347 = vmatprep.subr.mxu0 0.0
    %2348 = vmatpush1.msra.mxu0 0.0
    %2349 = vmatprep.subr.mxu0 0.0
    %2350 = vmatpush1.msra.mxu0 0.0
    %2351 = vmatprep.mubr.f32.mxu0 0.0
    %2352 = vmatmul.mubr.f32.gmra.mrb[0].mxu0 %v1264
    %v2353 = vpop.f32.mrb[0].mxu0
    %v2354 = vadd.f32 0.0, %v2353
    %v2355 = vpop.f32.mrb[0].mxu0
    %2356 = vmatprep.mubr.f32.mxu0 0.0
    %2357 = vmatmul.mubr.f32.gmra.mrb[0].mxu0 %v1266
    %v2358 = vpop.f32.mrb[0].mxu0
    %v2359 = vadd.f32 0.0, %v2358
    %v2360 = vpop.f32.mrb[0].mxu0
    %2361 = vmatprep.mubr.f32.mxu0 0.0
    %2362 = vmatmul.mubr.f32.gmra.mrb[0].mxu0 %v2278
    %v2363 = vpop.f32.mrb[0].mxu0
    %v2364 = vadd.f32 0.0, %v2363
    %v2365 = vpop.f32.mrb[0].mxu0
    %2366 = vmatprep.mubr.f32.mxu0 0.0
    %2367 = vmatmul.mubr.f32.gmra.mrb[0].mxu0 %v2280
    %v2368 = vpop.f32.mrb[0].mxu0
    %v2369 = vadd.f32 0.0, %v2368
    %v2370 = vpop.f32.mrb[0].mxu0
    %2371 = vmatprep.mubr.f32.mxu0 0.0
    %2372 = vmatmul.mubr.f32.gmra.mrb[0].mxu0 %v1272
    %v2373 = vpop.f32.mrb[0].mxu0
    %v2374 = vadd.f32 0.0, %v2373
    %v2375 = vpop.f32.mrb[0].mxu0
    %2376 = vmatprep.mubr.f32.mxu0 0.0
    %2377 = vmatmul.mubr.f32.gmra.mrb[0].mxu0 %v1274
    %v2378 = vpop.f32.mrb[0].mxu0
    %v2379 = vadd.f32 0.0, %v2378
    %v2380 = vpop.f32.mrb[0].mxu0
    %2381 = vmatprep.mubr.f32.mxu0 0.0
    %2382 = vmatmul.mubr.f32.gmra.mrb[0].mxu0 %v2282
    %v2383 = vpop.f32.mrb[0].mxu0
    %v2384 = vadd.f32 0.0, %v2383
    %v2385 = vpop.f32.mrb[0].mxu0
    %2386 = vdwg.mxu0
    %v2387 = vadd.f32 %v2260, %v2354
    %v2388 = vadd.f32 %v2261, %v2359
    %v2389 = vadd.f32 %v2262, %v2364
    %v2390 = vadd.f32 %v2263, %v2369
    %v2391 = vadd.f32 %v2264, %v2374
    %v2392 = vadd.f32 %v2265, %v2379
    %v2393 = vadd.f32 %v2266, %v2384
    %s2394 = scalar_lea.vmem [#allocation6], 64
    %v2395 = vld [vmem:[%s2394] sm:$0xf]
    %v2396 = vcombine.low %v150, %v1507
    %v2397 = vcombine.low %v151, %v154
    %v2398 = vcombine.low %v1508, %v157
    %v2399 = vsel %vm231, %v2396, 0
    %v2401 = vsel %vm231, %v2397, 0
    %v2403 = vsel %vm231, %v2398, 0
    %v2406 = vsel %vm246, %v2395, 0
    %2408 = vmatprep.subr.mxu0 0.0
    %2409 = vmatpush1.msra.mxu0 %v2406
    %2410 = vmatprep.subr.mxu0 0.0
    %2411 = vmatpush1.msra.mxu0 0.0
    %2412 = vmatprep.subr.mxu0 0.0
    %2413 = vmatpush1.msra.mxu0 0.0
    %2414 = vmatprep.subr.mxu0 0.0
    %2415 = vmatpush1.msra.mxu0 0.0
    %2416 = vmatprep.subr.mxu0 0.0
    %2417 = vmatpush1.msra.mxu0 0.0
    %2418 = vmatprep.subr.mxu0 0.0
    %2419 = vmatpush1.msra.mxu0 0.0
    %2420 = vmatprep.subr.mxu0 0.0
    %2421 = vmatpush1.msra.mxu0 0.0
    %2422 = vmatprep.subr.mxu0 0.0
    %2423 = vmatpush1.msra.mxu0 0.0
    %2424 = vmatprep.subr.mxu0 0.0
    %2425 = vmatpush1.msra.mxu0 0.0
    %2426 = vmatprep.subr.mxu0 0.0
    %2427 = vmatpush1.msra.mxu0 0.0
    %2428 = vmatprep.subr.mxu0 0.0
    %2429 = vmatpush1.msra.mxu0 0.0
    %2430 = vmatprep.subr.mxu0 0.0
    %2431 = vmatpush1.msra.mxu0 0.0
    %2432 = vmatprep.subr.mxu0 0.0
    %2433 = vmatpush1.msra.mxu0 0.0
    %2434 = vmatprep.subr.mxu0 0.0
    %2435 = vmatpush1.msra.mxu0 0.0
    %2436 = vmatprep.subr.mxu0 0.0
    %2437 = vmatpush1.msra.mxu0 0.0
    %2438 = vmatprep.subr.mxu0 0.0
    %2439 = vmatpush1.msra.mxu0 0.0
    %2440 = vmatprep.subr.mxu0 0.0
    %2441 = vmatpush1.msra.mxu0 0.0
    %2442 = vmatprep.subr.mxu0 0.0
    %2443 = vmatpush1.msra.mxu0 0.0
    %2444 = vmatprep.subr.mxu0 0.0
    %2445 = vmatpush1.msra.mxu0 0.0
    %2446 = vmatprep.subr.mxu0 0.0
    %2447 = vmatpush1.msra.mxu0 0.0
    %2448 = vmatprep.subr.mxu0 0.0
    %2449 = vmatpush1.msra.mxu0 0.0
    %2450 = vmatprep.subr.mxu0 0.0
    %2451 = vmatpush1.msra.mxu0 0.0
    %2452 = vmatprep.subr.mxu0 0.0
    %2453 = vmatpush1.msra.mxu0 0.0
    %2454 = vmatprep.subr.mxu0 0.0
    %2455 = vmatpush1.msra.mxu0 0.0
    %2456 = vmatprep.subr.mxu0 0.0
    %2457 = vmatpush1.msra.mxu0 0.0
    %2458 = vmatprep.subr.mxu0 0.0
    %2459 = vmatpush1.msra.mxu0 0.0
    %2460 = vmatprep.subr.mxu0 0.0
    %2461 = vmatpush1.msra.mxu0 0.0
    %2462 = vmatprep.subr.mxu0 0.0
    %2463 = vmatpush1.msra.mxu0 0.0
    %2464 = vmatprep.subr.mxu0 0.0
    %2465 = vmatpush1.msra.mxu0 0.0
    %2466 = vmatprep.subr.mxu0 0.0
    %2467 = vmatpush1.msra.mxu0 0.0
    %2468 = vmatprep.subr.mxu0 0.0
    %2469 = vmatpush1.msra.mxu0 0.0
    %2470 = vmatprep.subr.mxu0 0.0
    %2471 = vmatpush1.msra.mxu0 0.0
    %2472 = vmatprep.mubr.f32.mxu0 0.0
    %2473 = vmatmul.mubr.f32.gmra.mrb[0].mxu0 %v361
    %v2474 = vpop.f32.mrb[0].mxu0
    %v2475 = vadd.f32 0.0, %v2474
    %v2476 = vpop.f32.mrb[0].mxu0
    %2477 = vmatprep.mubr.f32.mxu0 0.0
    %2478 = vmatmul.mubr.f32.gmra.mrb[0].mxu0 %v1391
    %v2479 = vpop.f32.mrb[0].mxu0
    %v2480 = vadd.f32 0.0, %v2479
    %v2481 = vpop.f32.mrb[0].mxu0
    %2482 = vmatprep.mubr.f32.mxu0 0.0
    %2483 = vmatmul.mubr.f32.gmra.mrb[0].mxu0 %v2399
    %v2484 = vpop.f32.mrb[0].mxu0
    %v2485 = vadd.f32 0.0, %v2484
    %v2486 = vpop.f32.mrb[0].mxu0
    %2487 = vmatprep.mubr.f32.mxu0 0.0
    %2488 = vmatmul.mubr.f32.gmra.mrb[0].mxu0 %v2401
    %v2489 = vpop.f32.mrb[0].mxu0
    %v2490 = vadd.f32 0.0, %v2489
    %v2491 = vpop.f32.mrb[0].mxu0
    %2492 = vmatprep.mubr.f32.mxu0 0.0
    %2493 = vmatmul.mubr.f32.gmra.mrb[0].mxu0 %v369
    %v2494 = vpop.f32.mrb[0].mxu0
    %v2495 = vadd.f32 0.0, %v2494
    %v2496 = vpop.f32.mrb[0].mxu0
    %2497 = vmatprep.mubr.f32.mxu0 0.0
    %2498 = vmatmul.mubr.f32.gmra.mrb[0].mxu0 %v1395
    %v2499 = vpop.f32.mrb[0].mxu0
    %v2500 = vadd.f32 0.0, %v2499
    %v2501 = vpop.f32.mrb[0].mxu0
    %2502 = vmatprep.mubr.f32.mxu0 0.0
    %2503 = vmatmul.mubr.f32.gmra.mrb[0].mxu0 %v2403
    %v2504 = vpop.f32.mrb[0].mxu0
    %v2505 = vadd.f32 0.0, %v2504
    %v2506 = vpop.f32.mrb[0].mxu0
    %2507 = vdwg.mxu0
    %v2508 = vadd.f32 %v2387, %v2475
    %v2509 = vadd.f32 %v2388, %v2480
    %v2510 = vadd.f32 %v2389, %v2485
    %v2511 = vadd.f32 %v2390, %v2490
    %v2512 = vadd.f32 %v2391, %v2495
    %v2513 = vadd.f32 %v2392, %v2500
    %v2514 = vadd.f32 %v2393, %v2505
    %v2515 = vcombine.high %v151, %v151
    %v2516 = vcombine.high %v157, %v157
    %v2517 = vrot.slane %v2014, 4
    %v2518 = vrot.slane %v2515, 5
    %v2519 = vsel %vm177, %v2517, %v2518
    %v2520 = vrot.slane %v2017, 4
    %v2521 = vrot.slane %v2516, 5
    %v2522 = vsel %vm177, %v2520, %v2521
    %s2523 = scalar_lea.vmem [#allocation6], 68
    %v2524 = vld [vmem:[%s2523] sm:$0xf]
    %v2525 = vcombine.low %v1511, %v2015
    %v2526 = vcombine.low %v2519, %v215
    %v2527 = vcombine.low %v2018, %v2522
    %v2528 = vsel %vm231, %v2525, 0
    %v2530 = vsel %vm231, %v2526, 0
    %v2532 = vsel %vm231, %v2527, 0
    %v2535 = vsel %vm246, %v2524, 0
    %2537 = vmatprep.subr.mxu0 0.0
    %2538 = vmatpush1.msra.mxu0 %v2535
    %2539 = vmatprep.subr.mxu0 0.0
    %2540 = vmatpush1.msra.mxu0 0.0
    %2541 = vmatprep.subr.mxu0 0.0
    %2542 = vmatpush1.msra.mxu0 0.0
    %2543 = vmatprep.subr.mxu0 0.0
    %2544 = vmatpush1.msra.mxu0 0.0
    %2545 = vmatprep.subr.mxu0 0.0
    %2546 = vmatpush1.msra.mxu0 0.0
    %2547 = vmatprep.subr.mxu0 0.0
    %2548 = vmatpush1.msra.mxu0 0.0
    %2549 = vmatprep.subr.mxu0 0.0
    %2550 = vmatpush1.msra.mxu0 0.0
    %2551 = vmatprep.subr.mxu0 0.0
    %2552 = vmatpush1.msra.mxu0 0.0
    %2553 = vmatprep.subr.mxu0 0.0
    %2554 = vmatpush1.msra.mxu0 0.0
    %2555 = vmatprep.subr.mxu0 0.0
    %2556 = vmatpush1.msra.mxu0 0.0
    %2557 = vmatprep.subr.mxu0 0.0
    %2558 = vmatpush1.msra.mxu0 0.0
    %2559 = vmatprep.subr.mxu0 0.0
    %2560 = vmatpush1.msra.mxu0 0.0
    %2561 = vmatprep.subr.mxu0 0.0
    %2562 = vmatpush1.msra.mxu0 0.0
    %2563 = vmatprep.subr.mxu0 0.0
    %2564 = vmatpush1.msra.mxu0 0.0
    %2565 = vmatprep.subr.mxu0 0.0
    %2566 = vmatpush1.msra.mxu0 0.0
    %2567 = vmatprep.subr.mxu0 0.0
    %2568 = vmatpush1.msra.mxu0 0.0
    %2569 = vmatprep.subr.mxu0 0.0
    %2570 = vmatpush1.msra.mxu0 0.0
    %2571 = vmatprep.subr.mxu0 0.0
    %2572 = vmatpush1.msra.mxu0 0.0
    %2573 = vmatprep.subr.mxu0 0.0
    %2574 = vmatpush1.msra.mxu0 0.0
    %2575 = vmatprep.subr.mxu0 0.0
    %2576 = vmatpush1.msra.mxu0 0.0
    %2577 = vmatprep.subr.mxu0 0.0
    %2578 = vmatpush1.msra.mxu0 0.0
    %2579 = vmatprep.subr.mxu0 0.0
    %2580 = vmatpush1.msra.mxu0 0.0
    %2581 = vmatprep.subr.mxu0 0.0
    %2582 = vmatpush1.msra.mxu0 0.0
    %2583 = vmatprep.subr.mxu0 0.0
    %2584 = vmatpush1.msra.mxu0 0.0
    %2585 = vmatprep.subr.mxu0 0.0
    %2586 = vmatpush1.msra.mxu0 0.0
    %2587 = vmatprep.subr.mxu0 0.0
    %2588 = vmatpush1.msra.mxu0 0.0
    %2589 = vmatprep.subr.mxu0 0.0
    %2590 = vmatpush1.msra.mxu0 0.0
    %2591 = vmatprep.subr.mxu0 0.0
    %2592 = vmatpush1.msra.mxu0 0.0
    %2593 = vmatprep.subr.mxu0 0.0
    %2594 = vmatpush1.msra.mxu0 0.0
    %2595 = vmatprep.subr.mxu0 0.0
    %2596 = vmatpush1.msra.mxu0 0.0
    %2597 = vmatprep.subr.mxu0 0.0
    %2598 = vmatpush1.msra.mxu0 0.0
    %2599 = vmatprep.subr.mxu0 0.0
    %2600 = vmatpush1.msra.mxu0 0.0
    %2601 = vmatprep.mubr.f32.mxu0 0.0
    %2602 = vmatmul.mubr.f32.gmra.mrb[0].mxu0 %v236
    %v2603 = vpop.f32.mrb[0].mxu0
    %v2604 = vadd.f32 0.0, %v2603
    %v2605 = vpop.f32.mrb[0].mxu0
    %2606 = vmatprep.mubr.f32.mxu0 0.0
    %2607 = vmatmul.mubr.f32.gmra.mrb[0].mxu0 %v1520
    %v2608 = vpop.f32.mrb[0].mxu0
    %v2609 = vadd.f32 0.0, %v2608
    %v2610 = vpop.f32.mrb[0].mxu0
    %2611 = vmatprep.mubr.f32.mxu0 0.0
    %2612 = vmatmul.mubr.f32.gmra.mrb[0].mxu0 %v2528
    %v2613 = vpop.f32.mrb[0].mxu0
    %v2614 = vadd.f32 0.0, %v2613
    %v2615 = vpop.f32.mrb[0].mxu0
    %2616 = vmatprep.mubr.f32.mxu0 0.0
    %2617 = vmatmul.mubr.f32.gmra.mrb[0].mxu0 %v2530
    %v2618 = vpop.f32.mrb[0].mxu0
    %v2619 = vadd.f32 0.0, %v2618
    %v2620 = vpop.f32.mrb[0].mxu0
    %2621 = vmatprep.mubr.f32.mxu0 0.0
    %2622 = vmatmul.mubr.f32.gmra.mrb[0].mxu0 %v244
    %v2623 = vpop.f32.mrb[0].mxu0
    %v2624 = vadd.f32 0.0, %v2623
    %v2625 = vpop.f32.mrb[0].mxu0
    %2626 = vmatprep.mubr.f32.mxu0 0.0
    %2627 = vmatmul.mubr.f32.gmra.mrb[0].mxu0 %v1524
    %v2628 = vpop.f32.mrb[0].mxu0
    %v2629 = vadd.f32 0.0, %v2628
    %v2630 = vpop.f32.mrb[0].mxu0
    %2631 = vmatprep.mubr.f32.mxu0 0.0
    %2632 = vmatmul.mubr.f32.gmra.mrb[0].mxu0 %v2532
    %v2633 = vpop.f32.mrb[0].mxu0
    %v2634 = vadd.f32 0.0, %v2633
    %v2635 = vpop.f32.mrb[0].mxu0
    %2636 = vdwg.mxu0
    %v2637 = vadd.f32 %v2508, %v2604
    %v2638 = vadd.f32 %v2509, %v2609
    %v2639 = vadd.f32 %v2510, %v2614
    %v2640 = vadd.f32 %v2511, %v2619
    %v2641 = vadd.f32 %v2512, %v2624
    %v2642 = vadd.f32 %v2513, %v2629
    %v2643 = vadd.f32 %v2514, %v2634
    %v2644 = vrot.slane %v2141, 4
    %v2645 = vrot.slane %v2515, 6
    %v2646 = vsel %vm476, %v2644, %v2645
    %v2647 = vrot.slane %v2144, 4
    %v2648 = vrot.slane %v2516, 6
    %v2649 = vsel %vm476, %v2647, %v2648
    %s2650 = scalar_lea.vmem [#allocation6], 72
    %v2651 = vld [vmem:[%s2650] sm:$0xf]
    %v2652 = vcombine.low %v1638, %v2142
    %v2653 = vcombine.low %v2646, %v514
    %v2654 = vcombine.low %v2145, %v2649
    %v2655 = vsel %vm231, %v2652, 0
    %v2657 = vsel %vm231, %v2653, 0
    %v2659 = vsel %vm231, %v2654, 0
    %v2662 = vsel %vm246, %v2651, 0
    %2664 = vmatprep.subr.mxu0 0.0
    %2665 = vmatpush1.msra.mxu0 %v2662
    %2666 = vmatprep.subr.mxu0 0.0
    %2667 = vmatpush1.msra.mxu0 0.0
    %2668 = vmatprep.subr.mxu0 0.0
    %2669 = vmatpush1.msra.mxu0 0.0
    %2670 = vmatprep.subr.mxu0 0.0
    %2671 = vmatpush1.msra.mxu0 0.0
    %2672 = vmatprep.subr.mxu0 0.0
    %2673 = vmatpush1.msra.mxu0 0.0
    %2674 = vmatprep.subr.mxu0 0.0
    %2675 = vmatpush1.msra.mxu0 0.0
    %2676 = vmatprep.subr.mxu0 0.0
    %2677 = vmatpush1.msra.mxu0 0.0
    %2678 = vmatprep.subr.mxu0 0.0
    %2679 = vmatpush1.msra.mxu0 0.0
    %2680 = vmatprep.subr.mxu0 0.0
    %2681 = vmatpush1.msra.mxu0 0.0
    %2682 = vmatprep.subr.mxu0 0.0
    %2683 = vmatpush1.msra.mxu0 0.0
    %2684 = vmatprep.subr.mxu0 0.0
    %2685 = vmatpush1.msra.mxu0 0.0
    %2686 = vmatprep.subr.mxu0 0.0
    %2687 = vmatpush1.msra.mxu0 0.0
    %2688 = vmatprep.subr.mxu0 0.0
    %2689 = vmatpush1.msra.mxu0 0.0
    %2690 = vmatprep.subr.mxu0 0.0
    %2691 = vmatpush1.msra.mxu0 0.0
    %2692 = vmatprep.subr.mxu0 0.0
    %2693 = vmatpush1.msra.mxu0 0.0
    %2694 = vmatprep.subr.mxu0 0.0
    %2695 = vmatpush1.msra.mxu0 0.0
    %2696 = vmatprep.subr.mxu0 0.0
    %2697 = vmatpush1.msra.mxu0 0.0
    %2698 = vmatprep.subr.mxu0 0.0
    %2699 = vmatpush1.msra.mxu0 0.0
    %2700 = vmatprep.subr.mxu0 0.0
    %2701 = vmatpush1.msra.mxu0 0.0
    %2702 = vmatprep.subr.mxu0 0.0
    %2703 = vmatpush1.msra.mxu0 0.0
    %2704 = vmatprep.subr.mxu0 0.0
    %2705 = vmatpush1.msra.mxu0 0.0
    %2706 = vmatprep.subr.mxu0 0.0
    %2707 = vmatpush1.msra.mxu0 0.0
    %2708 = vmatprep.subr.mxu0 0.0
    %2709 = vmatpush1.msra.mxu0 0.0
    %2710 = vmatprep.subr.mxu0 0.0
    %2711 = vmatpush1.msra.mxu0 0.0
    %2712 = vmatprep.subr.mxu0 0.0
    %2713 = vmatpush1.msra.mxu0 0.0
    %2714 = vmatprep.subr.mxu0 0.0
    %2715 = vmatpush1.msra.mxu0 0.0
    %2716 = vmatprep.subr.mxu0 0.0
    %2717 = vmatpush1.msra.mxu0 0.0
    %2718 = vmatprep.subr.mxu0 0.0
    %2719 = vmatpush1.msra.mxu0 0.0
    %2720 = vmatprep.subr.mxu0 0.0
    %2721 = vmatpush1.msra.mxu0 0.0
    %2722 = vmatprep.subr.mxu0 0.0
    %2723 = vmatpush1.msra.mxu0 0.0
    %2724 = vmatprep.subr.mxu0 0.0
    %2725 = vmatpush1.msra.mxu0 0.0
    %2726 = vmatprep.subr.mxu0 0.0
    %2727 = vmatpush1.msra.mxu0 0.0
    %2728 = vmatprep.mubr.f32.mxu0 0.0
    %2729 = vmatmul.mubr.f32.gmra.mrb[0].mxu0 %v534
    %v2730 = vpop.f32.mrb[0].mxu0
    %v2731 = vadd.f32 0.0, %v2730
    %v2732 = vpop.f32.mrb[0].mxu0
    %2733 = vmatprep.mubr.f32.mxu0 0.0
    %2734 = vmatmul.mubr.f32.gmra.mrb[0].mxu0 %v1647
    %v2735 = vpop.f32.mrb[0].mxu0
    %v2736 = vadd.f32 0.0, %v2735
    %v2737 = vpop.f32.mrb[0].mxu0
    %2738 = vmatprep.mubr.f32.mxu0 0.0
    %2739 = vmatmul.mubr.f32.gmra.mrb[0].mxu0 %v2655
    %v2740 = vpop.f32.mrb[0].mxu0
    %v2741 = vadd.f32 0.0, %v2740
    %v2742 = vpop.f32.mrb[0].mxu0
    %2743 = vmatprep.mubr.f32.mxu0 0.0
    %2744 = vmatmul.mubr.f32.gmra.mrb[0].mxu0 %v2657
    %v2745 = vpop.f32.mrb[0].mxu0
    %v2746 = vadd.f32 0.0, %v2745
    %v2747 = vpop.f32.mrb[0].mxu0
    %2748 = vmatprep.mubr.f32.mxu0 0.0
    %2749 = vmatmul.mubr.f32.gmra.mrb[0].mxu0 %v542
    %v2750 = vpop.f32.mrb[0].mxu0
    %v2751 = vadd.f32 0.0, %v2750
    %v2752 = vpop.f32.mrb[0].mxu0
    %2753 = vmatprep.mubr.f32.mxu0 0.0
    %2754 = vmatmul.mubr.f32.gmra.mrb[0].mxu0 %v1651
    %v2755 = vpop.f32.mrb[0].mxu0
    %v2756 = vadd.f32 0.0, %v2755
    %v2757 = vpop.f32.mrb[0].mxu0
    %2758 = vmatprep.mubr.f32.mxu0 0.0
    %2759 = vmatmul.mubr.f32.gmra.mrb[0].mxu0 %v2659
    %v2760 = vpop.f32.mrb[0].mxu0
    %v2761 = vadd.f32 0.0, %v2760
    %v2762 = vpop.f32.mrb[0].mxu0
    %2763 = vdwg.mxu0
    %v2764 = vadd.f32 %v2637, %v2731
    %v2765 = vadd.f32 %v2638, %v2736
    %v2766 = vadd.f32 %v2639, %v2741
    %v2767 = vadd.f32 %v2640, %v2746
    %v2768 = vadd.f32 %v2641, %v2751
    %v2769 = vadd.f32 %v2642, %v2756
    %v2770 = vadd.f32 %v2643, %v2761
    %v2771 = vrot.slane %v2268, 4
    %v2772 = vrot.slane %v2515, 7
    %v2773 = vsel %vm656, %v2771, %v2772
    %v2774 = vrot.slane %v2271, 4
    %v2775 = vrot.slane %v2516, 7
    %v2776 = vsel %vm656, %v2774, %v2775
    %s2777 = scalar_lea.vmem [#allocation6], 76
    %v2778 = vld [vmem:[%s2777] sm:$0xf]
    %v2779 = vcombine.low %v1765, %v2269
    %v2780 = vcombine.low %v2773, %v694
    %v2781 = vcombine.low %v2272, %v2776
    %v2782 = vsel %vm231, %v2779, 0
    %v2784 = vsel %vm231, %v2780, 0
    %v2786 = vsel %vm231, %v2781, 0
    %v2789 = vsel %vm246, %v2778, 0
    %2791 = vmatprep.subr.mxu0 0.0
    %2792 = vmatpush1.msra.mxu0 %v2789
    %2793 = vmatprep.subr.mxu0 0.0
    %2794 = vmatpush1.msra.mxu0 0.0
    %2795 = vmatprep.subr.mxu0 0.0
    %2796 = vmatpush1.msra.mxu0 0.0
    %2797 = vmatprep.subr.mxu0 0.0
    %2798 = vmatpush1.msra.mxu0 0.0
    %2799 = vmatprep.subr.mxu0 0.0
    %2800 = vmatpush1.msra.mxu0 0.0
    %2801 = vmatprep.subr.mxu0 0.0
    %2802 = vmatpush1.msra.mxu0 0.0
    %2803 = vmatprep.subr.mxu0 0.0
    %2804 = vmatpush1.msra.mxu0 0.0
    %2805 = vmatprep.subr.mxu0 0.0
    %2806 = vmatpush1.msra.mxu0 0.0
    %2807 = vmatprep.subr.mxu0 0.0
    %2808 = vmatpush1.msra.mxu0 0.0
    %2809 = vmatprep.subr.mxu0 0.0
    %2810 = vmatpush1.msra.mxu0 0.0
    %2811 = vmatprep.subr.mxu0 0.0
    %2812 = vmatpush1.msra.mxu0 0.0
    %2813 = vmatprep.subr.mxu0 0.0
    %2814 = vmatpush1.msra.mxu0 0.0
    %2815 = vmatprep.subr.mxu0 0.0
    %2816 = vmatpush1.msra.mxu0 0.0
    %2817 = vmatprep.subr.mxu0 0.0
    %2818 = vmatpush1.msra.mxu0 0.0
    %2819 = vmatprep.subr.mxu0 0.0
    %2820 = vmatpush1.msra.mxu0 0.0
    %2821 = vmatprep.subr.mxu0 0.0
    %2822 = vmatpush1.msra.mxu0 0.0
    %2823 = vmatprep.subr.mxu0 0.0
    %2824 = vmatpush1.msra.mxu0 0.0
    %2825 = vmatprep.subr.mxu0 0.0
    %2826 = vmatpush1.msra.mxu0 0.0
    %2827 = vmatprep.subr.mxu0 0.0
    %2828 = vmatpush1.msra.mxu0 0.0
    %2829 = vmatprep.subr.mxu0 0.0
    %2830 = vmatpush1.msra.mxu0 0.0
    %2831 = vmatprep.subr.mxu0 0.0
    %2832 = vmatpush1.msra.mxu0 0.0
    %2833 = vmatprep.subr.mxu0 0.0
    %2834 = vmatpush1.msra.mxu0 0.0
    %2835 = vmatprep.subr.mxu0 0.0
    %2836 = vmatpush1.msra.mxu0 0.0
    %2837 = vmatprep.subr.mxu0 0.0
    %2838 = vmatpush1.msra.mxu0 0.0
    %2839 = vmatprep.subr.mxu0 0.0
    %2840 = vmatpush1.msra.mxu0 0.0
    %2841 = vmatprep.subr.mxu0 0.0
    %2842 = vmatpush1.msra.mxu0 0.0
    %2843 = vmatprep.subr.mxu0 0.0
    %2844 = vmatpush1.msra.mxu0 0.0
    %2845 = vmatprep.subr.mxu0 0.0
    %2846 = vmatpush1.msra.mxu0 0.0
    %2847 = vmatprep.subr.mxu0 0.0
    %2848 = vmatpush1.msra.mxu0 0.0
    %2849 = vmatprep.subr.mxu0 0.0
    %2850 = vmatpush1.msra.mxu0 0.0
    %2851 = vmatprep.subr.mxu0 0.0
    %2852 = vmatpush1.msra.mxu0 0.0
    %2853 = vmatprep.subr.mxu0 0.0
    %2854 = vmatpush1.msra.mxu0 0.0
    %2855 = vmatprep.mubr.f32.mxu0 0.0
    %2856 = vmatmul.mubr.f32.gmra.mrb[0].mxu0 %v714
    %v2857 = vpop.f32.mrb[0].mxu0
    %v2858 = vadd.f32 0.0, %v2857
    %v2859 = vpop.f32.mrb[0].mxu0
    %2860 = vmatprep.mubr.f32.mxu0 0.0
    %2861 = vmatmul.mubr.f32.gmra.mrb[0].mxu0 %v1774
    %v2862 = vpop.f32.mrb[0].mxu0
    %v2863 = vadd.f32 0.0, %v2862
    %v2864 = vpop.f32.mrb[0].mxu0
    %2865 = vmatprep.mubr.f32.mxu0 0.0
    %2866 = vmatmul.mubr.f32.gmra.mrb[0].mxu0 %v2782
    %v2867 = vpop.f32.mrb[0].mxu0
    %v2868 = vadd.f32 0.0, %v2867
    %v2869 = vpop.f32.mrb[0].mxu0
    %2870 = vmatprep.mubr.f32.mxu0 0.0
    %2871 = vmatmul.mubr.f32.gmra.mrb[0].mxu0 %v2784
    %v2872 = vpop.f32.mrb[0].mxu0
    %v2873 = vadd.f32 0.0, %v2872
    %v2874 = vpop.f32.mrb[0].mxu0
    %2875 = vmatprep.mubr.f32.mxu0 0.0
    %2876 = vmatmul.mubr.f32.gmra.mrb[0].mxu0 %v722
    %v2877 = vpop.f32.mrb[0].mxu0
    %v2878 = vadd.f32 0.0, %v2877
    %v2879 = vpop.f32.mrb[0].mxu0
    %2880 = vmatprep.mubr.f32.mxu0 0.0
    %2881 = vmatmul.mubr.f32.gmra.mrb[0].mxu0 %v1778
    %v2882 = vpop.f32.mrb[0].mxu0
    %v2883 = vadd.f32 0.0, %v2882
    %v2884 = vpop.f32.mrb[0].mxu0
    %2885 = vmatprep.mubr.f32.mxu0 0.0
    %2886 = vmatmul.mubr.f32.gmra.mrb[0].mxu0 %v2786
    %v2887 = vpop.f32.mrb[0].mxu0
    %v2888 = vadd.f32 0.0, %v2887
    %v2889 = vpop.f32.mrb[0].mxu0
    %2890 = vdwg.mxu0
    %v2891 = vadd.f32 %v2764, %v2858
    %v2892 = vadd.f32 %v2765, %v2863
    %v2893 = vadd.f32 %v2766, %v2868
    %v2894 = vadd.f32 %v2767, %v2873
    %v2895 = vadd.f32 %v2768, %v2878
    %v2896 = vadd.f32 %v2769, %v2883
    %v2897 = vadd.f32 %v2770, %v2888
    %s2898 = scalar_lea.vmem [#allocation6], 80
    %v2899 = vld [vmem:[%s2898] sm:$0xf]
    %v2900 = vcombine.low %v1507, %v151
    %v2901 = vcombine.low %v2515, %v171
    %v2902 = vcombine.low %v157, %v2516
    %v2903 = vsel %vm231, %v2900, 0
    %v2905 = vsel %vm231, %v2901, 0
    %v2907 = vsel %vm231, %v2902, 0
    %v2910 = vsel %vm246, %v2899, 0
    %2912 = vmatprep.subr.mxu0 0.0
    %2913 = vmatpush1.msra.mxu0 %v2910
    %2914 = vmatprep.subr.mxu0 0.0
    %2915 = vmatpush1.msra.mxu0 0.0
    %2916 = vmatprep.subr.mxu0 0.0
    %2917 = vmatpush1.msra.mxu0 0.0
    %2918 = vmatprep.subr.mxu0 0.0
    %2919 = vmatpush1.msra.mxu0 0.0
    %2920 = vmatprep.subr.mxu0 0.0
    %2921 = vmatpush1.msra.mxu0 0.0
    %2922 = vmatprep.subr.mxu0 0.0
    %2923 = vmatpush1.msra.mxu0 0.0
    %2924 = vmatprep.subr.mxu0 0.0
    %2925 = vmatpush1.msra.mxu0 0.0
    %2926 = vmatprep.subr.mxu0 0.0
    %2927 = vmatpush1.msra.mxu0 0.0
    %2928 = vmatprep.subr.mxu0 0.0
    %2929 = vmatpush1.msra.mxu0 0.0
    %2930 = vmatprep.subr.mxu0 0.0
    %2931 = vmatpush1.msra.mxu0 0.0
    %2932 = vmatprep.subr.mxu0 0.0
    %2933 = vmatpush1.msra.mxu0 0.0
    %2934 = vmatprep.subr.mxu0 0.0
    %2935 = vmatpush1.msra.mxu0 0.0
    %2936 = vmatprep.subr.mxu0 0.0
    %2937 = vmatpush1.msra.mxu0 0.0
    %2938 = vmatprep.subr.mxu0 0.0
    %2939 = vmatpush1.msra.mxu0 0.0
    %2940 = vmatprep.subr.mxu0 0.0
    %2941 = vmatpush1.msra.mxu0 0.0
    %2942 = vmatprep.subr.mxu0 0.0
    %2943 = vmatpush1.msra.mxu0 0.0
    %2944 = vmatprep.subr.mxu0 0.0
    %2945 = vmatpush1.msra.mxu0 0.0
    %2946 = vmatprep.subr.mxu0 0.0
    %2947 = vmatpush1.msra.mxu0 0.0
    %2948 = vmatprep.subr.mxu0 0.0
    %2949 = vmatpush1.msra.mxu0 0.0
    %2950 = vmatprep.subr.mxu0 0.0
    %2951 = vmatpush1.msra.mxu0 0.0
    %2952 = vmatprep.subr.mxu0 0.0
    %2953 = vmatpush1.msra.mxu0 0.0
    %2954 = vmatprep.subr.mxu0 0.0
    %2955 = vmatpush1.msra.mxu0 0.0
    %2956 = vmatprep.subr.mxu0 0.0
    %2957 = vmatpush1.msra.mxu0 0.0
    %2958 = vmatprep.subr.mxu0 0.0
    %2959 = vmatpush1.msra.mxu0 0.0
    %2960 = vmatprep.subr.mxu0 0.0
    %2961 = vmatpush1.msra.mxu0 0.0
    %2962 = vmatprep.subr.mxu0 0.0
    %2963 = vmatpush1.msra.mxu0 0.0
    %2964 = vmatprep.subr.mxu0 0.0
    %2965 = vmatpush1.msra.mxu0 0.0
    %2966 = vmatprep.subr.mxu0 0.0
    %2967 = vmatpush1.msra.mxu0 0.0
    %2968 = vmatprep.subr.mxu0 0.0
    %2969 = vmatpush1.msra.mxu0 0.0
    %2970 = vmatprep.subr.mxu0 0.0
    %2971 = vmatpush1.msra.mxu0 0.0
    %2972 = vmatprep.subr.mxu0 0.0
    %2973 = vmatpush1.msra.mxu0 0.0
    %2974 = vmatprep.subr.mxu0 0.0
    %2975 = vmatpush1.msra.mxu0 0.0
    %2976 = vmatprep.mubr.f32.mxu0 0.0
    %2977 = vmatmul.mubr.f32.gmra.mrb[0].mxu0 %v847
    %v2978 = vpop.f32.mrb[0].mxu0
    %v2979 = vadd.f32 0.0, %v2978
    %v2980 = vpop.f32.mrb[0].mxu0
    %2981 = vmatprep.mubr.f32.mxu0 0.0
    %2982 = vmatmul.mubr.f32.gmra.mrb[0].mxu0 %v1895
    %v2983 = vpop.f32.mrb[0].mxu0
    %v2984 = vadd.f32 0.0, %v2983
    %v2985 = vpop.f32.mrb[0].mxu0
    %2986 = vmatprep.mubr.f32.mxu0 0.0
    %2987 = vmatmul.mubr.f32.gmra.mrb[0].mxu0 %v2903
    %v2988 = vpop.f32.mrb[0].mxu0
    %v2989 = vadd.f32 0.0, %v2988
    %v2990 = vpop.f32.mrb[0].mxu0
    %2991 = vmatprep.mubr.f32.mxu0 0.0
    %2992 = vmatmul.mubr.f32.gmra.mrb[0].mxu0 %v2905
    %v2993 = vpop.f32.mrb[0].mxu0
    %v2994 = vadd.f32 0.0, %v2993
    %v2995 = vpop.f32.mrb[0].mxu0
    %2996 = vmatprep.mubr.f32.mxu0 0.0
    %2997 = vmatmul.mubr.f32.gmra.mrb[0].mxu0 %v855
    %v2998 = vpop.f32.mrb[0].mxu0
    %v2999 = vadd.f32 0.0, %v2998
    %v3000 = vpop.f32.mrb[0].mxu0
    %3001 = vmatprep.mubr.f32.mxu0 0.0
    %3002 = vmatmul.mubr.f32.gmra.mrb[0].mxu0 %v1899
    %v3003 = vpop.f32.mrb[0].mxu0
    %v3004 = vadd.f32 0.0, %v3003
    %v3005 = vpop.f32.mrb[0].mxu0
    %3006 = vmatprep.mubr.f32.mxu0 0.0
    %3007 = vmatmul.mubr.f32.gmra.mrb[0].mxu0 %v2907
    %v3008 = vpop.f32.mrb[0].mxu0
    %v3009 = vadd.f32 0.0, %v3008
    %v3010 = vpop.f32.mrb[0].mxu0
    %3011 = vdwg.mxu0
    %v3012 = vadd.f32 %v2891, %v2979
    %v3013 = vadd.f32 %v2892, %v2984
    %v3014 = vadd.f32 %v2893, %v2989
    %v3015 = vadd.f32 %v2894, %v2994
    %v3016 = vadd.f32 %v2895, %v2999
    %v3017 = vadd.f32 %v2896, %v3004
    %v3018 = vadd.f32 %v2897, %v3009
    %v3019 = vld [vmem:[#allocation8] sm:$0x1]
    %v3021 = vlaneseq
    %v3022 = vshrl.u32 %v3021, 7
    %v3023 = vsub.s32 0, %v3022
    %v3024 = vrot.slane %v3019, %v3023
    %v3026 = vadd.f32 %v3012, %v3024
    %v3027 = vadd.f32 %v3013, %v3024
    %v3028 = vadd.f32 %v3014, %v3024
    %v3029 = vadd.f32 %v3015, %v3024
    %v3030 = vadd.f32 %v3016, %v3024
    %v3031 = vadd.f32 %v3017, %v3024
    %v3032 = vadd.f32 %v3018, %v3024
    %v3033 = vmax.f32 %v3026, 0.0
    %v3034 = vmax.f32 %v3027, 0.0
    %v3035 = vmax.f32 %v3028, 0.0
    %v3036 = vmax.f32 %v3029, 0.0
    %v3037 = vmax.f32 %v3030, 0.0
    %v3038 = vmax.f32 %v3031, 0.0
    %v3039 = vmax.f32 %v3032, 0.0
    %v3040 = vpack.c.bf16 %v3034, %v3033
    %v3041 = vpack.c.bf16 %v3036, %v3035
    %v3042 = vpack.c.bf16 %v3038, %v3037
    %v3043 = vpack.c.bf16 %v3039, %v3039
    %v3048 = vcombine.high %v3040, %v3040
    %v3050 = vunpack.c.l.s4 1983009808
    %v3051 = vunpack.c.0.s8 %v3050
    %v3052 = vlaneseq
    %v3053 = vshrl.u32 %v3052, 7
    %v3054 = vsub.s32 %v3051, %v3053
    %v3055 = vrot.slane %v3040, %v3054
    %v3057 = vunpack.c.l.s4 1983009808
    %v3058 = vunpack.c.0.s8 %v3057
    %v3059 = vlaneseq
    %v3060 = vshrl.u32 %v3059, 7
    %v3061 = vsub.s32 %v3058, %v3060
    %v3062 = vrot.slane %v3048, %v3061
    %v3063 = vcombine.high %v3055, %v3055
    %v3064 = vcombine.high %v3062, %v3062
    %v3065 = vcombine.high %v3041, %v3041
    %v3067 = vunpack.c.l.s4 1983009808
    %v3068 = vunpack.c.0.s8 %v3067
    %v3069 = vlaneseq
    %v3070 = vshrl.u32 %v3069, 7
    %v3071 = vsub.s32 %v3068, %v3070
    %v3072 = vrot.slane %v3041, %v3071
    %v3074 = vunpack.c.l.s4 1983009808
    %v3075 = vunpack.c.0.s8 %v3074
    %v3076 = vlaneseq
    %v3077 = vshrl.u32 %v3076, 7
    %v3078 = vsub.s32 %v3075, %v3077
    %v3079 = vrot.slane %v3065, %v3078
    %v3080 = vcombine.high %v3072, %v3072
    %v3081 = vcombine.high %v3079, %v3079
    %v3082 = vcombine.high %v3042, %v3042
    %v3084 = vunpack.c.l.s4 1983009808
    %v3085 = vunpack.c.0.s8 %v3084
    %v3086 = vlaneseq
    %v3087 = vshrl.u32 %v3086, 7
    %v3088 = vsub.s32 %v3085, %v3087
    %v3089 = vrot.slane %v3042, %v3088
    %v3091 = vunpack.c.l.s4 1983009808
    %v3092 = vunpack.c.0.s8 %v3091
    %v3093 = vlaneseq
    %v3094 = vshrl.u32 %v3093, 7
    %v3095 = vsub.s32 %v3092, %v3094
    %v3096 = vrot.slane %v3082, %v3095
    %v3097 = vcombine.high %v3089, %v3089
    %v3098 = vcombine.high %v3096, %v3096
    %v3100 = vunpack.c.l.s4 1983009808
    %v3101 = vunpack.c.0.s8 %v3100
    %v3102 = vlaneseq
    %v3103 = vshrl.u32 %v3102, 7
    %v3104 = vsub.s32 %v3101, %v3103
    %v3105 = vrot.slane %v3043, %v3104
    %v3106 = vcombine.high %v3105, %v3105
    %s3107 = smul.u32 4, 21
    %s3108 = smul.u32 %s3107, 16
    %s3109 = smul.u32 %s3108, 1
    %s3110 = sshll.u32 %s3109, 4
    %3111 = dma.done [#allocation5], %s3110
    %v3112 = vld [vmem:[#allocation2] sm:$0xff]
    %v3113 = vld [vmem:[#allocation2 + $0x8] sm:$0xff]
    %v3114 = vld [vmem:[#allocation2 + $0x10] sm:$0xff]
    %v3115 = vld [vmem:[#allocation2 + $0x18] sm:$0xff]
    %v3116 = vld [vmem:[#allocation2 + $0x20] sm:$0xff]
    %v3117 = vld [vmem:[#allocation2 + $0x28] sm:$0xff]
    %v3118 = vld [vmem:[#allocation2 + $0x30] sm:$0xff]
    %v3119 = vld [vmem:[#allocation2 + $0x38] sm:$0xff]
    %vm3120 = vsmask.f32 1280
    %vm3121 = vsmask.f32 3336
    %vm3122 = vmor %vm3120, %vm3121
    %vm3123 = vsmask.f32 5392
    %vm3124 = vmor %vm3122, %vm3123
    %vm3125 = vsmask.f32 7448
    %vm3126 = vmor %vm3124, %vm3125
    %v3128 = vshrl.u32 %v3055, 16
    %v3130 = vrot.slane %v3128, 6
    %v3131 = vshll.u32 %v3055, 16
    %v3133 = vrot.slane %v3131, 7
    %v3134 = vor.u32 %v3130, %v3133
    %v3135 = vrot.slane %v3134, 2
    %v3137 = vshll.u32 %v3063, 16
    %v3139 = vrot.slane %v3137, 7
    %v3140 = vsel %vm3126, %v3135, %v3139
    %v3141 = vshrl.u32 %v3063, 16
    %v3143 = vrot.slane %v3141, 6
    %v3144 = vor.u32 %v3143, %v3139
    %v3145 = vrot.slane %v3144, 2
    %v3147 = vshll.u32 %v3062, 16
    %v3149 = vrot.slane %v3147, 7
    %v3150 = vsel %vm3126, %v3145, %v3149
    %v3152 = vshrl.u32 %v3081, 16
    %v3154 = vrot.slane %v3152, 6
    %v3155 = vshll.u32 %v3081, 16
    %v3157 = vrot.slane %v3155, 7
    %v3158 = vor.u32 %v3154, %v3157
    %v3159 = vrot.slane %v3158, 2
    %v3161 = vshll.u32 %v3089, 16
    %v3163 = vrot.slane %v3161, 7
    %v3164 = vsel %vm3126, %v3159, %v3163
    %v3165 = vshrl.u32 %v3089, 16
    %v3167 = vrot.slane %v3165, 6
    %v3168 = vor.u32 %v3167, %v3163
    %v3169 = vrot.slane %v3168, 2
    %v3171 = vshll.u32 %v3097, 16
    %v3173 = vrot.slane %v3171, 7
    %v3174 = vsel %vm3126, %v3169, %v3173
    %s3175 = scalar_lea.vmem [#allocation2], 64
    %v3176 = vld [vmem:[%s3175] sm:$0xff]
    %v3177 = vld [vmem:[%s3175 + $0x8] sm:$0xff]
    %v3178 = vld [vmem:[%s3175 + $0x10] sm:$0xff]
    %v3179 = vld [vmem:[%s3175 + $0x18] sm:$0xff]
    %v3180 = vld [vmem:[%s3175 + $0x20] sm:$0xff]
    %v3181 = vld [vmem:[%s3175 + $0x28] sm:$0xff]
    %v3182 = vld [vmem:[%s3175 + $0x30] sm:$0xff]
    %v3183 = vld [vmem:[%s3175 + $0x38] sm:$0xff]
    %v3184 = vcombine.low %v3140, %v3150
    %v3185 = vcombine.low %v3164, %v3174
    %v3187 = vunpack.c.l.s4 1983009808
    %v3188 = vunpack.c.0.s8 %v3187
    %v3189 = vlaneseq
    %v3190 = vshrl.u32 %v3189, 7
    %v3191 = vsub.s32 %v3188, %v3190
    %v3192 = vrot.slane %v3184, %v3191
    %v3194 = vunpack.c.l.s4 1983009808
    %v3195 = vunpack.c.0.s8 %v3194
    %v3196 = vlaneseq
    %v3197 = vshrl.u32 %v3196, 7
    %v3198 = vsub.s32 %v3195, %v3197
    %v3199 = vrot.slane %v3185, %v3198
    %v3200 = vcombine.low %v3192, %v3199
    %3202 = vmatprep.subr.bf16.mxu0 0
    %3203 = vmatpush1.bf16.msra.mxu0 %v3176
    %3204 = vmatprep.subr.bf16.mxu0 0
    %3205 = vmatpush1.bf16.msra.mxu0 %v3177
    %3206 = vmatprep.subr.bf16.mxu0 0
    %3207 = vmatpush1.bf16.msra.mxu0 %v3178
    %3208 = vmatprep.subr.bf16.mxu0 0
    %3209 = vmatpush1.bf16.msra.mxu0 %v3179
    %3210 = vmatprep.subr.bf16.mxu0 0
    %3211 = vmatpush1.bf16.msra.mxu0 %v3180
    %3212 = vmatprep.subr.bf16.mxu0 0
    %3213 = vmatpush1.bf16.msra.mxu0 %v3181
    %3214 = vmatprep.subr.bf16.mxu0 0
    %3215 = vmatpush1.bf16.msra.mxu0 %v3182
    %3216 = vmatprep.subr.bf16.mxu0 0
    %3217 = vmatpush1.bf16.msra.mxu0 %v3183
    %3218 = vmatprep.subr.bf16.mxu0 0
    %3219 = vmatpush1.bf16.msra.mxu0 0
    %3220 = vmatprep.subr.bf16.mxu0 0
    %3221 = vmatpush1.bf16.msra.mxu0 0
    %3222 = vmatprep.subr.bf16.mxu0 0
    %3223 = vmatpush1.bf16.msra.mxu0 0
    %3224 = vmatprep.subr.bf16.mxu0 0
    %3225 = vmatpush1.bf16.msra.mxu0 0
    %3226 = vmatprep.subr.bf16.mxu0 0
    %3227 = vmatpush1.bf16.msra.mxu0 0
    %3228 = vmatprep.subr.bf16.mxu0 0
    %3229 = vmatpush1.bf16.msra.mxu0 0
    %3230 = vmatprep.subr.bf16.mxu0 0
    %3231 = vmatpush1.bf16.msra.mxu0 0
    %3232 = vmatprep.subr.bf16.mxu0 0
    %3233 = vmatpush1.bf16.msra.mxu0 0
    %3234 = vmatprep.mubr.bf16.mxu0 0
    %3235 = vmatmul.mubr.bf16.gmra.mrb[0].mxu0 %v3200
    %v3236 = vpop.f32.mrb[0].mxu0
    %v3237 = vadd.f32 0.0, %v3236
    %v3238 = vpop.f32.mrb[0].mxu0
    %v3239 = vpop.f32.mrb[0].mxu0
    %v3240 = vadd.f32 0.0, %v3239
    %v3241 = vpop.f32.mrb[0].mxu0
    %3242 = vdwg.mxu0
    %v3243 = vcombine.low %v3055, %v3063
    %v3244 = vcombine.low %v3081, %v3089
    %v3246 = vunpack.c.l.s4 1983009808
    %v3247 = vunpack.c.0.s8 %v3246
    %v3248 = vlaneseq
    %v3249 = vshrl.u32 %v3248, 7
    %v3250 = vsub.s32 %v3247, %v3249
    %v3251 = vrot.slane %v3243, %v3250
    %v3253 = vunpack.c.l.s4 1983009808
    %v3254 = vunpack.c.0.s8 %v3253
    %v3255 = vlaneseq
    %v3256 = vshrl.u32 %v3255, 7
    %v3257 = vsub.s32 %v3254, %v3256
    %v3258 = vrot.slane %v3244, %v3257
    %v3259 = vcombine.low %v3251, %v3258
    %3261 = vmatprep.subr.bf16.mxu0 0
    %3262 = vmatpush1.bf16.msra.mxu0 %v3112
    %3263 = vmatprep.subr.bf16.mxu0 0
    %3264 = vmatpush1.bf16.msra.mxu0 %v3113
    %3265 = vmatprep.subr.bf16.mxu0 0
    %3266 = vmatpush1.bf16.msra.mxu0 %v3114
    %3267 = vmatprep.subr.bf16.mxu0 0
    %3268 = vmatpush1.bf16.msra.mxu0 %v3115
    %3269 = vmatprep.subr.bf16.mxu0 0
    %3270 = vmatpush1.bf16.msra.mxu0 %v3116
    %3271 = vmatprep.subr.bf16.mxu0 0
    %3272 = vmatpush1.bf16.msra.mxu0 %v3117
    %3273 = vmatprep.subr.bf16.mxu0 0
    %3274 = vmatpush1.bf16.msra.mxu0 %v3118
    %3275 = vmatprep.subr.bf16.mxu0 0
    %3276 = vmatpush1.bf16.msra.mxu0 %v3119
    %3277 = vmatprep.subr.bf16.mxu0 0
    %3278 = vmatpush1.bf16.msra.mxu0 0
    %3279 = vmatprep.subr.bf16.mxu0 0
    %3280 = vmatpush1.bf16.msra.mxu0 0
    %3281 = vmatprep.subr.bf16.mxu0 0
    %3282 = vmatpush1.bf16.msra.mxu0 0
    %3283 = vmatprep.subr.bf16.mxu0 0
    %3284 = vmatpush1.bf16.msra.mxu0 0
    %3285 = vmatprep.subr.bf16.mxu0 0
    %3286 = vmatpush1.bf16.msra.mxu0 0
    %3287 = vmatprep.subr.bf16.mxu0 0
    %3288 = vmatpush1.bf16.msra.mxu0 0
    %3289 = vmatprep.subr.bf16.mxu0 0
    %3290 = vmatpush1.bf16.msra.mxu0 0
    %3291 = vmatprep.subr.bf16.mxu0 0
    %3292 = vmatpush1.bf16.msra.mxu0 0
    %3293 = vmatprep.mubr.bf16.mxu0 0
    %3294 = vmatmul.mubr.bf16.gmra.mrb[0].mxu0 %v3259
    %v3295 = vpop.f32.mrb[0].mxu0
    %v3296 = vadd.f32 %v3237, %v3295
    %v3297 = vpop.f32.mrb[0].mxu0
    %v3298 = vpop.f32.mrb[0].mxu0
    %v3299 = vadd.f32 %v3240, %v3298
    %v3300 = vpop.f32.mrb[0].mxu0
    %3301 = vdwg.mxu0
    %vm3302 = vcmask 1040384
    %vm3303 = vcmask 1042434
    %vm3304 = vmor %vm3302, %vm3303
    %vm3305 = vcmask 1044484
    %vm3306 = vmor %vm3304, %vm3305
    %vm3307 = vcmask 1046534
    %vm3308 = vmor %vm3306, %vm3307
    %v3309 = vrot.slane %v3055, 7
    %v3310 = vrot.slane %v3309, 2
    %v3311 = vrot.slane %v3063, 7
    %v3312 = vsel %vm3308, %v3310, %v3311
    %v3313 = vrot.slane %v3311, 2
    %v3314 = vrot.slane %v3062, 7
    %v3315 = vsel %vm3308, %v3313, %v3314
    %v3316 = vrot.slane %v3081, 7
    %v3317 = vrot.slane %v3316, 2
    %v3318 = vrot.slane %v3089, 7
    %v3319 = vsel %vm3308, %v3317, %v3318
    %v3320 = vrot.slane %v3318, 2
    %v3321 = vrot.slane %v3097, 7
    %v3322 = vsel %vm3308, %v3320, %v3321
    %s3323 = scalar_lea.vmem [#allocation2], 128
    %v3324 = vld [vmem:[%s3323] sm:$0xff]
    %v3325 = vld [vmem:[%s3323 + $0x8] sm:$0xff]
    %v3326 = vld [vmem:[%s3323 + $0x10] sm:$0xff]
    %v3327 = vld [vmem:[%s3323 + $0x18] sm:$0xff]
    %v3328 = vld [vmem:[%s3323 + $0x20] sm:$0xff]
    %v3329 = vld [vmem:[%s3323 + $0x28] sm:$0xff]
    %v3330 = vld [vmem:[%s3323 + $0x30] sm:$0xff]
    %v3331 = vld [vmem:[%s3323 + $0x38] sm:$0xff]
    %v3332 = vcombine.low %v3312, %v3315
    %v3333 = vcombine.low %v3319, %v3322
    %v3335 = vunpack.c.l.s4 1983009808
    %v3336 = vunpack.c.0.s8 %v3335
    %v3337 = vlaneseq
    %v3338 = vshrl.u32 %v3337, 7
    %v3339 = vsub.s32 %v3336, %v3338
    %v3340 = vrot.slane %v3332, %v3339
    %v3342 = vunpack.c.l.s4 1983009808
    %v3343 = vunpack.c.0.s8 %v3342
    %v3344 = vlaneseq
    %v3345 = vshrl.u32 %v3344, 7
    %v3346 = vsub.s32 %v3343, %v3345
    %v3347 = vrot.slane %v3333, %v3346
    %v3348 = vcombine.low %v3340, %v3347
    %3350 = vmatprep.subr.bf16.mxu0 0
    %3351 = vmatpush1.bf16.msra.mxu0 %v3324
    %3352 = vmatprep.subr.bf16.mxu0 0
    %3353 = vmatpush1.bf16.msra.mxu0 %v3325
    %3354 = vmatprep.subr.bf16.mxu0 0
    %3355 = vmatpush1.bf16.msra.mxu0 %v3326
    %3356 = vmatprep.subr.bf16.mxu0 0
    %3357 = vmatpush1.bf16.msra.mxu0 %v3327
    %3358 = vmatprep.subr.bf16.mxu0 0
    %3359 = vmatpush1.bf16.msra.mxu0 %v3328
    %3360 = vmatprep.subr.bf16.mxu0 0
    %3361 = vmatpush1.bf16.msra.mxu0 %v3329
    %3362 = vmatprep.subr.bf16.mxu0 0
    %3363 = vmatpush1.bf16.msra.mxu0 %v3330
    %3364 = vmatprep.subr.bf16.mxu0 0
    %3365 = vmatpush1.bf16.msra.mxu0 %v3331
    %3366 = vmatprep.subr.bf16.mxu0 0
    %3367 = vmatpush1.bf16.msra.mxu0 0
    %3368 = vmatprep.subr.bf16.mxu0 0
    %3369 = vmatpush1.bf16.msra.mxu0 0
    %3370 = vmatprep.subr.bf16.mxu0 0
    %3371 = vmatpush1.bf16.msra.mxu0 0
    %3372 = vmatprep.subr.bf16.mxu0 0
    %3373 = vmatpush1.bf16.msra.mxu0 0
    %3374 = vmatprep.subr.bf16.mxu0 0
    %3375 = vmatpush1.bf16.msra.mxu0 0
    %3376 = vmatprep.subr.bf16.mxu0 0
    %3377 = vmatpush1.bf16.msra.mxu0 0
    %3378 = vmatprep.subr.bf16.mxu0 0
    %3379 = vmatpush1.bf16.msra.mxu0 0
    %3380 = vmatprep.subr.bf16.mxu0 0
    %3381 = vmatpush1.bf16.msra.mxu0 0
    %3382 = vmatprep.mubr.bf16.mxu0 0
    %3383 = vmatmul.mubr.bf16.gmra.mrb[0].mxu0 %v3348
    %v3384 = vpop.f32.mrb[0].mxu0
    %v3385 = vadd.f32 0.0, %v3384
    %v3386 = vpop.f32.mrb[0].mxu0
    %v3387 = vpop.f32.mrb[0].mxu0
    %v3388 = vadd.f32 0.0, %v3387
    %v3389 = vpop.f32.mrb[0].mxu0
    %3390 = vdwg.mxu0
    %v3391 = vadd.f32 %v3296, %v3385
    %v3392 = vadd.f32 %v3299, %v3388
    %vm3393 = vsmask.f32 256
    %vm3394 = vsmask.f32 2312
    %vm3395 = vmor %vm3393, %vm3394
    %vm3396 = vsmask.f32 4368
    %vm3397 = vmor %vm3395, %vm3396
    %vm3398 = vsmask.f32 6424
    %vm3399 = vmor %vm3397, %vm3398
    %v3400 = vrot.slane %v3128, 7
    %v3401 = vrot.slane %v3400, 2
    %v3402 = vrot.slane %v3141, 7
    %v3403 = vor.u32 %v3402, %v3137
    %v3404 = vsel %vm3399, %v3401, %v3403
    %v3405 = vrot.slane %v3402, 2
    %v3406 = vshrl.u32 %v3062, 16
    %v3408 = vrot.slane %v3406, 7
    %v3409 = vor.u32 %v3408, %v3147
    %v3410 = vsel %vm3399, %v3405, %v3409
    %v3411 = vrot.slane %v3152, 7
    %v3412 = vrot.slane %v3411, 2
    %v3413 = vrot.slane %v3165, 7
    %v3414 = vor.u32 %v3413, %v3161
    %v3415 = vsel %vm3399, %v3412, %v3414
    %v3416 = vrot.slane %v3413, 2
    %v3417 = vshrl.u32 %v3097, 16
    %v3419 = vrot.slane %v3417, 7
    %v3420 = vor.u32 %v3419, %v3171
    %v3421 = vsel %vm3399, %v3416, %v3420
    %s3422 = scalar_lea.vmem [#allocation2], 192
    %v3423 = vld [vmem:[%s3422] sm:$0xff]
    %v3424 = vld [vmem:[%s3422 + $0x8] sm:$0xff]
    %v3425 = vld [vmem:[%s3422 + $0x10] sm:$0xff]
    %v3426 = vld [vmem:[%s3422 + $0x18] sm:$0xff]
    %v3427 = vld [vmem:[%s3422 + $0x20] sm:$0xff]
    %v3428 = vld [vmem:[%s3422 + $0x28] sm:$0xff]
    %v3429 = vld [vmem:[%s3422 + $0x30] sm:$0xff]
    %v3430 = vld [vmem:[%s3422 + $0x38] sm:$0xff]
    %v3431 = vcombine.low %v3404, %v3410
    %v3432 = vcombine.low %v3415, %v3421
    %v3434 = vunpack.c.l.s4 1983009808
    %v3435 = vunpack.c.0.s8 %v3434
    %v3436 = vlaneseq
    %v3437 = vshrl.u32 %v3436, 7
    %v3438 = vsub.s32 %v3435, %v3437
    %v3439 = vrot.slane %v3431, %v3438
    %v3441 = vunpack.c.l.s4 1983009808
    %v3442 = vunpack.c.0.s8 %v3441
    %v3443 = vlaneseq
    %v3444 = vshrl.u32 %v3443, 7
    %v3445 = vsub.s32 %v3442, %v3444
    %v3446 = vrot.slane %v3432, %v3445
    %v3447 = vcombine.low %v3439, %v3446
    %3449 = vmatprep.subr.bf16.mxu0 0
    %3450 = vmatpush1.bf16.msra.mxu0 %v3423
    %3451 = vmatprep.subr.bf16.mxu0 0
    %3452 = vmatpush1.bf16.msra.mxu0 %v3424
    %3453 = vmatprep.subr.bf16.mxu0 0
    %3454 = vmatpush1.bf16.msra.mxu0 %v3425
    %3455 = vmatprep.subr.bf16.mxu0 0
    %3456 = vmatpush1.bf16.msra.mxu0 %v3426
    %3457 = vmatprep.subr.bf16.mxu0 0
    %3458 = vmatpush1.bf16.msra.mxu0 %v3427
    %3459 = vmatprep.subr.bf16.mxu0 0
    %3460 = vmatpush1.bf16.msra.mxu0 %v3428
    %3461 = vmatprep.subr.bf16.mxu0 0
    %3462 = vmatpush1.bf16.msra.mxu0 %v3429
    %3463 = vmatprep.subr.bf16.mxu0 0
    %3464 = vmatpush1.bf16.msra.mxu0 %v3430
    %3465 = vmatprep.subr.bf16.mxu0 0
    %3466 = vmatpush1.bf16.msra.mxu0 0
    %3467 = vmatprep.subr.bf16.mxu0 0
    %3468 = vmatpush1.bf16.msra.mxu0 0
    %3469 = vmatprep.subr.bf16.mxu0 0
    %3470 = vmatpush1.bf16.msra.mxu0 0
    %3471 = vmatprep.subr.bf16.mxu0 0
    %3472 = vmatpush1.bf16.msra.mxu0 0
    %3473 = vmatprep.subr.bf16.mxu0 0
    %3474 = vmatpush1.bf16.msra.mxu0 0
    %3475 = vmatprep.subr.bf16.mxu0 0
    %3476 = vmatpush1.bf16.msra.mxu0 0
    %3477 = vmatprep.subr.bf16.mxu0 0
    %3478 = vmatpush1.bf16.msra.mxu0 0
    %3479 = vmatprep.subr.bf16.mxu0 0
    %3480 = vmatpush1.bf16.msra.mxu0 0
    %3481 = vmatprep.mubr.bf16.mxu0 0
    %3482 = vmatmul.mubr.bf16.gmra.mrb[0].mxu0 %v3447
    %v3483 = vpop.f32.mrb[0].mxu0
    %v3484 = vadd.f32 0.0, %v3483
    %v3485 = vpop.f32.mrb[0].mxu0
    %v3486 = vpop.f32.mrb[0].mxu0
    %v3487 = vadd.f32 0.0, %v3486
    %v3488 = vpop.f32.mrb[0].mxu0
    %3489 = vdwg.mxu0
    %v3490 = vadd.f32 %v3391, %v3484
    %v3491 = vadd.f32 %v3392, %v3487
    %s3492 = scalar_lea.vmem [#allocation2], 256
    %v3493 = vld [vmem:[%s3492] sm:$0xff]
    %v3494 = vld [vmem:[%s3492 + $0x8] sm:$0xff]
    %v3495 = vld [vmem:[%s3492 + $0x10] sm:$0xff]
    %v3496 = vld [vmem:[%s3492 + $0x18] sm:$0xff]
    %v3497 = vld [vmem:[%s3492 + $0x20] sm:$0xff]
    %v3498 = vld [vmem:[%s3492 + $0x28] sm:$0xff]
    %v3499 = vld [vmem:[%s3492 + $0x30] sm:$0xff]
    %v3500 = vld [vmem:[%s3492 + $0x38] sm:$0xff]
    %v3501 = vcombine.low %v3063, %v3062
    %v3502 = vcombine.low %v3089, %v3097
    %v3504 = vunpack.c.l.s4 1983009808
    %v3505 = vunpack.c.0.s8 %v3504
    %v3506 = vlaneseq
    %v3507 = vshrl.u32 %v3506, 7
    %v3508 = vsub.s32 %v3505, %v3507
    %v3509 = vrot.slane %v3501, %v3508
    %v3511 = vunpack.c.l.s4 1983009808
    %v3512 = vunpack.c.0.s8 %v3511
    %v3513 = vlaneseq
    %v3514 = vshrl.u32 %v3513, 7
    %v3515 = vsub.s32 %v3512, %v3514
    %v3516 = vrot.slane %v3502, %v3515
    %v3517 = vcombine.low %v3509, %v3516
    %3519 = vmatprep.subr.bf16.mxu0 0
    %3520 = vmatpush1.bf16.msra.mxu0 %v3493
    %3521 = vmatprep.subr.bf16.mxu0 0
    %3522 = vmatpush1.bf16.msra.mxu0 %v3494
    %3523 = vmatprep.subr.bf16.mxu0 0
    %3524 = vmatpush1.bf16.msra.mxu0 %v3495
    %3525 = vmatprep.subr.bf16.mxu0 0
    %3526 = vmatpush1.bf16.msra.mxu0 %v3496
    %3527 = vmatprep.subr.bf16.mxu0 0
    %3528 = vmatpush1.bf16.msra.mxu0 %v3497
    %3529 = vmatprep.subr.bf16.mxu0 0
    %3530 = vmatpush1.bf16.msra.mxu0 %v3498
    %3531 = vmatprep.subr.bf16.mxu0 0
    %3532 = vmatpush1.bf16.msra.mxu0 %v3499
    %3533 = vmatprep.subr.bf16.mxu0 0
    %3534 = vmatpush1.bf16.msra.mxu0 %v3500
    %3535 = vmatprep.subr.bf16.mxu0 0
    %3536 = vmatpush1.bf16.msra.mxu0 0
    %3537 = vmatprep.subr.bf16.mxu0 0
    %3538 = vmatpush1.bf16.msra.mxu0 0
    %3539 = vmatprep.subr.bf16.mxu0 0
    %3540 = vmatpush1.bf16.msra.mxu0 0
    %3541 = vmatprep.subr.bf16.mxu0 0
    %3542 = vmatpush1.bf16.msra.mxu0 0
    %3543 = vmatprep.subr.bf16.mxu0 0
    %3544 = vmatpush1.bf16.msra.mxu0 0
    %3545 = vmatprep.subr.bf16.mxu0 0
    %3546 = vmatpush1.bf16.msra.mxu0 0
    %3547 = vmatprep.subr.bf16.mxu0 0
    %3548 = vmatpush1.bf16.msra.mxu0 0
    %3549 = vmatprep.subr.bf16.mxu0 0
    %3550 = vmatpush1.bf16.msra.mxu0 0
    %3551 = vmatprep.mubr.bf16.mxu0 0
    %3552 = vmatmul.mubr.bf16.gmra.mrb[0].mxu0 %v3517
    %v3553 = vpop.f32.mrb[0].mxu0
    %v3554 = vadd.f32 0.0, %v3553
    %v3555 = vpop.f32.mrb[0].mxu0
    %v3556 = vpop.f32.mrb[0].mxu0
    %v3557 = vadd.f32 0.0, %v3556
    %v3558 = vpop.f32.mrb[0].mxu0
    %3559 = vdwg.mxu0
    %v3560 = vadd.f32 %v3490, %v3554
    %v3561 = vadd.f32 %v3491, %v3557
    %v3562 = vrot.slane %v3406, 6
    %v3563 = vor.u32 %v3562, %v3149
    %v3564 = vrot.slane %v3563, 2
    %v3566 = vshll.u32 %v3064, 16
    %v3568 = vrot.slane %v3566, 7
    %v3569 = vsel %vm3126, %v3564, %v3568
    %v3570 = vrot.slane %v3417, 6
    %v3571 = vor.u32 %v3570, %v3173
    %v3572 = vrot.slane %v3571, 2
    %v3574 = vshll.u32 %v3096, 16
    %v3576 = vrot.slane %v3574, 7
    %v3577 = vsel %vm3126, %v3572, %v3576
    %s3578 = scalar_lea.vmem [#allocation2], 320
    %v3579 = vld [vmem:[%s3578] sm:$0xff]
    %v3580 = vld [vmem:[%s3578 + $0x8] sm:$0xff]
    %v3581 = vld [vmem:[%s3578 + $0x10] sm:$0xff]
    %v3582 = vld [vmem:[%s3578 + $0x18] sm:$0xff]
    %v3583 = vld [vmem:[%s3578 + $0x20] sm:$0xff]
    %v3584 = vld [vmem:[%s3578 + $0x28] sm:$0xff]
    %v3585 = vld [vmem:[%s3578 + $0x30] sm:$0xff]
    %v3586 = vld [vmem:[%s3578 + $0x38] sm:$0xff]
    %v3587 = vcombine.low %v3150, %v3569
    %v3588 = vcombine.low %v3174, %v3577
    %v3590 = vunpack.c.l.s4 1983009808
    %v3591 = vunpack.c.0.s8 %v3590
    %v3592 = vlaneseq
    %v3593 = vshrl.u32 %v3592, 7
    %v3594 = vsub.s32 %v3591, %v3593
    %v3595 = vrot.slane %v3587, %v3594
    %v3597 = vunpack.c.l.s4 1983009808
    %v3598 = vunpack.c.0.s8 %v3597
    %v3599 = vlaneseq
    %v3600 = vshrl.u32 %v3599, 7
    %v3601 = vsub.s32 %v3598, %v3600
    %v3602 = vrot.slane %v3588, %v3601
    %v3603 = vcombine.low %v3595, %v3602
    %3605 = vmatprep.subr.bf16.mxu0 0
    %3606 = vmatpush1.bf16.msra.mxu0 %v3579
    %3607 = vmatprep.subr.bf16.mxu0 0
    %3608 = vmatpush1.bf16.msra.mxu0 %v3580
    %3609 = vmatprep.subr.bf16.mxu0 0
    %3610 = vmatpush1.bf16.msra.mxu0 %v3581
    %3611 = vmatprep.subr.bf16.mxu0 0
    %3612 = vmatpush1.bf16.msra.mxu0 %v3582
    %3613 = vmatprep.subr.bf16.mxu0 0
    %3614 = vmatpush1.bf16.msra.mxu0 %v3583
    %3615 = vmatprep.subr.bf16.mxu0 0
    %3616 = vmatpush1.bf16.msra.mxu0 %v3584
    %3617 = vmatprep.subr.bf16.mxu0 0
    %3618 = vmatpush1.bf16.msra.mxu0 %v3585
    %3619 = vmatprep.subr.bf16.mxu0 0
    %3620 = vmatpush1.bf16.msra.mxu0 %v3586
    %3621 = vmatprep.subr.bf16.mxu0 0
    %3622 = vmatpush1.bf16.msra.mxu0 0
    %3623 = vmatprep.subr.bf16.mxu0 0
    %3624 = vmatpush1.bf16.msra.mxu0 0
    %3625 = vmatprep.subr.bf16.mxu0 0
    %3626 = vmatpush1.bf16.msra.mxu0 0
    %3627 = vmatprep.subr.bf16.mxu0 0
    %3628 = vmatpush1.bf16.msra.mxu0 0
    %3629 = vmatprep.subr.bf16.mxu0 0
    %3630 = vmatpush1.bf16.msra.mxu0 0
    %3631 = vmatprep.subr.bf16.mxu0 0
    %3632 = vmatpush1.bf16.msra.mxu0 0
    %3633 = vmatprep.subr.bf16.mxu0 0
    %3634 = vmatpush1.bf16.msra.mxu0 0
    %3635 = vmatprep.subr.bf16.mxu0 0
    %3636 = vmatpush1.bf16.msra.mxu0 0
    %3637 = vmatprep.mubr.bf16.mxu0 0
    %3638 = vmatmul.mubr.bf16.gmra.mrb[0].mxu0 %v3603
    %v3639 = vpop.f32.mrb[0].mxu0
    %v3640 = vadd.f32 0.0, %v3639
    %v3641 = vpop.f32.mrb[0].mxu0
    %v3642 = vpop.f32.mrb[0].mxu0
    %v3643 = vadd.f32 0.0, %v3642
    %v3644 = vpop.f32.mrb[0].mxu0
    %3645 = vdwg.mxu0
    %v3646 = vadd.f32 %v3560, %v3640
    %v3647 = vadd.f32 %v3561, %v3643
    %v3648 = vrot.slane %v3314, 2
    %v3649 = vrot.slane %v3064, 7
    %v3650 = vsel %vm3308, %v3648, %v3649
    %v3651 = vrot.slane %v3321, 2
    %v3652 = vrot.slane %v3096, 7
    %v3653 = vsel %vm3308, %v3651, %v3652
    %s3654 = scalar_lea.vmem [#allocation2], 384
    %v3655 = vld [vmem:[%s3654] sm:$0xff]
    %v3656 = vld [vmem:[%s3654 + $0x8] sm:$0xff]
    %v3657 = vld [vmem:[%s3654 + $0x10] sm:$0xff]
    %v3658 = vld [vmem:[%s3654 + $0x18] sm:$0xff]
    %v3659 = vld [vmem:[%s3654 + $0x20] sm:$0xff]
    %v3660 = vld [vmem:[%s3654 + $0x28] sm:$0xff]
    %v3661 = vld [vmem:[%s3654 + $0x30] sm:$0xff]
    %v3662 = vld [vmem:[%s3654 + $0x38] sm:$0xff]
    %v3663 = vcombine.low %v3315, %v3650
    %v3664 = vcombine.low %v3322, %v3653
    %v3666 = vunpack.c.l.s4 1983009808
    %v3667 = vunpack.c.0.s8 %v3666
    %v3668 = vlaneseq
    %v3669 = vshrl.u32 %v3668, 7
    %v3670 = vsub.s32 %v3667, %v3669
    %v3671 = vrot.slane %v3663, %v3670
    %v3673 = vunpack.c.l.s4 1983009808
    %v3674 = vunpack.c.0.s8 %v3673
    %v3675 = vlaneseq
    %v3676 = vshrl.u32 %v3675, 7
    %v3677 = vsub.s32 %v3674, %v3676
    %v3678 = vrot.slane %v3664, %v3677
    %v3679 = vcombine.low %v3671, %v3678
    %3681 = vmatprep.subr.bf16.mxu0 0
    %3682 = vmatpush1.bf16.msra.mxu0 %v3655
    %3683 = vmatprep.subr.bf16.mxu0 0
    %3684 = vmatpush1.bf16.msra.mxu0 %v3656
    %3685 = vmatprep.subr.bf16.mxu0 0
    %3686 = vmatpush1.bf16.msra.mxu0 %v3657
    %3687 = vmatprep.subr.bf16.mxu0 0
    %3688 = vmatpush1.bf16.msra.mxu0 %v3658
    %3689 = vmatprep.subr.bf16.mxu0 0
    %3690 = vmatpush1.bf16.msra.mxu0 %v3659
    %3691 = vmatprep.subr.bf16.mxu0 0
    %3692 = vmatpush1.bf16.msra.mxu0 %v3660
    %3693 = vmatprep.subr.bf16.mxu0 0
    %3694 = vmatpush1.bf16.msra.mxu0 %v3661
    %3695 = vmatprep.subr.bf16.mxu0 0
    %3696 = vmatpush1.bf16.msra.mxu0 %v3662
    %3697 = vmatprep.subr.bf16.mxu0 0
    %3698 = vmatpush1.bf16.msra.mxu0 0
    %3699 = vmatprep.subr.bf16.mxu0 0
    %3700 = vmatpush1.bf16.msra.mxu0 0
    %3701 = vmatprep.subr.bf16.mxu0 0
    %3702 = vmatpush1.bf16.msra.mxu0 0
    %3703 = vmatprep.subr.bf16.mxu0 0
    %3704 = vmatpush1.bf16.msra.mxu0 0
    %3705 = vmatprep.subr.bf16.mxu0 0
    %3706 = vmatpush1.bf16.msra.mxu0 0
    %3707 = vmatprep.subr.bf16.mxu0 0
    %3708 = vmatpush1.bf16.msra.mxu0 0
    %3709 = vmatprep.subr.bf16.mxu0 0
    %3710 = vmatpush1.bf16.msra.mxu0 0
    %3711 = vmatprep.subr.bf16.mxu0 0
    %3712 = vmatpush1.bf16.msra.mxu0 0
    %3713 = vmatprep.mubr.bf16.mxu0 0
    %3714 = vmatmul.mubr.bf16.gmra.mrb[0].mxu0 %v3679
    %v3715 = vpop.f32.mrb[0].mxu0
    %v3716 = vadd.f32 0.0, %v3715
    %v3717 = vpop.f32.mrb[0].mxu0
    %v3718 = vpop.f32.mrb[0].mxu0
    %v3719 = vadd.f32 0.0, %v3718
    %v3720 = vpop.f32.mrb[0].mxu0
    %3721 = vdwg.mxu0
    %v3722 = vadd.f32 %v3646, %v3716
    %v3723 = vadd.f32 %v3647, %v3719
    %v3724 = vrot.slane %v3408, 2
    %v3725 = vshrl.u32 %v3064, 16
    %v3727 = vrot.slane %v3725, 7
    %v3728 = vor.u32 %v3727, %v3566
    %v3729 = vsel %vm3399, %v3724, %v3728
    %v3730 = vrot.slane %v3419, 2
    %v3731 = vshrl.u32 %v3096, 16
    %v3733 = vrot.slane %v3731, 7
    %v3734 = vor.u32 %v3733, %v3574
    %v3735 = vsel %vm3399, %v3730, %v3734
    %s3736 = scalar_lea.vmem [#allocation2], 448
    %v3737 = vld [vmem:[%s3736] sm:$0xff]
    %v3738 = vld [vmem:[%s3736 + $0x8] sm:$0xff]
    %v3739 = vld [vmem:[%s3736 + $0x10] sm:$0xff]
    %v3740 = vld [vmem:[%s3736 + $0x18] sm:$0xff]
    %v3741 = vld [vmem:[%s3736 + $0x20] sm:$0xff]
    %v3742 = vld [vmem:[%s3736 + $0x28] sm:$0xff]
    %v3743 = vld [vmem:[%s3736 + $0x30] sm:$0xff]
    %v3744 = vld [vmem:[%s3736 + $0x38] sm:$0xff]
    %v3745 = vcombine.low %v3410, %v3729
    %v3746 = vcombine.low %v3421, %v3735
    %v3748 = vunpack.c.l.s4 1983009808
    %v3749 = vunpack.c.0.s8 %v3748
    %v3750 = vlaneseq
    %v3751 = vshrl.u32 %v3750, 7
    %v3752 = vsub.s32 %v3749, %v3751
    %v3753 = vrot.slane %v3745, %v3752
    %v3755 = vunpack.c.l.s4 1983009808
    %v3756 = vunpack.c.0.s8 %v3755
    %v3757 = vlaneseq
    %v3758 = vshrl.u32 %v3757, 7
    %v3759 = vsub.s32 %v3756, %v3758
    %v3760 = vrot.slane %v3746, %v3759
    %v3761 = vcombine.low %v3753, %v3760
    %3763 = vmatprep.subr.bf16.mxu0 0
    %3764 = vmatpush1.bf16.msra.mxu0 %v3737
    %3765 = vmatprep.subr.bf16.mxu0 0
    %3766 = vmatpush1.bf16.msra.mxu0 %v3738
    %3767 = vmatprep.subr.bf16.mxu0 0
    %3768 = vmatpush1.bf16.msra.mxu0 %v3739
    %3769 = vmatprep.subr.bf16.mxu0 0
    %3770 = vmatpush1.bf16.msra.mxu0 %v3740
    %3771 = vmatprep.subr.bf16.mxu0 0
    %3772 = vmatpush1.bf16.msra.mxu0 %v3741
    %3773 = vmatprep.subr.bf16.mxu0 0
    %3774 = vmatpush1.bf16.msra.mxu0 %v3742
    %3775 = vmatprep.subr.bf16.mxu0 0
    %3776 = vmatpush1.bf16.msra.mxu0 %v3743
    %3777 = vmatprep.subr.bf16.mxu0 0
    %3778 = vmatpush1.bf16.msra.mxu0 %v3744
    %3779 = vmatprep.subr.bf16.mxu0 0
    %3780 = vmatpush1.bf16.msra.mxu0 0
    %3781 = vmatprep.subr.bf16.mxu0 0
    %3782 = vmatpush1.bf16.msra.mxu0 0
    %3783 = vmatprep.subr.bf16.mxu0 0
    %3784 = vmatpush1.bf16.msra.mxu0 0
    %3785 = vmatprep.subr.bf16.mxu0 0
    %3786 = vmatpush1.bf16.msra.mxu0 0
    %3787 = vmatprep.subr.bf16.mxu0 0
    %3788 = vmatpush1.bf16.msra.mxu0 0
    %3789 = vmatprep.subr.bf16.mxu0 0
    %3790 = vmatpush1.bf16.msra.mxu0 0
    %3791 = vmatprep.subr.bf16.mxu0 0
    %3792 = vmatpush1.bf16.msra.mxu0 0
    %3793 = vmatprep.subr.bf16.mxu0 0
    %3794 = vmatpush1.bf16.msra.mxu0 0
    %3795 = vmatprep.mubr.bf16.mxu0 0
    %3796 = vmatmul.mubr.bf16.gmra.mrb[0].mxu0 %v3761
    %v3797 = vpop.f32.mrb[0].mxu0
    %v3798 = vadd.f32 0.0, %v3797
    %v3799 = vpop.f32.mrb[0].mxu0
    %v3800 = vpop.f32.mrb[0].mxu0
    %v3801 = vadd.f32 0.0, %v3800
    %v3802 = vpop.f32.mrb[0].mxu0
    %3803 = vdwg.mxu0
    %v3804 = vadd.f32 %v3722, %v3798
    %v3805 = vadd.f32 %v3723, %v3801
    %s3806 = scalar_lea.vmem [#allocation2], 512
    %v3807 = vld [vmem:[%s3806] sm:$0xff]
    %v3808 = vld [vmem:[%s3806 + $0x8] sm:$0xff]
    %v3809 = vld [vmem:[%s3806 + $0x10] sm:$0xff]
    %v3810 = vld [vmem:[%s3806 + $0x18] sm:$0xff]
    %v3811 = vld [vmem:[%s3806 + $0x20] sm:$0xff]
    %v3812 = vld [vmem:[%s3806 + $0x28] sm:$0xff]
    %v3813 = vld [vmem:[%s3806 + $0x30] sm:$0xff]
    %v3814 = vld [vmem:[%s3806 + $0x38] sm:$0xff]
    %v3815 = vcombine.low %v3062, %v3064
    %v3816 = vcombine.low %v3097, %v3096
    %v3818 = vunpack.c.l.s4 1983009808
    %v3819 = vunpack.c.0.s8 %v3818
    %v3820 = vlaneseq
    %v3821 = vshrl.u32 %v3820, 7
    %v3822 = vsub.s32 %v3819, %v3821
    %v3823 = vrot.slane %v3815, %v3822
    %v3825 = vunpack.c.l.s4 1983009808
    %v3826 = vunpack.c.0.s8 %v3825
    %v3827 = vlaneseq
    %v3828 = vshrl.u32 %v3827, 7
    %v3829 = vsub.s32 %v3826, %v3828
    %v3830 = vrot.slane %v3816, %v3829
    %v3831 = vcombine.low %v3823, %v3830
    %3833 = vmatprep.subr.bf16.mxu0 0
    %3834 = vmatpush1.bf16.msra.mxu0 %v3807
    %3835 = vmatprep.subr.bf16.mxu0 0
    %3836 = vmatpush1.bf16.msra.mxu0 %v3808
    %3837 = vmatprep.subr.bf16.mxu0 0
    %3838 = vmatpush1.bf16.msra.mxu0 %v3809
    %3839 = vmatprep.subr.bf16.mxu0 0
    %3840 = vmatpush1.bf16.msra.mxu0 %v3810
    %3841 = vmatprep.subr.bf16.mxu0 0
    %3842 = vmatpush1.bf16.msra.mxu0 %v3811
    %3843 = vmatprep.subr.bf16.mxu0 0
    %3844 = vmatpush1.bf16.msra.mxu0 %v3812
    %3845 = vmatprep.subr.bf16.mxu0 0
    %3846 = vmatpush1.bf16.msra.mxu0 %v3813
    %3847 = vmatprep.subr.bf16.mxu0 0
    %3848 = vmatpush1.bf16.msra.mxu0 %v3814
    %3849 = vmatprep.subr.bf16.mxu0 0
    %3850 = vmatpush1.bf16.msra.mxu0 0
    %3851 = vmatprep.subr.bf16.mxu0 0
    %3852 = vmatpush1.bf16.msra.mxu0 0
    %3853 = vmatprep.subr.bf16.mxu0 0
    %3854 = vmatpush1.bf16.msra.mxu0 0
    %3855 = vmatprep.subr.bf16.mxu0 0
    %3856 = vmatpush1.bf16.msra.mxu0 0
    %3857 = vmatprep.subr.bf16.mxu0 0
    %3858 = vmatpush1.bf16.msra.mxu0 0
    %3859 = vmatprep.subr.bf16.mxu0 0
    %3860 = vmatpush1.bf16.msra.mxu0 0
    %3861 = vmatprep.subr.bf16.mxu0 0
    %3862 = vmatpush1.bf16.msra.mxu0 0
    %3863 = vmatprep.subr.bf16.mxu0 0
    %3864 = vmatpush1.bf16.msra.mxu0 0
    %3865 = vmatprep.mubr.bf16.mxu0 0
    %3866 = vmatmul.mubr.bf16.gmra.mrb[0].mxu0 %v3831
    %v3867 = vpop.f32.mrb[0].mxu0
    %v3868 = vadd.f32 0.0, %v3867
    %v3869 = vpop.f32.mrb[0].mxu0
    %v3870 = vpop.f32.mrb[0].mxu0
    %v3871 = vadd.f32 0.0, %v3870
    %v3872 = vpop.f32.mrb[0].mxu0
    %3873 = vdwg.mxu0
    %v3874 = vadd.f32 %v3804, %v3868
    %v3875 = vadd.f32 %v3805, %v3871
    %v3876 = vrot.slane %v3725, 6
    %v3877 = vor.u32 %v3876, %v3568
    %v3878 = vrot.slane %v3877, 2
    %v3880 = vshll.u32 %v3072, 16
    %v3882 = vrot.slane %v3880, 7
    %v3883 = vsel %vm3126, %v3878, %v3882
    %v3884 = vrot.slane %v3731, 6
    %v3885 = vor.u32 %v3884, %v3576
    %v3886 = vrot.slane %v3885, 2
    %v3888 = vshll.u32 %v3098, 16
    %v3890 = vrot.slane %v3888, 7
    %v3891 = vsel %vm3126, %v3886, %v3890
    %s3892 = scalar_lea.vmem [#allocation2], 576
    %v3893 = vld [vmem:[%s3892] sm:$0xff]
    %v3894 = vld [vmem:[%s3892 + $0x8] sm:$0xff]
    %v3895 = vld [vmem:[%s3892 + $0x10] sm:$0xff]
    %v3896 = vld [vmem:[%s3892 + $0x18] sm:$0xff]
    %v3897 = vld [vmem:[%s3892 + $0x20] sm:$0xff]
    %v3898 = vld [vmem:[%s3892 + $0x28] sm:$0xff]
    %v3899 = vld [vmem:[%s3892 + $0x30] sm:$0xff]
    %v3900 = vld [vmem:[%s3892 + $0x38] sm:$0xff]
    %v3901 = vcombine.low %v3569, %v3883
    %v3902 = vcombine.low %v3577, %v3891
    %v3904 = vunpack.c.l.s4 1983009808
    %v3905 = vunpack.c.0.s8 %v3904
    %v3906 = vlaneseq
    %v3907 = vshrl.u32 %v3906, 7
    %v3908 = vsub.s32 %v3905, %v3907
    %v3909 = vrot.slane %v3901, %v3908
    %v3911 = vunpack.c.l.s4 1983009808
    %v3912 = vunpack.c.0.s8 %v3911
    %v3913 = vlaneseq
    %v3914 = vshrl.u32 %v3913, 7
    %v3915 = vsub.s32 %v3912, %v3914
    %v3916 = vrot.slane %v3902, %v3915
    %v3917 = vcombine.low %v3909, %v3916
    %3919 = vmatprep.subr.bf16.mxu0 0
    %3920 = vmatpush1.bf16.msra.mxu0 %v3893
    %3921 = vmatprep.subr.bf16.mxu0 0
    %3922 = vmatpush1.bf16.msra.mxu0 %v3894
    %3923 = vmatprep.subr.bf16.mxu0 0
    %3924 = vmatpush1.bf16.msra.mxu0 %v3895
    %3925 = vmatprep.subr.bf16.mxu0 0
    %3926 = vmatpush1.bf16.msra.mxu0 %v3896
    %3927 = vmatprep.subr.bf16.mxu0 0
    %3928 = vmatpush1.bf16.msra.mxu0 %v3897
    %3929 = vmatprep.subr.bf16.mxu0 0
    %3930 = vmatpush1.bf16.msra.mxu0 %v3898
    %3931 = vmatprep.subr.bf16.mxu0 0
    %3932 = vmatpush1.bf16.msra.mxu0 %v3899
    %3933 = vmatprep.subr.bf16.mxu0 0
    %3934 = vmatpush1.bf16.msra.mxu0 %v3900
    %3935 = vmatprep.subr.bf16.mxu0 0
    %3936 = vmatpush1.bf16.msra.mxu0 0
    %3937 = vmatprep.subr.bf16.mxu0 0
    %3938 = vmatpush1.bf16.msra.mxu0 0
    %3939 = vmatprep.subr.bf16.mxu0 0
    %3940 = vmatpush1.bf16.msra.mxu0 0
    %3941 = vmatprep.subr.bf16.mxu0 0
    %3942 = vmatpush1.bf16.msra.mxu0 0
    %3943 = vmatprep.subr.bf16.mxu0 0
    %3944 = vmatpush1.bf16.msra.mxu0 0
    %3945 = vmatprep.subr.bf16.mxu0 0
    %3946 = vmatpush1.bf16.msra.mxu0 0
    %3947 = vmatprep.subr.bf16.mxu0 0
    %3948 = vmatpush1.bf16.msra.mxu0 0
    %3949 = vmatprep.subr.bf16.mxu0 0
    %3950 = vmatpush1.bf16.msra.mxu0 0
    %3951 = vmatprep.mubr.bf16.mxu0 0
    %3952 = vmatmul.mubr.bf16.gmra.mrb[0].mxu0 %v3917
    %v3953 = vpop.f32.mrb[0].mxu0
    %v3954 = vadd.f32 0.0, %v3953
    %v3955 = vpop.f32.mrb[0].mxu0
    %v3956 = vpop.f32.mrb[0].mxu0
    %v3957 = vadd.f32 0.0, %v3956
    %v3958 = vpop.f32.mrb[0].mxu0
    %3959 = vdwg.mxu0
    %v3960 = vadd.f32 %v3874, %v3954
    %v3961 = vadd.f32 %v3875, %v3957
    %v3962 = vrot.slane %v3649, 2
    %v3963 = vrot.slane %v3072, 7
    %v3964 = vsel %vm3308, %v3962, %v3963
    %v3965 = vrot.slane %v3652, 2
    %v3966 = vrot.slane %v3098, 7
    %v3967 = vsel %vm3308, %v3965, %v3966
    %s3968 = scalar_lea.vmem [#allocation2], 640
    %v3969 = vld [vmem:[%s3968] sm:$0xff]
    %v3970 = vld [vmem:[%s3968 + $0x8] sm:$0xff]
    %v3971 = vld [vmem:[%s3968 + $0x10] sm:$0xff]
    %v3972 = vld [vmem:[%s3968 + $0x18] sm:$0xff]
    %v3973 = vld [vmem:[%s3968 + $0x20] sm:$0xff]
    %v3974 = vld [vmem:[%s3968 + $0x28] sm:$0xff]
    %v3975 = vld [vmem:[%s3968 + $0x30] sm:$0xff]
    %v3976 = vld [vmem:[%s3968 + $0x38] sm:$0xff]
    %v3977 = vcombine.low %v3650, %v3964
    %v3978 = vcombine.low %v3653, %v3967
    %v3980 = vunpack.c.l.s4 1983009808
    %v3981 = vunpack.c.0.s8 %v3980
    %v3982 = vlaneseq
    %v3983 = vshrl.u32 %v3982, 7
    %v3984 = vsub.s32 %v3981, %v3983
    %v3985 = vrot.slane %v3977, %v3984
    %v3987 = vunpack.c.l.s4 1983009808
    %v3988 = vunpack.c.0.s8 %v3987
    %v3989 = vlaneseq
    %v3990 = vshrl.u32 %v3989, 7
    %v3991 = vsub.s32 %v3988, %v3990
    %v3992 = vrot.slane %v3978, %v3991
    %v3993 = vcombine.low %v3985, %v3992
    %3995 = vmatprep.subr.bf16.mxu0 0
    %3996 = vmatpush1.bf16.msra.mxu0 %v3969
    %3997 = vmatprep.subr.bf16.mxu0 0
    %3998 = vmatpush1.bf16.msra.mxu0 %v3970
    %3999 = vmatprep.subr.bf16.mxu0 0
    %4000 = vmatpush1.bf16.msra.mxu0 %v3971
    %4001 = vmatprep.subr.bf16.mxu0 0
    %4002 = vmatpush1.bf16.msra.mxu0 %v3972
    %4003 = vmatprep.subr.bf16.mxu0 0
    %4004 = vmatpush1.bf16.msra.mxu0 %v3973
    %4005 = vmatprep.subr.bf16.mxu0 0
    %4006 = vmatpush1.bf16.msra.mxu0 %v3974
    %4007 = vmatprep.subr.bf16.mxu0 0
    %4008 = vmatpush1.bf16.msra.mxu0 %v3975
    %4009 = vmatprep.subr.bf16.mxu0 0
    %4010 = vmatpush1.bf16.msra.mxu0 %v3976
    %4011 = vmatprep.subr.bf16.mxu0 0
    %4012 = vmatpush1.bf16.msra.mxu0 0
    %4013 = vmatprep.subr.bf16.mxu0 0
    %4014 = vmatpush1.bf16.msra.mxu0 0
    %4015 = vmatprep.subr.bf16.mxu0 0
    %4016 = vmatpush1.bf16.msra.mxu0 0
    %4017 = vmatprep.subr.bf16.mxu0 0
    %4018 = vmatpush1.bf16.msra.mxu0 0
    %4019 = vmatprep.subr.bf16.mxu0 0
    %4020 = vmatpush1.bf16.msra.mxu0 0
    %4021 = vmatprep.subr.bf16.mxu0 0
    %4022 = vmatpush1.bf16.msra.mxu0 0
    %4023 = vmatprep.subr.bf16.mxu0 0
    %4024 = vmatpush1.bf16.msra.mxu0 0
    %4025 = vmatprep.subr.bf16.mxu0 0
    %4026 = vmatpush1.bf16.msra.mxu0 0
    %4027 = vmatprep.mubr.bf16.mxu0 0
    %4028 = vmatmul.mubr.bf16.gmra.mrb[0].mxu0 %v3993
    %v4029 = vpop.f32.mrb[0].mxu0
    %v4030 = vadd.f32 0.0, %v4029
    %v4031 = vpop.f32.mrb[0].mxu0
    %v4032 = vpop.f32.mrb[0].mxu0
    %v4033 = vadd.f32 0.0, %v4032
    %v4034 = vpop.f32.mrb[0].mxu0
    %4035 = vdwg.mxu0
    %v4036 = vadd.f32 %v3960, %v4030
    %v4037 = vadd.f32 %v3961, %v4033
    %v4038 = vrot.slane %v3727, 2
    %v4039 = vshrl.u32 %v3072, 16
    %v4041 = vrot.slane %v4039, 7
    %v4042 = vor.u32 %v4041, %v3880
    %v4043 = vsel %vm3399, %v4038, %v4042
    %v4044 = vrot.slane %v3733, 2
    %v4045 = vshrl.u32 %v3098, 16
    %v4047 = vrot.slane %v4045, 7
    %v4048 = vor.u32 %v4047, %v3888
    %v4049 = vsel %vm3399, %v4044, %v4048
    %s4050 = scalar_lea.vmem [#allocation2], 704
    %v4051 = vld [vmem:[%s4050] sm:$0xff]
    %v4052 = vld [vmem:[%s4050 + $0x8] sm:$0xff]
    %v4053 = vld [vmem:[%s4050 + $0x10] sm:$0xff]
    %v4054 = vld [vmem:[%s4050 + $0x18] sm:$0xff]
    %v4055 = vld [vmem:[%s4050 + $0x20] sm:$0xff]
    %v4056 = vld [vmem:[%s4050 + $0x28] sm:$0xff]
    %v4057 = vld [vmem:[%s4050 + $0x30] sm:$0xff]
    %v4058 = vld [vmem:[%s4050 + $0x38] sm:$0xff]
    %v4059 = vcombine.low %v3729, %v4043
    %v4060 = vcombine.low %v3735, %v4049
    %v4062 = vunpack.c.l.s4 1983009808
    %v4063 = vunpack.c.0.s8 %v4062
    %v4064 = vlaneseq
    %v4065 = vshrl.u32 %v4064, 7
    %v4066 = vsub.s32 %v4063, %v4065
    %v4067 = vrot.slane %v4059, %v4066
    %v4069 = vunpack.c.l.s4 1983009808
    %v4070 = vunpack.c.0.s8 %v4069
    %v4071 = vlaneseq
    %v4072 = vshrl.u32 %v4071, 7
    %v4073 = vsub.s32 %v4070, %v4072
    %v4074 = vrot.slane %v4060, %v4073
    %v4075 = vcombine.low %v4067, %v4074
    %4077 = vmatprep.subr.bf16.mxu0 0
    %4078 = vmatpush1.bf16.msra.mxu0 %v4051
    %4079 = vmatprep.subr.bf16.mxu0 0
    %4080 = vmatpush1.bf16.msra.mxu0 %v4052
    %4081 = vmatprep.subr.bf16.mxu0 0
    %4082 = vmatpush1.bf16.msra.mxu0 %v4053
    %4083 = vmatprep.subr.bf16.mxu0 0
    %4084 = vmatpush1.bf16.msra.mxu0 %v4054
    %4085 = vmatprep.subr.bf16.mxu0 0
    %4086 = vmatpush1.bf16.msra.mxu0 %v4055
    %4087 = vmatprep.subr.bf16.mxu0 0
    %4088 = vmatpush1.bf16.msra.mxu0 %v4056
    %4089 = vmatprep.subr.bf16.mxu0 0
    %4090 = vmatpush1.bf16.msra.mxu0 %v4057
    %4091 = vmatprep.subr.bf16.mxu0 0
    %4092 = vmatpush1.bf16.msra.mxu0 %v4058
    %4093 = vmatprep.subr.bf16.mxu0 0
    %4094 = vmatpush1.bf16.msra.mxu0 0
    %4095 = vmatprep.subr.bf16.mxu0 0
    %4096 = vmatpush1.bf16.msra.mxu0 0
    %4097 = vmatprep.subr.bf16.mxu0 0
    %4098 = vmatpush1.bf16.msra.mxu0 0
    %4099 = vmatprep.subr.bf16.mxu0 0
    %4100 = vmatpush1.bf16.msra.mxu0 0
    %4101 = vmatprep.subr.bf16.mxu0 0
    %4102 = vmatpush1.bf16.msra.mxu0 0
    %4103 = vmatprep.subr.bf16.mxu0 0
    %4104 = vmatpush1.bf16.msra.mxu0 0
    %4105 = vmatprep.subr.bf16.mxu0 0
    %4106 = vmatpush1.bf16.msra.mxu0 0
    %4107 = vmatprep.subr.bf16.mxu0 0
    %4108 = vmatpush1.bf16.msra.mxu0 0
    %4109 = vmatprep.mubr.bf16.mxu0 0
    %4110 = vmatmul.mubr.bf16.gmra.mrb[0].mxu0 %v4075
    %v4111 = vpop.f32.mrb[0].mxu0
    %v4112 = vadd.f32 0.0, %v4111
    %v4113 = vpop.f32.mrb[0].mxu0
    %v4114 = vpop.f32.mrb[0].mxu0
    %v4115 = vadd.f32 0.0, %v4114
    %v4116 = vpop.f32.mrb[0].mxu0
    %4117 = vdwg.mxu0
    %v4118 = vadd.f32 %v4036, %v4112
    %v4119 = vadd.f32 %v4037, %v4115
    %s4120 = scalar_lea.vmem [#allocation2], 768
    %v4121 = vld [vmem:[%s4120] sm:$0xff]
    %v4122 = vld [vmem:[%s4120 + $0x8] sm:$0xff]
    %v4123 = vld [vmem:[%s4120 + $0x10] sm:$0xff]
    %v4124 = vld [vmem:[%s4120 + $0x18] sm:$0xff]
    %v4125 = vld [vmem:[%s4120 + $0x20] sm:$0xff]
    %v4126 = vld [vmem:[%s4120 + $0x28] sm:$0xff]
    %v4127 = vld [vmem:[%s4120 + $0x30] sm:$0xff]
    %v4128 = vld [vmem:[%s4120 + $0x38] sm:$0xff]
    %v4129 = vcombine.low %v3064, %v3072
    %v4130 = vcombine.low %v3096, %v3098
    %v4132 = vunpack.c.l.s4 1983009808
    %v4133 = vunpack.c.0.s8 %v4132
    %v4134 = vlaneseq
    %v4135 = vshrl.u32 %v4134, 7
    %v4136 = vsub.s32 %v4133, %v4135
    %v4137 = vrot.slane %v4129, %v4136
    %v4139 = vunpack.c.l.s4 1983009808
    %v4140 = vunpack.c.0.s8 %v4139
    %v4141 = vlaneseq
    %v4142 = vshrl.u32 %v4141, 7
    %v4143 = vsub.s32 %v4140, %v4142
    %v4144 = vrot.slane %v4130, %v4143
    %v4145 = vcombine.low %v4137, %v4144
    %4147 = vmatprep.subr.bf16.mxu0 0
    %4148 = vmatpush1.bf16.msra.mxu0 %v4121
    %4149 = vmatprep.subr.bf16.mxu0 0
    %4150 = vmatpush1.bf16.msra.mxu0 %v4122
    %4151 = vmatprep.subr.bf16.mxu0 0
    %4152 = vmatpush1.bf16.msra.mxu0 %v4123
    %4153 = vmatprep.subr.bf16.mxu0 0
    %4154 = vmatpush1.bf16.msra.mxu0 %v4124
    %4155 = vmatprep.subr.bf16.mxu0 0
    %4156 = vmatpush1.bf16.msra.mxu0 %v4125
    %4157 = vmatprep.subr.bf16.mxu0 0
    %4158 = vmatpush1.bf16.msra.mxu0 %v4126
    %4159 = vmatprep.subr.bf16.mxu0 0
    %4160 = vmatpush1.bf16.msra.mxu0 %v4127
    %4161 = vmatprep.subr.bf16.mxu0 0
    %4162 = vmatpush1.bf16.msra.mxu0 %v4128
    %4163 = vmatprep.subr.bf16.mxu0 0
    %4164 = vmatpush1.bf16.msra.mxu0 0
    %4165 = vmatprep.subr.bf16.mxu0 0
    %4166 = vmatpush1.bf16.msra.mxu0 0
    %4167 = vmatprep.subr.bf16.mxu0 0
    %4168 = vmatpush1.bf16.msra.mxu0 0
    %4169 = vmatprep.subr.bf16.mxu0 0
    %4170 = vmatpush1.bf16.msra.mxu0 0
    %4171 = vmatprep.subr.bf16.mxu0 0
    %4172 = vmatpush1.bf16.msra.mxu0 0
    %4173 = vmatprep.subr.bf16.mxu0 0
    %4174 = vmatpush1.bf16.msra.mxu0 0
    %4175 = vmatprep.subr.bf16.mxu0 0
    %4176 = vmatpush1.bf16.msra.mxu0 0
    %4177 = vmatprep.subr.bf16.mxu0 0
    %4178 = vmatpush1.bf16.msra.mxu0 0
    %4179 = vmatprep.mubr.bf16.mxu0 0
    %4180 = vmatmul.mubr.bf16.gmra.mrb[0].mxu0 %v4145
    %v4181 = vpop.f32.mrb[0].mxu0
    %v4182 = vadd.f32 0.0, %v4181
    %v4183 = vpop.f32.mrb[0].mxu0
    %v4184 = vpop.f32.mrb[0].mxu0
    %v4185 = vadd.f32 0.0, %v4184
    %v4186 = vpop.f32.mrb[0].mxu0
    %4187 = vdwg.mxu0
    %v4188 = vadd.f32 %v4118, %v4182
    %v4189 = vadd.f32 %v4119, %v4185
    %v4190 = vrot.slane %v4039, 6
    %v4191 = vor.u32 %v4190, %v3882
    %v4192 = vrot.slane %v4191, 2
    %v4194 = vshll.u32 %v3080, 16
    %v4196 = vrot.slane %v4194, 7
    %v4197 = vsel %vm3126, %v4192, %v4196
    %v4198 = vrot.slane %v4045, 6
    %v4199 = vor.u32 %v4198, %v3890
    %v4200 = vrot.slane %v4199, 2
    %v4202 = vshll.u32 %v3105, 16
    %v4204 = vrot.slane %v4202, 7
    %v4205 = vsel %vm3126, %v4200, %v4204
    %s4206 = scalar_lea.vmem [#allocation2], 832
    %v4207 = vld [vmem:[%s4206] sm:$0xff]
    %v4208 = vld [vmem:[%s4206 + $0x8] sm:$0xff]
    %v4209 = vld [vmem:[%s4206 + $0x10] sm:$0xff]
    %v4210 = vld [vmem:[%s4206 + $0x18] sm:$0xff]
    %v4211 = vld [vmem:[%s4206 + $0x20] sm:$0xff]
    %v4212 = vld [vmem:[%s4206 + $0x28] sm:$0xff]
    %v4213 = vld [vmem:[%s4206 + $0x30] sm:$0xff]
    %v4214 = vld [vmem:[%s4206 + $0x38] sm:$0xff]
    %v4215 = vcombine.low %v3883, %v4197
    %v4216 = vcombine.low %v3891, %v4205
    %v4218 = vunpack.c.l.s4 1983009808
    %v4219 = vunpack.c.0.s8 %v4218
    %v4220 = vlaneseq
    %v4221 = vshrl.u32 %v4220, 7
    %v4222 = vsub.s32 %v4219, %v4221
    %v4223 = vrot.slane %v4215, %v4222
    %v4225 = vunpack.c.l.s4 1983009808
    %v4226 = vunpack.c.0.s8 %v4225
    %v4227 = vlaneseq
    %v4228 = vshrl.u32 %v4227, 7
    %v4229 = vsub.s32 %v4226, %v4228
    %v4230 = vrot.slane %v4216, %v4229
    %v4231 = vcombine.low %v4223, %v4230
    %4233 = vmatprep.subr.bf16.mxu0 0
    %4234 = vmatpush1.bf16.msra.mxu0 %v4207
    %4235 = vmatprep.subr.bf16.mxu0 0
    %4236 = vmatpush1.bf16.msra.mxu0 %v4208
    %4237 = vmatprep.subr.bf16.mxu0 0
    %4238 = vmatpush1.bf16.msra.mxu0 %v4209
    %4239 = vmatprep.subr.bf16.mxu0 0
    %4240 = vmatpush1.bf16.msra.mxu0 %v4210
    %4241 = vmatprep.subr.bf16.mxu0 0
    %4242 = vmatpush1.bf16.msra.mxu0 %v4211
    %4243 = vmatprep.subr.bf16.mxu0 0
    %4244 = vmatpush1.bf16.msra.mxu0 %v4212
    %4245 = vmatprep.subr.bf16.mxu0 0
    %4246 = vmatpush1.bf16.msra.mxu0 %v4213
    %4247 = vmatprep.subr.bf16.mxu0 0
    %4248 = vmatpush1.bf16.msra.mxu0 %v4214
    %4249 = vmatprep.subr.bf16.mxu0 0
    %4250 = vmatpush1.bf16.msra.mxu0 0
    %4251 = vmatprep.subr.bf16.mxu0 0
    %4252 = vmatpush1.bf16.msra.mxu0 0
    %4253 = vmatprep.subr.bf16.mxu0 0
    %4254 = vmatpush1.bf16.msra.mxu0 0
    %4255 = vmatprep.subr.bf16.mxu0 0
    %4256 = vmatpush1.bf16.msra.mxu0 0
    %4257 = vmatprep.subr.bf16.mxu0 0
    %4258 = vmatpush1.bf16.msra.mxu0 0
    %4259 = vmatprep.subr.bf16.mxu0 0
    %4260 = vmatpush1.bf16.msra.mxu0 0
    %4261 = vmatprep.subr.bf16.mxu0 0
    %4262 = vmatpush1.bf16.msra.mxu0 0
    %4263 = vmatprep.subr.bf16.mxu0 0
    %4264 = vmatpush1.bf16.msra.mxu0 0
    %4265 = vmatprep.mubr.bf16.mxu0 0
    %4266 = vmatmul.mubr.bf16.gmra.mrb[0].mxu0 %v4231
    %v4267 = vpop.f32.mrb[0].mxu0
    %v4268 = vadd.f32 0.0, %v4267
    %v4269 = vpop.f32.mrb[0].mxu0
    %v4270 = vpop.f32.mrb[0].mxu0
    %v4271 = vadd.f32 0.0, %v4270
    %v4272 = vpop.f32.mrb[0].mxu0
    %4273 = vdwg.mxu0
    %v4274 = vadd.f32 %v4188, %v4268
    %v4275 = vadd.f32 %v4189, %v4271
    %v4276 = vrot.slane %v3963, 2
    %v4277 = vrot.slane %v3080, 7
    %v4278 = vsel %vm3308, %v4276, %v4277
    %v4279 = vrot.slane %v3966, 2
    %v4280 = vrot.slane %v3105, 7
    %v4281 = vsel %vm3308, %v4279, %v4280
    %s4282 = scalar_lea.vmem [#allocation2], 896
    %v4283 = vld [vmem:[%s4282] sm:$0xff]
    %v4284 = vld [vmem:[%s4282 + $0x8] sm:$0xff]
    %v4285 = vld [vmem:[%s4282 + $0x10] sm:$0xff]
    %v4286 = vld [vmem:[%s4282 + $0x18] sm:$0xff]
    %v4287 = vld [vmem:[%s4282 + $0x20] sm:$0xff]
    %v4288 = vld [vmem:[%s4282 + $0x28] sm:$0xff]
    %v4289 = vld [vmem:[%s4282 + $0x30] sm:$0xff]
    %v4290 = vld [vmem:[%s4282 + $0x38] sm:$0xff]
    %v4291 = vcombine.low %v3964, %v4278
    %v4292 = vcombine.low %v3967, %v4281
    %v4294 = vunpack.c.l.s4 1983009808
    %v4295 = vunpack.c.0.s8 %v4294
    %v4296 = vlaneseq
    %v4297 = vshrl.u32 %v4296, 7
    %v4298 = vsub.s32 %v4295, %v4297
    %v4299 = vrot.slane %v4291, %v4298
    %v4301 = vunpack.c.l.s4 1983009808
    %v4302 = vunpack.c.0.s8 %v4301
    %v4303 = vlaneseq
    %v4304 = vshrl.u32 %v4303, 7
    %v4305 = vsub.s32 %v4302, %v4304
    %v4306 = vrot.slane %v4292, %v4305
    %v4307 = vcombine.low %v4299, %v4306
    %4309 = vmatprep.subr.bf16.mxu0 0
    %4310 = vmatpush1.bf16.msra.mxu0 %v4283
    %4311 = vmatprep.subr.bf16.mxu0 0
    %4312 = vmatpush1.bf16.msra.mxu0 %v4284
    %4313 = vmatprep.subr.bf16.mxu0 0
    %4314 = vmatpush1.bf16.msra.mxu0 %v4285
    %4315 = vmatprep.subr.bf16.mxu0 0
    %4316 = vmatpush1.bf16.msra.mxu0 %v4286
    %4317 = vmatprep.subr.bf16.mxu0 0
    %4318 = vmatpush1.bf16.msra.mxu0 %v4287
    %4319 = vmatprep.subr.bf16.mxu0 0
    %4320 = vmatpush1.bf16.msra.mxu0 %v4288
    %4321 = vmatprep.subr.bf16.mxu0 0
    %4322 = vmatpush1.bf16.msra.mxu0 %v4289
    %4323 = vmatprep.subr.bf16.mxu0 0
    %4324 = vmatpush1.bf16.msra.mxu0 %v4290
    %4325 = vmatprep.subr.bf16.mxu0 0
    %4326 = vmatpush1.bf16.msra.mxu0 0
    %4327 = vmatprep.subr.bf16.mxu0 0
    %4328 = vmatpush1.bf16.msra.mxu0 0
    %4329 = vmatprep.subr.bf16.mxu0 0
    %4330 = vmatpush1.bf16.msra.mxu0 0
    %4331 = vmatprep.subr.bf16.mxu0 0
    %4332 = vmatpush1.bf16.msra.mxu0 0
    %4333 = vmatprep.subr.bf16.mxu0 0
    %4334 = vmatpush1.bf16.msra.mxu0 0
    %4335 = vmatprep.subr.bf16.mxu0 0
    %4336 = vmatpush1.bf16.msra.mxu0 0
    %4337 = vmatprep.subr.bf16.mxu0 0
    %4338 = vmatpush1.bf16.msra.mxu0 0
    %4339 = vmatprep.subr.bf16.mxu0 0
    %4340 = vmatpush1.bf16.msra.mxu0 0
    %4341 = vmatprep.mubr.bf16.mxu0 0
    %4342 = vmatmul.mubr.bf16.gmra.mrb[0].mxu0 %v4307
    %v4343 = vpop.f32.mrb[0].mxu0
    %v4344 = vadd.f32 0.0, %v4343
    %v4345 = vpop.f32.mrb[0].mxu0
    %v4346 = vpop.f32.mrb[0].mxu0
    %v4347 = vadd.f32 0.0, %v4346
    %v4348 = vpop.f32.mrb[0].mxu0
    %4349 = vdwg.mxu0
    %v4350 = vadd.f32 %v4274, %v4344
    %v4351 = vadd.f32 %v4275, %v4347
    %v4352 = vrot.slane %v4041, 2
    %v4353 = vshrl.u32 %v3080, 16
    %v4355 = vrot.slane %v4353, 7
    %v4356 = vor.u32 %v4355, %v4194
    %v4357 = vsel %vm3399, %v4352, %v4356
    %v4358 = vrot.slane %v4047, 2
    %v4359 = vshrl.u32 %v3105, 16
    %v4361 = vrot.slane %v4359, 7
    %v4362 = vor.u32 %v4361, %v4202
    %v4363 = vsel %vm3399, %v4358, %v4362
    %s4364 = scalar_lea.vmem [#allocation2], 960
    %v4365 = vld [vmem:[%s4364] sm:$0xff]
    %v4366 = vld [vmem:[%s4364 + $0x8] sm:$0xff]
    %v4367 = vld [vmem:[%s4364 + $0x10] sm:$0xff]
    %v4368 = vld [vmem:[%s4364 + $0x18] sm:$0xff]
    %v4369 = vld [vmem:[%s4364 + $0x20] sm:$0xff]
    %v4370 = vld [vmem:[%s4364 + $0x28] sm:$0xff]
    %v4371 = vld [vmem:[%s4364 + $0x30] sm:$0xff]
    %v4372 = vld [vmem:[%s4364 + $0x38] sm:$0xff]
    %v4373 = vcombine.low %v4043, %v4357
    %v4374 = vcombine.low %v4049, %v4363
    %v4376 = vunpack.c.l.s4 1983009808
    %v4377 = vunpack.c.0.s8 %v4376
    %v4378 = vlaneseq
    %v4379 = vshrl.u32 %v4378, 7
    %v4380 = vsub.s32 %v4377, %v4379
    %v4381 = vrot.slane %v4373, %v4380
    %v4383 = vunpack.c.l.s4 1983009808
    %v4384 = vunpack.c.0.s8 %v4383
    %v4385 = vlaneseq
    %v4386 = vshrl.u32 %v4385, 7
    %v4387 = vsub.s32 %v4384, %v4386
    %v4388 = vrot.slane %v4374, %v4387
    %v4389 = vcombine.low %v4381, %v4388
    %4391 = vmatprep.subr.bf16.mxu0 0
    %4392 = vmatpush1.bf16.msra.mxu0 %v4365
    %4393 = vmatprep.subr.bf16.mxu0 0
    %4394 = vmatpush1.bf16.msra.mxu0 %v4366
    %4395 = vmatprep.subr.bf16.mxu0 0
    %4396 = vmatpush1.bf16.msra.mxu0 %v4367
    %4397 = vmatprep.subr.bf16.mxu0 0
    %4398 = vmatpush1.bf16.msra.mxu0 %v4368
    %4399 = vmatprep.subr.bf16.mxu0 0
    %4400 = vmatpush1.bf16.msra.mxu0 %v4369
    %4401 = vmatprep.subr.bf16.mxu0 0
    %4402 = vmatpush1.bf16.msra.mxu0 %v4370
    %4403 = vmatprep.subr.bf16.mxu0 0
    %4404 = vmatpush1.bf16.msra.mxu0 %v4371
    %4405 = vmatprep.subr.bf16.mxu0 0
    %4406 = vmatpush1.bf16.msra.mxu0 %v4372
    %4407 = vmatprep.subr.bf16.mxu0 0
    %4408 = vmatpush1.bf16.msra.mxu0 0
    %4409 = vmatprep.subr.bf16.mxu0 0
    %4410 = vmatpush1.bf16.msra.mxu0 0
    %4411 = vmatprep.subr.bf16.mxu0 0
    %4412 = vmatpush1.bf16.msra.mxu0 0
    %4413 = vmatprep.subr.bf16.mxu0 0
    %4414 = vmatpush1.bf16.msra.mxu0 0
    %4415 = vmatprep.subr.bf16.mxu0 0
    %4416 = vmatpush1.bf16.msra.mxu0 0
    %4417 = vmatprep.subr.bf16.mxu0 0
    %4418 = vmatpush1.bf16.msra.mxu0 0
    %4419 = vmatprep.subr.bf16.mxu0 0
    %4420 = vmatpush1.bf16.msra.mxu0 0
    %4421 = vmatprep.subr.bf16.mxu0 0
    %4422 = vmatpush1.bf16.msra.mxu0 0
    %4423 = vmatprep.mubr.bf16.mxu0 0
    %4424 = vmatmul.mubr.bf16.gmra.mrb[0].mxu0 %v4389
    %v4425 = vpop.f32.mrb[0].mxu0
    %v4426 = vadd.f32 0.0, %v4425
    %v4427 = vpop.f32.mrb[0].mxu0
    %v4428 = vpop.f32.mrb[0].mxu0
    %v4429 = vadd.f32 0.0, %v4428
    %v4430 = vpop.f32.mrb[0].mxu0
    %4431 = vdwg.mxu0
    %v4432 = vadd.f32 %v4350, %v4426
    %v4433 = vadd.f32 %v4351, %v4429
    %s4434 = scalar_lea.vmem [#allocation2], 1024
    %v4435 = vld [vmem:[%s4434] sm:$0xff]
    %v4436 = vld [vmem:[%s4434 + $0x8] sm:$0xff]
    %v4437 = vld [vmem:[%s4434 + $0x10] sm:$0xff]
    %v4438 = vld [vmem:[%s4434 + $0x18] sm:$0xff]
    %v4439 = vld [vmem:[%s4434 + $0x20] sm:$0xff]
    %v4440 = vld [vmem:[%s4434 + $0x28] sm:$0xff]
    %v4441 = vld [vmem:[%s4434 + $0x30] sm:$0xff]
    %v4442 = vld [vmem:[%s4434 + $0x38] sm:$0xff]
    %v4443 = vcombine.low %v3072, %v3080
    %v4444 = vcombine.low %v3098, %v3105
    %v4446 = vunpack.c.l.s4 1983009808
    %v4447 = vunpack.c.0.s8 %v4446
    %v4448 = vlaneseq
    %v4449 = vshrl.u32 %v4448, 7
    %v4450 = vsub.s32 %v4447, %v4449
    %v4451 = vrot.slane %v4443, %v4450
    %v4453 = vunpack.c.l.s4 1983009808
    %v4454 = vunpack.c.0.s8 %v4453
    %v4455 = vlaneseq
    %v4456 = vshrl.u32 %v4455, 7
    %v4457 = vsub.s32 %v4454, %v4456
    %v4458 = vrot.slane %v4444, %v4457
    %v4459 = vcombine.low %v4451, %v4458
    %4461 = vmatprep.subr.bf16.mxu0 0
    %4462 = vmatpush1.bf16.msra.mxu0 %v4435
    %4463 = vmatprep.subr.bf16.mxu0 0
    %4464 = vmatpush1.bf16.msra.mxu0 %v4436
    %4465 = vmatprep.subr.bf16.mxu0 0
    %4466 = vmatpush1.bf16.msra.mxu0 %v4437
    %4467 = vmatprep.subr.bf16.mxu0 0
    %4468 = vmatpush1.bf16.msra.mxu0 %v4438
    %4469 = vmatprep.subr.bf16.mxu0 0
    %4470 = vmatpush1.bf16.msra.mxu0 %v4439
    %4471 = vmatprep.subr.bf16.mxu0 0
    %4472 = vmatpush1.bf16.msra.mxu0 %v4440
    %4473 = vmatprep.subr.bf16.mxu0 0
    %4474 = vmatpush1.bf16.msra.mxu0 %v4441
    %4475 = vmatprep.subr.bf16.mxu0 0
    %4476 = vmatpush1.bf16.msra.mxu0 %v4442
    %4477 = vmatprep.subr.bf16.mxu0 0
    %4478 = vmatpush1.bf16.msra.mxu0 0
    %4479 = vmatprep.subr.bf16.mxu0 0
    %4480 = vmatpush1.bf16.msra.mxu0 0
    %4481 = vmatprep.subr.bf16.mxu0 0
    %4482 = vmatpush1.bf16.msra.mxu0 0
    %4483 = vmatprep.subr.bf16.mxu0 0
    %4484 = vmatpush1.bf16.msra.mxu0 0
    %4485 = vmatprep.subr.bf16.mxu0 0
    %4486 = vmatpush1.bf16.msra.mxu0 0
    %4487 = vmatprep.subr.bf16.mxu0 0
    %4488 = vmatpush1.bf16.msra.mxu0 0
    %4489 = vmatprep.subr.bf16.mxu0 0
    %4490 = vmatpush1.bf16.msra.mxu0 0
    %4491 = vmatprep.subr.bf16.mxu0 0
    %4492 = vmatpush1.bf16.msra.mxu0 0
    %4493 = vmatprep.mubr.bf16.mxu0 0
    %4494 = vmatmul.mubr.bf16.gmra.mrb[0].mxu0 %v4459
    %v4495 = vpop.f32.mrb[0].mxu0
    %v4496 = vadd.f32 0.0, %v4495
    %v4497 = vpop.f32.mrb[0].mxu0
    %v4498 = vpop.f32.mrb[0].mxu0
    %v4499 = vadd.f32 0.0, %v4498
    %v4500 = vpop.f32.mrb[0].mxu0
    %4501 = vdwg.mxu0
    %v4502 = vadd.f32 %v4432, %v4496
    %v4503 = vadd.f32 %v4433, %v4499
    %v4504 = vrot.slane %v4353, 6
    %v4505 = vor.u32 %v4504, %v4196
    %v4506 = vrot.slane %v4505, 2
    %v4508 = vshll.u32 %v3079, 16
    %v4510 = vrot.slane %v4508, 7
    %v4511 = vsel %vm3126, %v4506, %v4510
    %v4512 = vrot.slane %v4359, 6
    %v4513 = vor.u32 %v4512, %v4204
    %v4514 = vrot.slane %v4513, 2
    %v4516 = vshll.u32 %v3106, 16
    %v4518 = vrot.slane %v4516, 7
    %v4519 = vsel %vm3126, %v4514, %v4518
    %s4520 = scalar_lea.vmem [#allocation2], 1088
    %v4521 = vld [vmem:[%s4520] sm:$0xff]
    %v4522 = vld [vmem:[%s4520 + $0x8] sm:$0xff]
    %v4523 = vld [vmem:[%s4520 + $0x10] sm:$0xff]
    %v4524 = vld [vmem:[%s4520 + $0x18] sm:$0xff]
    %v4525 = vld [vmem:[%s4520 + $0x20] sm:$0xff]
    %v4526 = vld [vmem:[%s4520 + $0x28] sm:$0xff]
    %v4527 = vld [vmem:[%s4520 + $0x30] sm:$0xff]
    %v4528 = vld [vmem:[%s4520 + $0x38] sm:$0xff]
    %v4529 = vcombine.low %v4197, %v4511
    %v4530 = vcombine.low %v4205, %v4519
    %v4532 = vunpack.c.l.s4 1983009808
    %v4533 = vunpack.c.0.s8 %v4532
    %v4534 = vlaneseq
    %v4535 = vshrl.u32 %v4534, 7
    %v4536 = vsub.s32 %v4533, %v4535
    %v4537 = vrot.slane %v4529, %v4536
    %v4539 = vunpack.c.l.s4 1983009808
    %v4540 = vunpack.c.0.s8 %v4539
    %v4541 = vlaneseq
    %v4542 = vshrl.u32 %v4541, 7
    %v4543 = vsub.s32 %v4540, %v4542
    %v4544 = vrot.slane %v4530, %v4543
    %v4545 = vcombine.low %v4537, %v4544
    %4547 = vmatprep.subr.bf16.mxu0 0
    %4548 = vmatpush1.bf16.msra.mxu0 %v4521
    %4549 = vmatprep.subr.bf16.mxu0 0
    %4550 = vmatpush1.bf16.msra.mxu0 %v4522
    %4551 = vmatprep.subr.bf16.mxu0 0
    %4552 = vmatpush1.bf16.msra.mxu0 %v4523
    %4553 = vmatprep.subr.bf16.mxu0 0
    %4554 = vmatpush1.bf16.msra.mxu0 %v4524
    %4555 = vmatprep.subr.bf16.mxu0 0
    %4556 = vmatpush1.bf16.msra.mxu0 %v4525
    %4557 = vmatprep.subr.bf16.mxu0 0
    %4558 = vmatpush1.bf16.msra.mxu0 %v4526
    %4559 = vmatprep.subr.bf16.mxu0 0
    %4560 = vmatpush1.bf16.msra.mxu0 %v4527
    %4561 = vmatprep.subr.bf16.mxu0 0
    %4562 = vmatpush1.bf16.msra.mxu0 %v4528
    %4563 = vmatprep.subr.bf16.mxu0 0
    %4564 = vmatpush1.bf16.msra.mxu0 0
    %4565 = vmatprep.subr.bf16.mxu0 0
    %4566 = vmatpush1.bf16.msra.mxu0 0
    %4567 = vmatprep.subr.bf16.mxu0 0
    %4568 = vmatpush1.bf16.msra.mxu0 0
    %4569 = vmatprep.subr.bf16.mxu0 0
    %4570 = vmatpush1.bf16.msra.mxu0 0
    %4571 = vmatprep.subr.bf16.mxu0 0
    %4572 = vmatpush1.bf16.msra.mxu0 0
    %4573 = vmatprep.subr.bf16.mxu0 0
    %4574 = vmatpush1.bf16.msra.mxu0 0
    %4575 = vmatprep.subr.bf16.mxu0 0
    %4576 = vmatpush1.bf16.msra.mxu0 0
    %4577 = vmatprep.subr.bf16.mxu0 0
    %4578 = vmatpush1.bf16.msra.mxu0 0
    %4579 = vmatprep.mubr.bf16.mxu0 0
    %4580 = vmatmul.mubr.bf16.gmra.mrb[0].mxu0 %v4545
    %v4581 = vpop.f32.mrb[0].mxu0
    %v4582 = vadd.f32 0.0, %v4581
    %v4583 = vpop.f32.mrb[0].mxu0
    %v4584 = vpop.f32.mrb[0].mxu0
    %v4585 = vadd.f32 0.0, %v4584
    %v4586 = vpop.f32.mrb[0].mxu0
    %4587 = vdwg.mxu0
    %v4588 = vadd.f32 %v4502, %v4582
    %v4589 = vadd.f32 %v4503, %v4585
    %v4590 = vrot.slane %v4277, 2
    %v4591 = vrot.slane %v3079, 7
    %v4592 = vsel %vm3308, %v4590, %v4591
    %v4593 = vrot.slane %v4280, 2
    %v4594 = vrot.slane %v3106, 7
    %v4595 = vsel %vm3308, %v4593, %v4594
    %s4596 = scalar_lea.vmem [#allocation2], 1152
    %v4597 = vld [vmem:[%s4596] sm:$0xff]
    %v4598 = vld [vmem:[%s4596 + $0x8] sm:$0xff]
    %v4599 = vld [vmem:[%s4596 + $0x10] sm:$0xff]
    %v4600 = vld [vmem:[%s4596 + $0x18] sm:$0xff]
    %v4601 = vld [vmem:[%s4596 + $0x20] sm:$0xff]
    %v4602 = vld [vmem:[%s4596 + $0x28] sm:$0xff]
    %v4603 = vld [vmem:[%s4596 + $0x30] sm:$0xff]
    %v4604 = vld [vmem:[%s4596 + $0x38] sm:$0xff]
    %v4605 = vcombine.low %v4278, %v4592
    %v4606 = vcombine.low %v4281, %v4595
    %v4608 = vunpack.c.l.s4 1983009808
    %v4609 = vunpack.c.0.s8 %v4608
    %v4610 = vlaneseq
    %v4611 = vshrl.u32 %v4610, 7
    %v4612 = vsub.s32 %v4609, %v4611
    %v4613 = vrot.slane %v4605, %v4612
    %v4615 = vunpack.c.l.s4 1983009808
    %v4616 = vunpack.c.0.s8 %v4615
    %v4617 = vlaneseq
    %v4618 = vshrl.u32 %v4617, 7
    %v4619 = vsub.s32 %v4616, %v4618
    %v4620 = vrot.slane %v4606, %v4619
    %v4621 = vcombine.low %v4613, %v4620
    %4623 = vmatprep.subr.bf16.mxu0 0
    %4624 = vmatpush1.bf16.msra.mxu0 %v4597
    %4625 = vmatprep.subr.bf16.mxu0 0
    %4626 = vmatpush1.bf16.msra.mxu0 %v4598
    %4627 = vmatprep.subr.bf16.mxu0 0
    %4628 = vmatpush1.bf16.msra.mxu0 %v4599
    %4629 = vmatprep.subr.bf16.mxu0 0
    %4630 = vmatpush1.bf16.msra.mxu0 %v4600
    %4631 = vmatprep.subr.bf16.mxu0 0
    %4632 = vmatpush1.bf16.msra.mxu0 %v4601
    %4633 = vmatprep.subr.bf16.mxu0 0
    %4634 = vmatpush1.bf16.msra.mxu0 %v4602
    %4635 = vmatprep.subr.bf16.mxu0 0
    %4636 = vmatpush1.bf16.msra.mxu0 %v4603
    %4637 = vmatprep.subr.bf16.mxu0 0
    %4638 = vmatpush1.bf16.msra.mxu0 %v4604
    %4639 = vmatprep.subr.bf16.mxu0 0
    %4640 = vmatpush1.bf16.msra.mxu0 0
    %4641 = vmatprep.subr.bf16.mxu0 0
    %4642 = vmatpush1.bf16.msra.mxu0 0
    %4643 = vmatprep.subr.bf16.mxu0 0
    %4644 = vmatpush1.bf16.msra.mxu0 0
    %4645 = vmatprep.subr.bf16.mxu0 0
    %4646 = vmatpush1.bf16.msra.mxu0 0
    %4647 = vmatprep.subr.bf16.mxu0 0
    %4648 = vmatpush1.bf16.msra.mxu0 0
    %4649 = vmatprep.subr.bf16.mxu0 0
    %4650 = vmatpush1.bf16.msra.mxu0 0
    %4651 = vmatprep.subr.bf16.mxu0 0
    %4652 = vmatpush1.bf16.msra.mxu0 0
    %4653 = vmatprep.subr.bf16.mxu0 0
    %4654 = vmatpush1.bf16.msra.mxu0 0
    %4655 = vmatprep.mubr.bf16.mxu0 0
    %4656 = vmatmul.mubr.bf16.gmra.mrb[0].mxu0 %v4621
    %v4657 = vpop.f32.mrb[0].mxu0
    %v4658 = vadd.f32 0.0, %v4657
    %v4659 = vpop.f32.mrb[0].mxu0
    %v4660 = vpop.f32.mrb[0].mxu0
    %v4661 = vadd.f32 0.0, %v4660
    %v4662 = vpop.f32.mrb[0].mxu0
    %4663 = vdwg.mxu0
    %v4664 = vadd.f32 %v4588, %v4658
    %v4665 = vadd.f32 %v4589, %v4661
    %v4666 = vrot.slane %v4355, 2
    %v4667 = vshrl.u32 %v3079, 16
    %v4669 = vrot.slane %v4667, 7
    %v4670 = vor.u32 %v4669, %v4508
    %v4671 = vsel %vm3399, %v4666, %v4670
    %v4672 = vrot.slane %v4361, 2
    %v4673 = vshrl.u32 %v3106, 16
    %v4675 = vrot.slane %v4673, 7
    %v4676 = vor.u32 %v4675, %v4516
    %v4677 = vsel %vm3399, %v4672, %v4676
    %s4678 = scalar_lea.vmem [#allocation2], 1216
    %v4679 = vld [vmem:[%s4678] sm:$0xff]
    %v4680 = vld [vmem:[%s4678 + $0x8] sm:$0xff]
    %v4681 = vld [vmem:[%s4678 + $0x10] sm:$0xff]
    %v4682 = vld [vmem:[%s4678 + $0x18] sm:$0xff]
    %v4683 = vld [vmem:[%s4678 + $0x20] sm:$0xff]
    %v4684 = vld [vmem:[%s4678 + $0x28] sm:$0xff]
    %v4685 = vld [vmem:[%s4678 + $0x30] sm:$0xff]
    %v4686 = vld [vmem:[%s4678 + $0x38] sm:$0xff]
    %v4687 = vcombine.low %v4357, %v4671
    %v4688 = vcombine.low %v4363, %v4677
    %v4690 = vunpack.c.l.s4 1983009808
    %v4691 = vunpack.c.0.s8 %v4690
    %v4692 = vlaneseq
    %v4693 = vshrl.u32 %v4692, 7
    %v4694 = vsub.s32 %v4691, %v4693
    %v4695 = vrot.slane %v4687, %v4694
    %v4697 = vunpack.c.l.s4 1983009808
    %v4698 = vunpack.c.0.s8 %v4697
    %v4699 = vlaneseq
    %v4700 = vshrl.u32 %v4699, 7
    %v4701 = vsub.s32 %v4698, %v4700
    %v4702 = vrot.slane %v4688, %v4701
    %v4703 = vcombine.low %v4695, %v4702
    %4705 = vmatprep.subr.bf16.mxu0 0
    %4706 = vmatpush1.bf16.msra.mxu0 %v4679
    %4707 = vmatprep.subr.bf16.mxu0 0
    %4708 = vmatpush1.bf16.msra.mxu0 %v4680
    %4709 = vmatprep.subr.bf16.mxu0 0
    %4710 = vmatpush1.bf16.msra.mxu0 %v4681
    %4711 = vmatprep.subr.bf16.mxu0 0
    %4712 = vmatpush1.bf16.msra.mxu0 %v4682
    %4713 = vmatprep.subr.bf16.mxu0 0
    %4714 = vmatpush1.bf16.msra.mxu0 %v4683
    %4715 = vmatprep.subr.bf16.mxu0 0
    %4716 = vmatpush1.bf16.msra.mxu0 %v4684
    %4717 = vmatprep.subr.bf16.mxu0 0
    %4718 = vmatpush1.bf16.msra.mxu0 %v4685
    %4719 = vmatprep.subr.bf16.mxu0 0
    %4720 = vmatpush1.bf16.msra.mxu0 %v4686
    %4721 = vmatprep.subr.bf16.mxu0 0
    %4722 = vmatpush1.bf16.msra.mxu0 0
    %4723 = vmatprep.subr.bf16.mxu0 0
    %4724 = vmatpush1.bf16.msra.mxu0 0
    %4725 = vmatprep.subr.bf16.mxu0 0
    %4726 = vmatpush1.bf16.msra.mxu0 0
    %4727 = vmatprep.subr.bf16.mxu0 0
    %4728 = vmatpush1.bf16.msra.mxu0 0
    %4729 = vmatprep.subr.bf16.mxu0 0
    %4730 = vmatpush1.bf16.msra.mxu0 0
    %4731 = vmatprep.subr.bf16.mxu0 0
    %4732 = vmatpush1.bf16.msra.mxu0 0
    %4733 = vmatprep.subr.bf16.mxu0 0
    %4734 = vmatpush1.bf16.msra.mxu0 0
    %4735 = vmatprep.subr.bf16.mxu0 0
    %4736 = vmatpush1.bf16.msra.mxu0 0
    %4737 = vmatprep.mubr.bf16.mxu0 0
    %4738 = vmatmul.mubr.bf16.gmra.mrb[0].mxu0 %v4703
    %v4739 = vpop.f32.mrb[0].mxu0
    %v4740 = vadd.f32 0.0, %v4739
    %v4741 = vpop.f32.mrb[0].mxu0
    %v4742 = vpop.f32.mrb[0].mxu0
    %v4743 = vadd.f32 0.0, %v4742
    %v4744 = vpop.f32.mrb[0].mxu0
    %4745 = vdwg.mxu0
    %v4746 = vadd.f32 %v4664, %v4740
    %v4747 = vadd.f32 %v4665, %v4743
    %s4748 = scalar_lea.vmem [#allocation2], 1280
    %v4749 = vld [vmem:[%s4748] sm:$0xff]
    %v4750 = vld [vmem:[%s4748 + $0x8] sm:$0xff]
    %v4751 = vld [vmem:[%s4748 + $0x10] sm:$0xff]
    %v4752 = vld [vmem:[%s4748 + $0x18] sm:$0xff]
    %v4753 = vld [vmem:[%s4748 + $0x20] sm:$0xff]
    %v4754 = vld [vmem:[%s4748 + $0x28] sm:$0xff]
    %v4755 = vld [vmem:[%s4748 + $0x30] sm:$0xff]
    %v4756 = vld [vmem:[%s4748 + $0x38] sm:$0xff]
    %v4757 = vcombine.low %v3080, %v3079
    %v4758 = vcombine.low %v3105, %v3106
    %v4760 = vunpack.c.l.s4 1983009808
    %v4761 = vunpack.c.0.s8 %v4760
    %v4762 = vlaneseq
    %v4763 = vshrl.u32 %v4762, 7
    %v4764 = vsub.s32 %v4761, %v4763
    %v4765 = vrot.slane %v4757, %v4764
    %v4767 = vunpack.c.l.s4 1983009808
    %v4768 = vunpack.c.0.s8 %v4767
    %v4769 = vlaneseq
    %v4770 = vshrl.u32 %v4769, 7
    %v4771 = vsub.s32 %v4768, %v4770
    %v4772 = vrot.slane %v4758, %v4771
    %v4773 = vcombine.low %v4765, %v4772
    %4775 = vmatprep.subr.bf16.mxu0 0
    %4776 = vmatpush1.bf16.msra.mxu0 %v4749
    %4777 = vmatprep.subr.bf16.mxu0 0
    %4778 = vmatpush1.bf16.msra.mxu0 %v4750
    %4779 = vmatprep.subr.bf16.mxu0 0
    %4780 = vmatpush1.bf16.msra.mxu0 %v4751
    %4781 = vmatprep.subr.bf16.mxu0 0
    %4782 = vmatpush1.bf16.msra.mxu0 %v4752
    %4783 = vmatprep.subr.bf16.mxu0 0
    %4784 = vmatpush1.bf16.msra.mxu0 %v4753
    %4785 = vmatprep.subr.bf16.mxu0 0
    %4786 = vmatpush1.bf16.msra.mxu0 %v4754
    %4787 = vmatprep.subr.bf16.mxu0 0
    %4788 = vmatpush1.bf16.msra.mxu0 %v4755
    %4789 = vmatprep.subr.bf16.mxu0 0
    %4790 = vmatpush1.bf16.msra.mxu0 %v4756
    %4791 = vmatprep.subr.bf16.mxu0 0
    %4792 = vmatpush1.bf16.msra.mxu0 0
    %4793 = vmatprep.subr.bf16.mxu0 0
    %4794 = vmatpush1.bf16.msra.mxu0 0
    %4795 = vmatprep.subr.bf16.mxu0 0
    %4796 = vmatpush1.bf16.msra.mxu0 0
    %4797 = vmatprep.subr.bf16.mxu0 0
    %4798 = vmatpush1.bf16.msra.mxu0 0
    %4799 = vmatprep.subr.bf16.mxu0 0
    %4800 = vmatpush1.bf16.msra.mxu0 0
    %4801 = vmatprep.subr.bf16.mxu0 0
    %4802 = vmatpush1.bf16.msra.mxu0 0
    %4803 = vmatprep.subr.bf16.mxu0 0
    %4804 = vmatpush1.bf16.msra.mxu0 0
    %4805 = vmatprep.subr.bf16.mxu0 0
    %4806 = vmatpush1.bf16.msra.mxu0 0
    %4807 = vmatprep.mubr.bf16.mxu0 0
    %4808 = vmatmul.mubr.bf16.gmra.mrb[0].mxu0 %v4773
    %v4809 = vpop.f32.mrb[0].mxu0
    %v4810 = vadd.f32 0.0, %v4809
    %v4811 = vpop.f32.mrb[0].mxu0
    %v4812 = vpop.f32.mrb[0].mxu0
    %v4813 = vadd.f32 0.0, %v4812
    %v4814 = vpop.f32.mrb[0].mxu0
    %4815 = vdwg.mxu0
    %v4816 = vadd.f32 %v4746, %v4810
    %v4817 = vadd.f32 %v4747, %v4813
    %v4818 = vld [vmem:[#allocation10] sm:$0x1]
    %v4820 = vlaneseq
    %v4821 = vshrl.u32 %v4820, 7
    %v4822 = vsub.s32 0, %v4821
    %v4823 = vrot.slane %v4818, %v4822
    %v4825 = vadd.f32 %v4816, %v4823
    %v4826 = vadd.f32 %v4817, %v4823
    %v4827 = vmax.f32 %v4825, 0.0
    %v4828 = vmax.f32 %v4826, 0.0
    %v4829 = vpack.c.bf16 %v4828, %v4827
    %v4831 = vunpack.i.l.s16 %v4829
    %v4832 = vunpack.i.h.s16 %v4829
    %v4833 = vpack.c.b16 %v4832, %v4831
    %v4834 = vunpack.i.l.s16 %v4833
    %v4835 = vunpack.i.h.s16 %v4833
    %v4836 = vpack.c.b16 %v4835, %v4834
    %v4837 = vunpack.i.l.s16 %v4836
    %v4838 = vunpack.i.h.s16 %v4836
    %v4839 = vpack.c.b16 %v4838, %v4837
    %s4840 = smul.u32 4, 128
    %s4841 = smul.u32 %s4840, 8
    %s4842 = sshll.u32 %s4841, 4
    %4843 = dma.done %s98, %s4842
    %v4844 = vld [vmem:[#allocation3] sm:$0xff]
    %v4845 = vld [vmem:[#allocation3 + $0x8] sm:$0xff]
    %v4846 = vld [vmem:[#allocation3 + $0x10] sm:$0xff]
    %v4847 = vld [vmem:[#allocation3 + $0x18] sm:$0xff]
    %v4848 = vld [vmem:[#allocation3 + $0x20] sm:$0xff]
    %v4849 = vld [vmem:[#allocation3 + $0x28] sm:$0xff]
    %v4850 = vld [vmem:[#allocation3 + $0x30] sm:$0xff]
    %v4851 = vld [vmem:[#allocation3 + $0x38] sm:$0xff]
    %v4852 = vld [vmem:[#allocation3 + $0x40] sm:$0xff]
    %v4853 = vld [vmem:[#allocation3 + $0x48] sm:$0xff]
    %v4854 = vld [vmem:[#allocation3 + $0x50] sm:$0xff]
    %v4855 = vld [vmem:[#allocation3 + $0x58] sm:$0xff]
    %v4856 = vld [vmem:[#allocation3 + $0x60] sm:$0xff]
    %v4857 = vld [vmem:[#allocation3 + $0x68] sm:$0xff]
    %v4858 = vld [vmem:[#allocation3 + $0x70] sm:$0xff]
    %v4859 = vld [vmem:[#allocation3 + $0x78] sm:$0xff]
    %v4860 = vld [vmem:[#allocation3 + $0x80] sm:$0xff]
    %v4861 = vld [vmem:[#allocation3 + $0x88] sm:$0xff]
    %v4862 = vld [vmem:[#allocation3 + $0x90] sm:$0xff]
    %v4863 = vld [vmem:[#allocation3 + $0x98] sm:$0xff]
    %v4864 = vld [vmem:[#allocation3 + $0xa0] sm:$0xff]
    %v4865 = vld [vmem:[#allocation3 + $0xa8] sm:$0xff]
    %v4866 = vld [vmem:[#allocation3 + $0xb0] sm:$0xff]
    %v4867 = vld [vmem:[#allocation3 + $0xb8] sm:$0xff]
    %v4868 = vld [vmem:[#allocation3 + $0xc0] sm:$0xff]
    %v4869 = vld [vmem:[#allocation3 + $0xc8] sm:$0xff]
    %v4870 = vld [vmem:[#allocation3 + $0xd0] sm:$0xff]
    %v4871 = vld [vmem:[#allocation3 + $0xd8] sm:$0xff]
    %v4872 = vld [vmem:[#allocation3 + $0xe0] sm:$0xff]
    %v4873 = vld [vmem:[#allocation3 + $0xe8] sm:$0xff]
    %v4874 = vld [vmem:[#allocation3 + $0xf0] sm:$0xff]
    %v4875 = vld [vmem:[#allocation3 + $0xf8] sm:$0xff]
    %v4876 = vld [vmem:[#allocation3 + $0x100] sm:$0xff]
    %v4877 = vld [vmem:[#allocation3 + $0x108] sm:$0xff]
    %v4878 = vld [vmem:[#allocation3 + $0x110] sm:$0xff]
    %v4879 = vld [vmem:[#allocation3 + $0x118] sm:$0xff]
    %v4880 = vld [vmem:[#allocation3 + $0x120] sm:$0xff]
    %v4881 = vld [vmem:[#allocation3 + $0x128] sm:$0xff]
    %v4882 = vld [vmem:[#allocation3 + $0x130] sm:$0xff]
    %v4883 = vld [vmem:[#allocation3 + $0x138] sm:$0xff]
    %v4884 = vld [vmem:[#allocation3 + $0x140] sm:$0xff]
    %v4885 = vld [vmem:[#allocation3 + $0x148] sm:$0xff]
    %v4886 = vld [vmem:[#allocation3 + $0x150] sm:$0xff]
    %v4887 = vld [vmem:[#allocation3 + $0x158] sm:$0xff]
    %v4888 = vld [vmem:[#allocation3 + $0x160] sm:$0xff]
    %v4889 = vld [vmem:[#allocation3 + $0x168] sm:$0xff]
    %v4890 = vld [vmem:[#allocation3 + $0x170] sm:$0xff]
    %v4891 = vld [vmem:[#allocation3 + $0x178] sm:$0xff]
    %v4892 = vld [vmem:[#allocation3 + $0x180] sm:$0xff]
    %v4893 = vld [vmem:[#allocation3 + $0x188] sm:$0xff]
    %v4894 = vld [vmem:[#allocation3 + $0x190] sm:$0xff]
    %v4895 = vld [vmem:[#allocation3 + $0x198] sm:$0xff]
    %v4896 = vld [vmem:[#allocation3 + $0x1a0] sm:$0xff]
    %v4897 = vld [vmem:[#allocation3 + $0x1a8] sm:$0xff]
    %v4898 = vld [vmem:[#allocation3 + $0x1b0] sm:$0xff]
    %v4899 = vld [vmem:[#allocation3 + $0x1b8] sm:$0xff]
    %v4900 = vld [vmem:[#allocation3 + $0x1c0] sm:$0xff]
    %v4901 = vld [vmem:[#allocation3 + $0x1c8] sm:$0xff]
    %v4902 = vld [vmem:[#allocation3 + $0x1d0] sm:$0xff]
    %v4903 = vld [vmem:[#allocation3 + $0x1d8] sm:$0xff]
    %v4904 = vld [vmem:[#allocation3 + $0x1e0] sm:$0xff]
    %v4905 = vld [vmem:[#allocation3 + $0x1e8] sm:$0xff]
    %v4906 = vld [vmem:[#allocation3 + $0x1f0] sm:$0xff]
    %v4907 = vld [vmem:[#allocation3 + $0x1f8] sm:$0xff]
    %v4908 = vld [vmem:[#allocation3 + $0x200] sm:$0xff]
    %v4909 = vld [vmem:[#allocation3 + $0x208] sm:$0xff]
    %v4910 = vld [vmem:[#allocation3 + $0x210] sm:$0xff]
    %v4911 = vld [vmem:[#allocation3 + $0x218] sm:$0xff]
    %v4912 = vld [vmem:[#allocation3 + $0x220] sm:$0xff]
    %v4913 = vld [vmem:[#allocation3 + $0x228] sm:$0xff]
    %v4914 = vld [vmem:[#allocation3 + $0x230] sm:$0xff]
    %v4915 = vld [vmem:[#allocation3 + $0x238] sm:$0xff]
    %v4916 = vld [vmem:[#allocation3 + $0x240] sm:$0xff]
    %v4917 = vld [vmem:[#allocation3 + $0x248] sm:$0xff]
    %v4918 = vld [vmem:[#allocation3 + $0x250] sm:$0xff]
    %v4919 = vld [vmem:[#allocation3 + $0x258] sm:$0xff]
    %v4920 = vld [vmem:[#allocation3 + $0x260] sm:$0xff]
    %v4921 = vld [vmem:[#allocation3 + $0x268] sm:$0xff]
    %v4922 = vld [vmem:[#allocation3 + $0x270] sm:$0xff]
    %v4923 = vld [vmem:[#allocation3 + $0x278] sm:$0xff]
    %v4924 = vld [vmem:[#allocation3 + $0x280] sm:$0xff]
    %v4925 = vld [vmem:[#allocation3 + $0x288] sm:$0xff]
    %v4926 = vld [vmem:[#allocation3 + $0x290] sm:$0xff]
    %v4927 = vld [vmem:[#allocation3 + $0x298] sm:$0xff]
    %v4928 = vld [vmem:[#allocation3 + $0x2a0] sm:$0xff]
    %v4929 = vld [vmem:[#allocation3 + $0x2a8] sm:$0xff]
    %v4930 = vld [vmem:[#allocation3 + $0x2b0] sm:$0xff]
    %v4931 = vld [vmem:[#allocation3 + $0x2b8] sm:$0xff]
    %v4932 = vld [vmem:[#allocation3 + $0x2c0] sm:$0xff]
    %v4933 = vld [vmem:[#allocation3 + $0x2c8] sm:$0xff]
    %v4934 = vld [vmem:[#allocation3 + $0x2d0] sm:$0xff]
    %v4935 = vld [vmem:[#allocation3 + $0x2d8] sm:$0xff]
    %v4936 = vld [vmem:[#allocation3 + $0x2e0] sm:$0xff]
    %v4937 = vld [vmem:[#allocation3 + $0x2e8] sm:$0xff]
    %v4938 = vld [vmem:[#allocation3 + $0x2f0] sm:$0xff]
    %v4939 = vld [vmem:[#allocation3 + $0x2f8] sm:$0xff]
    %v4940 = vld [vmem:[#allocation3 + $0x300] sm:$0xff]
    %v4941 = vld [vmem:[#allocation3 + $0x308] sm:$0xff]
    %v4942 = vld [vmem:[#allocation3 + $0x310] sm:$0xff]
    %v4943 = vld [vmem:[#allocation3 + $0x318] sm:$0xff]
    %v4944 = vld [vmem:[#allocation3 + $0x320] sm:$0xff]
    %v4945 = vld [vmem:[#allocation3 + $0x328] sm:$0xff]
    %v4946 = vld [vmem:[#allocation3 + $0x330] sm:$0xff]
    %v4947 = vld [vmem:[#allocation3 + $0x338] sm:$0xff]
    %v4948 = vld [vmem:[#allocation3 + $0x340] sm:$0xff]
    %v4949 = vld [vmem:[#allocation3 + $0x348] sm:$0xff]
    %v4950 = vld [vmem:[#allocation3 + $0x350] sm:$0xff]
    %v4951 = vld [vmem:[#allocation3 + $0x358] sm:$0xff]
    %v4952 = vld [vmem:[#allocation3 + $0x360] sm:$0xff]
    %v4953 = vld [vmem:[#allocation3 + $0x368] sm:$0xff]
    %v4954 = vld [vmem:[#allocation3 + $0x370] sm:$0xff]
    %v4955 = vld [vmem:[#allocation3 + $0x378] sm:$0xff]
    %v4956 = vld [vmem:[#allocation3 + $0x380] sm:$0xff]
    %v4957 = vld [vmem:[#allocation3 + $0x388] sm:$0xff]
    %v4958 = vld [vmem:[#allocation3 + $0x390] sm:$0xff]
    %v4959 = vld [vmem:[#allocation3 + $0x398] sm:$0xff]
    %v4960 = vld [vmem:[#allocation3 + $0x3a0] sm:$0xff]
    %v4961 = vld [vmem:[#allocation3 + $0x3a8] sm:$0xff]
    %v4962 = vld [vmem:[#allocation3 + $0x3b0] sm:$0xff]
    %v4963 = vld [vmem:[#allocation3 + $0x3b8] sm:$0xff]
    %v4964 = vld [vmem:[#allocation3 + $0x3c0] sm:$0xff]
    %v4965 = vld [vmem:[#allocation3 + $0x3c8] sm:$0xff]
    %v4966 = vld [vmem:[#allocation3 + $0x3d0] sm:$0xff]
    %v4967 = vld [vmem:[#allocation3 + $0x3d8] sm:$0xff]
    %v4968 = vld [vmem:[#allocation3 + $0x3e0] sm:$0xff]
    %v4969 = vld [vmem:[#allocation3 + $0x3e8] sm:$0xff]
    %v4970 = vld [vmem:[#allocation3 + $0x3f0] sm:$0xff]
    %v4971 = vld [vmem:[#allocation3 + $0x3f8] sm:$0xff]
    %v4972 = vld [vmem:[#allocation3 + $0x400] sm:$0xff]
    %v4973 = vld [vmem:[#allocation3 + $0x408] sm:$0xff]
    %v4974 = vld [vmem:[#allocation3 + $0x410] sm:$0xff]
    %v4975 = vld [vmem:[#allocation3 + $0x418] sm:$0xff]
    %v4976 = vld [vmem:[#allocation3 + $0x420] sm:$0xff]
    %v4977 = vld [vmem:[#allocation3 + $0x428] sm:$0xff]
    %v4978 = vld [vmem:[#allocation3 + $0x430] sm:$0xff]
    %v4979 = vld [vmem:[#allocation3 + $0x438] sm:$0xff]
    %v4980 = vld [vmem:[#allocation3 + $0x440] sm:$0xff]
    %v4981 = vld [vmem:[#allocation3 + $0x448] sm:$0xff]
    %v4982 = vld [vmem:[#allocation3 + $0x450] sm:$0xff]
    %v4983 = vld [vmem:[#allocation3 + $0x458] sm:$0xff]
    %v4984 = vld [vmem:[#allocation3 + $0x460] sm:$0xff]
    %v4985 = vld [vmem:[#allocation3 + $0x468] sm:$0xff]
    %v4986 = vld [vmem:[#allocation3 + $0x470] sm:$0xff]
    %v4987 = vld [vmem:[#allocation3 + $0x478] sm:$0xff]
    %v4988 = vld [vmem:[#allocation3 + $0x480] sm:$0xff]
    %v4989 = vld [vmem:[#allocation3 + $0x488] sm:$0xff]
    %v4990 = vld [vmem:[#allocation3 + $0x490] sm:$0xff]
    %v4991 = vld [vmem:[#allocation3 + $0x498] sm:$0xff]
    %v4992 = vld [vmem:[#allocation3 + $0x4a0] sm:$0xff]
    %v4993 = vld [vmem:[#allocation3 + $0x4a8] sm:$0xff]
    %v4994 = vld [vmem:[#allocation3 + $0x4b0] sm:$0xff]
    %v4995 = vld [vmem:[#allocation3 + $0x4b8] sm:$0xff]
    %v4996 = vld [vmem:[#allocation3 + $0x4c0] sm:$0xff]
    %v4997 = vld [vmem:[#allocation3 + $0x4c8] sm:$0xff]
    %v4998 = vld [vmem:[#allocation3 + $0x4d0] sm:$0xff]
    %v4999 = vld [vmem:[#allocation3 + $0x4d8] sm:$0xff]
    %v5000 = vld [vmem:[#allocation3 + $0x4e0] sm:$0xff]
    %v5001 = vld [vmem:[#allocation3 + $0x4e8] sm:$0xff]
    %v5002 = vld [vmem:[#allocation3 + $0x4f0] sm:$0xff]
    %v5003 = vld [vmem:[#allocation3 + $0x4f8] sm:$0xff]
    %v5004 = vld [vmem:[#allocation3 + $0x500] sm:$0xff]
    %v5005 = vld [vmem:[#allocation3 + $0x508] sm:$0xff]
    %v5006 = vld [vmem:[#allocation3 + $0x510] sm:$0xff]
    %v5007 = vld [vmem:[#allocation3 + $0x518] sm:$0xff]
    %v5008 = vld [vmem:[#allocation3 + $0x520] sm:$0xff]
    %v5009 = vld [vmem:[#allocation3 + $0x528] sm:$0xff]
    %v5010 = vld [vmem:[#allocation3 + $0x530] sm:$0xff]
    %v5011 = vld [vmem:[#allocation3 + $0x538] sm:$0xff]
    %v5012 = vld [vmem:[#allocation3 + $0x540] sm:$0xff]
    %v5013 = vld [vmem:[#allocation3 + $0x548] sm:$0xff]
    %v5014 = vld [vmem:[#allocation3 + $0x550] sm:$0xff]
    %v5015 = vld [vmem:[#allocation3 + $0x558] sm:$0xff]
    %v5016 = vld [vmem:[#allocation3 + $0x560] sm:$0xff]
    %v5017 = vld [vmem:[#allocation3 + $0x568] sm:$0xff]
    %v5018 = vld [vmem:[#allocation3 + $0x570] sm:$0xff]
    %v5019 = vld [vmem:[#allocation3 + $0x578] sm:$0xff]
    %v5020 = vld [vmem:[#allocation3 + $0x580] sm:$0xff]
    %v5021 = vld [vmem:[#allocation3 + $0x588] sm:$0xff]
    %v5022 = vld [vmem:[#allocation3 + $0x590] sm:$0xff]
    %v5023 = vld [vmem:[#allocation3 + $0x598] sm:$0xff]
    %v5024 = vld [vmem:[#allocation3 + $0x5a0] sm:$0xff]
    %v5025 = vld [vmem:[#allocation3 + $0x5a8] sm:$0xff]
    %v5026 = vld [vmem:[#allocation3 + $0x5b0] sm:$0xff]
    %v5027 = vld [vmem:[#allocation3 + $0x5b8] sm:$0xff]
    %v5028 = vld [vmem:[#allocation3 + $0x5c0] sm:$0xff]
    %v5029 = vld [vmem:[#allocation3 + $0x5c8] sm:$0xff]
    %v5030 = vld [vmem:[#allocation3 + $0x5d0] sm:$0xff]
    %v5031 = vld [vmem:[#allocation3 + $0x5d8] sm:$0xff]
    %v5032 = vld [vmem:[#allocation3 + $0x5e0] sm:$0xff]
    %v5033 = vld [vmem:[#allocation3 + $0x5e8] sm:$0xff]
    %v5034 = vld [vmem:[#allocation3 + $0x5f0] sm:$0xff]
    %v5035 = vld [vmem:[#allocation3 + $0x5f8] sm:$0xff]
    %v5036 = vld [vmem:[#allocation3 + $0x600] sm:$0xff]
    %v5037 = vld [vmem:[#allocation3 + $0x608] sm:$0xff]
    %v5038 = vld [vmem:[#allocation3 + $0x610] sm:$0xff]
    %v5039 = vld [vmem:[#allocation3 + $0x618] sm:$0xff]
    %v5040 = vld [vmem:[#allocation3 + $0x620] sm:$0xff]
    %v5041 = vld [vmem:[#allocation3 + $0x628] sm:$0xff]
    %v5042 = vld [vmem:[#allocation3 + $0x630] sm:$0xff]
    %v5043 = vld [vmem:[#allocation3 + $0x638] sm:$0xff]
    %v5044 = vld [vmem:[#allocation3 + $0x640] sm:$0xff]
    %v5045 = vld [vmem:[#allocation3 + $0x648] sm:$0xff]
    %v5046 = vld [vmem:[#allocation3 + $0x650] sm:$0xff]
    %v5047 = vld [vmem:[#allocation3 + $0x658] sm:$0xff]
    %v5048 = vld [vmem:[#allocation3 + $0x660] sm:$0xff]
    %v5049 = vld [vmem:[#allocation3 + $0x668] sm:$0xff]
    %v5050 = vld [vmem:[#allocation3 + $0x670] sm:$0xff]
    %v5051 = vld [vmem:[#allocation3 + $0x678] sm:$0xff]
    %v5052 = vld [vmem:[#allocation3 + $0x680] sm:$0xff]
    %v5053 = vld [vmem:[#allocation3 + $0x688] sm:$0xff]
    %v5054 = vld [vmem:[#allocation3 + $0x690] sm:$0xff]
    %v5055 = vld [vmem:[#allocation3 + $0x698] sm:$0xff]
    %v5056 = vld [vmem:[#allocation3 + $0x6a0] sm:$0xff]
    %v5057 = vld [vmem:[#allocation3 + $0x6a8] sm:$0xff]
    %v5058 = vld [vmem:[#allocation3 + $0x6b0] sm:$0xff]
    %v5059 = vld [vmem:[#allocation3 + $0x6b8] sm:$0xff]
    %v5060 = vld [vmem:[#allocation3 + $0x6c0] sm:$0xff]
    %v5061 = vld [vmem:[#allocation3 + $0x6c8] sm:$0xff]
    %v5062 = vld [vmem:[#allocation3 + $0x6d0] sm:$0xff]
    %v5063 = vld [vmem:[#allocation3 + $0x6d8] sm:$0xff]
    %v5064 = vld [vmem:[#allocation3 + $0x6e0] sm:$0xff]
    %v5065 = vld [vmem:[#allocation3 + $0x6e8] sm:$0xff]
    %v5066 = vld [vmem:[#allocation3 + $0x6f0] sm:$0xff]
    %v5067 = vld [vmem:[#allocation3 + $0x6f8] sm:$0xff]
    %v5068 = vld [vmem:[#allocation3 + $0x700] sm:$0xff]
    %v5069 = vld [vmem:[#allocation3 + $0x708] sm:$0xff]
    %v5070 = vld [vmem:[#allocation3 + $0x710] sm:$0xff]
    %v5071 = vld [vmem:[#allocation3 + $0x718] sm:$0xff]
    %v5072 = vld [vmem:[#allocation3 + $0x720] sm:$0xff]
    %v5073 = vld [vmem:[#allocation3 + $0x728] sm:$0xff]
    %v5074 = vld [vmem:[#allocation3 + $0x730] sm:$0xff]
    %v5075 = vld [vmem:[#allocation3 + $0x738] sm:$0xff]
    %v5076 = vld [vmem:[#allocation3 + $0x740] sm:$0xff]
    %v5077 = vld [vmem:[#allocation3 + $0x748] sm:$0xff]
    %v5078 = vld [vmem:[#allocation3 + $0x750] sm:$0xff]
    %v5079 = vld [vmem:[#allocation3 + $0x758] sm:$0xff]
    %v5080 = vld [vmem:[#allocation3 + $0x760] sm:$0xff]
    %v5081 = vld [vmem:[#allocation3 + $0x768] sm:$0xff]
    %v5082 = vld [vmem:[#allocation3 + $0x770] sm:$0xff]
    %v5083 = vld [vmem:[#allocation3 + $0x778] sm:$0xff]
    %v5084 = vld [vmem:[#allocation3 + $0x780] sm:$0xff]
    %v5085 = vld [vmem:[#allocation3 + $0x788] sm:$0xff]
    %v5086 = vld [vmem:[#allocation3 + $0x790] sm:$0xff]
    %v5087 = vld [vmem:[#allocation3 + $0x798] sm:$0xff]
    %v5088 = vld [vmem:[#allocation3 + $0x7a0] sm:$0xff]
    %v5089 = vld [vmem:[#allocation3 + $0x7a8] sm:$0xff]
    %v5090 = vld [vmem:[#allocation3 + $0x7b0] sm:$0xff]
    %v5091 = vld [vmem:[#allocation3 + $0x7b8] sm:$0xff]
    %v5092 = vld [vmem:[#allocation3 + $0x7c0] sm:$0xff]
    %v5093 = vld [vmem:[#allocation3 + $0x7c8] sm:$0xff]
    %v5094 = vld [vmem:[#allocation3 + $0x7d0] sm:$0xff]
    %v5095 = vld [vmem:[#allocation3 + $0x7d8] sm:$0xff]
    %v5096 = vld [vmem:[#allocation3 + $0x7e0] sm:$0xff]
    %v5097 = vld [vmem:[#allocation3 + $0x7e8] sm:$0xff]
    %v5098 = vld [vmem:[#allocation3 + $0x7f0] sm:$0xff]
    %v5099 = vld [vmem:[#allocation3 + $0x7f8] sm:$0xff]
    %v5100 = vld [vmem:[#allocation3 + $0x800] sm:$0xff]
    %v5101 = vld [vmem:[#allocation3 + $0x808] sm:$0xff]
    %v5102 = vld [vmem:[#allocation3 + $0x810] sm:$0xff]
    %v5103 = vld [vmem:[#allocation3 + $0x818] sm:$0xff]
    %v5104 = vld [vmem:[#allocation3 + $0x820] sm:$0xff]
    %v5105 = vld [vmem:[#allocation3 + $0x828] sm:$0xff]
    %v5106 = vld [vmem:[#allocation3 + $0x830] sm:$0xff]
    %v5107 = vld [vmem:[#allocation3 + $0x838] sm:$0xff]
    %v5108 = vld [vmem:[#allocation3 + $0x840] sm:$0xff]
    %v5109 = vld [vmem:[#allocation3 + $0x848] sm:$0xff]
    %v5110 = vld [vmem:[#allocation3 + $0x850] sm:$0xff]
    %v5111 = vld [vmem:[#allocation3 + $0x858] sm:$0xff]
    %v5112 = vld [vmem:[#allocation3 + $0x860] sm:$0xff]
    %v5113 = vld [vmem:[#allocation3 + $0x868] sm:$0xff]
    %v5114 = vld [vmem:[#allocation3 + $0x870] sm:$0xff]
    %v5115 = vld [vmem:[#allocation3 + $0x878] sm:$0xff]
    %v5116 = vld [vmem:[#allocation3 + $0x880] sm:$0xff]
    %v5117 = vld [vmem:[#allocation3 + $0x888] sm:$0xff]
    %v5118 = vld [vmem:[#allocation3 + $0x890] sm:$0xff]
    %v5119 = vld [vmem:[#allocation3 + $0x898] sm:$0xff]
    %v5120 = vld [vmem:[#allocation3 + $0x8a0] sm:$0xff]
    %v5121 = vld [vmem:[#allocation3 + $0x8a8] sm:$0xff]
    %v5122 = vld [vmem:[#allocation3 + $0x8b0] sm:$0xff]
    %v5123 = vld [vmem:[#allocation3 + $0x8b8] sm:$0xff]
    %v5124 = vld [vmem:[#allocation3 + $0x8c0] sm:$0xff]
    %v5125 = vld [vmem:[#allocation3 + $0x8c8] sm:$0xff]
    %v5126 = vld [vmem:[#allocation3 + $0x8d0] sm:$0xff]
    %v5127 = vld [vmem:[#allocation3 + $0x8d8] sm:$0xff]
    %v5128 = vld [vmem:[#allocation3 + $0x8e0] sm:$0xff]
    %v5129 = vld [vmem:[#allocation3 + $0x8e8] sm:$0xff]
    %v5130 = vld [vmem:[#allocation3 + $0x8f0] sm:$0xff]
    %v5131 = vld [vmem:[#allocation3 + $0x8f8] sm:$0xff]
    %v5132 = vld [vmem:[#allocation3 + $0x900] sm:$0xff]
    %v5133 = vld [vmem:[#allocation3 + $0x908] sm:$0xff]
    %v5134 = vld [vmem:[#allocation3 + $0x910] sm:$0xff]
    %v5135 = vld [vmem:[#allocation3 + $0x918] sm:$0xff]
    %v5136 = vld [vmem:[#allocation3 + $0x920] sm:$0xff]
    %v5137 = vld [vmem:[#allocation3 + $0x928] sm:$0xff]
    %v5138 = vld [vmem:[#allocation3 + $0x930] sm:$0xff]
    %v5139 = vld [vmem:[#allocation3 + $0x938] sm:$0xff]
    %v5140 = vld [vmem:[#allocation3 + $0x940] sm:$0xff]
    %v5141 = vld [vmem:[#allocation3 + $0x948] sm:$0xff]
    %v5142 = vld [vmem:[#allocation3 + $0x950] sm:$0xff]
    %v5143 = vld [vmem:[#allocation3 + $0x958] sm:$0xff]
    %v5144 = vld [vmem:[#allocation3 + $0x960] sm:$0xff]
    %v5145 = vld [vmem:[#allocation3 + $0x968] sm:$0xff]
    %v5146 = vld [vmem:[#allocation3 + $0x970] sm:$0xff]
    %v5147 = vld [vmem:[#allocation3 + $0x978] sm:$0xff]
    %v5148 = vld [vmem:[#allocation3 + $0x980] sm:$0xff]
    %v5149 = vld [vmem:[#allocation3 + $0x988] sm:$0xff]
    %v5150 = vld [vmem:[#allocation3 + $0x990] sm:$0xff]
    %v5151 = vld [vmem:[#allocation3 + $0x998] sm:$0xff]
    %v5152 = vld [vmem:[#allocation3 + $0x9a0] sm:$0xff]
    %v5153 = vld [vmem:[#allocation3 + $0x9a8] sm:$0xff]
    %v5154 = vld [vmem:[#allocation3 + $0x9b0] sm:$0xff]
    %v5155 = vld [vmem:[#allocation3 + $0x9b8] sm:$0xff]
    %v5156 = vld [vmem:[#allocation3 + $0x9c0] sm:$0xff]
    %v5157 = vld [vmem:[#allocation3 + $0x9c8] sm:$0xff]
    %v5158 = vld [vmem:[#allocation3 + $0x9d0] sm:$0xff]
    %v5159 = vld [vmem:[#allocation3 + $0x9d8] sm:$0xff]
    %v5160 = vld [vmem:[#allocation3 + $0x9e0] sm:$0xff]
    %v5161 = vld [vmem:[#allocation3 + $0x9e8] sm:$0xff]
    %v5162 = vld [vmem:[#allocation3 + $0x9f0] sm:$0xff]
    %v5163 = vld [vmem:[#allocation3 + $0x9f8] sm:$0xff]
    %v5164 = vld [vmem:[#allocation3 + $0xa00] sm:$0xff]
    %v5165 = vld [vmem:[#allocation3 + $0xa08] sm:$0xff]
    %v5166 = vld [vmem:[#allocation3 + $0xa10] sm:$0xff]
    %v5167 = vld [vmem:[#allocation3 + $0xa18] sm:$0xff]
    %v5168 = vld [vmem:[#allocation3 + $0xa20] sm:$0xff]
    %v5169 = vld [vmem:[#allocation3 + $0xa28] sm:$0xff]
    %v5170 = vld [vmem:[#allocation3 + $0xa30] sm:$0xff]
    %v5171 = vld [vmem:[#allocation3 + $0xa38] sm:$0xff]
    %v5172 = vld [vmem:[#allocation3 + $0xa40] sm:$0xff]
    %v5173 = vld [vmem:[#allocation3 + $0xa48] sm:$0xff]
    %v5174 = vld [vmem:[#allocation3 + $0xa50] sm:$0xff]
    %v5175 = vld [vmem:[#allocation3 + $0xa58] sm:$0xff]
    %v5176 = vld [vmem:[#allocation3 + $0xa60] sm:$0xff]
    %v5177 = vld [vmem:[#allocation3 + $0xa68] sm:$0xff]
    %v5178 = vld [vmem:[#allocation3 + $0xa70] sm:$0xff]
    %v5179 = vld [vmem:[#allocation3 + $0xa78] sm:$0xff]
    %v5180 = vld [vmem:[#allocation3 + $0xa80] sm:$0xff]
    %v5181 = vld [vmem:[#allocation3 + $0xa88] sm:$0xff]
    %v5182 = vld [vmem:[#allocation3 + $0xa90] sm:$0xff]
    %v5183 = vld [vmem:[#allocation3 + $0xa98] sm:$0xff]
    %v5184 = vld [vmem:[#allocation3 + $0xaa0] sm:$0xff]
    %v5185 = vld [vmem:[#allocation3 + $0xaa8] sm:$0xff]
    %v5186 = vld [vmem:[#allocation3 + $0xab0] sm:$0xff]
    %v5187 = vld [vmem:[#allocation3 + $0xab8] sm:$0xff]
    %v5188 = vld [vmem:[#allocation3 + $0xac0] sm:$0xff]
    %v5189 = vld [vmem:[#allocation3 + $0xac8] sm:$0xff]
    %v5190 = vld [vmem:[#allocation3 + $0xad0] sm:$0xff]
    %v5191 = vld [vmem:[#allocation3 + $0xad8] sm:$0xff]
    %v5192 = vld [vmem:[#allocation3 + $0xae0] sm:$0xff]
    %v5193 = vld [vmem:[#allocation3 + $0xae8] sm:$0xff]
    %v5194 = vld [vmem:[#allocation3 + $0xaf0] sm:$0xff]
    %v5195 = vld [vmem:[#allocation3 + $0xaf8] sm:$0xff]
    %v5196 = vld [vmem:[#allocation3 + $0xb00] sm:$0xff]
    %v5197 = vld [vmem:[#allocation3 + $0xb08] sm:$0xff]
    %v5198 = vld [vmem:[#allocation3 + $0xb10] sm:$0xff]
    %v5199 = vld [vmem:[#allocation3 + $0xb18] sm:$0xff]
    %v5200 = vld [vmem:[#allocation3 + $0xb20] sm:$0xff]
    %v5201 = vld [vmem:[#allocation3 + $0xb28] sm:$0xff]
    %v5202 = vld [vmem:[#allocation3 + $0xb30] sm:$0xff]
    %v5203 = vld [vmem:[#allocation3 + $0xb38] sm:$0xff]
    %v5204 = vld [vmem:[#allocation3 + $0xb40] sm:$0xff]
    %v5205 = vld [vmem:[#allocation3 + $0xb48] sm:$0xff]
    %v5206 = vld [vmem:[#allocation3 + $0xb50] sm:$0xff]
    %v5207 = vld [vmem:[#allocation3 + $0xb58] sm:$0xff]
    %v5208 = vld [vmem:[#allocation3 + $0xb60] sm:$0xff]
    %v5209 = vld [vmem:[#allocation3 + $0xb68] sm:$0xff]
    %v5210 = vld [vmem:[#allocation3 + $0xb70] sm:$0xff]
    %v5211 = vld [vmem:[#allocation3 + $0xb78] sm:$0xff]
    %v5212 = vld [vmem:[#allocation3 + $0xb80] sm:$0xff]
    %v5213 = vld [vmem:[#allocation3 + $0xb88] sm:$0xff]
    %v5214 = vld [vmem:[#allocation3 + $0xb90] sm:$0xff]
    %v5215 = vld [vmem:[#allocation3 + $0xb98] sm:$0xff]
    %v5216 = vld [vmem:[#allocation3 + $0xba0] sm:$0xff]
    %v5217 = vld [vmem:[#allocation3 + $0xba8] sm:$0xff]
    %v5218 = vld [vmem:[#allocation3 + $0xbb0] sm:$0xff]
    %v5219 = vld [vmem:[#allocation3 + $0xbb8] sm:$0xff]
    %v5220 = vld [vmem:[#allocation3 + $0xbc0] sm:$0xff]
    %v5221 = vld [vmem:[#allocation3 + $0xbc8] sm:$0xff]
    %v5222 = vld [vmem:[#allocation3 + $0xbd0] sm:$0xff]
    %v5223 = vld [vmem:[#allocation3 + $0xbd8] sm:$0xff]
    %v5224 = vld [vmem:[#allocation3 + $0xbe0] sm:$0xff]
    %v5225 = vld [vmem:[#allocation3 + $0xbe8] sm:$0xff]
    %v5226 = vld [vmem:[#allocation3 + $0xbf0] sm:$0xff]
    %v5227 = vld [vmem:[#allocation3 + $0xbf8] sm:$0xff]
    %v5228 = vld [vmem:[#allocation3 + $0xc00] sm:$0xff]
    %v5229 = vld [vmem:[#allocation3 + $0xc08] sm:$0xff]
    %v5230 = vld [vmem:[#allocation3 + $0xc10] sm:$0xff]
    %v5231 = vld [vmem:[#allocation3 + $0xc18] sm:$0xff]
    %v5232 = vld [vmem:[#allocation3 + $0xc20] sm:$0xff]
    %v5233 = vld [vmem:[#allocation3 + $0xc28] sm:$0xff]
    %v5234 = vld [vmem:[#allocation3 + $0xc30] sm:$0xff]
    %v5235 = vld [vmem:[#allocation3 + $0xc38] sm:$0xff]
    %v5236 = vld [vmem:[#allocation3 + $0xc40] sm:$0xff]
    %v5237 = vld [vmem:[#allocation3 + $0xc48] sm:$0xff]
    %v5238 = vld [vmem:[#allocation3 + $0xc50] sm:$0xff]
    %v5239 = vld [vmem:[#allocation3 + $0xc58] sm:$0xff]
    %v5240 = vld [vmem:[#allocation3 + $0xc60] sm:$0xff]
    %v5241 = vld [vmem:[#allocation3 + $0xc68] sm:$0xff]
    %v5242 = vld [vmem:[#allocation3 + $0xc70] sm:$0xff]
    %v5243 = vld [vmem:[#allocation3 + $0xc78] sm:$0xff]
    %v5244 = vld [vmem:[#allocation3 + $0xc80] sm:$0xff]
    %v5245 = vld [vmem:[#allocation3 + $0xc88] sm:$0xff]
    %v5246 = vld [vmem:[#allocation3 + $0xc90] sm:$0xff]
    %v5247 = vld [vmem:[#allocation3 + $0xc98] sm:$0xff]
    %v5248 = vld [vmem:[#allocation3 + $0xca0] sm:$0xff]
    %v5249 = vld [vmem:[#allocation3 + $0xca8] sm:$0xff]
    %v5250 = vld [vmem:[#allocation3 + $0xcb0] sm:$0xff]
    %v5251 = vld [vmem:[#allocation3 + $0xcb8] sm:$0xff]
    %v5252 = vld [vmem:[#allocation3 + $0xcc0] sm:$0xff]
    %v5253 = vld [vmem:[#allocation3 + $0xcc8] sm:$0xff]
    %v5254 = vld [vmem:[#allocation3 + $0xcd0] sm:$0xff]
    %v5255 = vld [vmem:[#allocation3 + $0xcd8] sm:$0xff]
    %v5256 = vld [vmem:[#allocation3 + $0xce0] sm:$0xff]
    %v5257 = vld [vmem:[#allocation3 + $0xce8] sm:$0xff]
    %v5258 = vld [vmem:[#allocation3 + $0xcf0] sm:$0xff]
    %v5259 = vld [vmem:[#allocation3 + $0xcf8] sm:$0xff]
    %v5260 = vld [vmem:[#allocation3 + $0xd00] sm:$0xff]
    %v5261 = vld [vmem:[#allocation3 + $0xd08] sm:$0xff]
    %v5262 = vld [vmem:[#allocation3 + $0xd10] sm:$0xff]
    %v5263 = vld [vmem:[#allocation3 + $0xd18] sm:$0xff]
    %v5264 = vld [vmem:[#allocation3 + $0xd20] sm:$0xff]
    %v5265 = vld [vmem:[#allocation3 + $0xd28] sm:$0xff]
    %v5266 = vld [vmem:[#allocation3 + $0xd30] sm:$0xff]
    %v5267 = vld [vmem:[#allocation3 + $0xd38] sm:$0xff]
    %v5268 = vld [vmem:[#allocation3 + $0xd40] sm:$0xff]
    %v5269 = vld [vmem:[#allocation3 + $0xd48] sm:$0xff]
    %v5270 = vld [vmem:[#allocation3 + $0xd50] sm:$0xff]
    %v5271 = vld [vmem:[#allocation3 + $0xd58] sm:$0xff]
    %v5272 = vld [vmem:[#allocation3 + $0xd60] sm:$0xff]
    %v5273 = vld [vmem:[#allocation3 + $0xd68] sm:$0xff]
    %v5274 = vld [vmem:[#allocation3 + $0xd70] sm:$0xff]
    %v5275 = vld [vmem:[#allocation3 + $0xd78] sm:$0xff]
    %v5276 = vld [vmem:[#allocation3 + $0xd80] sm:$0xff]
    %v5277 = vld [vmem:[#allocation3 + $0xd88] sm:$0xff]
    %v5278 = vld [vmem:[#allocation3 + $0xd90] sm:$0xff]
    %v5279 = vld [vmem:[#allocation3 + $0xd98] sm:$0xff]
    %v5280 = vld [vmem:[#allocation3 + $0xda0] sm:$0xff]
    %v5281 = vld [vmem:[#allocation3 + $0xda8] sm:$0xff]
    %v5282 = vld [vmem:[#allocation3 + $0xdb0] sm:$0xff]
    %v5283 = vld [vmem:[#allocation3 + $0xdb8] sm:$0xff]
    %v5284 = vld [vmem:[#allocation3 + $0xdc0] sm:$0xff]
    %v5285 = vld [vmem:[#allocation3 + $0xdc8] sm:$0xff]
    %v5286 = vld [vmem:[#allocation3 + $0xdd0] sm:$0xff]
    %v5287 = vld [vmem:[#allocation3 + $0xdd8] sm:$0xff]
    %v5288 = vld [vmem:[#allocation3 + $0xde0] sm:$0xff]
    %v5289 = vld [vmem:[#allocation3 + $0xde8] sm:$0xff]
    %v5290 = vld [vmem:[#allocation3 + $0xdf0] sm:$0xff]
    %v5291 = vld [vmem:[#allocation3 + $0xdf8] sm:$0xff]
    %v5292 = vld [vmem:[#allocation3 + $0xe00] sm:$0xff]
    %v5293 = vld [vmem:[#allocation3 + $0xe08] sm:$0xff]
    %v5294 = vld [vmem:[#allocation3 + $0xe10] sm:$0xff]
    %v5295 = vld [vmem:[#allocation3 + $0xe18] sm:$0xff]
    %v5296 = vld [vmem:[#allocation3 + $0xe20] sm:$0xff]
    %v5297 = vld [vmem:[#allocation3 + $0xe28] sm:$0xff]
    %v5298 = vld [vmem:[#allocation3 + $0xe30] sm:$0xff]
    %v5299 = vld [vmem:[#allocation3 + $0xe38] sm:$0xff]
    %v5300 = vld [vmem:[#allocation3 + $0xe40] sm:$0xff]
    %v5301 = vld [vmem:[#allocation3 + $0xe48] sm:$0xff]
    %v5302 = vld [vmem:[#allocation3 + $0xe50] sm:$0xff]
    %v5303 = vld [vmem:[#allocation3 + $0xe58] sm:$0xff]
    %v5304 = vld [vmem:[#allocation3 + $0xe60] sm:$0xff]
    %v5305 = vld [vmem:[#allocation3 + $0xe68] sm:$0xff]
    %v5306 = vld [vmem:[#allocation3 + $0xe70] sm:$0xff]
    %v5307 = vld [vmem:[#allocation3 + $0xe78] sm:$0xff]
    %v5308 = vld [vmem:[#allocation3 + $0xe80] sm:$0xff]
    %v5309 = vld [vmem:[#allocation3 + $0xe88] sm:$0xff]
    %v5310 = vld [vmem:[#allocation3 + $0xe90] sm:$0xff]
    %v5311 = vld [vmem:[#allocation3 + $0xe98] sm:$0xff]
    %v5312 = vld [vmem:[#allocation3 + $0xea0] sm:$0xff]
    %v5313 = vld [vmem:[#allocation3 + $0xea8] sm:$0xff]
    %v5314 = vld [vmem:[#allocation3 + $0xeb0] sm:$0xff]
    %v5315 = vld [vmem:[#allocation3 + $0xeb8] sm:$0xff]
    %v5316 = vld [vmem:[#allocation3 + $0xec0] sm:$0xff]
    %v5317 = vld [vmem:[#allocation3 + $0xec8] sm:$0xff]
    %v5318 = vld [vmem:[#allocation3 + $0xed0] sm:$0xff]
    %v5319 = vld [vmem:[#allocation3 + $0xed8] sm:$0xff]
    %v5320 = vld [vmem:[#allocation3 + $0xee0] sm:$0xff]
    %v5321 = vld [vmem:[#allocation3 + $0xee8] sm:$0xff]
    %v5322 = vld [vmem:[#allocation3 + $0xef0] sm:$0xff]
    %v5323 = vld [vmem:[#allocation3 + $0xef8] sm:$0xff]
    %v5324 = vld [vmem:[#allocation3 + $0xf00] sm:$0xff]
    %v5325 = vld [vmem:[#allocation3 + $0xf08] sm:$0xff]
    %v5326 = vld [vmem:[#allocation3 + $0xf10] sm:$0xff]
    %v5327 = vld [vmem:[#allocation3 + $0xf18] sm:$0xff]
    %v5328 = vld [vmem:[#allocation3 + $0xf20] sm:$0xff]
    %v5329 = vld [vmem:[#allocation3 + $0xf28] sm:$0xff]
    %v5330 = vld [vmem:[#allocation3 + $0xf30] sm:$0xff]
    %v5331 = vld [vmem:[#allocation3 + $0xf38] sm:$0xff]
    %v5332 = vld [vmem:[#allocation3 + $0xf40] sm:$0xff]
    %v5333 = vld [vmem:[#allocation3 + $0xf48] sm:$0xff]
    %v5334 = vld [vmem:[#allocation3 + $0xf50] sm:$0xff]
    %v5335 = vld [vmem:[#allocation3 + $0xf58] sm:$0xff]
    %v5336 = vld [vmem:[#allocation3 + $0xf60] sm:$0xff]
    %v5337 = vld [vmem:[#allocation3 + $0xf68] sm:$0xff]
    %v5338 = vld [vmem:[#allocation3 + $0xf70] sm:$0xff]
    %v5339 = vld [vmem:[#allocation3 + $0xf78] sm:$0xff]
    %v5340 = vld [vmem:[#allocation3 + $0xf80] sm:$0xff]
    %v5341 = vld [vmem:[#allocation3 + $0xf88] sm:$0xff]
    %v5342 = vld [vmem:[#allocation3 + $0xf90] sm:$0xff]
    %v5343 = vld [vmem:[#allocation3 + $0xf98] sm:$0xff]
    %v5344 = vld [vmem:[#allocation3 + $0xfa0] sm:$0xff]
    %v5345 = vld [vmem:[#allocation3 + $0xfa8] sm:$0xff]
    %v5346 = vld [vmem:[#allocation3 + $0xfb0] sm:$0xff]
    %v5347 = vld [vmem:[#allocation3 + $0xfb8] sm:$0xff]
    %v5348 = vld [vmem:[#allocation3 + $0xfc0] sm:$0xff]
    %v5349 = vld [vmem:[#allocation3 + $0xfc8] sm:$0xff]
    %v5350 = vld [vmem:[#allocation3 + $0xfd0] sm:$0xff]
    %v5351 = vld [vmem:[#allocation3 + $0xfd8] sm:$0xff]
    %v5352 = vld [vmem:[#allocation3 + $0xfe0] sm:$0xff]
    %v5353 = vld [vmem:[#allocation3 + $0xfe8] sm:$0xff]
    %v5354 = vld [vmem:[#allocation3 + $0xff0] sm:$0xff]
    %v5355 = vld [vmem:[#allocation3 + $0xff8] sm:$0xff]
    %v5356 = vld [vmem:[#allocation11] sm:$0xff]
    %v5358 = vlaneseq
    %v5359 = vshrl.u32 %v5358, 7
    %v5360 = vsub.s32 0, %v5359
    %v5361 = vrot.slane %v5356, %v5360
    %v5362 = vlaneseq
    %v5363 = vshrl.u32 %v5362, 7
    %v5364 = vsub.s32 1, %v5363
    %v5365 = vrot.slane %v5356, %v5364
    %v5366 = vlaneseq
    %v5367 = vshrl.u32 %v5366, 7
    %v5368 = vsub.s32 2, %v5367
    %v5369 = vrot.slane %v5356, %v5368
    %v5370 = vlaneseq
    %v5371 = vshrl.u32 %v5370, 7
    %v5372 = vsub.s32 3, %v5371
    %v5373 = vrot.slane %v5356, %v5372
    %v5374 = vlaneseq
    %v5375 = vshrl.u32 %v5374, 7
    %v5376 = vsub.s32 4, %v5375
    %v5377 = vrot.slane %v5356, %v5376
    %v5378 = vlaneseq
    %v5379 = vshrl.u32 %v5378, 7
    %v5380 = vsub.s32 5, %v5379
    %v5381 = vrot.slane %v5356, %v5380
    %v5382 = vlaneseq
    %v5383 = vshrl.u32 %v5382, 7
    %v5384 = vsub.s32 6, %v5383
    %v5385 = vrot.slane %v5356, %v5384
    %v5386 = vlaneseq
    %v5387 = vshrl.u32 %v5386, 7
    %v5388 = vsub.s32 7, %v5387
    %v5389 = vrot.slane %v5356, %v5388
    %v5398 = vcombine.high %v4839, %v4839
    %v5400 = vunpack.c.l.s4 1966171168
    %v5401 = vunpack.c.0.s8 %v5400
    %v5402 = vlaneseq
    %v5403 = vshrl.u32 %v5402, 7
    %v5404 = vsub.s32 %v5401, %v5403
    %v5405 = vrot.slane %v4839, %v5404
    %v5407 = vunpack.c.l.s4 1966171168
    %v5408 = vunpack.c.0.s8 %v5407
    %v5409 = vlaneseq
    %v5410 = vshrl.u32 %v5409, 7
    %v5411 = vsub.s32 %v5408, %v5410
    %v5412 = vrot.slane %v5398, %v5411
    %v5413 = vcombine.high %v5405, %v5405
    %v5414 = vcombine.high %v5412, %v5412
    %v5416 = vunpack.c.l.s4 1966171168
    %v5417 = vunpack.c.0.s8 %v5416
    %v5418 = vlaneseq
    %v5419 = vshrl.u32 %v5418, 7
    %v5420 = vsub.s32 %v5417, %v5419
    %v5421 = vrot.slane %v5405, %v5420
    %v5423 = vunpack.c.l.s4 1966171168
    %v5424 = vunpack.c.0.s8 %v5423
    %v5425 = vlaneseq
    %v5426 = vshrl.u32 %v5425, 7
    %v5427 = vsub.s32 %v5424, %v5426
    %v5428 = vrot.slane %v5412, %v5427
    %v5430 = vunpack.c.l.s4 1966171168
    %v5431 = vunpack.c.0.s8 %v5430
    %v5432 = vlaneseq
    %v5433 = vshrl.u32 %v5432, 7
    %v5434 = vsub.s32 %v5431, %v5433
    %v5435 = vrot.slane %v5413, %v5434
    %v5437 = vunpack.c.l.s4 1966171168
    %v5438 = vunpack.c.0.s8 %v5437
    %v5439 = vlaneseq
    %v5440 = vshrl.u32 %v5439, 7
    %v5441 = vsub.s32 %v5438, %v5440
    %v5442 = vrot.slane %v5414, %v5441
    %v5443 = vcombine.high %v5421, %v5421
    %v5444 = vcombine.high %v5428, %v5428
    %v5445 = vcombine.high %v5435, %v5435
    %v5446 = vcombine.high %v5442, %v5442
    %5455 = vmatprep.subr.bf16.mxu0 %v4845
    %5456 = vmatpush1.bf16.msra.mxu0 %v4844
    %5457 = vmatprep.subr.bf16.mxu0 %v4853
    %5458 = vmatpush1.bf16.msra.mxu0 %v4852
    %5459 = vmatprep.subr.bf16.mxu0 %v4861
    %5460 = vmatpush1.bf16.msra.mxu0 %v4860
    %5461 = vmatprep.subr.bf16.mxu0 %v4869
    %5462 = vmatpush1.bf16.msra.mxu0 %v4868
    %5463 = vmatprep.subr.bf16.mxu0 %v4877
    %5464 = vmatpush1.bf16.msra.mxu0 %v4876
    %5465 = vmatprep.subr.bf16.mxu0 %v4885
    %5466 = vmatpush1.bf16.msra.mxu0 %v4884
    %5467 = vmatprep.subr.bf16.mxu0 %v4893
    %5468 = vmatpush1.bf16.msra.mxu0 %v4892
    %5469 = vmatprep.subr.bf16.mxu0 %v4901
    %5470 = vmatpush1.bf16.msra.mxu0 %v4900
    %5471 = vmatprep.subr.bf16.mxu0 %v4909
    %5472 = vmatpush1.bf16.msra.mxu0 %v4908
    %5473 = vmatprep.subr.bf16.mxu0 %v4917
    %5474 = vmatpush1.bf16.msra.mxu0 %v4916
    %5475 = vmatprep.subr.bf16.mxu0 %v4925
    %5476 = vmatpush1.bf16.msra.mxu0 %v4924
    %5477 = vmatprep.subr.bf16.mxu0 %v4933
    %5478 = vmatpush1.bf16.msra.mxu0 %v4932
    %5479 = vmatprep.subr.bf16.mxu0 %v4941
    %5480 = vmatpush1.bf16.msra.mxu0 %v4940
    %5481 = vmatprep.subr.bf16.mxu0 %v4949
    %5482 = vmatpush1.bf16.msra.mxu0 %v4948
    %5483 = vmatprep.subr.bf16.mxu0 %v4957
    %5484 = vmatpush1.bf16.msra.mxu0 %v4956
    %5485 = vmatprep.subr.bf16.mxu0 %v4965
    %5486 = vmatpush1.bf16.msra.mxu0 %v4964
    %5487 = vmatprep.mubr.bf16.mxu0 %v5435
    %5488 = vmatmul.mubr.bf16.gmra.mrb[0].mxu0 %v5421
    %v5489 = vpop.f32.mrb[0].mxu0
    %v5490 = vadd.f32 %v5361, %v5489
    %v5491 = vpop.f32.mrb[0].mxu0
    %v5492 = vadd.f32 %v5365, %v5491
    %v5493 = vpop.f32.mrb[0].mxu0
    %v5494 = vpop.f32.mrb[0].mxu0
    %5495 = vdwg.mxu0
    %5496 = vmatprep.subr.bf16.mxu0 %v4973
    %5497 = vmatpush1.bf16.msra.mxu0 %v4972
    %5498 = vmatprep.subr.bf16.mxu0 %v4981
    %5499 = vmatpush1.bf16.msra.mxu0 %v4980
    %5500 = vmatprep.subr.bf16.mxu0 %v4989
    %5501 = vmatpush1.bf16.msra.mxu0 %v4988
    %5502 = vmatprep.subr.bf16.mxu0 %v4997
    %5503 = vmatpush1.bf16.msra.mxu0 %v4996
    %5504 = vmatprep.subr.bf16.mxu0 %v5005
    %5505 = vmatpush1.bf16.msra.mxu0 %v5004
    %5506 = vmatprep.subr.bf16.mxu0 %v5013
    %5507 = vmatpush1.bf16.msra.mxu0 %v5012
    %5508 = vmatprep.subr.bf16.mxu0 %v5021
    %5509 = vmatpush1.bf16.msra.mxu0 %v5020
    %5510 = vmatprep.subr.bf16.mxu0 %v5029
    %5511 = vmatpush1.bf16.msra.mxu0 %v5028
    %5512 = vmatprep.subr.bf16.mxu0 %v5037
    %5513 = vmatpush1.bf16.msra.mxu0 %v5036
    %5514 = vmatprep.subr.bf16.mxu0 %v5045
    %5515 = vmatpush1.bf16.msra.mxu0 %v5044
    %5516 = vmatprep.subr.bf16.mxu0 %v5053
    %5517 = vmatpush1.bf16.msra.mxu0 %v5052
    %5518 = vmatprep.subr.bf16.mxu0 %v5061
    %5519 = vmatpush1.bf16.msra.mxu0 %v5060
    %5520 = vmatprep.subr.bf16.mxu0 %v5069
    %5521 = vmatpush1.bf16.msra.mxu0 %v5068
    %5522 = vmatprep.subr.bf16.mxu0 %v5077
    %5523 = vmatpush1.bf16.msra.mxu0 %v5076
    %5524 = vmatprep.subr.bf16.mxu0 %v5085
    %5525 = vmatpush1.bf16.msra.mxu0 %v5084
    %5526 = vmatprep.subr.bf16.mxu0 %v5093
    %5527 = vmatpush1.bf16.msra.mxu0 %v5092
    %5528 = vmatprep.mubr.bf16.mxu0 %v5445
    %5529 = vmatmul.mubr.bf16.gmra.mrb[0].mxu0 %v5443
    %v5530 = vpop.f32.mrb[0].mxu0
    %v5531 = vadd.f32 %v5490, %v5530
    %v5532 = vpop.f32.mrb[0].mxu0
    %v5533 = vadd.f32 %v5492, %v5532
    %v5534 = vpop.f32.mrb[0].mxu0
    %v5535 = vpop.f32.mrb[0].mxu0
    %5536 = vdwg.mxu0
    %5537 = vmatprep.subr.bf16.mxu0 %v5101
    %5538 = vmatpush1.bf16.msra.mxu0 %v5100
    %5539 = vmatprep.subr.bf16.mxu0 %v5109
    %5540 = vmatpush1.bf16.msra.mxu0 %v5108
    %5541 = vmatprep.subr.bf16.mxu0 %v5117
    %5542 = vmatpush1.bf16.msra.mxu0 %v5116
    %5543 = vmatprep.subr.bf16.mxu0 %v5125
    %5544 = vmatpush1.bf16.msra.mxu0 %v5124
    %5545 = vmatprep.subr.bf16.mxu0 %v5133
    %5546 = vmatpush1.bf16.msra.mxu0 %v5132
    %5547 = vmatprep.subr.bf16.mxu0 %v5141
    %5548 = vmatpush1.bf16.msra.mxu0 %v5140
    %5549 = vmatprep.subr.bf16.mxu0 %v5149
    %5550 = vmatpush1.bf16.msra.mxu0 %v5148
    %5551 = vmatprep.subr.bf16.mxu0 %v5157
    %5552 = vmatpush1.bf16.msra.mxu0 %v5156
    %5553 = vmatprep.subr.bf16.mxu0 %v5165
    %5554 = vmatpush1.bf16.msra.mxu0 %v5164
    %5555 = vmatprep.subr.bf16.mxu0 %v5173
    %5556 = vmatpush1.bf16.msra.mxu0 %v5172
    %5557 = vmatprep.subr.bf16.mxu0 %v5181
    %5558 = vmatpush1.bf16.msra.mxu0 %v5180
    %5559 = vmatprep.subr.bf16.mxu0 %v5189
    %5560 = vmatpush1.bf16.msra.mxu0 %v5188
    %5561 = vmatprep.subr.bf16.mxu0 %v5197
    %5562 = vmatpush1.bf16.msra.mxu0 %v5196
    %5563 = vmatprep.subr.bf16.mxu0 %v5205
    %5564 = vmatpush1.bf16.msra.mxu0 %v5204
    %5565 = vmatprep.subr.bf16.mxu0 %v5213
    %5566 = vmatpush1.bf16.msra.mxu0 %v5212
    %5567 = vmatprep.subr.bf16.mxu0 %v5221
    %5568 = vmatpush1.bf16.msra.mxu0 %v5220
    %5569 = vmatprep.mubr.bf16.mxu0 %v5442
    %5570 = vmatmul.mubr.bf16.gmra.mrb[0].mxu0 %v5428
    %v5571 = vpop.f32.mrb[0].mxu0
    %v5572 = vadd.f32 %v5531, %v5571
    %v5573 = vpop.f32.mrb[0].mxu0
    %v5574 = vadd.f32 %v5533, %v5573
    %v5575 = vpop.f32.mrb[0].mxu0
    %v5576 = vpop.f32.mrb[0].mxu0
    %5577 = vdwg.mxu0
    %5578 = vmatprep.subr.bf16.mxu0 %v5229
    %5579 = vmatpush1.bf16.msra.mxu0 %v5228
    %5580 = vmatprep.subr.bf16.mxu0 %v5237
    %5581 = vmatpush1.bf16.msra.mxu0 %v5236
    %5582 = vmatprep.subr.bf16.mxu0 %v5245
    %5583 = vmatpush1.bf16.msra.mxu0 %v5244
    %5584 = vmatprep.subr.bf16.mxu0 %v5253
    %5585 = vmatpush1.bf16.msra.mxu0 %v5252
    %5586 = vmatprep.subr.bf16.mxu0 %v5261
    %5587 = vmatpush1.bf16.msra.mxu0 %v5260
    %5588 = vmatprep.subr.bf16.mxu0 %v5269
    %5589 = vmatpush1.bf16.msra.mxu0 %v5268
    %5590 = vmatprep.subr.bf16.mxu0 %v5277
    %5591 = vmatpush1.bf16.msra.mxu0 %v5276
    %5592 = vmatprep.subr.bf16.mxu0 %v5285
    %5593 = vmatpush1.bf16.msra.mxu0 %v5284
    %5594 = vmatprep.subr.bf16.mxu0 %v5293
    %5595 = vmatpush1.bf16.msra.mxu0 %v5292
    %5596 = vmatprep.subr.bf16.mxu0 %v5301
    %5597 = vmatpush1.bf16.msra.mxu0 %v5300
    %5598 = vmatprep.subr.bf16.mxu0 %v5309
    %5599 = vmatpush1.bf16.msra.mxu0 %v5308
    %5600 = vmatprep.subr.bf16.mxu0 %v5317
    %5601 = vmatpush1.bf16.msra.mxu0 %v5316
    %5602 = vmatprep.subr.bf16.mxu0 %v5325
    %5603 = vmatpush1.bf16.msra.mxu0 %v5324
    %5604 = vmatprep.subr.bf16.mxu0 %v5333
    %5605 = vmatpush1.bf16.msra.mxu0 %v5332
    %5606 = vmatprep.subr.bf16.mxu0 %v5341
    %5607 = vmatpush1.bf16.msra.mxu0 %v5340
    %5608 = vmatprep.subr.bf16.mxu0 %v5349
    %5609 = vmatpush1.bf16.msra.mxu0 %v5348
    %5610 = vmatprep.mubr.bf16.mxu0 %v5446
    %5611 = vmatmul.mubr.bf16.gmra.mrb[0].mxu0 %v5444
    %v5612 = vpop.f32.mrb[0].mxu0
    %v5613 = vadd.f32 %v5572, %v5612
    %v5614 = vpop.f32.mrb[0].mxu0
    %v5615 = vadd.f32 %v5574, %v5614
    %v5616 = vpop.f32.mrb[0].mxu0
    %v5617 = vpop.f32.mrb[0].mxu0
    %5618 = vdwg.mxu0
    %5619 = vmatprep.subr.bf16.mxu0 %v4847
    %5620 = vmatpush1.bf16.msra.mxu0 %v4846
    %5621 = vmatprep.subr.bf16.mxu0 %v4855
    %5622 = vmatpush1.bf16.msra.mxu0 %v4854
    %5623 = vmatprep.subr.bf16.mxu0 %v4863
    %5624 = vmatpush1.bf16.msra.mxu0 %v4862
    %5625 = vmatprep.subr.bf16.mxu0 %v4871
    %5626 = vmatpush1.bf16.msra.mxu0 %v4870
    %5627 = vmatprep.subr.bf16.mxu0 %v4879
    %5628 = vmatpush1.bf16.msra.mxu0 %v4878
    %5629 = vmatprep.subr.bf16.mxu0 %v4887
    %5630 = vmatpush1.bf16.msra.mxu0 %v4886
    %5631 = vmatprep.subr.bf16.mxu0 %v4895
    %5632 = vmatpush1.bf16.msra.mxu0 %v4894
    %5633 = vmatprep.subr.bf16.mxu0 %v4903
    %5634 = vmatpush1.bf16.msra.mxu0 %v4902
    %5635 = vmatprep.subr.bf16.mxu0 %v4911
    %5636 = vmatpush1.bf16.msra.mxu0 %v4910
    %5637 = vmatprep.subr.bf16.mxu0 %v4919
    %5638 = vmatpush1.bf16.msra.mxu0 %v4918
    %5639 = vmatprep.subr.bf16.mxu0 %v4927
    %5640 = vmatpush1.bf16.msra.mxu0 %v4926
    %5641 = vmatprep.subr.bf16.mxu0 %v4935
    %5642 = vmatpush1.bf16.msra.mxu0 %v4934
    %5643 = vmatprep.subr.bf16.mxu0 %v4943
    %5644 = vmatpush1.bf16.msra.mxu0 %v4942
    %5645 = vmatprep.subr.bf16.mxu0 %v4951
    %5646 = vmatpush1.bf16.msra.mxu0 %v4950
    %5647 = vmatprep.subr.bf16.mxu0 %v4959
    %5648 = vmatpush1.bf16.msra.mxu0 %v4958
    %5649 = vmatprep.subr.bf16.mxu0 %v4967
    %5650 = vmatpush1.bf16.msra.mxu0 %v4966
    %5651 = vmatprep.mubr.bf16.mxu0 %v5435
    %5652 = vmatmul.mubr.bf16.gmra.mrb[0].mxu0 %v5421
    %v5653 = vpop.f32.mrb[0].mxu0
    %v5654 = vadd.f32 %v5369, %v5653
    %v5655 = vpop.f32.mrb[0].mxu0
    %v5656 = vadd.f32 %v5373, %v5655
    %v5657 = vpop.f32.mrb[0].mxu0
    %v5658 = vpop.f32.mrb[0].mxu0
    %5659 = vdwg.mxu0
    %5660 = vmatprep.subr.bf16.mxu0 %v4975
    %5661 = vmatpush1.bf16.msra.mxu0 %v4974
    %5662 = vmatprep.subr.bf16.mxu0 %v4983
    %5663 = vmatpush1.bf16.msra.mxu0 %v4982
    %5664 = vmatprep.subr.bf16.mxu0 %v4991
    %5665 = vmatpush1.bf16.msra.mxu0 %v4990
    %5666 = vmatprep.subr.bf16.mxu0 %v4999
    %5667 = vmatpush1.bf16.msra.mxu0 %v4998
    %5668 = vmatprep.subr.bf16.mxu0 %v5007
    %5669 = vmatpush1.bf16.msra.mxu0 %v5006
    %5670 = vmatprep.subr.bf16.mxu0 %v5015
    %5671 = vmatpush1.bf16.msra.mxu0 %v5014
    %5672 = vmatprep.subr.bf16.mxu0 %v5023
    %5673 = vmatpush1.bf16.msra.mxu0 %v5022
    %5674 = vmatprep.subr.bf16.mxu0 %v5031
    %5675 = vmatpush1.bf16.msra.mxu0 %v5030
    %5676 = vmatprep.subr.bf16.mxu0 %v5039
    %5677 = vmatpush1.bf16.msra.mxu0 %v5038
    %5678 = vmatprep.subr.bf16.mxu0 %v5047
    %5679 = vmatpush1.bf16.msra.mxu0 %v5046
    %5680 = vmatprep.subr.bf16.mxu0 %v5055
    %5681 = vmatpush1.bf16.msra.mxu0 %v5054
    %5682 = vmatprep.subr.bf16.mxu0 %v5063
    %5683 = vmatpush1.bf16.msra.mxu0 %v5062
    %5684 = vmatprep.subr.bf16.mxu0 %v5071
    %5685 = vmatpush1.bf16.msra.mxu0 %v5070
    %5686 = vmatprep.subr.bf16.mxu0 %v5079
    %5687 = vmatpush1.bf16.msra.mxu0 %v5078
    %5688 = vmatprep.subr.bf16.mxu0 %v5087
    %5689 = vmatpush1.bf16.msra.mxu0 %v5086
    %5690 = vmatprep.subr.bf16.mxu0 %v5095
    %5691 = vmatpush1.bf16.msra.mxu0 %v5094
    %5692 = vmatprep.mubr.bf16.mxu0 %v5445
    %5693 = vmatmul.mubr.bf16.gmra.mrb[0].mxu0 %v5443
    %v5694 = vpop.f32.mrb[0].mxu0
    %v5695 = vadd.f32 %v5654, %v5694
    %v5696 = vpop.f32.mrb[0].mxu0
    %v5697 = vadd.f32 %v5656, %v5696
    %v5698 = vpop.f32.mrb[0].mxu0
    %v5699 = vpop.f32.mrb[0].mxu0
    %5700 = vdwg.mxu0
    %5701 = vmatprep.subr.bf16.mxu0 %v5103
    %5702 = vmatpush1.bf16.msra.mxu0 %v5102
    %5703 = vmatprep.subr.bf16.mxu0 %v5111
    %5704 = vmatpush1.bf16.msra.mxu0 %v5110
    %5705 = vmatprep.subr.bf16.mxu0 %v5119
    %5706 = vmatpush1.bf16.msra.mxu0 %v5118
    %5707 = vmatprep.subr.bf16.mxu0 %v5127
    %5708 = vmatpush1.bf16.msra.mxu0 %v5126
    %5709 = vmatprep.subr.bf16.mxu0 %v5135
    %5710 = vmatpush1.bf16.msra.mxu0 %v5134
    %5711 = vmatprep.subr.bf16.mxu0 %v5143
    %5712 = vmatpush1.bf16.msra.mxu0 %v5142
    %5713 = vmatprep.subr.bf16.mxu0 %v5151
    %5714 = vmatpush1.bf16.msra.mxu0 %v5150
    %5715 = vmatprep.subr.bf16.mxu0 %v5159
    %5716 = vmatpush1.bf16.msra.mxu0 %v5158
    %5717 = vmatprep.subr.bf16.mxu0 %v5167
    %5718 = vmatpush1.bf16.msra.mxu0 %v5166
    %5719 = vmatprep.subr.bf16.mxu0 %v5175
    %5720 = vmatpush1.bf16.msra.mxu0 %v5174
    %5721 = vmatprep.subr.bf16.mxu0 %v5183
    %5722 = vmatpush1.bf16.msra.mxu0 %v5182
    %5723 = vmatprep.subr.bf16.mxu0 %v5191
    %5724 = vmatpush1.bf16.msra.mxu0 %v5190
    %5725 = vmatprep.subr.bf16.mxu0 %v5199
    %5726 = vmatpush1.bf16.msra.mxu0 %v5198
    %5727 = vmatprep.subr.bf16.mxu0 %v5207
    %5728 = vmatpush1.bf16.msra.mxu0 %v5206
    %5729 = vmatprep.subr.bf16.mxu0 %v5215
    %5730 = vmatpush1.bf16.msra.mxu0 %v5214
    %5731 = vmatprep.subr.bf16.mxu0 %v5223
    %5732 = vmatpush1.bf16.msra.mxu0 %v5222
    %5733 = vmatprep.mubr.bf16.mxu0 %v5442
    %5734 = vmatmul.mubr.bf16.gmra.mrb[0].mxu0 %v5428
    %v5735 = vpop.f32.mrb[0].mxu0
    %v5736 = vadd.f32 %v5695, %v5735
    %v5737 = vpop.f32.mrb[0].mxu0
    %v5738 = vadd.f32 %v5697, %v5737
    %v5739 = vpop.f32.mrb[0].mxu0
    %v5740 = vpop.f32.mrb[0].mxu0
    %5741 = vdwg.mxu0
    %5742 = vmatprep.subr.bf16.mxu0 %v5231
    %5743 = vmatpush1.bf16.msra.mxu0 %v5230
    %5744 = vmatprep.subr.bf16.mxu0 %v5239
    %5745 = vmatpush1.bf16.msra.mxu0 %v5238
    %5746 = vmatprep.subr.bf16.mxu0 %v5247
    %5747 = vmatpush1.bf16.msra.mxu0 %v5246
    %5748 = vmatprep.subr.bf16.mxu0 %v5255
    %5749 = vmatpush1.bf16.msra.mxu0 %v5254
    %5750 = vmatprep.subr.bf16.mxu0 %v5263
    %5751 = vmatpush1.bf16.msra.mxu0 %v5262
    %5752 = vmatprep.subr.bf16.mxu0 %v5271
    %5753 = vmatpush1.bf16.msra.mxu0 %v5270
    %5754 = vmatprep.subr.bf16.mxu0 %v5279
    %5755 = vmatpush1.bf16.msra.mxu0 %v5278
    %5756 = vmatprep.subr.bf16.mxu0 %v5287
    %5757 = vmatpush1.bf16.msra.mxu0 %v5286
    %5758 = vmatprep.subr.bf16.mxu0 %v5295
    %5759 = vmatpush1.bf16.msra.mxu0 %v5294
    %5760 = vmatprep.subr.bf16.mxu0 %v5303
    %5761 = vmatpush1.bf16.msra.mxu0 %v5302
    %5762 = vmatprep.subr.bf16.mxu0 %v5311
    %5763 = vmatpush1.bf16.msra.mxu0 %v5310
    %5764 = vmatprep.subr.bf16.mxu0 %v5319
    %5765 = vmatpush1.bf16.msra.mxu0 %v5318
    %5766 = vmatprep.subr.bf16.mxu0 %v5327
    %5767 = vmatpush1.bf16.msra.mxu0 %v5326
    %5768 = vmatprep.subr.bf16.mxu0 %v5335
    %5769 = vmatpush1.bf16.msra.mxu0 %v5334
    %5770 = vmatprep.subr.bf16.mxu0 %v5343
    %5771 = vmatpush1.bf16.msra.mxu0 %v5342
    %5772 = vmatprep.subr.bf16.mxu0 %v5351
    %5773 = vmatpush1.bf16.msra.mxu0 %v5350
    %5774 = vmatprep.mubr.bf16.mxu0 %v5446
    %5775 = vmatmul.mubr.bf16.gmra.mrb[0].mxu0 %v5444
    %v5776 = vpop.f32.mrb[0].mxu0
    %v5777 = vadd.f32 %v5736, %v5776
    %v5778 = vpop.f32.mrb[0].mxu0
    %v5779 = vadd.f32 %v5738, %v5778
    %v5780 = vpop.f32.mrb[0].mxu0
    %v5781 = vpop.f32.mrb[0].mxu0
    %5782 = vdwg.mxu0
    %5783 = vmatprep.subr.bf16.mxu0 %v4849
    %5784 = vmatpush1.bf16.msra.mxu0 %v4848
    %5785 = vmatprep.subr.bf16.mxu0 %v4857
    %5786 = vmatpush1.bf16.msra.mxu0 %v4856
    %5787 = vmatprep.subr.bf16.mxu0 %v4865
    %5788 = vmatpush1.bf16.msra.mxu0 %v4864
    %5789 = vmatprep.subr.bf16.mxu0 %v4873
    %5790 = vmatpush1.bf16.msra.mxu0 %v4872
    %5791 = vmatprep.subr.bf16.mxu0 %v4881
    %5792 = vmatpush1.bf16.msra.mxu0 %v4880
    %5793 = vmatprep.subr.bf16.mxu0 %v4889
    %5794 = vmatpush1.bf16.msra.mxu0 %v4888
    %5795 = vmatprep.subr.bf16.mxu0 %v4897
    %5796 = vmatpush1.bf16.msra.mxu0 %v4896
    %5797 = vmatprep.subr.bf16.mxu0 %v4905
    %5798 = vmatpush1.bf16.msra.mxu0 %v4904
    %5799 = vmatprep.subr.bf16.mxu0 %v4913
    %5800 = vmatpush1.bf16.msra.mxu0 %v4912
    %5801 = vmatprep.subr.bf16.mxu0 %v4921
    %5802 = vmatpush1.bf16.msra.mxu0 %v4920
    %5803 = vmatprep.subr.bf16.mxu0 %v4929
    %5804 = vmatpush1.bf16.msra.mxu0 %v4928
    %5805 = vmatprep.subr.bf16.mxu0 %v4937
    %5806 = vmatpush1.bf16.msra.mxu0 %v4936
    %5807 = vmatprep.subr.bf16.mxu0 %v4945
    %5808 = vmatpush1.bf16.msra.mxu0 %v4944
    %5809 = vmatprep.subr.bf16.mxu0 %v4953
    %5810 = vmatpush1.bf16.msra.mxu0 %v4952
    %5811 = vmatprep.subr.bf16.mxu0 %v4961
    %5812 = vmatpush1.bf16.msra.mxu0 %v4960
    %5813 = vmatprep.subr.bf16.mxu0 %v4969
    %5814 = vmatpush1.bf16.msra.mxu0 %v4968
    %5815 = vmatprep.mubr.bf16.mxu0 %v5435
    %5816 = vmatmul.mubr.bf16.gmra.mrb[0].mxu0 %v5421
    %v5817 = vpop.f32.mrb[0].mxu0
    %v5818 = vadd.f32 %v5377, %v5817
    %v5819 = vpop.f32.mrb[0].mxu0
    %v5820 = vadd.f32 %v5381, %v5819
    %v5821 = vpop.f32.mrb[0].mxu0
    %v5822 = vpop.f32.mrb[0].mxu0
    %5823 = vdwg.mxu0
    %5824 = vmatprep.subr.bf16.mxu0 %v4977
    %5825 = vmatpush1.bf16.msra.mxu0 %v4976
    %5826 = vmatprep.subr.bf16.mxu0 %v4985
    %5827 = vmatpush1.bf16.msra.mxu0 %v4984
    %5828 = vmatprep.subr.bf16.mxu0 %v4993
    %5829 = vmatpush1.bf16.msra.mxu0 %v4992
    %5830 = vmatprep.subr.bf16.mxu0 %v5001
    %5831 = vmatpush1.bf16.msra.mxu0 %v5000
    %5832 = vmatprep.subr.bf16.mxu0 %v5009
    %5833 = vmatpush1.bf16.msra.mxu0 %v5008
    %5834 = vmatprep.subr.bf16.mxu0 %v5017
    %5835 = vmatpush1.bf16.msra.mxu0 %v5016
    %5836 = vmatprep.subr.bf16.mxu0 %v5025
    %5837 = vmatpush1.bf16.msra.mxu0 %v5024
    %5838 = vmatprep.subr.bf16.mxu0 %v5033
    %5839 = vmatpush1.bf16.msra.mxu0 %v5032
    %5840 = vmatprep.subr.bf16.mxu0 %v5041
    %5841 = vmatpush1.bf16.msra.mxu0 %v5040
    %5842 = vmatprep.subr.bf16.mxu0 %v5049
    %5843 = vmatpush1.bf16.msra.mxu0 %v5048
    %5844 = vmatprep.subr.bf16.mxu0 %v5057
    %5845 = vmatpush1.bf16.msra.mxu0 %v5056
    %5846 = vmatprep.subr.bf16.mxu0 %v5065
    %5847 = vmatpush1.bf16.msra.mxu0 %v5064
    %5848 = vmatprep.subr.bf16.mxu0 %v5073
    %5849 = vmatpush1.bf16.msra.mxu0 %v5072
    %5850 = vmatprep.subr.bf16.mxu0 %v5081
    %5851 = vmatpush1.bf16.msra.mxu0 %v5080
    %5852 = vmatprep.subr.bf16.mxu0 %v5089
    %5853 = vmatpush1.bf16.msra.mxu0 %v5088
    %5854 = vmatprep.subr.bf16.mxu0 %v5097
    %5855 = vmatpush1.bf16.msra.mxu0 %v5096
    %5856 = vmatprep.mubr.bf16.mxu0 %v5445
    %5857 = vmatmul.mubr.bf16.gmra.mrb[0].mxu0 %v5443
    %v5858 = vpop.f32.mrb[0].mxu0
    %v5859 = vadd.f32 %v5818, %v5858
    %v5860 = vpop.f32.mrb[0].mxu0
    %v5861 = vadd.f32 %v5820, %v5860
    %v5862 = vpop.f32.mrb[0].mxu0
    %v5863 = vpop.f32.mrb[0].mxu0
    %5864 = vdwg.mxu0
    %5865 = vmatprep.subr.bf16.mxu0 %v5105
    %5866 = vmatpush1.bf16.msra.mxu0 %v5104
    %5867 = vmatprep.subr.bf16.mxu0 %v5113
    %5868 = vmatpush1.bf16.msra.mxu0 %v5112
    %5869 = vmatprep.subr.bf16.mxu0 %v5121
    %5870 = vmatpush1.bf16.msra.mxu0 %v5120
    %5871 = vmatprep.subr.bf16.mxu0 %v5129
    %5872 = vmatpush1.bf16.msra.mxu0 %v5128
    %5873 = vmatprep.subr.bf16.mxu0 %v5137
    %5874 = vmatpush1.bf16.msra.mxu0 %v5136
    %5875 = vmatprep.subr.bf16.mxu0 %v5145
    %5876 = vmatpush1.bf16.msra.mxu0 %v5144
    %5877 = vmatprep.subr.bf16.mxu0 %v5153
    %5878 = vmatpush1.bf16.msra.mxu0 %v5152
    %5879 = vmatprep.subr.bf16.mxu0 %v5161
    %5880 = vmatpush1.bf16.msra.mxu0 %v5160
    %5881 = vmatprep.subr.bf16.mxu0 %v5169
    %5882 = vmatpush1.bf16.msra.mxu0 %v5168
    %5883 = vmatprep.subr.bf16.mxu0 %v5177
    %5884 = vmatpush1.bf16.msra.mxu0 %v5176
    %5885 = vmatprep.subr.bf16.mxu0 %v5185
    %5886 = vmatpush1.bf16.msra.mxu0 %v5184
    %5887 = vmatprep.subr.bf16.mxu0 %v5193
    %5888 = vmatpush1.bf16.msra.mxu0 %v5192
    %5889 = vmatprep.subr.bf16.mxu0 %v5201
    %5890 = vmatpush1.bf16.msra.mxu0 %v5200
    %5891 = vmatprep.subr.bf16.mxu0 %v5209
    %5892 = vmatpush1.bf16.msra.mxu0 %v5208
    %5893 = vmatprep.subr.bf16.mxu0 %v5217
    %5894 = vmatpush1.bf16.msra.mxu0 %v5216
    %5895 = vmatprep.subr.bf16.mxu0 %v5225
    %5896 = vmatpush1.bf16.msra.mxu0 %v5224
    %5897 = vmatprep.mubr.bf16.mxu0 %v5442
    %5898 = vmatmul.mubr.bf16.gmra.mrb[0].mxu0 %v5428
    %v5899 = vpop.f32.mrb[0].mxu0
    %v5900 = vadd.f32 %v5859, %v5899
    %v5901 = vpop.f32.mrb[0].mxu0
    %v5902 = vadd.f32 %v5861, %v5901
    %v5903 = vpop.f32.mrb[0].mxu0
    %v5904 = vpop.f32.mrb[0].mxu0
    %5905 = vdwg.mxu0
    %5906 = vmatprep.subr.bf16.mxu0 %v5233
    %5907 = vmatpush1.bf16.msra.mxu0 %v5232
    %5908 = vmatprep.subr.bf16.mxu0 %v5241
    %5909 = vmatpush1.bf16.msra.mxu0 %v5240
    %5910 = vmatprep.subr.bf16.mxu0 %v5249
    %5911 = vmatpush1.bf16.msra.mxu0 %v5248
    %5912 = vmatprep.subr.bf16.mxu0 %v5257
    %5913 = vmatpush1.bf16.msra.mxu0 %v5256
    %5914 = vmatprep.subr.bf16.mxu0 %v5265
    %5915 = vmatpush1.bf16.msra.mxu0 %v5264
    %5916 = vmatprep.subr.bf16.mxu0 %v5273
    %5917 = vmatpush1.bf16.msra.mxu0 %v5272
    %5918 = vmatprep.subr.bf16.mxu0 %v5281
    %5919 = vmatpush1.bf16.msra.mxu0 %v5280
    %5920 = vmatprep.subr.bf16.mxu0 %v5289
    %5921 = vmatpush1.bf16.msra.mxu0 %v5288
    %5922 = vmatprep.subr.bf16.mxu0 %v5297
    %5923 = vmatpush1.bf16.msra.mxu0 %v5296
    %5924 = vmatprep.subr.bf16.mxu0 %v5305
    %5925 = vmatpush1.bf16.msra.mxu0 %v5304
    %5926 = vmatprep.subr.bf16.mxu0 %v5313
    %5927 = vmatpush1.bf16.msra.mxu0 %v5312
    %5928 = vmatprep.subr.bf16.mxu0 %v5321
    %5929 = vmatpush1.bf16.msra.mxu0 %v5320
    %5930 = vmatprep.subr.bf16.mxu0 %v5329
    %5931 = vmatpush1.bf16.msra.mxu0 %v5328
    %5932 = vmatprep.subr.bf16.mxu0 %v5337
    %5933 = vmatpush1.bf16.msra.mxu0 %v5336
    %5934 = vmatprep.subr.bf16.mxu0 %v5345
    %5935 = vmatpush1.bf16.msra.mxu0 %v5344
    %5936 = vmatprep.subr.bf16.mxu0 %v5353
    %5937 = vmatpush1.bf16.msra.mxu0 %v5352
    %5938 = vmatprep.mubr.bf16.mxu0 %v5446
    %5939 = vmatmul.mubr.bf16.gmra.mrb[0].mxu0 %v5444
    %v5940 = vpop.f32.mrb[0].mxu0
    %v5941 = vadd.f32 %v5900, %v5940
    %v5942 = vpop.f32.mrb[0].mxu0
    %v5943 = vadd.f32 %v5902, %v5942
    %v5944 = vpop.f32.mrb[0].mxu0
    %v5945 = vpop.f32.mrb[0].mxu0
    %5946 = vdwg.mxu0
    %5947 = vmatprep.subr.bf16.mxu0 %v4851
    %5948 = vmatpush1.bf16.msra.mxu0 %v4850
    %5949 = vmatprep.subr.bf16.mxu0 %v4859
    %5950 = vmatpush1.bf16.msra.mxu0 %v4858
    %5951 = vmatprep.subr.bf16.mxu0 %v4867
    %5952 = vmatpush1.bf16.msra.mxu0 %v4866
    %5953 = vmatprep.subr.bf16.mxu0 %v4875
    %5954 = vmatpush1.bf16.msra.mxu0 %v4874
    %5955 = vmatprep.subr.bf16.mxu0 %v4883
    %5956 = vmatpush1.bf16.msra.mxu0 %v4882
    %5957 = vmatprep.subr.bf16.mxu0 %v4891
    %5958 = vmatpush1.bf16.msra.mxu0 %v4890
    %5959 = vmatprep.subr.bf16.mxu0 %v4899
    %5960 = vmatpush1.bf16.msra.mxu0 %v4898
    %5961 = vmatprep.subr.bf16.mxu0 %v4907
    %5962 = vmatpush1.bf16.msra.mxu0 %v4906
    %5963 = vmatprep.subr.bf16.mxu0 %v4915
    %5964 = vmatpush1.bf16.msra.mxu0 %v4914
    %5965 = vmatprep.subr.bf16.mxu0 %v4923
    %5966 = vmatpush1.bf16.msra.mxu0 %v4922
    %5967 = vmatprep.subr.bf16.mxu0 %v4931
    %5968 = vmatpush1.bf16.msra.mxu0 %v4930
    %5969 = vmatprep.subr.bf16.mxu0 %v4939
    %5970 = vmatpush1.bf16.msra.mxu0 %v4938
    %5971 = vmatprep.subr.bf16.mxu0 %v4947
    %5972 = vmatpush1.bf16.msra.mxu0 %v4946
    %5973 = vmatprep.subr.bf16.mxu0 %v4955
    %5974 = vmatpush1.bf16.msra.mxu0 %v4954
    %5975 = vmatprep.subr.bf16.mxu0 %v4963
    %5976 = vmatpush1.bf16.msra.mxu0 %v4962
    %5977 = vmatprep.subr.bf16.mxu0 %v4971
    %5978 = vmatpush1.bf16.msra.mxu0 %v4970
    %5979 = vmatprep.mubr.bf16.mxu0 %v5435
    %5980 = vmatmul.mubr.bf16.gmra.mrb[0].mxu0 %v5421
    %v5981 = vpop.f32.mrb[0].mxu0
    %v5982 = vadd.f32 %v5385, %v5981
    %v5983 = vpop.f32.mrb[0].mxu0
    %v5984 = vadd.f32 %v5389, %v5983
    %v5985 = vpop.f32.mrb[0].mxu0
    %v5986 = vpop.f32.mrb[0].mxu0
    %5987 = vdwg.mxu0
    %5988 = vmatprep.subr.bf16.mxu0 %v4979
    %5989 = vmatpush1.bf16.msra.mxu0 %v4978
    %5990 = vmatprep.subr.bf16.mxu0 %v4987
    %5991 = vmatpush1.bf16.msra.mxu0 %v4986
    %5992 = vmatprep.subr.bf16.mxu0 %v4995
    %5993 = vmatpush1.bf16.msra.mxu0 %v4994
    %5994 = vmatprep.subr.bf16.mxu0 %v5003
    %5995 = vmatpush1.bf16.msra.mxu0 %v5002
    %5996 = vmatprep.subr.bf16.mxu0 %v5011
    %5997 = vmatpush1.bf16.msra.mxu0 %v5010
    %5998 = vmatprep.subr.bf16.mxu0 %v5019
    %5999 = vmatpush1.bf16.msra.mxu0 %v5018
    %6000 = vmatprep.subr.bf16.mxu0 %v5027
    %6001 = vmatpush1.bf16.msra.mxu0 %v5026
    %6002 = vmatprep.subr.bf16.mxu0 %v5035
    %6003 = vmatpush1.bf16.msra.mxu0 %v5034
    %6004 = vmatprep.subr.bf16.mxu0 %v5043
    %6005 = vmatpush1.bf16.msra.mxu0 %v5042
    %6006 = vmatprep.subr.bf16.mxu0 %v5051
    %6007 = vmatpush1.bf16.msra.mxu0 %v5050
    %6008 = vmatprep.subr.bf16.mxu0 %v5059
    %6009 = vmatpush1.bf16.msra.mxu0 %v5058
    %6010 = vmatprep.subr.bf16.mxu0 %v5067
    %6011 = vmatpush1.bf16.msra.mxu0 %v5066
    %6012 = vmatprep.subr.bf16.mxu0 %v5075
    %6013 = vmatpush1.bf16.msra.mxu0 %v5074
    %6014 = vmatprep.subr.bf16.mxu0 %v5083
    %6015 = vmatpush1.bf16.msra.mxu0 %v5082
    %6016 = vmatprep.subr.bf16.mxu0 %v5091
    %6017 = vmatpush1.bf16.msra.mxu0 %v5090
    %6018 = vmatprep.subr.bf16.mxu0 %v5099
    %6019 = vmatpush1.bf16.msra.mxu0 %v5098
    %6020 = vmatprep.mubr.bf16.mxu0 %v5445
    %6021 = vmatmul.mubr.bf16.gmra.mrb[0].mxu0 %v5443
    %v6022 = vpop.f32.mrb[0].mxu0
    %v6023 = vadd.f32 %v5982, %v6022
    %v6024 = vpop.f32.mrb[0].mxu0
    %v6025 = vadd.f32 %v5984, %v6024
    %v6026 = vpop.f32.mrb[0].mxu0
    %v6027 = vpop.f32.mrb[0].mxu0
    %6028 = vdwg.mxu0
    %6029 = vmatprep.subr.bf16.mxu0 %v5107
    %6030 = vmatpush1.bf16.msra.mxu0 %v5106
    %6031 = vmatprep.subr.bf16.mxu0 %v5115
    %6032 = vmatpush1.bf16.msra.mxu0 %v5114
    %6033 = vmatprep.subr.bf16.mxu0 %v5123
    %6034 = vmatpush1.bf16.msra.mxu0 %v5122
    %6035 = vmatprep.subr.bf16.mxu0 %v5131
    %6036 = vmatpush1.bf16.msra.mxu0 %v5130
    %6037 = vmatprep.subr.bf16.mxu0 %v5139
    %6038 = vmatpush1.bf16.msra.mxu0 %v5138
    %6039 = vmatprep.subr.bf16.mxu0 %v5147
    %6040 = vmatpush1.bf16.msra.mxu0 %v5146
    %6041 = vmatprep.subr.bf16.mxu0 %v5155
    %6042 = vmatpush1.bf16.msra.mxu0 %v5154
    %6043 = vmatprep.subr.bf16.mxu0 %v5163
    %6044 = vmatpush1.bf16.msra.mxu0 %v5162
    %6045 = vmatprep.subr.bf16.mxu0 %v5171
    %6046 = vmatpush1.bf16.msra.mxu0 %v5170
    %6047 = vmatprep.subr.bf16.mxu0 %v5179
    %6048 = vmatpush1.bf16.msra.mxu0 %v5178
    %6049 = vmatprep.subr.bf16.mxu0 %v5187
    %6050 = vmatpush1.bf16.msra.mxu0 %v5186
    %6051 = vmatprep.subr.bf16.mxu0 %v5195
    %6052 = vmatpush1.bf16.msra.mxu0 %v5194
    %6053 = vmatprep.subr.bf16.mxu0 %v5203
    %6054 = vmatpush1.bf16.msra.mxu0 %v5202
    %6055 = vmatprep.subr.bf16.mxu0 %v5211
    %6056 = vmatpush1.bf16.msra.mxu0 %v5210
    %6057 = vmatprep.subr.bf16.mxu0 %v5219
    %6058 = vmatpush1.bf16.msra.mxu0 %v5218
    %6059 = vmatprep.subr.bf16.mxu0 %v5227
    %6060 = vmatpush1.bf16.msra.mxu0 %v5226
    %6061 = vmatprep.mubr.bf16.mxu0 %v5442
    %6062 = vmatmul.mubr.bf16.gmra.mrb[0].mxu0 %v5428
    %v6063 = vpop.f32.mrb[0].mxu0
    %v6064 = vadd.f32 %v6023, %v6063
    %v6065 = vpop.f32.mrb[0].mxu0
    %v6066 = vadd.f32 %v6025, %v6065
    %v6067 = vpop.f32.mrb[0].mxu0
    %v6068 = vpop.f32.mrb[0].mxu0
    %6069 = vdwg.mxu0
    %6070 = vmatprep.subr.bf16.mxu0 %v5235
    %6071 = vmatpush1.bf16.msra.mxu0 %v5234
    %6072 = vmatprep.subr.bf16.mxu0 %v5243
    %6073 = vmatpush1.bf16.msra.mxu0 %v5242
    %6074 = vmatprep.subr.bf16.mxu0 %v5251
    %6075 = vmatpush1.bf16.msra.mxu0 %v5250
    %6076 = vmatprep.subr.bf16.mxu0 %v5259
    %6077 = vmatpush1.bf16.msra.mxu0 %v5258
    %6078 = vmatprep.subr.bf16.mxu0 %v5267
    %6079 = vmatpush1.bf16.msra.mxu0 %v5266
    %6080 = vmatprep.subr.bf16.mxu0 %v5275
    %6081 = vmatpush1.bf16.msra.mxu0 %v5274
    %6082 = vmatprep.subr.bf16.mxu0 %v5283
    %6083 = vmatpush1.bf16.msra.mxu0 %v5282
    %6084 = vmatprep.subr.bf16.mxu0 %v5291
    %6085 = vmatpush1.bf16.msra.mxu0 %v5290
    %6086 = vmatprep.subr.bf16.mxu0 %v5299
    %6087 = vmatpush1.bf16.msra.mxu0 %v5298
    %6088 = vmatprep.subr.bf16.mxu0 %v5307
    %6089 = vmatpush1.bf16.msra.mxu0 %v5306
    %6090 = vmatprep.subr.bf16.mxu0 %v5315
    %6091 = vmatpush1.bf16.msra.mxu0 %v5314
    %6092 = vmatprep.subr.bf16.mxu0 %v5323
    %6093 = vmatpush1.bf16.msra.mxu0 %v5322
    %6094 = vmatprep.subr.bf16.mxu0 %v5331
    %6095 = vmatpush1.bf16.msra.mxu0 %v5330
    %6096 = vmatprep.subr.bf16.mxu0 %v5339
    %6097 = vmatpush1.bf16.msra.mxu0 %v5338
    %6098 = vmatprep.subr.bf16.mxu0 %v5347
    %6099 = vmatpush1.bf16.msra.mxu0 %v5346
    %6100 = vmatprep.subr.bf16.mxu0 %v5355
    %6101 = vmatpush1.bf16.msra.mxu0 %v5354
    %6102 = vmatprep.mubr.bf16.mxu0 %v5446
    %6103 = vmatmul.mubr.bf16.gmra.mrb[0].mxu0 %v5444
    %v6104 = vpop.f32.mrb[0].mxu0
    %v6105 = vadd.f32 %v6064, %v6104
    %v6106 = vpop.f32.mrb[0].mxu0
    %v6107 = vadd.f32 %v6066, %v6106
    %v6108 = vpop.f32.mrb[0].mxu0
    %v6109 = vpop.f32.mrb[0].mxu0
    %6110 = vdwg.mxu0
    %v6111 = vmax.f32 %v5613, 0.0
    %v6112 = vmax.f32 %v5615, 0.0
    %v6113 = vmax.f32 %v5777, 0.0
    %v6114 = vmax.f32 %v5779, 0.0
    %v6115 = vmax.f32 %v5941, 0.0
    %v6116 = vmax.f32 %v5943, 0.0
    %v6117 = vmax.f32 %v6105, 0.0
    %v6118 = vmax.f32 %v6107, 0.0
    %v6119 = vpack.c.bf16 %v6111, %v6111
    %v6120 = vpack.c.bf16 %v6112, %v6112
    %v6121 = vpack.c.bf16 %v6113, %v6113
    %v6122 = vpack.c.bf16 %v6114, %v6114
    %v6123 = vpack.c.bf16 %v6115, %v6115
    %v6124 = vpack.c.bf16 %v6116, %v6116
    %v6125 = vpack.c.bf16 %v6117, %v6117
    %v6126 = vpack.c.bf16 %v6118, %v6118
    %s6127 = smul.u32 %s4840, 1
    %s6128 = sshll.u32 %s6127, 4
    %6129 = dma.done %s134, %s6128
    %v6130 = vld [vmem:[#allocation4] sm:$0xff]
    %v6131 = vld [vmem:[#allocation4 + $0x8] sm:$0xff]
    %v6132 = vld [vmem:[#allocation4 + $0x10] sm:$0xff]
    %v6133 = vld [vmem:[#allocation4 + $0x18] sm:$0xff]
    %v6134 = vld [vmem:[#allocation4 + $0x20] sm:$0xff]
    %v6135 = vld [vmem:[#allocation4 + $0x28] sm:$0xff]
    %v6136 = vld [vmem:[#allocation4 + $0x30] sm:$0xff]
    %v6137 = vld [vmem:[#allocation4 + $0x38] sm:$0xff]
    %v6138 = vld [vmem:[#allocation4 + $0x40] sm:$0xff]
    %v6139 = vld [vmem:[#allocation4 + $0x48] sm:$0xff]
    %v6140 = vld [vmem:[#allocation4 + $0x50] sm:$0xff]
    %v6141 = vld [vmem:[#allocation4 + $0x58] sm:$0xff]
    %v6142 = vld [vmem:[#allocation4 + $0x60] sm:$0xff]
    %v6143 = vld [vmem:[#allocation4 + $0x68] sm:$0xff]
    %v6144 = vld [vmem:[#allocation4 + $0x70] sm:$0xff]
    %v6145 = vld [vmem:[#allocation4 + $0x78] sm:$0xff]
    %v6146 = vld [vmem:[#allocation4 + $0x80] sm:$0xff]
    %v6147 = vld [vmem:[#allocation4 + $0x88] sm:$0xff]
    %v6148 = vld [vmem:[#allocation4 + $0x90] sm:$0xff]
    %v6149 = vld [vmem:[#allocation4 + $0x98] sm:$0xff]
    %v6150 = vld [vmem:[#allocation4 + $0xa0] sm:$0xff]
    %v6151 = vld [vmem:[#allocation4 + $0xa8] sm:$0xff]
    %v6152 = vld [vmem:[#allocation4 + $0xb0] sm:$0xff]
    %v6153 = vld [vmem:[#allocation4 + $0xb8] sm:$0xff]
    %v6154 = vld [vmem:[#allocation4 + $0xc0] sm:$0xff]
    %v6155 = vld [vmem:[#allocation4 + $0xc8] sm:$0xff]
    %v6156 = vld [vmem:[#allocation4 + $0xd0] sm:$0xff]
    %v6157 = vld [vmem:[#allocation4 + $0xd8] sm:$0xff]
    %v6158 = vld [vmem:[#allocation4 + $0xe0] sm:$0xff]
    %v6159 = vld [vmem:[#allocation4 + $0xe8] sm:$0xff]
    %v6160 = vld [vmem:[#allocation4 + $0xf0] sm:$0xff]
    %v6161 = vld [vmem:[#allocation4 + $0xf8] sm:$0xff]
    %v6162 = vld [vmem:[#allocation4 + $0x100] sm:$0xff]
    %v6163 = vld [vmem:[#allocation4 + $0x108] sm:$0xff]
    %v6164 = vld [vmem:[#allocation4 + $0x110] sm:$0xff]
    %v6165 = vld [vmem:[#allocation4 + $0x118] sm:$0xff]
    %v6166 = vld [vmem:[#allocation4 + $0x120] sm:$0xff]
    %v6167 = vld [vmem:[#allocation4 + $0x128] sm:$0xff]
    %v6168 = vld [vmem:[#allocation4 + $0x130] sm:$0xff]
    %v6169 = vld [vmem:[#allocation4 + $0x138] sm:$0xff]
    %v6170 = vld [vmem:[#allocation4 + $0x140] sm:$0xff]
    %v6171 = vld [vmem:[#allocation4 + $0x148] sm:$0xff]
    %v6172 = vld [vmem:[#allocation4 + $0x150] sm:$0xff]
    %v6173 = vld [vmem:[#allocation4 + $0x158] sm:$0xff]
    %v6174 = vld [vmem:[#allocation4 + $0x160] sm:$0xff]
    %v6175 = vld [vmem:[#allocation4 + $0x168] sm:$0xff]
    %v6176 = vld [vmem:[#allocation4 + $0x170] sm:$0xff]
    %v6177 = vld [vmem:[#allocation4 + $0x178] sm:$0xff]
    %v6178 = vld [vmem:[#allocation4 + $0x180] sm:$0xff]
    %v6179 = vld [vmem:[#allocation4 + $0x188] sm:$0xff]
    %v6180 = vld [vmem:[#allocation4 + $0x190] sm:$0xff]
    %v6181 = vld [vmem:[#allocation4 + $0x198] sm:$0xff]
    %v6182 = vld [vmem:[#allocation4 + $0x1a0] sm:$0xff]
    %v6183 = vld [vmem:[#allocation4 + $0x1a8] sm:$0xff]
    %v6184 = vld [vmem:[#allocation4 + $0x1b0] sm:$0xff]
    %v6185 = vld [vmem:[#allocation4 + $0x1b8] sm:$0xff]
    %v6186 = vld [vmem:[#allocation4 + $0x1c0] sm:$0xff]
    %v6187 = vld [vmem:[#allocation4 + $0x1c8] sm:$0xff]
    %v6188 = vld [vmem:[#allocation4 + $0x1d0] sm:$0xff]
    %v6189 = vld [vmem:[#allocation4 + $0x1d8] sm:$0xff]
    %v6190 = vld [vmem:[#allocation4 + $0x1e0] sm:$0xff]
    %v6191 = vld [vmem:[#allocation4 + $0x1e8] sm:$0xff]
    %v6192 = vld [vmem:[#allocation4 + $0x1f0] sm:$0xff]
    %v6193 = vld [vmem:[#allocation4 + $0x1f8] sm:$0xff]
    %v6194 = vld [vmem:[#allocation13] sm:$0x1]
    %v6196 = vlaneseq
    %v6197 = vshrl.u32 %v6196, 7
    %v6198 = vsub.s32 0, %v6197
    %v6199 = vrot.slane %v6194, %v6198
    %6201 = vmatprep.subr.bf16.mxu0 0
    %6202 = vmatpush1.bf16.msra.mxu0 %v6130
    %6203 = vmatprep.subr.bf16.mxu0 0
    %6204 = vmatpush1.bf16.msra.mxu0 %v6131
    %6205 = vmatprep.subr.bf16.mxu0 0
    %6206 = vmatpush1.bf16.msra.mxu0 %v6132
    %6207 = vmatprep.subr.bf16.mxu0 0
    %6208 = vmatpush1.bf16.msra.mxu0 %v6133
    %6209 = vmatprep.subr.bf16.mxu0 0
    %6210 = vmatpush1.bf16.msra.mxu0 %v6134
    %6211 = vmatprep.subr.bf16.mxu0 0
    %6212 = vmatpush1.bf16.msra.mxu0 %v6135
    %6213 = vmatprep.subr.bf16.mxu0 0
    %6214 = vmatpush1.bf16.msra.mxu0 %v6136
    %6215 = vmatprep.subr.bf16.mxu0 0
    %6216 = vmatpush1.bf16.msra.mxu0 %v6137
    %6217 = vmatprep.subr.bf16.mxu0 0
    %6218 = vmatpush1.bf16.msra.mxu0 %v6138
    %6219 = vmatprep.subr.bf16.mxu0 0
    %6220 = vmatpush1.bf16.msra.mxu0 %v6139
    %6221 = vmatprep.subr.bf16.mxu0 0
    %6222 = vmatpush1.bf16.msra.mxu0 %v6140
    %6223 = vmatprep.subr.bf16.mxu0 0
    %6224 = vmatpush1.bf16.msra.mxu0 %v6141
    %6225 = vmatprep.subr.bf16.mxu0 0
    %6226 = vmatpush1.bf16.msra.mxu0 %v6142
    %6227 = vmatprep.subr.bf16.mxu0 0
    %6228 = vmatpush1.bf16.msra.mxu0 %v6143
    %6229 = vmatprep.subr.bf16.mxu0 0
    %6230 = vmatpush1.bf16.msra.mxu0 %v6144
    %6231 = vmatprep.subr.bf16.mxu0 0
    %6232 = vmatpush1.bf16.msra.mxu0 %v6145
    %6233 = vmatprep.mubr.bf16.mxu0 %v6120
    %6234 = vmatmul.mubr.bf16.gmra.mrb[0].mxu0 %v6119
    %v6235 = vpop.f32.mrb[0].mxu0
    %v6236 = vadd.f32 %v6199, %v6235
    %v6237 = vpop.f32.mrb[0].mxu0
    %v6238 = vpop.f32.mrb[0].mxu0
    %v6239 = vpop.f32.mrb[0].mxu0
    %6240 = vdwg.mxu0
    %6241 = vmatprep.subr.bf16.mxu0 0
    %6242 = vmatpush1.bf16.msra.mxu0 %v6146
    %6243 = vmatprep.subr.bf16.mxu0 0
    %6244 = vmatpush1.bf16.msra.mxu0 %v6147
    %6245 = vmatprep.subr.bf16.mxu0 0
    %6246 = vmatpush1.bf16.msra.mxu0 %v6148
    %6247 = vmatprep.subr.bf16.mxu0 0
    %6248 = vmatpush1.bf16.msra.mxu0 %v6149
    %6249 = vmatprep.subr.bf16.mxu0 0
    %6250 = vmatpush1.bf16.msra.mxu0 %v6150
    %6251 = vmatprep.subr.bf16.mxu0 0
    %6252 = vmatpush1.bf16.msra.mxu0 %v6151
    %6253 = vmatprep.subr.bf16.mxu0 0
    %6254 = vmatpush1.bf16.msra.mxu0 %v6152
    %6255 = vmatprep.subr.bf16.mxu0 0
    %6256 = vmatpush1.bf16.msra.mxu0 %v6153
    %6257 = vmatprep.subr.bf16.mxu0 0
    %6258 = vmatpush1.bf16.msra.mxu0 %v6154
    %6259 = vmatprep.subr.bf16.mxu0 0
    %6260 = vmatpush1.bf16.msra.mxu0 %v6155
    %6261 = vmatprep.subr.bf16.mxu0 0
    %6262 = vmatpush1.bf16.msra.mxu0 %v6156
    %6263 = vmatprep.subr.bf16.mxu0 0
    %6264 = vmatpush1.bf16.msra.mxu0 %v6157
    %6265 = vmatprep.subr.bf16.mxu0 0
    %6266 = vmatpush1.bf16.msra.mxu0 %v6158
    %6267 = vmatprep.subr.bf16.mxu0 0
    %6268 = vmatpush1.bf16.msra.mxu0 %v6159
    %6269 = vmatprep.subr.bf16.mxu0 0
    %6270 = vmatpush1.bf16.msra.mxu0 %v6160
    %6271 = vmatprep.subr.bf16.mxu0 0
    %6272 = vmatpush1.bf16.msra.mxu0 %v6161
    %6273 = vmatprep.mubr.bf16.mxu0 %v6122
    %6274 = vmatmul.mubr.bf16.gmra.mrb[0].mxu0 %v6121
    %v6275 = vpop.f32.mrb[0].mxu0
    %v6276 = vadd.f32 %v6236, %v6275
    %v6277 = vpop.f32.mrb[0].mxu0
    %v6278 = vpop.f32.mrb[0].mxu0
    %v6279 = vpop.f32.mrb[0].mxu0
    %6280 = vdwg.mxu0
    %6281 = vmatprep.subr.bf16.mxu0 0
    %6282 = vmatpush1.bf16.msra.mxu0 %v6162
    %6283 = vmatprep.subr.bf16.mxu0 0
    %6284 = vmatpush1.bf16.msra.mxu0 %v6163
    %6285 = vmatprep.subr.bf16.mxu0 0
    %6286 = vmatpush1.bf16.msra.mxu0 %v6164
    %6287 = vmatprep.subr.bf16.mxu0 0
    %6288 = vmatpush1.bf16.msra.mxu0 %v6165
    %6289 = vmatprep.subr.bf16.mxu0 0
    %6290 = vmatpush1.bf16.msra.mxu0 %v6166
    %6291 = vmatprep.subr.bf16.mxu0 0
    %6292 = vmatpush1.bf16.msra.mxu0 %v6167
    %6293 = vmatprep.subr.bf16.mxu0 0
    %6294 = vmatpush1.bf16.msra.mxu0 %v6168
    %6295 = vmatprep.subr.bf16.mxu0 0
    %6296 = vmatpush1.bf16.msra.mxu0 %v6169
    %6297 = vmatprep.subr.bf16.mxu0 0
    %6298 = vmatpush1.bf16.msra.mxu0 %v6170
    %6299 = vmatprep.subr.bf16.mxu0 0
    %6300 = vmatpush1.bf16.msra.mxu0 %v6171
    %6301 = vmatprep.subr.bf16.mxu0 0
    %6302 = vmatpush1.bf16.msra.mxu0 %v6172
    %6303 = vmatprep.subr.bf16.mxu0 0
    %6304 = vmatpush1.bf16.msra.mxu0 %v6173
    %6305 = vmatprep.subr.bf16.mxu0 0
    %6306 = vmatpush1.bf16.msra.mxu0 %v6174
    %6307 = vmatprep.subr.bf16.mxu0 0
    %6308 = vmatpush1.bf16.msra.mxu0 %v6175
    %6309 = vmatprep.subr.bf16.mxu0 0
    %6310 = vmatpush1.bf16.msra.mxu0 %v6176
    %6311 = vmatprep.subr.bf16.mxu0 0
    %6312 = vmatpush1.bf16.msra.mxu0 %v6177
    %6313 = vmatprep.mubr.bf16.mxu0 %v6124
    %6314 = vmatmul.mubr.bf16.gmra.mrb[0].mxu0 %v6123
    %v6315 = vpop.f32.mrb[0].mxu0
    %v6316 = vadd.f32 %v6276, %v6315
    %v6317 = vpop.f32.mrb[0].mxu0
    %v6318 = vpop.f32.mrb[0].mxu0
    %v6319 = vpop.f32.mrb[0].mxu0
    %6320 = vdwg.mxu0
    %6321 = vmatprep.subr.bf16.mxu0 0
    %6322 = vmatpush1.bf16.msra.mxu0 %v6178
    %6323 = vmatprep.subr.bf16.mxu0 0
    %6324 = vmatpush1.bf16.msra.mxu0 %v6179
    %6325 = vmatprep.subr.bf16.mxu0 0
    %6326 = vmatpush1.bf16.msra.mxu0 %v6180
    %6327 = vmatprep.subr.bf16.mxu0 0
    %6328 = vmatpush1.bf16.msra.mxu0 %v6181
    %6329 = vmatprep.subr.bf16.mxu0 0
    %6330 = vmatpush1.bf16.msra.mxu0 %v6182
    %6331 = vmatprep.subr.bf16.mxu0 0
    %6332 = vmatpush1.bf16.msra.mxu0 %v6183
    %6333 = vmatprep.subr.bf16.mxu0 0
    %6334 = vmatpush1.bf16.msra.mxu0 %v6184
    %6335 = vmatprep.subr.bf16.mxu0 0
    %6336 = vmatpush1.bf16.msra.mxu0 %v6185
    %6337 = vmatprep.subr.bf16.mxu0 0
    %6338 = vmatpush1.bf16.msra.mxu0 %v6186
    %6339 = vmatprep.subr.bf16.mxu0 0
    %6340 = vmatpush1.bf16.msra.mxu0 %v6187
    %6341 = vmatprep.subr.bf16.mxu0 0
    %6342 = vmatpush1.bf16.msra.mxu0 %v6188
    %6343 = vmatprep.subr.bf16.mxu0 0
    %6344 = vmatpush1.bf16.msra.mxu0 %v6189
    %6345 = vmatprep.subr.bf16.mxu0 0
    %6346 = vmatpush1.bf16.msra.mxu0 %v6190
    %6347 = vmatprep.subr.bf16.mxu0 0
    %6348 = vmatpush1.bf16.msra.mxu0 %v6191
    %6349 = vmatprep.subr.bf16.mxu0 0
    %6350 = vmatpush1.bf16.msra.mxu0 %v6192
    %6351 = vmatprep.subr.bf16.mxu0 0
    %6352 = vmatpush1.bf16.msra.mxu0 %v6193
    %6353 = vmatprep.mubr.bf16.mxu0 %v6126
    %6354 = vmatmul.mubr.bf16.gmra.mrb[0].mxu0 %v6125
    %v6355 = vpop.f32.mrb[0].mxu0
    %v6356 = vadd.f32 %v6316, %v6355
    %v6357 = vpop.f32.mrb[0].mxu0
    %v6358 = vpop.f32.mrb[0].mxu0
    %v6359 = vpop.f32.mrb[0].mxu0
    %6360 = vdwg.mxu0
    %6361 = vst [vmem:[%s9] sm:$0x3] %v6356
    // Predicated region
    $region54: #{a2c_conv1d_forward.1} parent=1 // pred_check
      _
    $region55: #{a2c_conv1d_forward.1} parent=1 // pred_check_branch
      %6363 = sbr.rel (0) target = $region57
    $region56: #{a2c_conv1d_forward.1} parent=1 // pred_region
      _
    $region57: #{a2c_conv1d_forward.1} parent=1 // pred_fallthru
      _
    // Predicated region
    $region58: #{a2c_conv1d_forward.1} parent=1 // pred_check
      _
    $region59: #{a2c_conv1d_forward.1} parent=1 // pred_check_branch
      %6365 = sbr.rel (0) target = $region61
    $region60: #{a2c_conv1d_forward.1} parent=1 // pred_region
      _
    $region61: #{a2c_conv1d_forward.1} parent=1 // pred_fallthru
      _
    %6366 = vsyncpa [#allocation7], 1
    %6367 = vsyncpa [#allocation9], 1
    %6368 = vsyncpa [#allocation12], 1
  %6369 = vsyncmov [#allocation5]
  %s6370 = vpop.sfrf %6369
  %p6371 = scmp.eq.s32.totalorder %s6370, 0
  %p6372 = pneg %p6371
  %6374 = shalt.err (%p6372)
  %s6375 = scalar_lea.sflag [#allocation5], 1
  %6376 = vsyncmov %s6375
  %s6377 = vpop.sfrf %6376
  %p6378 = scmp.eq.s32.totalorder %s6377, 0
  %p6379 = pneg %p6378
  %6381 = shalt.err (%p6379)
  %s6382 = scalar_lea.sflag [#allocation5], 2
  %6383 = vsyncmov %s6382
  %s6384 = vpop.sfrf %6383
  %p6385 = scmp.eq.s32.totalorder %s6384, 0
  %p6386 = pneg %p6385
  %6388 = shalt.err (%p6386)

</llo_original>
